<compile_context>
chip_gen: v6e
topology: v6e:2x2x1
jax: 0.10.0
libtpu: 0.0.40
codegen_flags: <defaults>
</compile_context>

<pallas_src>
import functools

import jax
import jax.numpy as jnp
from jax import lax
from jax.experimental import pallas as pl
from jax.experimental.pallas import tpu as pltpu


def _pc_layer_kernel(x_ref, wff_t_ref, bff_ref, wfb_t_ref, bfb_ref,
                     wlat_t_ref, blat_ref,
                     rep_ref, pred_ref, err_ref,
                     *, prediction_steps, learning_rate, precision, unroll):
    """One batch tile of the PCLayer forward pass (weights resident in VMEM).

      r    = relu(x @ Wff.T + bff)
      repeat prediction_steps times:
        pred   = r @ Wfb.T + bfb
        err    = x - pred                       (stored per step, steps-major)
        r     += lr * ((err * precision) @ Wff.T + bff)
        r     += lr * relu(r @ Wlat.T + blat)
        r      = relu(r)

    Weights arrive pre-transposed ([in, out]) so every product is a plain
    [M, K] @ [K, N] MXU matmul with f32 accumulation.
    """
    x = x_ref[...]                           # native dtype for the MXU feed
    x_f32 = x.astype(jnp.float32)
    wff_t = wff_t_ref[...]                   # [I, H]
    wfb_t = wfb_t_ref[...]                   # [H, I]
    wlat_t = wlat_t_ref[...]                 # [H, H]

    # (1, n) bias rows; the adds broadcast along sublanes -> no (bt, n) f32 temps.
    bff_row = bff_ref[...].astype(jnp.float32)
    bfb_row = bfb_ref[...].astype(jnp.float32)
    blat_row = blat_ref[...].astype(jnp.float32)

    lr = jnp.float32(learning_rate)
    lr_bff_row = lr * bff_row                            # folded lr * bff
    err_scale = jnp.float32(learning_rate * precision)   # folded lr * precision

    def mm(a, w_t):
        return jnp.dot(a.astype(w_t.dtype), w_t,
                       preferred_element_type=jnp.float32)

    # representation = relu(feedforward(x))
    r0 = jnp.maximum(mm(x, wff_t) + bff_row, 0.0)
    pred0 = jnp.zeros_like(x_f32)

    def step_body(step, carry):
        r, _ = carry
        pred = mm(r, wfb_t) + bfb_row
        err = x_f32 - pred
        # Steps-major error output: a full, lane/sublane-dense (bt, I) store.
        err_ref[step] = err.astype(err_ref.dtype)
        # r += lr * ((err * precision) @ Wff.T + bff)   (constants folded)
        r = r + mm(err * err_scale, wff_t) + lr_bff_row
        lat = jnp.maximum(mm(r, wlat_t) + blat_row, 0.0)
        r = jnp.maximum(r + lr * lat, 0.0)
        return (r, pred)

    r_fin, pred_fin = lax.fori_loop(0, prediction_steps, step_body, (r0, pred0),
                                    unroll=unroll)

    rep_ref[...] = r_fin.astype(rep_ref.dtype)
    pred_ref[...] = pred_fin.astype(pred_ref.dtype)


def _round_up(n, m):
    return -(-n // m) * m


def _choose_batch_tile(batch):
    """Batch tile: multiple of 8, <= 512, grid >= 2 whenever the batch allows."""
    if batch < 16:
        return batch                       # single full block (dims == array dims)
    if batch >= 1024:
        return 512
    if batch >= 512:
        return 256
    if batch >= 256:
        return 128
    return max(8, ((batch // 2) // 8) * 8)


def _vmem_bytes(bt, in_size, hidden, steps, w_itemsize, x_itemsize,
                out_itemsize, single_buffer_weights):
    """Approximate per-grid-step VMEM footprint, padded to (8,128) tiles."""
    i_p = _round_up(in_size, 128)
    h_p = _round_up(hidden, 128)
    bt_p = _round_up(bt, 8)
    w_bufs = 1 if single_buffer_weights else 2
    weights = w_bufs * (i_p * h_p + h_p * i_p + h_p * h_p) * w_itemsize
    biases = w_bufs * 8 * (2 * h_p + i_p) * w_itemsize
    x_blk = 2 * bt_p * i_p * x_itemsize                      # double-buffered input
    rep_blk = 2 * bt_p * h_p * out_itemsize
    pred_blk = 2 * bt_p * i_p * out_itemsize
    err_blk = 2 * steps * bt_p * i_p * out_itemsize
    interm = (2 * bt_p * h_p + 3 * bt_p * i_p) * 4           # r/lat + x_f32/pred/err (f32)
    return weights + biases + x_blk + rep_blk + pred_blk + err_blk + interm


def pc_layer_forward(x, params, *, prediction_steps=10, learning_rate=0.1,
                     precision=1.0, top_down_prediction=None):
    """PCLayer forward pass.

    Returns (representation, prediction, errors) with errors shaped
    [batch, prediction_steps, input_size] (== return_errors=True in PyTorch;
    representation alone matches return_errors=False).
    """
    wff, bff, wfb, bfb, wlat, blat = params
    B, I = x.shape
    H = wff.shape[0]                          # PyTorch weight layout: [out, in]
    steps = int(prediction_steps)
    out_dtype = x.dtype

    if steps == 0:
        # Degenerate case (no kernel needed).  Only here does top_down_prediction
        # affect the result — with steps >= 1 the loop overwrites it (as in PyTorch).
        rep = jnp.maximum(x @ wff.T + bff, 0.0).astype(out_dtype)
        pred = (jnp.zeros_like(x) if top_down_prediction is None
                else top_down_prediction).astype(out_dtype)
        return rep, pred, jnp.zeros((B, 0, I), out_dtype)
    # TODO(synk): with steps >= 1 top_down_prediction never reaches the outputs
    # (matches the PyTorch module), so the kernel path ignores it.

    # One-time wrapper transposes [out,in] -> [in,out]; biases as (1, n) rows.
    wff_t, wfb_t, wlat_t = wff.T, wfb.T, wlat.T
    bff2, bfb2, blat2 = bff.reshape(1, H), bfb.reshape(1, I), blat.reshape(1, H)

    w_is = wff.dtype.itemsize
    x_is = x.dtype.itemsize
    o_is = jnp.dtype(out_dtype).itemsize

    # Tile the batch; shrink the tile until the footprint fits a conservative
    # 40 MiB budget (headroom below v7x's 64 MiB physical VMEM).
    budget = 40 << 20
    bt = _choose_batch_tile(B)
    while bt >= 16 and _vmem_bytes(bt, I, H, steps, w_is, x_is, o_is, True) > budget:
        bt = max(8, ((bt // 2) // 8) * 8)

    padded_b = _round_up(B, bt)
    x_p = x if padded_b == B else jnp.pad(x, ((0, padded_b - B), (0, 0)))
    grid = (padded_b // bt,)

    # Pure dependence chain across steps: full unroll only for small tiles.
    unroll = True if bt * max(H, I) <= 16 * 1024 else 2

    kernel = functools.partial(
        _pc_layer_kernel,
        prediction_steps=steps,
        learning_rate=float(learning_rate),
        precision=float(precision),
        unroll=unroll,
    )

    flops = 2 * padded_b * I * H + steps * (2 * padded_b * H * I
                                            + 2 * padded_b * I * H
                                            + 2 * padded_b * H * H)
    bytes_accessed = int(
        x_p.size * x_is
        + (wff.size + wfb.size + wlat.size + bff.size + bfb.size + blat.size) * w_is
        + (padded_b * H + padded_b * I + steps * padded_b * I) * o_is)
    cost = pl.CostEstimate(flops=int(flops), transcendentals=0,
                           bytes_accessed=bytes_accessed)

    def run(single_buffer_weights):
        vmem_est = _vmem_bytes(bt, I, H, steps, w_is, x_is, o_is,
                               single_buffer_weights)
        # Always request a limit: v5e's default scoped-VMEM limit is only 16 MiB;
        # cap at 48 MiB so v7x keeps headroom for Mosaic internal scratch.
        vmem_limit = int(min(48 << 20, max(vmem_est + (8 << 20), 24 << 20)))

        def resident(shape):
            kwargs = ({"pipeline_mode": pl.Buffered(1)}
                      if single_buffer_weights else {})
            return pl.BlockSpec(shape, lambda b: (0,) * len(shape), **kwargs)

        return pl.pallas_call(
            kernel,
            out_shape=(
                jax.ShapeDtypeStruct((padded_b, H), out_dtype),         # representation
                jax.ShapeDtypeStruct((padded_b, I), out_dtype),         # prediction
                jax.ShapeDtypeStruct((steps, padded_b, I), out_dtype),  # errors, steps-major
            ),
            grid=grid,
            in_specs=[
                pl.BlockSpec((bt, I), lambda b: (b, 0)),   # x: tiled over batch
                resident((I, H)), resident((1, H)),        # feedforward Wᵀ, b
                resident((H, I)), resident((1, I)),        # feedback    Wᵀ, b
                resident((H, H)), resident((1, H)),        # lateral     Wᵀ, b
            ],
            out_specs=(
                pl.BlockSpec((bt, H), lambda b: (b, 0)),
                pl.BlockSpec((bt, I), lambda b: (b, 0)),
                pl.BlockSpec((steps, bt, I), lambda b: (0, b, 0)),
            ),
            compiler_params=pltpu.CompilerParams(
                dimension_semantics=("parallel",),
                vmem_limit_bytes=vmem_limit),
            cost_estimate=cost,
        )(x_p, wff_t, bff2, wfb_t, bfb2, wlat_t, blat2)

    try:
        rep, pred, err_sbi = run(single_buffer_weights=True)
    except Exception:
        # Fallback for jax versions that reject pl.Buffered(1) on resident inputs;
        # only cost is double-buffered (still VMEM-resident) weights.
        rep, pred, err_sbi = run(single_buffer_weights=False)

    rep = rep[:B]
    pred = pred[:B]
    # Restore the module's [B, steps, I] layout with one cheap XLA transpose.
    errors = jnp.transpose(err_sbi[:, :B, :], (1, 0, 2))
    return rep, pred, errors


def _xavier_normal(key, out_f, in_f):
    std = (2.0 / (in_f + out_f)) ** 0.5
    return std * jax.random.normal(key, (out_f, in_f), dtype=jnp.float32)


def _linear_bias(key, out_f, in_f):
    # PyTorch nn.Linear default bias init: U(-1/sqrt(fan_in), 1/sqrt(fan_in))
    bound = 1.0 / (in_f ** 0.5)
    return jax.random.uniform(key, (out_f,), minval=-bound, maxval=bound,
                              dtype=jnp.float32)


def init_pc_layer_params(key, input_size, hidden_size):
    ks = jax.random.split(key, 6)
    wff = _xavier_normal(ks[0], hidden_size, input_size)
    bff = _linear_bias(ks[1], hidden_size, input_size)
    wfb = _xavier_normal(ks[2], input_size, hidden_size)
    bfb = _linear_bias(ks[3], input_size, hidden_size)
    wlat = _xavier_normal(ks[4], hidden_size, hidden_size)
    blat = _linear_bias(ks[5], hidden_size, hidden_size)
    return (wff, bff, wfb, bfb, wlat, blat)


def _reference_forward(x, params, prediction_steps, learning_rate, precision):
    """Pure-JAX reference mirroring the PyTorch module."""
    wff, bff, wfb, bfb, wlat, blat = params
    relu = lambda t: jnp.maximum(t, 0.0)
    r = relu(x @ wff.T + bff)
    pred = jnp.zeros_like(x)
    errs = []
    for _ in range(prediction_steps):
        pred = r @ wfb.T + bfb
        err = x - pred
        errs.append(err)
        delta = (err * precision) @ wff.T + bff
        r = r + learning_rate * delta
        r = r + learning_rate * relu(r @ wlat.T + blat)
        r = relu(r)
    return r, pred, jnp.stack(errs, axis=1)


if __name__ == "__main__":
    batch = 18                 # not a multiple of the tile -> exercises pad/slice path
    input_size = 16
    hidden_size = 32
    prediction_steps = 10
    learning_rate = 0.1
    precision = 1.0

    key = jax.random.PRNGKey(0)
    k_x, k_p = jax.random.split(key)
    x = jax.random.normal(k_x, (batch, input_size), dtype=jnp.float32)
    params = init_pc_layer_params(k_p, input_size, hidden_size)

    rep, pred, errors = pc_layer_forward(
        x, params,
        prediction_steps=prediction_steps,
        learning_rate=learning_rate,
        precision=precision,
    )
    jax.block_until_ready((rep, pred, errors))

    # Sanity check against the pure-JAX reference (slightly loosened tolerance:
    # the kernel folds lr*precision into the delta matmul — float reassociation).
    rep_ref, pred_ref, err_ref = _reference_forward(
        x, params, prediction_steps, learning_rate, precision)
    assert rep.shape == (batch, hidden_size)
    assert pred.shape == (batch, input_size)
    assert errors.shape == (batch, prediction_steps, input_size)
    assert jnp.allclose(rep, rep_ref, atol=5e-4, rtol=5e-4)
    assert jnp.allclose(pred, pred_ref, atol=5e-4, rtol=5e-4)
    assert jnp.allclose(errors, err_ref, atol=5e-4, rtol=5e-4)

    print("KERNEL_OK")
</pallas_src>

<mosaic_0001>
module attributes {stable_mosaic.version = 11 : i64} {
  func.func @_pc_layer_kernel(%arg0: i32, %arg1: memref<8x16xf32, #tpu.memory_space<vmem>>, %arg2: memref<16x32xf32, #tpu.memory_space<vmem>>, %arg3: memref<1x32xf32, #tpu.memory_space<vmem>>, %arg4: memref<32x16xf32, #tpu.memory_space<vmem>>, %arg5: memref<1x16xf32, #tpu.memory_space<vmem>>, %arg6: memref<32x32xf32, #tpu.memory_space<vmem>>, %arg7: memref<1x32xf32, #tpu.memory_space<vmem>>, %arg8: memref<8x32xf32, #tpu.memory_space<vmem>>, %arg9: memref<8x16xf32, #tpu.memory_space<vmem>>, %arg10: memref<10x8x16xf32, #tpu.memory_space<vmem>>) attributes {dimension_semantics = [#tpu.dimension_semantics<parallel>], iteration_bounds = array<i64: 3>, scalar_prefetch = 0 : i64, scratch_operands = 0 : i64, tpu.core_type = #tpu.core_type<tc>, window_params = [{transform_indices = @transform_0, window_bounds = array<i64: 8, 16>}, {pipeline_mode = #tpu.pipeline_mode<synchronous>, transform_indices = @transform_1, window_bounds = array<i64: 16, 32>}, {pipeline_mode = #tpu.pipeline_mode<synchronous>, transform_indices = @transform_2, window_bounds = array<i64: 1, 32>}, {pipeline_mode = #tpu.pipeline_mode<synchronous>, transform_indices = @transform_3, window_bounds = array<i64: 32, 16>}, {pipeline_mode = #tpu.pipeline_mode<synchronous>, transform_indices = @transform_4, window_bounds = array<i64: 1, 16>}, {pipeline_mode = #tpu.pipeline_mode<synchronous>, transform_indices = @transform_5, window_bounds = array<i64: 32, 32>}, {pipeline_mode = #tpu.pipeline_mode<synchronous>, transform_indices = @transform_6, window_bounds = array<i64: 1, 32>}, {transform_indices = @transform_7, window_bounds = array<i64: 8, 32>}, {transform_indices = @transform_8, window_bounds = array<i64: 8, 16>}, {transform_indices = @transform_9, window_bounds = array<i64: 10, 8, 16>}]} {
    %c0 = arith.constant 0 : index
    %c0_0 = arith.constant 0 : index
    %0 = vector.load %arg1[%c0, %c0_0] : memref<8x16xf32, #tpu.memory_space<vmem>>, vector<8x16xf32>
    %c0_1 = arith.constant 0 : index
    %c0_2 = arith.constant 0 : index
    %1 = vector.load %arg2[%c0_1, %c0_2] : memref<16x32xf32, #tpu.memory_space<vmem>>, vector<16x32xf32>
    %c0_3 = arith.constant 0 : index
    %c0_4 = arith.constant 0 : index
    %2 = vector.load %arg4[%c0_3, %c0_4] : memref<32x16xf32, #tpu.memory_space<vmem>>, vector<32x16xf32>
    %c0_5 = arith.constant 0 : index
    %c0_6 = arith.constant 0 : index
    %3 = vector.load %arg6[%c0_5, %c0_6] : memref<32x32xf32, #tpu.memory_space<vmem>>, vector<32x32xf32>
    %c0_7 = arith.constant 0 : index
    %c0_8 = arith.constant 0 : index
    %4 = vector.load %arg3[%c0_7, %c0_8] : memref<1x32xf32, #tpu.memory_space<vmem>>, vector<1x32xf32>
    %c0_9 = arith.constant 0 : index
    %c0_10 = arith.constant 0 : index
    %5 = vector.load %arg5[%c0_9, %c0_10] : memref<1x16xf32, #tpu.memory_space<vmem>>, vector<1x16xf32>
    %c0_11 = arith.constant 0 : index
    %c0_12 = arith.constant 0 : index
    %6 = vector.load %arg7[%c0_11, %c0_12] : memref<1x32xf32, #tpu.memory_space<vmem>>, vector<1x32xf32>
    %cst = arith.constant 1.000000e-01 : f32
    %7 = vector.broadcast %cst : f32 to vector<1x32xf32>
    %8 = arith.mulf %7, %4 : vector<1x32xf32>
    %cst_13 = arith.constant dense<0.000000e+00> : vector<8x32xf32>
    %9 = tpu.matmul %0, %1, %cst_13 {dimension_numbers = #tpu.dot_dimension_numbers<[1], [0], [0], [1], [0, 0, 1, 1], [], []>} : vector<8x16xf32>, vector<16x32xf32>, vector<8x32xf32> -> vector<8x32xf32>
    %10 = vector.broadcast %4 : vector<1x32xf32> to vector<8x32xf32>
    %11 = arith.addf %9, %10 : vector<8x32xf32>
    %cst_14 = arith.constant 0.000000e+00 : f32
    %12 = vector.broadcast %cst_14 : f32 to vector<8x32xf32>
    %13 = arith.maximumf %11, %12 : vector<8x32xf32>
    %cst_15 = arith.constant 0.000000e+00 : f32
    %14 = vector.broadcast %cst_15 : f32 to vector<8x16xf32>
    %cst_16 = arith.constant 1.000000e-01 : f32
    %cst_17 = arith.constant 1.000000e-01 : f32
    %c0_i32 = arith.constant 0 : i32
    %cst_18 = arith.constant dense<0.000000e+00> : vector<8x16xf32>
    %15 = tpu.matmul %13, %2, %cst_18 {dimension_numbers = #tpu.dot_dimension_numbers<[1], [0], [0], [1], [0, 0, 1, 1], [], []>} : vector<8x32xf32>, vector<32x16xf32>, vector<8x16xf32> -> vector<8x16xf32>
    %16 = vector.broadcast %5 : vector<1x16xf32> to vector<8x16xf32>
    %17 = arith.addf %15, %16 : vector<8x16xf32>
    %18 = arith.subf %0, %17 : vector<8x16xf32>
    %19 = arith.index_cast %c0_i32 : i32 to index
    %c0_19 = arith.constant 0 : index
    %c0_20 = arith.constant 0 : index
    %20 = vector.load %arg10[%19, %c0_19, %c0_20] : memref<10x8x16xf32, #tpu.memory_space<vmem>>, vector<1x8x16xf32>
    %21 = vector.shape_cast %20 : vector<1x8x16xf32> to vector<8x16xf32>
    %22 = vector.shape_cast %18 : vector<8x16xf32> to vector<1x8x16xf32>
    tpu.vector_store %arg10[%19, %c0_19, %c0_20], %22 {strides = array<i32>} : memref<10x8x16xf32, #tpu.memory_space<vmem>>, vector<1x8x16xf32>,
    %23 = vector.broadcast %cst_16 : f32 to vector<8x16xf32>
    %24 = arith.mulf %18, %23 : vector<8x16xf32>
    %cst_21 = arith.constant dense<0.000000e+00> : vector<8x32xf32>
    %25 = tpu.matmul %24, %1, %cst_21 {dimension_numbers = #tpu.dot_dimension_numbers<[1], [0], [0], [1], [0, 0, 1, 1], [], []>} : vector<8x16xf32>, vector<16x32xf32>, vector<8x32xf32> -> vector<8x32xf32>
    %26 = arith.addf %13, %25 : vector<8x32xf32>
    %27 = vector.broadcast %8 : vector<1x32xf32> to vector<8x32xf32>
    %28 = arith.addf %26, %27 : vector<8x32xf32>
    %cst_22 = arith.constant dense<0.000000e+00> : vector<8x32xf32>
    %29 = tpu.matmul %28, %3, %cst_22 {dimension_numbers = #tpu.dot_dimension_numbers<[1], [0], [0], [1], [0, 0, 1, 1], [], []>} : vector<8x32xf32>, vector<32x32xf32>, vector<8x32xf32> -> vector<8x32xf32>
    %30 = vector.broadcast %6 : vector<1x32xf32> to vector<8x32xf32>
    %31 = arith.addf %29, %30 : vector<8x32xf32>
    %cst_23 = arith.constant 0.000000e+00 : f32
    %32 = vector.broadcast %cst_23 : f32 to vector<8x32xf32>
    %33 = arith.maximumf %31, %32 : vector<8x32xf32>
    %34 = vector.broadcast %cst_17 : f32 to vector<8x32xf32>
    %35 = arith.mulf %34, %33 : vector<8x32xf32>
    %36 = arith.addf %28, %35 : vector<8x32xf32>
    %cst_24 = arith.constant 0.000000e+00 : f32
    %37 = vector.broadcast %cst_24 : f32 to vector<8x32xf32>
    %38 = arith.maximumf %36, %37 : vector<8x32xf32>
    %c1_i32 = arith.constant 1 : i32
    %cst_25 = arith.constant dense<0.000000e+00> : vector<8x16xf32>
    %39 = tpu.matmul %38, %2, %cst_25 {dimension_numbers = #tpu.dot_dimension_numbers<[1], [0], [0], [1], [0, 0, 1, 1], [], []>} : vector<8x32xf32>, vector<32x16xf32>, vector<8x16xf32> -> vector<8x16xf32>
    %40 = vector.broadcast %5 : vector<1x16xf32> to vector<8x16xf32>
    %41 = arith.addf %39, %40 : vector<8x16xf32>
    %42 = arith.subf %0, %41 : vector<8x16xf32>
    %43 = arith.index_cast %c1_i32 : i32 to index
    %c0_26 = arith.constant 0 : index
    %c0_27 = arith.constant 0 : index
    %44 = vector.load %arg10[%43, %c0_26, %c0_27] : memref<10x8x16xf32, #tpu.memory_space<vmem>>, vector<1x8x16xf32>
    %45 = vector.shape_cast %44 : vector<1x8x16xf32> to vector<8x16xf32>
    %46 = vector.shape_cast %42 : vector<8x16xf32> to vector<1x8x16xf32>
    tpu.vector_store %arg10[%43, %c0_26, %c0_27], %46 {strides = array<i32>} : memref<10x8x16xf32, #tpu.memory_space<vmem>>, vector<1x8x16xf32>,
    %47 = vector.broadcast %cst_16 : f32 to vector<8x16xf32>
    %48 = arith.mulf %42, %47 : vector<8x16xf32>
    %cst_28 = arith.constant dense<0.000000e+00> : vector<8x32xf32>
    %49 = tpu.matmul %48, %1, %cst_28 {dimension_numbers = #tpu.dot_dimension_numbers<[1], [0], [0], [1], [0, 0, 1, 1], [], []>} : vector<8x16xf32>, vector<16x32xf32>, vector<8x32xf32> -> vector<8x32xf32>
    %50 = arith.addf %38, %49 : vector<8x32xf32>
    %51 = vector.broadcast %8 : vector<1x32xf32> to vector<8x32xf32>
    %52 = arith.addf %50, %51 : vector<8x32xf32>
    %cst_29 = arith.constant dense<0.000000e+00> : vector<8x32xf32>
    %53 = tpu.matmul %52, %3, %cst_29 {dimension_numbers = #tpu.dot_dimension_numbers<[1], [0], [0], [1], [0, 0, 1, 1], [], []>} : vector<8x32xf32>, vector<32x32xf32>, vector<8x32xf32> -> vector<8x32xf32>
    %54 = vector.broadcast %6 : vector<1x32xf32> to vector<8x32xf32>
    %55 = arith.addf %53, %54 : vector<8x32xf32>
    %cst_30 = arith.constant 0.000000e+00 : f32
    %56 = vector.broadcast %cst_30 : f32 to vector<8x32xf32>
    %57 = arith.maximumf %55, %56 : vector<8x32xf32>
    %58 = vector.broadcast %cst_17 : f32 to vector<8x32xf32>
    %59 = arith.mulf %58, %57 : vector<8x32xf32>
    %60 = arith.addf %52, %59 : vector<8x32xf32>
    %cst_31 = arith.constant 0.000000e+00 : f32
    %61 = vector.broadcast %cst_31 : f32 to vector<8x32xf32>
    %62 = arith.maximumf %60, %61 : vector<8x32xf32>
    %c2_i32 = arith.constant 2 : i32
    %cst_32 = arith.constant dense<0.000000e+00> : vector<8x16xf32>
    %63 = tpu.matmul %62, %2, %cst_32 {dimension_numbers = #tpu.dot_dimension_numbers<[1], [0], [0], [1], [0, 0, 1, 1], [], []>} : vector<8x32xf32>, vector<32x16xf32>, vector<8x16xf32> -> vector<8x16xf32>
    %64 = vector.broadcast %5 : vector<1x16xf32> to vector<8x16xf32>
    %65 = arith.addf %63, %64 : vector<8x16xf32>
    %66 = arith.subf %0, %65 : vector<8x16xf32>
    %67 = arith.index_cast %c2_i32 : i32 to index
    %c0_33 = arith.constant 0 : index
    %c0_34 = arith.constant 0 : index
    %68 = vector.load %arg10[%67, %c0_33, %c0_34] : memref<10x8x16xf32, #tpu.memory_space<vmem>>, vector<1x8x16xf32>
    %69 = vector.shape_cast %68 : vector<1x8x16xf32> to vector<8x16xf32>
    %70 = vector.shape_cast %66 : vector<8x16xf32> to vector<1x8x16xf32>
    tpu.vector_store %arg10[%67, %c0_33, %c0_34], %70 {strides = array<i32>} : memref<10x8x16xf32, #tpu.memory_space<vmem>>, vector<1x8x16xf32>,
    %71 = vector.broadcast %cst_16 : f32 to vector<8x16xf32>
    %72 = arith.mulf %66, %71 : vector<8x16xf32>
    %cst_35 = arith.constant dense<0.000000e+00> : vector<8x32xf32>
    %73 = tpu.matmul %72, %1, %cst_35 {dimension_numbers = #tpu.dot_dimension_numbers<[1], [0], [0], [1], [0, 0, 1, 1], [], []>} : vector<8x16xf32>, vector<16x32xf32>, vector<8x32xf32> -> vector<8x32xf32>
    %74 = arith.addf %62, %73 : vector<8x32xf32>
    %75 = vector.broadcast %8 : vector<1x32xf32> to vector<8x32xf32>
    %76 = arith.addf %74, %75 : vector<8x32xf32>
    %cst_36 = arith.constant dense<0.000000e+00> : vector<8x32xf32>
    %77 = tpu.matmul %76, %3, %cst_36 {dimension_numbers = #tpu.dot_dimension_numbers<[1], [0], [0], [1], [0, 0, 1, 1], [], []>} : vector<8x32xf32>, vector<32x32xf32>, vector<8x32xf32> -> vector<8x32xf32>
    %78 = vector.broadcast %6 : vector<1x32xf32> to vector<8x32xf32>
    %79 = arith.addf %77, %78 : vector<8x32xf32>
    %cst_37 = arith.constant 0.000000e+00 : f32
    %80 = vector.broadcast %cst_37 : f32 to vector<8x32xf32>
    %81 = arith.maximumf %79, %80 : vector<8x32xf32>
    %82 = vector.broadcast %cst_17 : f32 to vector<8x32xf32>
    %83 = arith.mulf %82, %81 : vector<8x32xf32>
    %84 = arith.addf %76, %83 : vector<8x32xf32>
    %cst_38 = arith.constant 0.000000e+00 : f32
    %85 = vector.broadcast %cst_38 : f32 to vector<8x32xf32>
    %86 = arith.maximumf %84, %85 : vector<8x32xf32>
    %c3_i32 = arith.constant 3 : i32
    %cst_39 = arith.constant dense<0.000000e+00> : vector<8x16xf32>
    %87 = tpu.matmul %86, %2, %cst_39 {dimension_numbers = #tpu.dot_dimension_numbers<[1], [0], [0], [1], [0, 0, 1, 1], [], []>} : vector<8x32xf32>, vector<32x16xf32>, vector<8x16xf32> -> vector<8x16xf32>
    %88 = vector.broadcast %5 : vector<1x16xf32> to vector<8x16xf32>
    %89 = arith.addf %87, %88 : vector<8x16xf32>
    %90 = arith.subf %0, %89 : vector<8x16xf32>
    %91 = arith.index_cast %c3_i32 : i32 to index
    %c0_40 = arith.constant 0 : index
    %c0_41 = arith.constant 0 : index
    %92 = vector.load %arg10[%91, %c0_40, %c0_41] : memref<10x8x16xf32, #tpu.memory_space<vmem>>, vector<1x8x16xf32>
    %93 = vector.shape_cast %92 : vector<1x8x16xf32> to vector<8x16xf32>
    %94 = vector.shape_cast %90 : vector<8x16xf32> to vector<1x8x16xf32>
    tpu.vector_store %arg10[%91, %c0_40, %c0_41], %94 {strides = array<i32>} : memref<10x8x16xf32, #tpu.memory_space<vmem>>, vector<1x8x16xf32>,
    %95 = vector.broadcast %cst_16 : f32 to vector<8x16xf32>
    %96 = arith.mulf %90, %95 : vector<8x16xf32>
    %cst_42 = arith.constant dense<0.000000e+00> : vector<8x32xf32>
    %97 = tpu.matmul %96, %1, %cst_42 {dimension_numbers = #tpu.dot_dimension_numbers<[1], [0], [0], [1], [0, 0, 1, 1], [], []>} : vector<8x16xf32>, vector<16x32xf32>, vector<8x32xf32> -> vector<8x32xf32>
    %98 = arith.addf %86, %97 : vector<8x32xf32>
    %99 = vector.broadcast %8 : vector<1x32xf32> to vector<8x32xf32>
    %100 = arith.addf %98, %99 : vector<8x32xf32>
    %cst_43 = arith.constant dense<0.000000e+00> : vector<8x32xf32>
    %101 = tpu.matmul %100, %3, %cst_43 {dimension_numbers = #tpu.dot_dimension_numbers<[1], [0], [0], [1], [0, 0, 1, 1], [], []>} : vector<8x32xf32>, vector<32x32xf32>, vector<8x32xf32> -> vector<8x32xf32>
    %102 = vector.broadcast %6 : vector<1x32xf32> to vector<8x32xf32>
    %103 = arith.addf %101, %102 : vector<8x32xf32>
    %cst_44 = arith.constant 0.000000e+00 : f32
    %104 = vector.broadcast %cst_44 : f32 to vector<8x32xf32>
    %105 = arith.maximumf %103, %104 : vector<8x32xf32>
    %106 = vector.broadcast %cst_17 : f32 to vector<8x32xf32>
    %107 = arith.mulf %106, %105 : vector<8x32xf32>
    %108 = arith.addf %100, %107 : vector<8x32xf32>
    %cst_45 = arith.constant 0.000000e+00 : f32
    %109 = vector.broadcast %cst_45 : f32 to vector<8x32xf32>
    %110 = arith.maximumf %108, %109 : vector<8x32xf32>
    %c4_i32 = arith.constant 4 : i32
    %cst_46 = arith.constant dense<0.000000e+00> : vector<8x16xf32>
    %111 = tpu.matmul %110, %2, %cst_46 {dimension_numbers = #tpu.dot_dimension_numbers<[1], [0], [0], [1], [0, 0, 1, 1], [], []>} : vector<8x32xf32>, vector<32x16xf32>, vector<8x16xf32> -> vector<8x16xf32>
    %112 = vector.broadcast %5 : vector<1x16xf32> to vector<8x16xf32>
    %113 = arith.addf %111, %112 : vector<8x16xf32>
    %114 = arith.subf %0, %113 : vector<8x16xf32>
    %115 = arith.index_cast %c4_i32 : i32 to index
    %c0_47 = arith.constant 0 : index
    %c0_48 = arith.constant 0 : index
    %116 = vector.load %arg10[%115, %c0_47, %c0_48] : memref<10x8x16xf32, #tpu.memory_space<vmem>>, vector<1x8x16xf32>
    %117 = vector.shape_cast %116 : vector<1x8x16xf32> to vector<8x16xf32>
    %118 = vector.shape_cast %114 : vector<8x16xf32> to vector<1x8x16xf32>
    tpu.vector_store %arg10[%115, %c0_47, %c0_48], %118 {strides = array<i32>} : memref<10x8x16xf32, #tpu.memory_space<vmem>>, vector<1x8x16xf32>,
    %119 = vector.broadcast %cst_16 : f32 to vector<8x16xf32>
    %120 = arith.mulf %114, %119 : vector<8x16xf32>
    %cst_49 = arith.constant dense<0.000000e+00> : vector<8x32xf32>
    %121 = tpu.matmul %120, %1, %cst_49 {dimension_numbers = #tpu.dot_dimension_numbers<[1], [0], [0], [1], [0, 0, 1, 1], [], []>} : vector<8x16xf32>, vector<16x32xf32>, vector<8x32xf32> -> vector<8x32xf32>
    %122 = arith.addf %110, %121 : vector<8x32xf32>
    %123 = vector.broadcast %8 : vector<1x32xf32> to vector<8x32xf32>
    %124 = arith.addf %122, %123 : vector<8x32xf32>
    %cst_50 = arith.constant dense<0.000000e+00> : vector<8x32xf32>
    %125 = tpu.matmul %124, %3, %cst_50 {dimension_numbers = #tpu.dot_dimension_numbers<[1], [0], [0], [1], [0, 0, 1, 1], [], []>} : vector<8x32xf32>, vector<32x32xf32>, vector<8x32xf32> -> vector<8x32xf32>
    %126 = vector.broadcast %6 : vector<1x32xf32> to vector<8x32xf32>
    %127 = arith.addf %125, %126 : vector<8x32xf32>
    %cst_51 = arith.constant 0.000000e+00 : f32
    %128 = vector.broadcast %cst_51 : f32 to vector<8x32xf32>
    %129 = arith.maximumf %127, %128 : vector<8x32xf32>
    %130 = vector.broadcast %cst_17 : f32 to vector<8x32xf32>
    %131 = arith.mulf %130, %129 : vector<8x32xf32>
    %132 = arith.addf %124, %131 : vector<8x32xf32>
    %cst_52 = arith.constant 0.000000e+00 : f32
    %133 = vector.broadcast %cst_52 : f32 to vector<8x32xf32>
    %134 = arith.maximumf %132, %133 : vector<8x32xf32>
    %c5_i32 = arith.constant 5 : i32
    %cst_53 = arith.constant dense<0.000000e+00> : vector<8x16xf32>
    %135 = tpu.matmul %134, %2, %cst_53 {dimension_numbers = #tpu.dot_dimension_numbers<[1], [0], [0], [1], [0, 0, 1, 1], [], []>} : vector<8x32xf32>, vector<32x16xf32>, vector<8x16xf32> -> vector<8x16xf32>
    %136 = vector.broadcast %5 : vector<1x16xf32> to vector<8x16xf32>
    %137 = arith.addf %135, %136 : vector<8x16xf32>
    %138 = arith.subf %0, %137 : vector<8x16xf32>
    %139 = arith.index_cast %c5_i32 : i32 to index
    %c0_54 = arith.constant 0 : index
    %c0_55 = arith.constant 0 : index
    %140 = vector.load %arg10[%139, %c0_54, %c0_55] : memref<10x8x16xf32, #tpu.memory_space<vmem>>, vector<1x8x16xf32>
    %141 = vector.shape_cast %140 : vector<1x8x16xf32> to vector<8x16xf32>
    %142 = vector.shape_cast %138 : vector<8x16xf32> to vector<1x8x16xf32>
    tpu.vector_store %arg10[%139, %c0_54, %c0_55], %142 {strides = array<i32>} : memref<10x8x16xf32, #tpu.memory_space<vmem>>, vector<1x8x16xf32>,
    %143 = vector.broadcast %cst_16 : f32 to vector<8x16xf32>
    %144 = arith.mulf %138, %143 : vector<8x16xf32>
    %cst_56 = arith.constant dense<0.000000e+00> : vector<8x32xf32>
    %145 = tpu.matmul %144, %1, %cst_56 {dimension_numbers = #tpu.dot_dimension_numbers<[1], [0], [0], [1], [0, 0, 1, 1], [], []>} : vector<8x16xf32>, vector<16x32xf32>, vector<8x32xf32> -> vector<8x32xf32>
    %146 = arith.addf %134, %145 : vector<8x32xf32>
    %147 = vector.broadcast %8 : vector<1x32xf32> to vector<8x32xf32>
    %148 = arith.addf %146, %147 : vector<8x32xf32>
    %cst_57 = arith.constant dense<0.000000e+00> : vector<8x32xf32>
    %149 = tpu.matmul %148, %3, %cst_57 {dimension_numbers = #tpu.dot_dimension_numbers<[1], [0], [0], [1], [0, 0, 1, 1], [], []>} : vector<8x32xf32>, vector<32x32xf32>, vector<8x32xf32> -> vector<8x32xf32>
    %150 = vector.broadcast %6 : vector<1x32xf32> to vector<8x32xf32>
    %151 = arith.addf %149, %150 : vector<8x32xf32>
    %cst_58 = arith.constant 0.000000e+00 : f32
    %152 = vector.broadcast %cst_58 : f32 to vector<8x32xf32>
    %153 = arith.maximumf %151, %152 : vector<8x32xf32>
    %154 = vector.broadcast %cst_17 : f32 to vector<8x32xf32>
    %155 = arith.mulf %154, %153 : vector<8x32xf32>
    %156 = arith.addf %148, %155 : vector<8x32xf32>
    %cst_59 = arith.constant 0.000000e+00 : f32
    %157 = vector.broadcast %cst_59 : f32 to vector<8x32xf32>
    %158 = arith.maximumf %156, %157 : vector<8x32xf32>
    %c6_i32 = arith.constant 6 : i32
    %cst_60 = arith.constant dense<0.000000e+00> : vector<8x16xf32>
    %159 = tpu.matmul %158, %2, %cst_60 {dimension_numbers = #tpu.dot_dimension_numbers<[1], [0], [0], [1], [0, 0, 1, 1], [], []>} : vector<8x32xf32>, vector<32x16xf32>, vector<8x16xf32> -> vector<8x16xf32>
    %160 = vector.broadcast %5 : vector<1x16xf32> to vector<8x16xf32>
    %161 = arith.addf %159, %160 : vector<8x16xf32>
    %162 = arith.subf %0, %161 : vector<8x16xf32>
    %163 = arith.index_cast %c6_i32 : i32 to index
    %c0_61 = arith.constant 0 : index
    %c0_62 = arith.constant 0 : index
    %164 = vector.load %arg10[%163, %c0_61, %c0_62] : memref<10x8x16xf32, #tpu.memory_space<vmem>>, vector<1x8x16xf32>
    %165 = vector.shape_cast %164 : vector<1x8x16xf32> to vector<8x16xf32>
    %166 = vector.shape_cast %162 : vector<8x16xf32> to vector<1x8x16xf32>
    tpu.vector_store %arg10[%163, %c0_61, %c0_62], %166 {strides = array<i32>} : memref<10x8x16xf32, #tpu.memory_space<vmem>>, vector<1x8x16xf32>,
    %167 = vector.broadcast %cst_16 : f32 to vector<8x16xf32>
    %168 = arith.mulf %162, %167 : vector<8x16xf32>
    %cst_63 = arith.constant dense<0.000000e+00> : vector<8x32xf32>
    %169 = tpu.matmul %168, %1, %cst_63 {dimension_numbers = #tpu.dot_dimension_numbers<[1], [0], [0], [1], [0, 0, 1, 1], [], []>} : vector<8x16xf32>, vector<16x32xf32>, vector<8x32xf32> -> vector<8x32xf32>
    %170 = arith.addf %158, %169 : vector<8x32xf32>
    %171 = vector.broadcast %8 : vector<1x32xf32> to vector<8x32xf32>
    %172 = arith.addf %170, %171 : vector<8x32xf32>
    %cst_64 = arith.constant dense<0.000000e+00> : vector<8x32xf32>
    %173 = tpu.matmul %172, %3, %cst_64 {dimension_numbers = #tpu.dot_dimension_numbers<[1], [0], [0], [1], [0, 0, 1, 1], [], []>} : vector<8x32xf32>, vector<32x32xf32>, vector<8x32xf32> -> vector<8x32xf32>
    %174 = vector.broadcast %6 : vector<1x32xf32> to vector<8x32xf32>
    %175 = arith.addf %173, %174 : vector<8x32xf32>
    %cst_65 = arith.constant 0.000000e+00 : f32
    %176 = vector.broadcast %cst_65 : f32 to vector<8x32xf32>
    %177 = arith.maximumf %175, %176 : vector<8x32xf32>
    %178 = vector.broadcast %cst_17 : f32 to vector<8x32xf32>
    %179 = arith.mulf %178, %177 : vector<8x32xf32>
    %180 = arith.addf %172, %179 : vector<8x32xf32>
    %cst_66 = arith.constant 0.000000e+00 : f32
    %181 = vector.broadcast %cst_66 : f32 to vector<8x32xf32>
    %182 = arith.maximumf %180, %181 : vector<8x32xf32>
    %c7_i32 = arith.constant 7 : i32
    %cst_67 = arith.constant dense<0.000000e+00> : vector<8x16xf32>
    %183 = tpu.matmul %182, %2, %cst_67 {dimension_numbers = #tpu.dot_dimension_numbers<[1], [0], [0], [1], [0, 0, 1, 1], [], []>} : vector<8x32xf32>, vector<32x16xf32>, vector<8x16xf32> -> vector<8x16xf32>
    %184 = vector.broadcast %5 : vector<1x16xf32> to vector<8x16xf32>
    %185 = arith.addf %183, %184 : vector<8x16xf32>
    %186 = arith.subf %0, %185 : vector<8x16xf32>
    %187 = arith.index_cast %c7_i32 : i32 to index
    %c0_68 = arith.constant 0 : index
    %c0_69 = arith.constant 0 : index
    %188 = vector.load %arg10[%187, %c0_68, %c0_69] : memref<10x8x16xf32, #tpu.memory_space<vmem>>, vector<1x8x16xf32>
    %189 = vector.shape_cast %188 : vector<1x8x16xf32> to vector<8x16xf32>
    %190 = vector.shape_cast %186 : vector<8x16xf32> to vector<1x8x16xf32>
    tpu.vector_store %arg10[%187, %c0_68, %c0_69], %190 {strides = array<i32>} : memref<10x8x16xf32, #tpu.memory_space<vmem>>, vector<1x8x16xf32>,
    %191 = vector.broadcast %cst_16 : f32 to vector<8x16xf32>
    %192 = arith.mulf %186, %191 : vector<8x16xf32>
    %cst_70 = arith.constant dense<0.000000e+00> : vector<8x32xf32>
    %193 = tpu.matmul %192, %1, %cst_70 {dimension_numbers = #tpu.dot_dimension_numbers<[1], [0], [0], [1], [0, 0, 1, 1], [], []>} : vector<8x16xf32>, vector<16x32xf32>, vector<8x32xf32> -> vector<8x32xf32>
    %194 = arith.addf %182, %193 : vector<8x32xf32>
    %195 = vector.broadcast %8 : vector<1x32xf32> to vector<8x32xf32>
    %196 = arith.addf %194, %195 : vector<8x32xf32>
    %cst_71 = arith.constant dense<0.000000e+00> : vector<8x32xf32>
    %197 = tpu.matmul %196, %3, %cst_71 {dimension_numbers = #tpu.dot_dimension_numbers<[1], [0], [0], [1], [0, 0, 1, 1], [], []>} : vector<8x32xf32>, vector<32x32xf32>, vector<8x32xf32> -> vector<8x32xf32>
    %198 = vector.broadcast %6 : vector<1x32xf32> to vector<8x32xf32>
    %199 = arith.addf %197, %198 : vector<8x32xf32>
    %cst_72 = arith.constant 0.000000e+00 : f32
    %200 = vector.broadcast %cst_72 : f32 to vector<8x32xf32>
    %201 = arith.maximumf %199, %200 : vector<8x32xf32>
    %202 = vector.broadcast %cst_17 : f32 to vector<8x32xf32>
    %203 = arith.mulf %202, %201 : vector<8x32xf32>
    %204 = arith.addf %196, %203 : vector<8x32xf32>
    %cst_73 = arith.constant 0.000000e+00 : f32
    %205 = vector.broadcast %cst_73 : f32 to vector<8x32xf32>
    %206 = arith.maximumf %204, %205 : vector<8x32xf32>
    %c8_i32 = arith.constant 8 : i32
    %cst_74 = arith.constant dense<0.000000e+00> : vector<8x16xf32>
    %207 = tpu.matmul %206, %2, %cst_74 {dimension_numbers = #tpu.dot_dimension_numbers<[1], [0], [0], [1], [0, 0, 1, 1], [], []>} : vector<8x32xf32>, vector<32x16xf32>, vector<8x16xf32> -> vector<8x16xf32>
    %208 = vector.broadcast %5 : vector<1x16xf32> to vector<8x16xf32>
    %209 = arith.addf %207, %208 : vector<8x16xf32>
    %210 = arith.subf %0, %209 : vector<8x16xf32>
    %211 = arith.index_cast %c8_i32 : i32 to index
    %c0_75 = arith.constant 0 : index
    %c0_76 = arith.constant 0 : index
    %212 = vector.load %arg10[%211, %c0_75, %c0_76] : memref<10x8x16xf32, #tpu.memory_space<vmem>>, vector<1x8x16xf32>
    %213 = vector.shape_cast %212 : vector<1x8x16xf32> to vector<8x16xf32>
    %214 = vector.shape_cast %210 : vector<8x16xf32> to vector<1x8x16xf32>
    tpu.vector_store %arg10[%211, %c0_75, %c0_76], %214 {strides = array<i32>} : memref<10x8x16xf32, #tpu.memory_space<vmem>>, vector<1x8x16xf32>,
    %215 = vector.broadcast %cst_16 : f32 to vector<8x16xf32>
    %216 = arith.mulf %210, %215 : vector<8x16xf32>
    %cst_77 = arith.constant dense<0.000000e+00> : vector<8x32xf32>
    %217 = tpu.matmul %216, %1, %cst_77 {dimension_numbers = #tpu.dot_dimension_numbers<[1], [0], [0], [1], [0, 0, 1, 1], [], []>} : vector<8x16xf32>, vector<16x32xf32>, vector<8x32xf32> -> vector<8x32xf32>
    %218 = arith.addf %206, %217 : vector<8x32xf32>
    %219 = vector.broadcast %8 : vector<1x32xf32> to vector<8x32xf32>
    %220 = arith.addf %218, %219 : vector<8x32xf32>
    %cst_78 = arith.constant dense<0.000000e+00> : vector<8x32xf32>
    %221 = tpu.matmul %220, %3, %cst_78 {dimension_numbers = #tpu.dot_dimension_numbers<[1], [0], [0], [1], [0, 0, 1, 1], [], []>} : vector<8x32xf32>, vector<32x32xf32>, vector<8x32xf32> -> vector<8x32xf32>
    %222 = vector.broadcast %6 : vector<1x32xf32> to vector<8x32xf32>
    %223 = arith.addf %221, %222 : vector<8x32xf32>
    %cst_79 = arith.constant 0.000000e+00 : f32
    %224 = vector.broadcast %cst_79 : f32 to vector<8x32xf32>
    %225 = arith.maximumf %223, %224 : vector<8x32xf32>
    %226 = vector.broadcast %cst_17 : f32 to vector<8x32xf32>
    %227 = arith.mulf %226, %225 : vector<8x32xf32>
    %228 = arith.addf %220, %227 : vector<8x32xf32>
    %cst_80 = arith.constant 0.000000e+00 : f32
    %229 = vector.broadcast %cst_80 : f32 to vector<8x32xf32>
    %230 = arith.maximumf %228, %229 : vector<8x32xf32>
    %c9_i32 = arith.constant 9 : i32
    %cst_81 = arith.constant dense<0.000000e+00> : vector<8x16xf32>
    %231 = tpu.matmul %230, %2, %cst_81 {dimension_numbers = #tpu.dot_dimension_numbers<[1], [0], [0], [1], [0, 0, 1, 1], [], []>} : vector<8x32xf32>, vector<32x16xf32>, vector<8x16xf32> -> vector<8x16xf32>
    %232 = vector.broadcast %5 : vector<1x16xf32> to vector<8x16xf32>
    %233 = arith.addf %231, %232 : vector<8x16xf32>
    %234 = arith.subf %0, %233 : vector<8x16xf32>
    %235 = arith.index_cast %c9_i32 : i32 to index
    %c0_82 = arith.constant 0 : index
    %c0_83 = arith.constant 0 : index
    %236 = vector.load %arg10[%235, %c0_82, %c0_83] : memref<10x8x16xf32, #tpu.memory_space<vmem>>, vector<1x8x16xf32>
    %237 = vector.shape_cast %236 : vector<1x8x16xf32> to vector<8x16xf32>
    %238 = vector.shape_cast %234 : vector<8x16xf32> to vector<1x8x16xf32>
    tpu.vector_store %arg10[%235, %c0_82, %c0_83], %238 {strides = array<i32>} : memref<10x8x16xf32, #tpu.memory_space<vmem>>, vector<1x8x16xf32>,
    %239 = vector.broadcast %cst_16 : f32 to vector<8x16xf32>
    %240 = arith.mulf %234, %239 : vector<8x16xf32>
    %cst_84 = arith.constant dense<0.000000e+00> : vector<8x32xf32>
    %241 = tpu.matmul %240, %1, %cst_84 {dimension_numbers = #tpu.dot_dimension_numbers<[1], [0], [0], [1], [0, 0, 1, 1], [], []>} : vector<8x16xf32>, vector<16x32xf32>, vector<8x32xf32> -> vector<8x32xf32>
    %242 = arith.addf %230, %241 : vector<8x32xf32>
    %243 = vector.broadcast %8 : vector<1x32xf32> to vector<8x32xf32>
    %244 = arith.addf %242, %243 : vector<8x32xf32>
    %cst_85 = arith.constant dense<0.000000e+00> : vector<8x32xf32>
    %245 = tpu.matmul %244, %3, %cst_85 {dimension_numbers = #tpu.dot_dimension_numbers<[1], [0], [0], [1], [0, 0, 1, 1], [], []>} : vector<8x32xf32>, vector<32x32xf32>, vector<8x32xf32> -> vector<8x32xf32>
    %246 = vector.broadcast %6 : vector<1x32xf32> to vector<8x32xf32>
    %247 = arith.addf %245, %246 : vector<8x32xf32>
    %cst_86 = arith.constant 0.000000e+00 : f32
    %248 = vector.broadcast %cst_86 : f32 to vector<8x32xf32>
    %249 = arith.maximumf %247, %248 : vector<8x32xf32>
    %250 = vector.broadcast %cst_17 : f32 to vector<8x32xf32>
    %251 = arith.mulf %250, %249 : vector<8x32xf32>
    %252 = arith.addf %244, %251 : vector<8x32xf32>
    %cst_87 = arith.constant 0.000000e+00 : f32
    %253 = vector.broadcast %cst_87 : f32 to vector<8x32xf32>
    %254 = arith.maximumf %252, %253 : vector<8x32xf32>
    %c10_i32 = arith.constant 10 : i32
    %c0_88 = arith.constant 0 : index
    %c0_89 = arith.constant 0 : index
    %255 = vector.load %arg8[%c0_88, %c0_89] : memref<8x32xf32, #tpu.memory_space<vmem>>, vector<8x32xf32>
    tpu.vector_store %arg8[%c0_88, %c0_89], %254 {strides = array<i32>} : memref<8x32xf32, #tpu.memory_space<vmem>>, vector<8x32xf32>,
    %c0_90 = arith.constant 0 : index
    %c0_91 = arith.constant 0 : index
    %256 = vector.load %arg9[%c0_90, %c0_91] : memref<8x16xf32, #tpu.memory_space<vmem>>, vector<8x16xf32>
    tpu.vector_store %arg9[%c0_90, %c0_91], %233 {strides = array<i32>} : memref<8x16xf32, #tpu.memory_space<vmem>>, vector<8x16xf32>,
    return
  }
  func.func @transform_0(%arg0: i32) -> (i32, i32) {
    %c0_i32 = arith.constant 0 : i32
    %c0_i32_0 = arith.constant 0 : i32
    return %arg0, %c0_i32 : i32, i32
  }
  func.func @transform_1(%arg0: i32) -> (i32, i32) {
    %c0_i32 = arith.constant 0 : i32
    %c0_i32_0 = arith.constant 0 : i32
    %c0_i32_1 = arith.constant 0 : i32
    return %c0_i32, %c0_i32_0 : i32, i32
  }
  func.func @transform_2(%arg0: i32) -> (i32, i32) {
    %c0_i32 = arith.constant 0 : i32
    %c0_i32_0 = arith.constant 0 : i32
    %c0_i32_1 = arith.constant 0 : i32
    return %c0_i32, %c0_i32_0 : i32, i32
  }
  func.func @transform_3(%arg0: i32) -> (i32, i32) {
    %c0_i32 = arith.constant 0 : i32
    %c0_i32_0 = arith.constant 0 : i32
    %c0_i32_1 = arith.constant 0 : i32
    return %c0_i32, %c0_i32_0 : i32, i32
  }
  func.func @transform_4(%arg0: i32) -> (i32, i32) {
    %c0_i32 = arith.constant 0 : i32
    %c0_i32_0 = arith.constant 0 : i32
    %c0_i32_1 = arith.constant 0 : i32
    return %c0_i32, %c0_i32_0 : i32, i32
  }
  func.func @transform_5(%arg0: i32) -> (i32, i32) {
    %c0_i32 = arith.constant 0 : i32
    %c0_i32_0 = arith.constant 0 : i32
    %c0_i32_1 = arith.constant 0 : i32
    return %c0_i32, %c0_i32_0 : i32, i32
  }
  func.func @transform_6(%arg0: i32) -> (i32, i32) {
    %c0_i32 = arith.constant 0 : i32
    %c0_i32_0 = arith.constant 0 : i32
    %c0_i32_1 = arith.constant 0 : i32
    return %c0_i32, %c0_i32_0 : i32, i32
  }
  func.func @transform_7(%arg0: i32) -> (i32, i32) {
    %c0_i32 = arith.constant 0 : i32
    %c0_i32_0 = arith.constant 0 : i32
    return %arg0, %c0_i32 : i32, i32
  }
  func.func @transform_8(%arg0: i32) -> (i32, i32) {
    %c0_i32 = arith.constant 0 : i32
    %c0_i32_0 = arith.constant 0 : i32
    return %arg0, %c0_i32 : i32, i32
  }
  func.func @transform_9(%arg0: i32) -> (i32, i32, i32) {
    %c0_i32 = arith.constant 0 : i32
    %c0_i32_0 = arith.constant 0 : i32
    %c0_i32_1 = arith.constant 0 : i32
    return %c0_i32, %arg0, %c0_i32_0 : i32, i32, i32
  }
}

module attributes {stable_mosaic.version = 11 : i64} {
  func.func @_pc_layer_kernel(%arg0: i32, %arg1: memref<8x16xf32, #tpu.memory_space<vmem>>, %arg2: memref<16x32xf32, #tpu.memory_space<vmem>>, %arg3: memref<1x32xf32, #tpu.memory_space<vmem>>, %arg4: memref<32x16xf32, #tpu.memory_space<vmem>>, %arg5: memref<1x16xf32, #tpu.memory_space<vmem>>, %arg6: memref<32x32xf32, #tpu.memory_space<vmem>>, %arg7: memref<1x32xf32, #tpu.memory_space<vmem>>, %arg8: memref<8x32xf32, #tpu.memory_space<vmem>>, %arg9: memref<8x16xf32, #tpu.memory_space<vmem>>, %arg10: memref<10x8x16xf32, #tpu.memory_space<vmem>>) attributes {dimension_semantics = [#tpu.dimension_semantics<parallel>], iteration_bounds = array<i64: 3>, scalar_prefetch = 0 : i64, scratch_operands = 0 : i64, tpu.core_type = #tpu.core_type<tc>, window_params = [{transform_indices = @transform_0, window_bounds = array<i64: 8, 16>}, {pipeline_mode = #tpu.pipeline_mode<synchronous>, transform_indices = @transform_1, window_bounds = array<i64: 16, 32>}, {pipeline_mode = #tpu.pipeline_mode<synchronous>, transform_indices = @transform_2, window_bounds = array<i64: 1, 32>}, {pipeline_mode = #tpu.pipeline_mode<synchronous>, transform_indices = @transform_3, window_bounds = array<i64: 32, 16>}, {pipeline_mode = #tpu.pipeline_mode<synchronous>, transform_indices = @transform_4, window_bounds = array<i64: 1, 16>}, {pipeline_mode = #tpu.pipeline_mode<synchronous>, transform_indices = @transform_5, window_bounds = array<i64: 32, 32>}, {pipeline_mode = #tpu.pipeline_mode<synchronous>, transform_indices = @transform_6, window_bounds = array<i64: 1, 32>}, {transform_indices = @transform_7, window_bounds = array<i64: 8, 32>}, {transform_indices = @transform_8, window_bounds = array<i64: 8, 16>}, {transform_indices = @transform_9, window_bounds = array<i64: 10, 8, 16>}]} {
    %c0 = arith.constant 0 : index
    %c0_0 = arith.constant 0 : index
    %0 = vector.load %arg1[%c0, %c0_0] : memref<8x16xf32, #tpu.memory_space<vmem>>, vector<8x16xf32>
    %c0_1 = arith.constant 0 : index
    %c0_2 = arith.constant 0 : index
    %1 = vector.load %arg2[%c0_1, %c0_2] : memref<16x32xf32, #tpu.memory_space<vmem>>, vector<16x32xf32>
    %c0_3 = arith.constant 0 : index
    %c0_4 = arith.constant 0 : index
    %2 = vector.load %arg4[%c0_3, %c0_4] : memref<32x16xf32, #tpu.memory_space<vmem>>, vector<32x16xf32>
    %c0_5 = arith.constant 0 : index
    %c0_6 = arith.constant 0 : index
    %3 = vector.load %arg6[%c0_5, %c0_6] : memref<32x32xf32, #tpu.memory_space<vmem>>, vector<32x32xf32>
    %c0_7 = arith.constant 0 : index
    %c0_8 = arith.constant 0 : index
    %4 = vector.load %arg3[%c0_7, %c0_8] : memref<1x32xf32, #tpu.memory_space<vmem>>, vector<1x32xf32>
    %c0_9 = arith.constant 0 : index
    %c0_10 = arith.constant 0 : index
    %5 = vector.load %arg5[%c0_9, %c0_10] : memref<1x16xf32, #tpu.memory_space<vmem>>, vector<1x16xf32>
    %c0_11 = arith.constant 0 : index
    %c0_12 = arith.constant 0 : index
    %6 = vector.load %arg7[%c0_11, %c0_12] : memref<1x32xf32, #tpu.memory_space<vmem>>, vector<1x32xf32>
    %cst = arith.constant 1.000000e-01 : f32
    %7 = vector.broadcast %cst : f32 to vector<1x32xf32>
    %8 = arith.mulf %7, %4 : vector<1x32xf32>
    %cst_13 = arith.constant dense<0.000000e+00> : vector<8x32xf32>
    %9 = tpu.matmul %0, %1, %cst_13 {dimension_numbers = #tpu.dot_dimension_numbers<[1], [0], [0], [1], [0, 0, 1, 1], [], []>} : vector<8x16xf32>, vector<16x32xf32>, vector<8x32xf32> -> vector<8x32xf32>
    %10 = vector.broadcast %4 : vector<1x32xf32> to vector<8x32xf32>
    %11 = arith.addf %9, %10 : vector<8x32xf32>
    %cst_14 = arith.constant 0.000000e+00 : f32
    %12 = vector.broadcast %cst_14 : f32 to vector<8x32xf32>
    %13 = arith.maximumf %11, %12 : vector<8x32xf32>
    %cst_15 = arith.constant 0.000000e+00 : f32
    %14 = vector.broadcast %cst_15 : f32 to vector<8x16xf32>
    %cst_16 = arith.constant 1.000000e-01 : f32
    %cst_17 = arith.constant 1.000000e-01 : f32
    %c0_i32 = arith.constant 0 : i32
    %cst_18 = arith.constant dense<0.000000e+00> : vector<8x16xf32>
    %15 = tpu.matmul %13, %2, %cst_18 {dimension_numbers = #tpu.dot_dimension_numbers<[1], [0], [0], [1], [0, 0, 1, 1], [], []>} : vector<8x32xf32>, vector<32x16xf32>, vector<8x16xf32> -> vector<8x16xf32>
    %16 = vector.broadcast %5 : vector<1x16xf32> to vector<8x16xf32>
    %17 = arith.addf %15, %16 : vector<8x16xf32>
    %18 = arith.subf %0, %17 : vector<8x16xf32>
    %19 = arith.index_cast %c0_i32 : i32 to index
    %c0_19 = arith.constant 0 : index
    %c0_20 = arith.constant 0 : index
    %20 = vector.load %arg10[%19, %c0_19, %c0_20] : memref<10x8x16xf32, #tpu.memory_space<vmem>>, vector<1x8x16xf32>
    %21 = vector.shape_cast %20 : vector<1x8x16xf32> to vector<8x16xf32>
    %22 = vector.shape_cast %18 : vector<8x16xf32> to vector<1x8x16xf32>
    tpu.vector_store %arg10[%19, %c0_19, %c0_20], %22 {strides = array<i32>} : memref<10x8x16xf32, #tpu.memory_space<vmem>>, vector<1x8x16xf32>,
    %23 = vector.broadcast %cst_16 : f32 to vector<8x16xf32>
    %24 = arith.mulf %18, %23 : vector<8x16xf32>
    %cst_21 = arith.constant dense<0.000000e+00> : vector<8x32xf32>
    %25 = tpu.matmul %24, %1, %cst_21 {dimension_numbers = #tpu.dot_dimension_numbers<[1], [0], [0], [1], [0, 0, 1, 1], [], []>} : vector<8x16xf32>, vector<16x32xf32>, vector<8x32xf32> -> vector<8x32xf32>
    %26 = arith.addf %13, %25 : vector<8x32xf32>
    %27 = vector.broadcast %8 : vector<1x32xf32> to vector<8x32xf32>
    %28 = arith.addf %26, %27 : vector<8x32xf32>
    %cst_22 = arith.constant dense<0.000000e+00> : vector<8x32xf32>
    %29 = tpu.matmul %28, %3, %cst_22 {dimension_numbers = #tpu.dot_dimension_numbers<[1], [0], [0], [1], [0, 0, 1, 1], [], []>} : vector<8x32xf32>, vector<32x32xf32>, vector<8x32xf32> -> vector<8x32xf32>
    %30 = vector.broadcast %6 : vector<1x32xf32> to vector<8x32xf32>
    %31 = arith.addf %29, %30 : vector<8x32xf32>
    %cst_23 = arith.constant 0.000000e+00 : f32
    %32 = vector.broadcast %cst_23 : f32 to vector<8x32xf32>
    %33 = arith.maximumf %31, %32 : vector<8x32xf32>
    %34 = vector.broadcast %cst_17 : f32 to vector<8x32xf32>
    %35 = arith.mulf %34, %33 : vector<8x32xf32>
    %36 = arith.addf %28, %35 : vector<8x32xf32>
    %cst_24 = arith.constant 0.000000e+00 : f32
    %37 = vector.broadcast %cst_24 : f32 to vector<8x32xf32>
    %38 = arith.maximumf %36, %37 : vector<8x32xf32>
    %c1_i32 = arith.constant 1 : i32
    %cst_25 = arith.constant dense<0.000000e+00> : vector<8x16xf32>
    %39 = tpu.matmul %38, %2, %cst_25 {dimension_numbers = #tpu.dot_dimension_numbers<[1], [0], [0], [1], [0, 0, 1, 1], [], []>} : vector<8x32xf32>, vector<32x16xf32>, vector<8x16xf32> -> vector<8x16xf32>
    %40 = vector.broadcast %5 : vector<1x16xf32> to vector<8x16xf32>
    %41 = arith.addf %39, %40 : vector<8x16xf32>
    %42 = arith.subf %0, %41 : vector<8x16xf32>
    %43 = arith.index_cast %c1_i32 : i32 to index
    %c0_26 = arith.constant 0 : index
    %c0_27 = arith.constant 0 : index
    %44 = vector.load %arg10[%43, %c0_26, %c0_27] : memref<10x8x16xf32, #tpu.memory_space<vmem>>, vector<1x8x16xf32>
    %45 = vector.shape_cast %44 : vector<1x8x16xf32> to vector<8x16xf32>
    %46 = vector.shape_cast %42 : vector<8x16xf32> to vector<1x8x16xf32>
    tpu.vector_store %arg10[%43, %c0_26, %c0_27], %46 {strides = array<i32>} : memref<10x8x16xf32, #tpu.memory_space<vmem>>, vector<1x8x16xf32>,
    %47 = vector.broadcast %cst_16 : f32 to vector<8x16xf32>
    %48 = arith.mulf %42, %47 : vector<8x16xf32>
    %cst_28 = arith.constant dense<0.000000e+00> : vector<8x32xf32>
    %49 = tpu.matmul %48, %1, %cst_28 {dimension_numbers = #tpu.dot_dimension_numbers<[1], [0], [0], [1], [0, 0, 1, 1], [], []>} : vector<8x16xf32>, vector<16x32xf32>, vector<8x32xf32> -> vector<8x32xf32>
    %50 = arith.addf %38, %49 : vector<8x32xf32>
    %51 = vector.broadcast %8 : vector<1x32xf32> to vector<8x32xf32>
    %52 = arith.addf %50, %51 : vector<8x32xf32>
    %cst_29 = arith.constant dense<0.000000e+00> : vector<8x32xf32>
    %53 = tpu.matmul %52, %3, %cst_29 {dimension_numbers = #tpu.dot_dimension_numbers<[1], [0], [0], [1], [0, 0, 1, 1], [], []>} : vector<8x32xf32>, vector<32x32xf32>, vector<8x32xf32> -> vector<8x32xf32>
    %54 = vector.broadcast %6 : vector<1x32xf32> to vector<8x32xf32>
    %55 = arith.addf %53, %54 : vector<8x32xf32>
    %cst_30 = arith.constant 0.000000e+00 : f32
    %56 = vector.broadcast %cst_30 : f32 to vector<8x32xf32>
    %57 = arith.maximumf %55, %56 : vector<8x32xf32>
    %58 = vector.broadcast %cst_17 : f32 to vector<8x32xf32>
    %59 = arith.mulf %58, %57 : vector<8x32xf32>
    %60 = arith.addf %52, %59 : vector<8x32xf32>
    %cst_31 = arith.constant 0.000000e+00 : f32
    %61 = vector.broadcast %cst_31 : f32 to vector<8x32xf32>
    %62 = arith.maximumf %60, %61 : vector<8x32xf32>
    %c2_i32 = arith.constant 2 : i32
    %cst_32 = arith.constant dense<0.000000e+00> : vector<8x16xf32>
    %63 = tpu.matmul %62, %2, %cst_32 {dimension_numbers = #tpu.dot_dimension_numbers<[1], [0], [0], [1], [0, 0, 1, 1], [], []>} : vector<8x32xf32>, vector<32x16xf32>, vector<8x16xf32> -> vector<8x16xf32>
    %64 = vector.broadcast %5 : vector<1x16xf32> to vector<8x16xf32>
    %65 = arith.addf %63, %64 : vector<8x16xf32>
    %66 = arith.subf %0, %65 : vector<8x16xf32>
    %67 = arith.index_cast %c2_i32 : i32 to index
    %c0_33 = arith.constant 0 : index
    %c0_34 = arith.constant 0 : index
    %68 = vector.load %arg10[%67, %c0_33, %c0_34] : memref<10x8x16xf32, #tpu.memory_space<vmem>>, vector<1x8x16xf32>
    %69 = vector.shape_cast %68 : vector<1x8x16xf32> to vector<8x16xf32>
    %70 = vector.shape_cast %66 : vector<8x16xf32> to vector<1x8x16xf32>
    tpu.vector_store %arg10[%67, %c0_33, %c0_34], %70 {strides = array<i32>} : memref<10x8x16xf32, #tpu.memory_space<vmem>>, vector<1x8x16xf32>,
    %71 = vector.broadcast %cst_16 : f32 to vector<8x16xf32>
    %72 = arith.mulf %66, %71 : vector<8x16xf32>
    %cst_35 = arith.constant dense<0.000000e+00> : vector<8x32xf32>
    %73 = tpu.matmul %72, %1, %cst_35 {dimension_numbers = #tpu.dot_dimension_numbers<[1], [0], [0], [1], [0, 0, 1, 1], [], []>} : vector<8x16xf32>, vector<16x32xf32>, vector<8x32xf32> -> vector<8x32xf32>
    %74 = arith.addf %62, %73 : vector<8x32xf32>
    %75 = vector.broadcast %8 : vector<1x32xf32> to vector<8x32xf32>
    %76 = arith.addf %74, %75 : vector<8x32xf32>
    %cst_36 = arith.constant dense<0.000000e+00> : vector<8x32xf32>
    %77 = tpu.matmul %76, %3, %cst_36 {dimension_numbers = #tpu.dot_dimension_numbers<[1], [0], [0], [1], [0, 0, 1, 1], [], []>} : vector<8x32xf32>, vector<32x32xf32>, vector<8x32xf32> -> vector<8x32xf32>
    %78 = vector.broadcast %6 : vector<1x32xf32> to vector<8x32xf32>
    %79 = arith.addf %77, %78 : vector<8x32xf32>
    %cst_37 = arith.constant 0.000000e+00 : f32
    %80 = vector.broadcast %cst_37 : f32 to vector<8x32xf32>
    %81 = arith.maximumf %79, %80 : vector<8x32xf32>
    %82 = vector.broadcast %cst_17 : f32 to vector<8x32xf32>
    %83 = arith.mulf %82, %81 : vector<8x32xf32>
    %84 = arith.addf %76, %83 : vector<8x32xf32>
    %cst_38 = arith.constant 0.000000e+00 : f32
    %85 = vector.broadcast %cst_38 : f32 to vector<8x32xf32>
    %86 = arith.maximumf %84, %85 : vector<8x32xf32>
    %c3_i32 = arith.constant 3 : i32
    %cst_39 = arith.constant dense<0.000000e+00> : vector<8x16xf32>
    %87 = tpu.matmul %86, %2, %cst_39 {dimension_numbers = #tpu.dot_dimension_numbers<[1], [0], [0], [1], [0, 0, 1, 1], [], []>} : vector<8x32xf32>, vector<32x16xf32>, vector<8x16xf32> -> vector<8x16xf32>
    %88 = vector.broadcast %5 : vector<1x16xf32> to vector<8x16xf32>
    %89 = arith.addf %87, %88 : vector<8x16xf32>
    %90 = arith.subf %0, %89 : vector<8x16xf32>
    %91 = arith.index_cast %c3_i32 : i32 to index
    %c0_40 = arith.constant 0 : index
    %c0_41 = arith.constant 0 : index
    %92 = vector.load %arg10[%91, %c0_40, %c0_41] : memref<10x8x16xf32, #tpu.memory_space<vmem>>, vector<1x8x16xf32>
    %93 = vector.shape_cast %92 : vector<1x8x16xf32> to vector<8x16xf32>
    %94 = vector.shape_cast %90 : vector<8x16xf32> to vector<1x8x16xf32>
    tpu.vector_store %arg10[%91, %c0_40, %c0_41], %94 {strides = array<i32>} : memref<10x8x16xf32, #tpu.memory_space<vmem>>, vector<1x8x16xf32>,
    %95 = vector.broadcast %cst_16 : f32 to vector<8x16xf32>
    %96 = arith.mulf %90, %95 : vector<8x16xf32>
    %cst_42 = arith.constant dense<0.000000e+00> : vector<8x32xf32>
    %97 = tpu.matmul %96, %1, %cst_42 {dimension_numbers = #tpu.dot_dimension_numbers<[1], [0], [0], [1], [0, 0, 1, 1], [], []>} : vector<8x16xf32>, vector<16x32xf32>, vector<8x32xf32> -> vector<8x32xf32>
    %98 = arith.addf %86, %97 : vector<8x32xf32>
    %99 = vector.broadcast %8 : vector<1x32xf32> to vector<8x32xf32>
    %100 = arith.addf %98, %99 : vector<8x32xf32>
    %cst_43 = arith.constant dense<0.000000e+00> : vector<8x32xf32>
    %101 = tpu.matmul %100, %3, %cst_43 {dimension_numbers = #tpu.dot_dimension_numbers<[1], [0], [0], [1], [0, 0, 1, 1], [], []>} : vector<8x32xf32>, vector<32x32xf32>, vector<8x32xf32> -> vector<8x32xf32>
    %102 = vector.broadcast %6 : vector<1x32xf32> to vector<8x32xf32>
    %103 = arith.addf %101, %102 : vector<8x32xf32>
    %cst_44 = arith.constant 0.000000e+00 : f32
    %104 = vector.broadcast %cst_44 : f32 to vector<8x32xf32>
    %105 = arith.maximumf %103, %104 : vector<8x32xf32>
    %106 = vector.broadcast %cst_17 : f32 to vector<8x32xf32>
    %107 = arith.mulf %106, %105 : vector<8x32xf32>
    %108 = arith.addf %100, %107 : vector<8x32xf32>
    %cst_45 = arith.constant 0.000000e+00 : f32
    %109 = vector.broadcast %cst_45 : f32 to vector<8x32xf32>
    %110 = arith.maximumf %108, %109 : vector<8x32xf32>
    %c4_i32 = arith.constant 4 : i32
    %cst_46 = arith.constant dense<0.000000e+00> : vector<8x16xf32>
    %111 = tpu.matmul %110, %2, %cst_46 {dimension_numbers = #tpu.dot_dimension_numbers<[1], [0], [0], [1], [0, 0, 1, 1], [], []>} : vector<8x32xf32>, vector<32x16xf32>, vector<8x16xf32> -> vector<8x16xf32>
    %112 = vector.broadcast %5 : vector<1x16xf32> to vector<8x16xf32>
    %113 = arith.addf %111, %112 : vector<8x16xf32>
    %114 = arith.subf %0, %113 : vector<8x16xf32>
    %115 = arith.index_cast %c4_i32 : i32 to index
    %c0_47 = arith.constant 0 : index
    %c0_48 = arith.constant 0 : index
    %116 = vector.load %arg10[%115, %c0_47, %c0_48] : memref<10x8x16xf32, #tpu.memory_space<vmem>>, vector<1x8x16xf32>
    %117 = vector.shape_cast %116 : vector<1x8x16xf32> to vector<8x16xf32>
    %118 = vector.shape_cast %114 : vector<8x16xf32> to vector<1x8x16xf32>
    tpu.vector_store %arg10[%115, %c0_47, %c0_48], %118 {strides = array<i32>} : memref<10x8x16xf32, #tpu.memory_space<vmem>>, vector<1x8x16xf32>,
    %119 = vector.broadcast %cst_16 : f32 to vector<8x16xf32>
    %120 = arith.mulf %114, %119 : vector<8x16xf32>
    %cst_49 = arith.constant dense<0.000000e+00> : vector<8x32xf32>
    %121 = tpu.matmul %120, %1, %cst_49 {dimension_numbers = #tpu.dot_dimension_numbers<[1], [0], [0], [1], [0, 0, 1, 1], [], []>} : vector<8x16xf32>, vector<16x32xf32>, vector<8x32xf32> -> vector<8x32xf32>
    %122 = arith.addf %110, %121 : vector<8x32xf32>
    %123 = vector.broadcast %8 : vector<1x32xf32> to vector<8x32xf32>
    %124 = arith.addf %122, %123 : vector<8x32xf32>
    %cst_50 = arith.constant dense<0.000000e+00> : vector<8x32xf32>
    %125 = tpu.matmul %124, %3, %cst_50 {dimension_numbers = #tpu.dot_dimension_numbers<[1], [0], [0], [1], [0, 0, 1, 1], [], []>} : vector<8x32xf32>, vector<32x32xf32>, vector<8x32xf32> -> vector<8x32xf32>
    %126 = vector.broadcast %6 : vector<1x32xf32> to vector<8x32xf32>
    %127 = arith.addf %125, %126 : vector<8x32xf32>
    %cst_51 = arith.constant 0.000000e+00 : f32
    %128 = vector.broadcast %cst_51 : f32 to vector<8x32xf32>
    %129 = arith.maximumf %127, %128 : vector<8x32xf32>
    %130 = vector.broadcast %cst_17 : f32 to vector<8x32xf32>
    %131 = arith.mulf %130, %129 : vector<8x32xf32>
    %132 = arith.addf %124, %131 : vector<8x32xf32>
    %cst_52 = arith.constant 0.000000e+00 : f32
    %133 = vector.broadcast %cst_52 : f32 to vector<8x32xf32>
    %134 = arith.maximumf %132, %133 : vector<8x32xf32>
    %c5_i32 = arith.constant 5 : i32
    %cst_53 = arith.constant dense<0.000000e+00> : vector<8x16xf32>
    %135 = tpu.matmul %134, %2, %cst_53 {dimension_numbers = #tpu.dot_dimension_numbers<[1], [0], [0], [1], [0, 0, 1, 1], [], []>} : vector<8x32xf32>, vector<32x16xf32>, vector<8x16xf32> -> vector<8x16xf32>
    %136 = vector.broadcast %5 : vector<1x16xf32> to vector<8x16xf32>
    %137 = arith.addf %135, %136 : vector<8x16xf32>
    %138 = arith.subf %0, %137 : vector<8x16xf32>
    %139 = arith.index_cast %c5_i32 : i32 to index
    %c0_54 = arith.constant 0 : index
    %c0_55 = arith.constant 0 : index
    %140 = vector.load %arg10[%139, %c0_54, %c0_55] : memref<10x8x16xf32, #tpu.memory_space<vmem>>, vector<1x8x16xf32>
    %141 = vector.shape_cast %140 : vector<1x8x16xf32> to vector<8x16xf32>
    %142 = vector.shape_cast %138 : vector<8x16xf32> to vector<1x8x16xf32>
    tpu.vector_store %arg10[%139, %c0_54, %c0_55], %142 {strides = array<i32>} : memref<10x8x16xf32, #tpu.memory_space<vmem>>, vector<1x8x16xf32>,
    %143 = vector.broadcast %cst_16 : f32 to vector<8x16xf32>
    %144 = arith.mulf %138, %143 : vector<8x16xf32>
    %cst_56 = arith.constant dense<0.000000e+00> : vector<8x32xf32>
    %145 = tpu.matmul %144, %1, %cst_56 {dimension_numbers = #tpu.dot_dimension_numbers<[1], [0], [0], [1], [0, 0, 1, 1], [], []>} : vector<8x16xf32>, vector<16x32xf32>, vector<8x32xf32> -> vector<8x32xf32>
    %146 = arith.addf %134, %145 : vector<8x32xf32>
    %147 = vector.broadcast %8 : vector<1x32xf32> to vector<8x32xf32>
    %148 = arith.addf %146, %147 : vector<8x32xf32>
    %cst_57 = arith.constant dense<0.000000e+00> : vector<8x32xf32>
    %149 = tpu.matmul %148, %3, %cst_57 {dimension_numbers = #tpu.dot_dimension_numbers<[1], [0], [0], [1], [0, 0, 1, 1], [], []>} : vector<8x32xf32>, vector<32x32xf32>, vector<8x32xf32> -> vector<8x32xf32>
    %150 = vector.broadcast %6 : vector<1x32xf32> to vector<8x32xf32>
    %151 = arith.addf %149, %150 : vector<8x32xf32>
    %cst_58 = arith.constant 0.000000e+00 : f32
    %152 = vector.broadcast %cst_58 : f32 to vector<8x32xf32>
    %153 = arith.maximumf %151, %152 : vector<8x32xf32>
    %154 = vector.broadcast %cst_17 : f32 to vector<8x32xf32>
    %155 = arith.mulf %154, %153 : vector<8x32xf32>
    %156 = arith.addf %148, %155 : vector<8x32xf32>
    %cst_59 = arith.constant 0.000000e+00 : f32
    %157 = vector.broadcast %cst_59 : f32 to vector<8x32xf32>
    %158 = arith.maximumf %156, %157 : vector<8x32xf32>
    %c6_i32 = arith.constant 6 : i32
    %cst_60 = arith.constant dense<0.000000e+00> : vector<8x16xf32>
    %159 = tpu.matmul %158, %2, %cst_60 {dimension_numbers = #tpu.dot_dimension_numbers<[1], [0], [0], [1], [0, 0, 1, 1], [], []>} : vector<8x32xf32>, vector<32x16xf32>, vector<8x16xf32> -> vector<8x16xf32>
    %160 = vector.broadcast %5 : vector<1x16xf32> to vector<8x16xf32>
    %161 = arith.addf %159, %160 : vector<8x16xf32>
    %162 = arith.subf %0, %161 : vector<8x16xf32>
    %163 = arith.index_cast %c6_i32 : i32 to index
    %c0_61 = arith.constant 0 : index
    %c0_62 = arith.constant 0 : index
    %164 = vector.load %arg10[%163, %c0_61, %c0_62] : memref<10x8x16xf32, #tpu.memory_space<vmem>>, vector<1x8x16xf32>
    %165 = vector.shape_cast %164 : vector<1x8x16xf32> to vector<8x16xf32>
    %166 = vector.shape_cast %162 : vector<8x16xf32> to vector<1x8x16xf32>
    tpu.vector_store %arg10[%163, %c0_61, %c0_62], %166 {strides = array<i32>} : memref<10x8x16xf32, #tpu.memory_space<vmem>>, vector<1x8x16xf32>,
    %167 = vector.broadcast %cst_16 : f32 to vector<8x16xf32>
    %168 = arith.mulf %162, %167 : vector<8x16xf32>
    %cst_63 = arith.constant dense<0.000000e+00> : vector<8x32xf32>
    %169 = tpu.matmul %168, %1, %cst_63 {dimension_numbers = #tpu.dot_dimension_numbers<[1], [0], [0], [1], [0, 0, 1, 1], [], []>} : vector<8x16xf32>, vector<16x32xf32>, vector<8x32xf32> -> vector<8x32xf32>
    %170 = arith.addf %158, %169 : vector<8x32xf32>
    %171 = vector.broadcast %8 : vector<1x32xf32> to vector<8x32xf32>
    %172 = arith.addf %170, %171 : vector<8x32xf32>
    %cst_64 = arith.constant dense<0.000000e+00> : vector<8x32xf32>
    %173 = tpu.matmul %172, %3, %cst_64 {dimension_numbers = #tpu.dot_dimension_numbers<[1], [0], [0], [1], [0, 0, 1, 1], [], []>} : vector<8x32xf32>, vector<32x32xf32>, vector<8x32xf32> -> vector<8x32xf32>
    %174 = vector.broadcast %6 : vector<1x32xf32> to vector<8x32xf32>
    %175 = arith.addf %173, %174 : vector<8x32xf32>
    %cst_65 = arith.constant 0.000000e+00 : f32
    %176 = vector.broadcast %cst_65 : f32 to vector<8x32xf32>
    %177 = arith.maximumf %175, %176 : vector<8x32xf32>
    %178 = vector.broadcast %cst_17 : f32 to vector<8x32xf32>
    %179 = arith.mulf %178, %177 : vector<8x32xf32>
    %180 = arith.addf %172, %179 : vector<8x32xf32>
    %cst_66 = arith.constant 0.000000e+00 : f32
    %181 = vector.broadcast %cst_66 : f32 to vector<8x32xf32>
    %182 = arith.maximumf %180, %181 : vector<8x32xf32>
    %c7_i32 = arith.constant 7 : i32
    %cst_67 = arith.constant dense<0.000000e+00> : vector<8x16xf32>
    %183 = tpu.matmul %182, %2, %cst_67 {dimension_numbers = #tpu.dot_dimension_numbers<[1], [0], [0], [1], [0, 0, 1, 1], [], []>} : vector<8x32xf32>, vector<32x16xf32>, vector<8x16xf32> -> vector<8x16xf32>
    %184 = vector.broadcast %5 : vector<1x16xf32> to vector<8x16xf32>
    %185 = arith.addf %183, %184 : vector<8x16xf32>
    %186 = arith.subf %0, %185 : vector<8x16xf32>
    %187 = arith.index_cast %c7_i32 : i32 to index
    %c0_68 = arith.constant 0 : index
    %c0_69 = arith.constant 0 : index
    %188 = vector.load %arg10[%187, %c0_68, %c0_69] : memref<10x8x16xf32, #tpu.memory_space<vmem>>, vector<1x8x16xf32>
    %189 = vector.shape_cast %188 : vector<1x8x16xf32> to vector<8x16xf32>
    %190 = vector.shape_cast %186 : vector<8x16xf32> to vector<1x8x16xf32>
    tpu.vector_store %arg10[%187, %c0_68, %c0_69], %190 {strides = array<i32>} : memref<10x8x16xf32, #tpu.memory_space<vmem>>, vector<1x8x16xf32>,
    %191 = vector.broadcast %cst_16 : f32 to vector<8x16xf32>
    %192 = arith.mulf %186, %191 : vector<8x16xf32>
    %cst_70 = arith.constant dense<0.000000e+00> : vector<8x32xf32>
    %193 = tpu.matmul %192, %1, %cst_70 {dimension_numbers = #tpu.dot_dimension_numbers<[1], [0], [0], [1], [0, 0, 1, 1], [], []>} : vector<8x16xf32>, vector<16x32xf32>, vector<8x32xf32> -> vector<8x32xf32>
    %194 = arith.addf %182, %193 : vector<8x32xf32>
    %195 = vector.broadcast %8 : vector<1x32xf32> to vector<8x32xf32>
    %196 = arith.addf %194, %195 : vector<8x32xf32>
    %cst_71 = arith.constant dense<0.000000e+00> : vector<8x32xf32>
    %197 = tpu.matmul %196, %3, %cst_71 {dimension_numbers = #tpu.dot_dimension_numbers<[1], [0], [0], [1], [0, 0, 1, 1], [], []>} : vector<8x32xf32>, vector<32x32xf32>, vector<8x32xf32> -> vector<8x32xf32>
    %198 = vector.broadcast %6 : vector<1x32xf32> to vector<8x32xf32>
    %199 = arith.addf %197, %198 : vector<8x32xf32>
    %cst_72 = arith.constant 0.000000e+00 : f32
    %200 = vector.broadcast %cst_72 : f32 to vector<8x32xf32>
    %201 = arith.maximumf %199, %200 : vector<8x32xf32>
    %202 = vector.broadcast %cst_17 : f32 to vector<8x32xf32>
    %203 = arith.mulf %202, %201 : vector<8x32xf32>
    %204 = arith.addf %196, %203 : vector<8x32xf32>
    %cst_73 = arith.constant 0.000000e+00 : f32
    %205 = vector.broadcast %cst_73 : f32 to vector<8x32xf32>
    %206 = arith.maximumf %204, %205 : vector<8x32xf32>
    %c8_i32 = arith.constant 8 : i32
    %cst_74 = arith.constant dense<0.000000e+00> : vector<8x16xf32>
    %207 = tpu.matmul %206, %2, %cst_74 {dimension_numbers = #tpu.dot_dimension_numbers<[1], [0], [0], [1], [0, 0, 1, 1], [], []>} : vector<8x32xf32>, vector<32x16xf32>, vector<8x16xf32> -> vector<8x16xf32>
    %208 = vector.broadcast %5 : vector<1x16xf32> to vector<8x16xf32>
    %209 = arith.addf %207, %208 : vector<8x16xf32>
    %210 = arith.subf %0, %209 : vector<8x16xf32>
    %211 = arith.index_cast %c8_i32 : i32 to index
    %c0_75 = arith.constant 0 : index
    %c0_76 = arith.constant 0 : index
    %212 = vector.load %arg10[%211, %c0_75, %c0_76] : memref<10x8x16xf32, #tpu.memory_space<vmem>>, vector<1x8x16xf32>
    %213 = vector.shape_cast %212 : vector<1x8x16xf32> to vector<8x16xf32>
    %214 = vector.shape_cast %210 : vector<8x16xf32> to vector<1x8x16xf32>
    tpu.vector_store %arg10[%211, %c0_75, %c0_76], %214 {strides = array<i32>} : memref<10x8x16xf32, #tpu.memory_space<vmem>>, vector<1x8x16xf32>,
    %215 = vector.broadcast %cst_16 : f32 to vector<8x16xf32>
    %216 = arith.mulf %210, %215 : vector<8x16xf32>
    %cst_77 = arith.constant dense<0.000000e+00> : vector<8x32xf32>
    %217 = tpu.matmul %216, %1, %cst_77 {dimension_numbers = #tpu.dot_dimension_numbers<[1], [0], [0], [1], [0, 0, 1, 1], [], []>} : vector<8x16xf32>, vector<16x32xf32>, vector<8x32xf32> -> vector<8x32xf32>
    %218 = arith.addf %206, %217 : vector<8x32xf32>
    %219 = vector.broadcast %8 : vector<1x32xf32> to vector<8x32xf32>
    %220 = arith.addf %218, %219 : vector<8x32xf32>
    %cst_78 = arith.constant dense<0.000000e+00> : vector<8x32xf32>
    %221 = tpu.matmul %220, %3, %cst_78 {dimension_numbers = #tpu.dot_dimension_numbers<[1], [0], [0], [1], [0, 0, 1, 1], [], []>} : vector<8x32xf32>, vector<32x32xf32>, vector<8x32xf32> -> vector<8x32xf32>
    %222 = vector.broadcast %6 : vector<1x32xf32> to vector<8x32xf32>
    %223 = arith.addf %221, %222 : vector<8x32xf32>
    %cst_79 = arith.constant 0.000000e+00 : f32
    %224 = vector.broadcast %cst_79 : f32 to vector<8x32xf32>
    %225 = arith.maximumf %223, %224 : vector<8x32xf32>
    %226 = vector.broadcast %cst_17 : f32 to vector<8x32xf32>
    %227 = arith.mulf %226, %225 : vector<8x32xf32>
    %228 = arith.addf %220, %227 : vector<8x32xf32>
    %cst_80 = arith.constant 0.000000e+00 : f32
    %229 = vector.broadcast %cst_80 : f32 to vector<8x32xf32>
    %230 = arith.maximumf %228, %229 : vector<8x32xf32>
    %c9_i32 = arith.constant 9 : i32
    %cst_81 = arith.constant dense<0.000000e+00> : vector<8x16xf32>
    %231 = tpu.matmul %230, %2, %cst_81 {dimension_numbers = #tpu.dot_dimension_numbers<[1], [0], [0], [1], [0, 0, 1, 1], [], []>} : vector<8x32xf32>, vector<32x16xf32>, vector<8x16xf32> -> vector<8x16xf32>
    %232 = vector.broadcast %5 : vector<1x16xf32> to vector<8x16xf32>
    %233 = arith.addf %231, %232 : vector<8x16xf32>
    %234 = arith.subf %0, %233 : vector<8x16xf32>
    %235 = arith.index_cast %c9_i32 : i32 to index
    %c0_82 = arith.constant 0 : index
    %c0_83 = arith.constant 0 : index
    %236 = vector.load %arg10[%235, %c0_82, %c0_83] : memref<10x8x16xf32, #tpu.memory_space<vmem>>, vector<1x8x16xf32>
    %237 = vector.shape_cast %236 : vector<1x8x16xf32> to vector<8x16xf32>
    %238 = vector.shape_cast %234 : vector<8x16xf32> to vector<1x8x16xf32>
    tpu.vector_store %arg10[%235, %c0_82, %c0_83], %238 {strides = array<i32>} : memref<10x8x16xf32, #tpu.memory_space<vmem>>, vector<1x8x16xf32>,
    %239 = vector.broadcast %cst_16 : f32 to vector<8x16xf32>
    %240 = arith.mulf %234, %239 : vector<8x16xf32>
    %cst_84 = arith.constant dense<0.000000e+00> : vector<8x32xf32>
    %241 = tpu.matmul %240, %1, %cst_84 {dimension_numbers = #tpu.dot_dimension_numbers<[1], [0], [0], [1], [0, 0, 1, 1], [], []>} : vector<8x16xf32>, vector<16x32xf32>, vector<8x32xf32> -> vector<8x32xf32>
    %242 = arith.addf %230, %241 : vector<8x32xf32>
    %243 = vector.broadcast %8 : vector<1x32xf32> to vector<8x32xf32>
    %244 = arith.addf %242, %243 : vector<8x32xf32>
    %cst_85 = arith.constant dense<0.000000e+00> : vector<8x32xf32>
    %245 = tpu.matmul %244, %3, %cst_85 {dimension_numbers = #tpu.dot_dimension_numbers<[1], [0], [0], [1], [0, 0, 1, 1], [], []>} : vector<8x32xf32>, vector<32x32xf32>, vector<8x32xf32> -> vector<8x32xf32>
    %246 = vector.broadcast %6 : vector<1x32xf32> to vector<8x32xf32>
    %247 = arith.addf %245, %246 : vector<8x32xf32>
    %cst_86 = arith.constant 0.000000e+00 : f32
    %248 = vector.broadcast %cst_86 : f32 to vector<8x32xf32>
    %249 = arith.maximumf %247, %248 : vector<8x32xf32>
    %250 = vector.broadcast %cst_17 : f32 to vector<8x32xf32>
    %251 = arith.mulf %250, %249 : vector<8x32xf32>
    %252 = arith.addf %244, %251 : vector<8x32xf32>
    %cst_87 = arith.constant 0.000000e+00 : f32
    %253 = vector.broadcast %cst_87 : f32 to vector<8x32xf32>
    %254 = arith.maximumf %252, %253 : vector<8x32xf32>
    %c10_i32 = arith.constant 10 : i32
    %c0_88 = arith.constant 0 : index
    %c0_89 = arith.constant 0 : index
    %255 = vector.load %arg8[%c0_88, %c0_89] : memref<8x32xf32, #tpu.memory_space<vmem>>, vector<8x32xf32>
    tpu.vector_store %arg8[%c0_88, %c0_89], %254 {strides = array<i32>} : memref<8x32xf32, #tpu.memory_space<vmem>>, vector<8x32xf32>,
    %c0_90 = arith.constant 0 : index
    %c0_91 = arith.constant 0 : index
    %256 = vector.load %arg9[%c0_90, %c0_91] : memref<8x16xf32, #tpu.memory_space<vmem>>, vector<8x16xf32>
    tpu.vector_store %arg9[%c0_90, %c0_91], %233 {strides = array<i32>} : memref<8x16xf32, #tpu.memory_space<vmem>>, vector<8x16xf32>,
    return
  }
  func.func @transform_0(%arg0: i32) -> (i32, i32) {
    %c0_i32 = arith.constant 0 : i32
    %c0_i32_0 = arith.constant 0 : i32
    return %arg0, %c0_i32 : i32, i32
  }
  func.func @transform_1(%arg0: i32) -> (i32, i32) {
    %c0_i32 = arith.constant 0 : i32
    %c0_i32_0 = arith.constant 0 : i32
    %c0_i32_1 = arith.constant 0 : i32
    return %c0_i32, %c0_i32_0 : i32, i32
  }
  func.func @transform_2(%arg0: i32) -> (i32, i32) {
    %c0_i32 = arith.constant 0 : i32
    %c0_i32_0 = arith.constant 0 : i32
    %c0_i32_1 = arith.constant 0 : i32
    return %c0_i32, %c0_i32_0 : i32, i32
  }
  func.func @transform_3(%arg0: i32) -> (i32, i32) {
    %c0_i32 = arith.constant 0 : i32
    %c0_i32_0 = arith.constant 0 : i32
    %c0_i32_1 = arith.constant 0 : i32
    return %c0_i32, %c0_i32_0 : i32, i32
  }
  func.func @transform_4(%arg0: i32) -> (i32, i32) {
    %c0_i32 = arith.constant 0 : i32
    %c0_i32_0 = arith.constant 0 : i32
    %c0_i32_1 = arith.constant 0 : i32
    return %c0_i32, %c0_i32_0 : i32, i32
  }
  func.func @transform_5(%arg0: i32) -> (i32, i32) {
    %c0_i32 = arith.constant 0 : i32
    %c0_i32_0 = arith.constant 0 : i32
    %c0_i32_1 = arith.constant 0 : i32
    return %c0_i32, %c0_i32_0 : i32, i32
  }
  func.func @transform_6(%arg0: i32) -> (i32, i32) {
    %c0_i32 = arith.constant 0 : i32
    %c0_i32_0 = arith.constant 0 : i32
    %c0_i32_1 = arith.constant 0 : i32
    return %c0_i32, %c0_i32_0 : i32, i32
  }
  func.func @transform_7(%arg0: i32) -> (i32, i32) {
    %c0_i32 = arith.constant 0 : i32
    %c0_i32_0 = arith.constant 0 : i32
    return %arg0, %c0_i32 : i32, i32
  }
  func.func @transform_8(%arg0: i32) -> (i32, i32) {
    %c0_i32 = arith.constant 0 : i32
    %c0_i32_0 = arith.constant 0 : i32
    return %arg0, %c0_i32 : i32, i32
  }
  func.func @transform_9(%arg0: i32) -> (i32, i32, i32) {
    %c0_i32 = arith.constant 0 : i32
    %c0_i32_0 = arith.constant 0 : i32
    %c0_i32_1 = arith.constant 0 : i32
    return %c0_i32, %arg0, %c0_i32_0 : i32, i32, i32
  }
}

</mosaic_0001>

<llo_original>
// kernel: tpu_custom_call.1
$region0: #{tpu_custom_call.1}
  #allocation0 [shape = 'u32[]', space=smem, size = 0x4, offset = 0x4, fixed_abs, tag = 'smem constant byte address 0x4 - core index']
  #allocation1 [shape = 'u32[144,128]{1,0:T(1,128)}', space=vmem, size = 0x12000, scoped, tag = 'internal scratch']
  %s0 = inlined_call_operand.vmem [shape: f32[24,16], index: 0, kind: input, shape index: {}]
  %s1 = inlined_call_operand.vmem [shape: f32[16,32], index: 1, kind: input, shape index: {}]
  %s2 = inlined_call_operand.vmem [shape: f32[1,32], index: 2, kind: input, shape index: {}]
  %s3 = inlined_call_operand.vmem [shape: f32[32,16], index: 3, kind: input, shape index: {}]
  %s4 = inlined_call_operand.vmem [shape: f32[1,16], index: 4, kind: input, shape index: {}]
  %s5 = inlined_call_operand.vmem [shape: f32[32,32], index: 5, kind: input, shape index: {}]
  %s6 = inlined_call_operand.vmem [shape: f32[1,32], index: 6, kind: input, shape index: {}]
  %s7 = inlined_call_operand.hbm [shape: f32[24,32], index: 7, kind: output, shape index: {0}]
  %s8 = inlined_call_operand.vmem [shape: f32[24,16], index: 8, kind: output, shape index: {1}]
  %s9 = inlined_call_operand.vmem [shape: f32[10,24,16], index: 9, kind: output, shape index: {2}]
  %10 = xla_tuple %s7, %s8, %s9
  %s11 = sld [smem:[#allocation0]]
  $region111: #{tpu_custom_call.1} parent=0
    _
  %s13 = ssub.s32 1, %s11
  %s14 = scalar_select 0, %s13, %s11
  $region1: #{tpu_custom_call.1} parent=0
    #allocation2 [shape = 'u8[8192]{0}', space=vmem, size = 0x2000, scoped, tag = 'output window, operand 0']
    #allocation3 [shape = 's32[2]{0}', space=sflag, size = 0x8, scoped, tag = 'scoped memory for tpu_custom_call.1']
    #allocation4 [shape = 'u8[81920]{0}', space=vmem, size = 0x14000, scoped, tag = 'output window, operand 2']
    %15 = vsyncpa [#allocation3], 0
    %s16 = scalar_lea.sflag [#allocation3], 1
    %17 = vsyncpa %s16, 0
    loop: start=0, step=1, limit=5
    $region2: #{tpu_custom_call.1} parent=1 // loop_pre_header
      _
    $region3: #{tpu_custom_call.1} parent=1 // loop_header
      %s19 = sphi 0, %s23
      %p20 = scmp.ge.s32.totalorder %s19, 5
      %s29 = sphi 0, %s31
      %s32 = sphi 0, %s29
      %s33 = sphi 0, %s32
      %s49 = sphi 0, %s33
      %s53 = sphi 0, %s53
      %s55 = sphi 0, %s53
      %s56 = sphi 0, %s55
      %s70 = sphi 0, %s56
      %s74 = sphi 0, %s74
      %s76 = sphi 0, %s74
      %s77 = sphi 0, %s76
      %s91 = sphi 0, %s77
      %s95 = sphi 0, %s95
      %s97 = sphi 0, %s95
      %s98 = sphi 0, %s97
      %s112 = sphi 0, %s98
      %s116 = sphi 0, %s116
      %s118 = sphi 0, %s116
      %s119 = sphi 0, %s118
      %s133 = sphi 0, %s119
      %s137 = sphi 0, %s137
      %s139 = sphi 0, %s137
      %s140 = sphi 0, %s139
      %s154 = sphi 0, %s140
      %s158 = sphi 0, %s158
      %s160 = sphi 0, %s158
      %s161 = sphi 0, %s160
      %s175 = sphi 0, %s161
      %s181 = sphi 0, %s183
      %s184 = sphi 0, %s181
      %s185 = sphi 0, %s184
      %s201 = sphi 0, %s185
      %s207 = sphi 0, %s209
      %s210 = sphi 0, %s207
      %s211 = sphi 0, %s210
      %s227 = sphi 0, %s211
      %s233 = sphi 0, %s235
      %s236 = sphi 0, %s233
      %s237 = sphi 0, %s236
      %s253 = sphi 0, %s237
    $region4: #{tpu_custom_call.1} parent=1 // loop_header_branch
      %22 = sbr.rel (%p20) target = $region8
    $region5: #{tpu_custom_call.1} parent=1 // loop_body
      %s24 = ssub.s32 %s19, 1
      %s25 = ssub.s32 %s19, 2
      %s26 = sadd.s32 %s19, 1
      %s27 = ssub.s32 %s19, %s26
      %p28 = scmp.eq.s32.totalorder %s27, 0
      %s30 = sadd.s32 %s29, 1
      %s31 = scalar_select %p28, %s29, %s30
      %p34 = pneg %p28
      %p35 = scmp.eq.s32.totalorder %s19, 2
      %p36 = por %p34, %p35
      %p37 = scmp.ne.s32.totalorder %s29, %s32
      %p38 = scmp.eq.s32.totalorder %s19, 0
      %p39 = por %p37, %p38
      %p40 = scmp.ne.s32.totalorder %s29, %s32
      %p41 = scmp.eq.s32.totalorder %s24, 2
      %p42 = por %p40, %p41
      %p43 = scmp.ne.s32.totalorder %s32, %s33
      %p44 = scmp.eq.s32.totalorder %s24, 0
      %p45 = por %p43, %p44
      %p46 = scmp.ne.s32.totalorder %s32, %s33
      %p47 = scmp.eq.s32.totalorder %s25, 2
      %p48 = por %p46, %p47
      %p50 = scmp.ne.s32.totalorder %s33, %s49
      %p51 = scmp.eq.s32.totalorder %s25, 0
      %p52 = por %p50, %p51
      %s54 = sadd.s32 %s53, 1
      %p57 = scmp.eq.s32.totalorder %s19, 2
      %p58 = scmp.ne.s32.totalorder %s53, %s55
      %p59 = scmp.eq.s32.totalorder %s19, 0
      %p60 = por %p58, %p59
      %p61 = scmp.ne.s32.totalorder %s53, %s55
      %p62 = scmp.eq.s32.totalorder %s24, 2
      %p63 = por %p61, %p62
      %p64 = scmp.ne.s32.totalorder %s55, %s56
      %p65 = scmp.eq.s32.totalorder %s24, 0
      %p66 = por %p64, %p65
      %p67 = scmp.ne.s32.totalorder %s55, %s56
      %p68 = scmp.eq.s32.totalorder %s25, 2
      %p69 = por %p67, %p68
      %p71 = scmp.ne.s32.totalorder %s56, %s70
      %p72 = scmp.eq.s32.totalorder %s25, 0
      %p73 = por %p71, %p72
      %s75 = sadd.s32 %s74, 1
      %p78 = scmp.eq.s32.totalorder %s19, 2
      %p79 = scmp.ne.s32.totalorder %s74, %s76
      %p80 = scmp.eq.s32.totalorder %s19, 0
      %p81 = por %p79, %p80
      %p82 = scmp.ne.s32.totalorder %s74, %s76
      %p83 = scmp.eq.s32.totalorder %s24, 2
      %p84 = por %p82, %p83
      %p85 = scmp.ne.s32.totalorder %s76, %s77
      %p86 = scmp.eq.s32.totalorder %s24, 0
      %p87 = por %p85, %p86
      %p88 = scmp.ne.s32.totalorder %s76, %s77
      %p89 = scmp.eq.s32.totalorder %s25, 2
      %p90 = por %p88, %p89
      %p92 = scmp.ne.s32.totalorder %s77, %s91
      %p93 = scmp.eq.s32.totalorder %s25, 0
      %p94 = por %p92, %p93
      %s96 = sadd.s32 %s95, 1
      %p99 = scmp.eq.s32.totalorder %s19, 2
      %p100 = scmp.ne.s32.totalorder %s95, %s97
      %p101 = scmp.eq.s32.totalorder %s19, 0
      %p102 = por %p100, %p101
      %p103 = scmp.ne.s32.totalorder %s95, %s97
      %p104 = scmp.eq.s32.totalorder %s24, 2
      %p105 = por %p103, %p104
      %p106 = scmp.ne.s32.totalorder %s97, %s98
      %p107 = scmp.eq.s32.totalorder %s24, 0
      %p108 = por %p106, %p107
      %p109 = scmp.ne.s32.totalorder %s97, %s98
      %p110 = scmp.eq.s32.totalorder %s25, 2
      %p111 = por %p109, %p110
      %p113 = scmp.ne.s32.totalorder %s98, %s112
      %p114 = scmp.eq.s32.totalorder %s25, 0
      %p115 = por %p113, %p114
      %s117 = sadd.s32 %s116, 1
      %p120 = scmp.eq.s32.totalorder %s19, 2
      %p121 = scmp.ne.s32.totalorder %s116, %s118
      %p122 = scmp.eq.s32.totalorder %s19, 0
      %p123 = por %p121, %p122
      %p124 = scmp.ne.s32.totalorder %s116, %s118
      %p125 = scmp.eq.s32.totalorder %s24, 2
      %p126 = por %p124, %p125
      %p127 = scmp.ne.s32.totalorder %s118, %s119
      %p128 = scmp.eq.s32.totalorder %s24, 0
      %p129 = por %p127, %p128
      %p130 = scmp.ne.s32.totalorder %s118, %s119
      %p131 = scmp.eq.s32.totalorder %s25, 2
      %p132 = por %p130, %p131
      %p134 = scmp.ne.s32.totalorder %s119, %s133
      %p135 = scmp.eq.s32.totalorder %s25, 0
      %p136 = por %p134, %p135
      %s138 = sadd.s32 %s137, 1
      %p141 = scmp.eq.s32.totalorder %s19, 2
      %p142 = scmp.ne.s32.totalorder %s137, %s139
      %p143 = scmp.eq.s32.totalorder %s19, 0
      %p144 = por %p142, %p143
      %p145 = scmp.ne.s32.totalorder %s137, %s139
      %p146 = scmp.eq.s32.totalorder %s24, 2
      %p147 = por %p145, %p146
      %p148 = scmp.ne.s32.totalorder %s139, %s140
      %p149 = scmp.eq.s32.totalorder %s24, 0
      %p150 = por %p148, %p149
      %p151 = scmp.ne.s32.totalorder %s139, %s140
      %p152 = scmp.eq.s32.totalorder %s25, 2
      %p153 = por %p151, %p152
      %p155 = scmp.ne.s32.totalorder %s140, %s154
      %p156 = scmp.eq.s32.totalorder %s25, 0
      %p157 = por %p155, %p156
      %s159 = sadd.s32 %s158, 1
      %p162 = scmp.eq.s32.totalorder %s19, 2
      %p163 = scmp.ne.s32.totalorder %s158, %s160
      %p164 = scmp.eq.s32.totalorder %s19, 0
      %p165 = por %p163, %p164
      %p166 = scmp.ne.s32.totalorder %s158, %s160
      %p167 = scmp.eq.s32.totalorder %s24, 2
      %p168 = por %p166, %p167
      %p169 = scmp.ne.s32.totalorder %s160, %s161
      %p170 = scmp.eq.s32.totalorder %s24, 0
      %p171 = por %p169, %p170
      %p172 = scmp.ne.s32.totalorder %s160, %s161
      %p173 = scmp.eq.s32.totalorder %s25, 2
      %p174 = por %p172, %p173
      %p176 = scmp.ne.s32.totalorder %s161, %s175
      %p177 = scmp.eq.s32.totalorder %s25, 0
      %p178 = por %p176, %p177
      %s179 = ssub.s32 %s19, %s26
      %p180 = scmp.eq.s32.totalorder %s179, 0
      %s182 = sadd.s32 %s181, 1
      %s183 = scalar_select %p180, %s181, %s182
      %p186 = pneg %p180
      %p187 = scmp.eq.s32.totalorder %s19, 2
      %p188 = por %p186, %p187
      %p189 = scmp.ne.s32.totalorder %s181, %s184
      %p190 = scmp.eq.s32.totalorder %s19, 0
      %p191 = por %p189, %p190
      %p192 = scmp.ne.s32.totalorder %s181, %s184
      %p193 = scmp.eq.s32.totalorder %s24, 2
      %p194 = por %p192, %p193
      %p195 = scmp.ne.s32.totalorder %s184, %s185
      %p196 = scmp.eq.s32.totalorder %s24, 0
      %p197 = por %p195, %p196
      %p198 = scmp.ne.s32.totalorder %s184, %s185
      %p199 = scmp.eq.s32.totalorder %s25, 2
      %p200 = por %p198, %p199
      %p202 = scmp.ne.s32.totalorder %s185, %s201
      %p203 = scmp.eq.s32.totalorder %s25, 0
      %p204 = por %p202, %p203
      %s205 = ssub.s32 %s19, %s26
      %p206 = scmp.eq.s32.totalorder %s205, 0
      %s208 = sadd.s32 %s207, 1
      %s209 = scalar_select %p206, %s207, %s208
      %p212 = pneg %p206
      %p213 = scmp.eq.s32.totalorder %s19, 2
      %p214 = por %p212, %p213
      %p215 = scmp.ne.s32.totalorder %s207, %s210
      %p216 = scmp.eq.s32.totalorder %s19, 0
      %p217 = por %p215, %p216
      %p218 = scmp.ne.s32.totalorder %s207, %s210
      %p219 = scmp.eq.s32.totalorder %s24, 2
      %p220 = por %p218, %p219
      %p221 = scmp.ne.s32.totalorder %s210, %s211
      %p222 = scmp.eq.s32.totalorder %s24, 0
      %p223 = por %p221, %p222
      %p224 = scmp.ne.s32.totalorder %s210, %s211
      %p225 = scmp.eq.s32.totalorder %s25, 2
      %p226 = por %p224, %p225
      %p228 = scmp.ne.s32.totalorder %s211, %s227
      %p229 = scmp.eq.s32.totalorder %s25, 0
      %p230 = por %p228, %p229
      %s231 = ssub.s32 %s19, %s26
      %p232 = scmp.eq.s32.totalorder %s231, 0
      %s234 = sadd.s32 %s233, 1
      %s235 = scalar_select %p232, %s233, %s234
      %p238 = pneg %p232
      %p239 = scmp.eq.s32.totalorder %s19, 2
      %p240 = por %p238, %p239
      %p241 = scmp.ne.s32.totalorder %s233, %s236
      %p242 = scmp.eq.s32.totalorder %s19, 0
      %p243 = por %p241, %p242
      %p244 = scmp.ne.s32.totalorder %s233, %s236
      %p245 = scmp.eq.s32.totalorder %s24, 2
      %p246 = por %p244, %p245
      %p247 = scmp.ne.s32.totalorder %s236, %s237
      %p248 = scmp.eq.s32.totalorder %s24, 0
      %p249 = por %p247, %p248
      %p250 = scmp.ne.s32.totalorder %s236, %s237
      %p251 = scmp.eq.s32.totalorder %s25, 2
      %p252 = por %p250, %p251
      %p254 = scmp.ne.s32.totalorder %s237, %s253
      %p255 = scmp.eq.s32.totalorder %s25, 0
      %p256 = por %p254, %p255
      %p257 = scmp.le.s32.totalorder 1, %s19
      %p258 = scmp.lt.s32.totalorder %s19, 4
      %p259 = pnand %p257, %p258
      %p260 = pneg %p259
      // Predicated region
      $region9: #{tpu_custom_call.1} parent=5 // pred_check
        _
      $region10: #{tpu_custom_call.1} parent=5 // pred_check_branch
        %262 = sbr.rel (%p259) target = $region12
      $region11: #{tpu_custom_call.1} parent=5 // pred_region
        %s263 = ssub.s32 %s19, 1
        // Predicated region
        $region13: #{tpu_custom_call.1} parent=11 // pred_check
          %p264 = pneg %p66
        $region14: #{tpu_custom_call.1} parent=11 // pred_check_branch
          %266 = sbr.rel (%p264) target = $region16
        $region15: #{tpu_custom_call.1} parent=11 // pred_region
          _
        $region16: #{tpu_custom_call.1} parent=11 // pred_fallthru
          _
        // Predicated region
        $region17: #{tpu_custom_call.1} parent=11 // pred_check
          %p267 = pneg %p87
        $region18: #{tpu_custom_call.1} parent=11 // pred_check_branch
          %269 = sbr.rel (%p267) target = $region20
        $region19: #{tpu_custom_call.1} parent=11 // pred_region
          _
        $region20: #{tpu_custom_call.1} parent=11 // pred_fallthru
          _
        // Predicated region
        $region21: #{tpu_custom_call.1} parent=11 // pred_check
          %p270 = pneg %p108
        $region22: #{tpu_custom_call.1} parent=11 // pred_check_branch
          %272 = sbr.rel (%p270) target = $region24
        $region23: #{tpu_custom_call.1} parent=11 // pred_region
          _
        $region24: #{tpu_custom_call.1} parent=11 // pred_fallthru
          _
        // Predicated region
        $region25: #{tpu_custom_call.1} parent=11 // pred_check
          %p273 = pneg %p129
        $region26: #{tpu_custom_call.1} parent=11 // pred_check_branch
          %275 = sbr.rel (%p273) target = $region28
        $region27: #{tpu_custom_call.1} parent=11 // pred_region
          _
        $region28: #{tpu_custom_call.1} parent=11 // pred_fallthru
          _
        // Predicated region
        $region29: #{tpu_custom_call.1} parent=11 // pred_check
          %p276 = pneg %p150
        $region30: #{tpu_custom_call.1} parent=11 // pred_check_branch
          %278 = sbr.rel (%p276) target = $region32
        $region31: #{tpu_custom_call.1} parent=11 // pred_region
          _
        $region32: #{tpu_custom_call.1} parent=11 // pred_fallthru
          _
        // Predicated region
        $region33: #{tpu_custom_call.1} parent=11 // pred_check
          %p279 = pneg %p171
        $region34: #{tpu_custom_call.1} parent=11 // pred_check_branch
          %281 = sbr.rel (%p279) target = $region36
        $region35: #{tpu_custom_call.1} parent=11 // pred_region
          _
        $region36: #{tpu_custom_call.1} parent=11 // pred_fallthru
          _
      $region12: #{tpu_custom_call.1} parent=5 // pred_fallthru
        _
      %p282 = scmp.lt.s32.totalorder %s19, 3
      // Predicated region
      $region37: #{tpu_custom_call.1} parent=5 // pred_check
        %p283 = pneg %p282
      $region38: #{tpu_custom_call.1} parent=5 // pred_check_branch
        %285 = sbr.rel (%p283) target = $region40
      $region39: #{tpu_custom_call.1} parent=5 // pred_region
        // Predicated region
        $region41: #{tpu_custom_call.1} parent=39 // pred_check
          %p286 = pneg %p39
        $region42: #{tpu_custom_call.1} parent=39 // pred_check_branch
          %288 = sbr.rel (%p286) target = $region44
        $region43: #{tpu_custom_call.1} parent=39 // pred_region
          %p289 = scmp.lt.s32.totalorder %s19, 2
          %s290 = scalar_select %p289, %s19, 2
          %s291 = smul.addr %s290, 8
          %s292 = scalar_lea.vmem %s0, %s291
        $region44: #{tpu_custom_call.1} parent=39 // pred_fallthru
          _
      $region40: #{tpu_custom_call.1} parent=5 // pred_fallthru
        _
      %p293 = scmp.le.s32.totalorder 1, %s19
      %p294 = scmp.lt.s32.totalorder %s19, 4
      %p295 = pnand %p293, %p294
      %p296 = pneg %p295
      // Predicated region
      $region45: #{tpu_custom_call.1} parent=5 // pred_check
        _
      $region46: #{tpu_custom_call.1} parent=5 // pred_check_branch
        %298 = sbr.rel (%p295) target = $region48
      $region47: #{tpu_custom_call.1} parent=5 // pred_region
        %s299 = ssub.s32 %s19, 1
        %p300 = scmp.lt.s32.totalorder %s24, 2
        %s301 = scalar_select %p300, %s24, 2
        %s302 = smul.addr %s301, 8
        %s303 = scalar_lea.vmem %s0, %s302
        %p304 = pneg %p45
        %p305 = pneg %p42
        %p306 = pneg %p66
        %p307 = pneg %p63
        %p308 = pneg %p87
        %p309 = pneg %p84
        %p310 = pneg %p108
        %p311 = pneg %p105
        %p312 = pneg %p129
        %p313 = pneg %p126
        %p314 = pneg %p150
        %p315 = pneg %p147
        %p316 = pneg %p171
        %p317 = pneg %p168
        %p318 = pneg %p197
        %p319 = pneg %p194
        %s320 = sand.u32 %s184, 1
        %s321 = scalar_lea.sflag [#allocation3], %s320
        %s322 = sand.u32 %s184, 1
        %s323 = smul.addr %s322, 8
        %s324 = scalar_lea.vmem [#allocation2], %s323
        %p325 = pneg %p223
        %p326 = pneg %p220
        %p327 = scmp.lt.s32.totalorder %s24, 2
        %s328 = scalar_select %p327, %s24, 2
        %s329 = smul.addr %s328, 8
        %s330 = scalar_lea.vmem %s8, %s329
        %p331 = pneg %p249
        %p332 = pneg %p246
        %s333 = sand.u32 %s236, 1
        %s334 = sand.u32 %s236, 1
        %s335 = smul.addr %s334, 80
        %s336 = scalar_lea.vmem [#allocation4], %s335
        %p337 = scmp.lt.s32.totalorder %s24, 2
        %s338 = scalar_select %p337, %s24, 2
        %s339 = smul.addr %s338, 8
        %s340 = scalar_lea.vmem %s0, %s339
        %p341 = scmp.lt.s32.totalorder %s24, 2
        %s342 = scalar_select %p341, %s24, 2
        %s343 = smul.addr %s342, 8
        %s344 = scalar_lea.vmem %s8, %s343
        %v345 = vld [vmem:[%s340] sm:$0xff]
        %v346 = vld [vmem:[%s1] sm:$0xff]
        %v347 = vld [vmem:[%s1 + $0x8] sm:$0xff]
        %v348 = vld [vmem:[%s3] sm:$0xff]
        %v349 = vld [vmem:[%s3 + $0x8] sm:$0xff]
        %v350 = vld [vmem:[%s3 + $0x10] sm:$0xff]
        %v351 = vld [vmem:[%s3 + $0x18] sm:$0xff]
        %v352 = vld [vmem:[%s5] sm:$0xff]
        %v353 = vld [vmem:[%s5 + $0x8] sm:$0xff]
        %v354 = vld [vmem:[%s5 + $0x10] sm:$0xff]
        %v355 = vld [vmem:[%s5 + $0x18] sm:$0xff]
        %v356 = vld [vmem:[%s2] sm:$0x1]
        %v357 = vld [vmem:[%s4] sm:$0x1]
        %v358 = vld [vmem:[%s6] sm:$0x1]
        %v359 = vmul.f32 %v356, 0.1
        %v361 = vlaneseq
        %v362 = vshrl.u32 %v361, 7
        %v363 = vsub.s32 0, %v362
        %v364 = vrot.slane %v356, %v363
        %vm366 = vcmask 130048
        %v368 = vsel %vm366, %v345, 0
        %370 = vmatprep.subr.mxu0 0.0
        %371 = vmatpush1.msra.mxu0 0.0
        %372 = vmatprep.subr.mxu0 0.0
        %373 = vmatpush1.msra.mxu0 0.0
        %374 = vmatprep.subr.mxu0 0.0
        %375 = vmatpush1.msra.mxu0 0.0
        %376 = vmatprep.subr.mxu0 0.0
        %377 = vmatpush1.msra.mxu0 0.0
        %378 = vmatprep.subr.mxu0 0.0
        %379 = vmatpush1.msra.mxu0 0.0
        %380 = vmatprep.subr.mxu0 0.0
        %381 = vmatpush1.msra.mxu0 0.0
        %382 = vmatprep.subr.mxu0 0.0
        %383 = vmatpush1.msra.mxu0 0.0
        %384 = vmatprep.subr.mxu0 0.0
        %385 = vmatpush1.msra.mxu0 0.0
        %386 = vmatprep.subr.mxu0 0.0
        %387 = vmatpush1.msra.mxu0 0.0
        %388 = vmatprep.subr.mxu0 0.0
        %389 = vmatpush1.msra.mxu0 0.0
        %390 = vmatprep.subr.mxu0 0.0
        %391 = vmatpush1.msra.mxu0 0.0
        %392 = vmatprep.subr.mxu0 0.0
        %393 = vmatpush1.msra.mxu0 0.0
        %394 = vmatprep.subr.mxu0 0.0
        %395 = vmatpush1.msra.mxu0 0.0
        %396 = vmatprep.subr.mxu0 0.0
        %397 = vmatpush1.msra.mxu0 0.0
        %398 = vmatprep.subr.mxu0 0.0
        %399 = vmatpush1.msra.mxu0 %v347
        %400 = vmatprep.subr.mxu0 0.0
        %401 = vmatpush1.msra.mxu0 %v346
        %402 = vmatprep.subr.mxu0 0.0
        %403 = vmatpush2.msra.mxu0 0.0
        %404 = vmatprep.subr.mxu0 0.0
        %405 = vmatpush2.msra.mxu0 0.0
        %406 = vmatprep.subr.mxu0 0.0
        %407 = vmatpush2.msra.mxu0 0.0
        %408 = vmatprep.subr.mxu0 0.0
        %409 = vmatpush2.msra.mxu0 0.0
        %410 = vmatprep.subr.mxu0 0.0
        %411 = vmatpush2.msra.mxu0 0.0
        %412 = vmatprep.subr.mxu0 0.0
        %413 = vmatpush2.msra.mxu0 0.0
        %414 = vmatprep.subr.mxu0 0.0
        %415 = vmatpush2.msra.mxu0 0.0
        %416 = vmatprep.subr.mxu0 0.0
        %417 = vmatpush2.msra.mxu0 0.0
        %418 = vmatprep.subr.mxu0 0.0
        %419 = vmatpush2.msra.mxu0 0.0
        %420 = vmatprep.subr.mxu0 0.0
        %421 = vmatpush2.msra.mxu0 0.0
        %422 = vmatprep.subr.mxu0 0.0
        %423 = vmatpush2.msra.mxu0 0.0
        %424 = vmatprep.subr.mxu0 0.0
        %425 = vmatpush2.msra.mxu0 0.0
        %426 = vmatprep.subr.mxu0 0.0
        %427 = vmatpush2.msra.mxu0 0.0
        %428 = vmatprep.subr.mxu0 0.0
        %429 = vmatpush2.msra.mxu0 0.0
        %430 = vmatprep.subr.mxu0 0.0
        %431 = vmatpush2.msra.mxu0 0.0
        %432 = vmatprep.subr.mxu0 0.0
        %433 = vmatpush2.msra.mxu0 0.0
        %434 = vmatprep.mubr.f32.mxu0 0.0
        %435 = vmatmul.mubr.f32.gmra.mxu0 %v368
        %v436 = vpop.f32.mrf.mxu0
        %v437 = vadd.f32 %v364, %v436
        %v438 = vpop.f32.mrf.mxu0
        %439 = vdwg.mxu0
        %v440 = vmax.f32 %v437, 0.0
        %v442 = vlaneseq
        %v443 = vshrl.u32 %v442, 7
        %v444 = vsub.s32 0, %v443
        %v445 = vrot.slane %v357, %v444
        %vm447 = vcmask 261120
        %v449 = vsel %vm447, %v440, 0
        %451 = vmatprep.subr.mxu0 0.0
        %452 = vmatpush1.msra.mxu0 0.0
        %453 = vmatprep.subr.mxu0 0.0
        %454 = vmatpush1.msra.mxu0 0.0
        %455 = vmatprep.subr.mxu0 0.0
        %456 = vmatpush1.msra.mxu0 0.0
        %457 = vmatprep.subr.mxu0 0.0
        %458 = vmatpush1.msra.mxu0 0.0
        %459 = vmatprep.subr.mxu0 0.0
        %460 = vmatpush1.msra.mxu0 0.0
        %461 = vmatprep.subr.mxu0 0.0
        %462 = vmatpush1.msra.mxu0 0.0
        %463 = vmatprep.subr.mxu0 0.0
        %464 = vmatpush1.msra.mxu0 0.0
        %465 = vmatprep.subr.mxu0 0.0
        %466 = vmatpush1.msra.mxu0 0.0
        %467 = vmatprep.subr.mxu0 0.0
        %468 = vmatpush1.msra.mxu0 0.0
        %469 = vmatprep.subr.mxu0 0.0
        %470 = vmatpush1.msra.mxu0 0.0
        %471 = vmatprep.subr.mxu0 0.0
        %472 = vmatpush1.msra.mxu0 0.0
        %473 = vmatprep.subr.mxu0 0.0
        %474 = vmatpush1.msra.mxu0 0.0
        %475 = vmatprep.subr.mxu0 0.0
        %476 = vmatpush1.msra.mxu0 %v351
        %477 = vmatprep.subr.mxu0 0.0
        %478 = vmatpush1.msra.mxu0 %v350
        %479 = vmatprep.subr.mxu0 0.0
        %480 = vmatpush1.msra.mxu0 %v349
        %481 = vmatprep.subr.mxu0 0.0
        %482 = vmatpush1.msra.mxu0 %v348
        %483 = vmatprep.subr.mxu0 0.0
        %484 = vmatpush2.msra.mxu0 0.0
        %485 = vmatprep.subr.mxu0 0.0
        %486 = vmatpush2.msra.mxu0 0.0
        %487 = vmatprep.subr.mxu0 0.0
        %488 = vmatpush2.msra.mxu0 0.0
        %489 = vmatprep.subr.mxu0 0.0
        %490 = vmatpush2.msra.mxu0 0.0
        %491 = vmatprep.subr.mxu0 0.0
        %492 = vmatpush2.msra.mxu0 0.0
        %493 = vmatprep.subr.mxu0 0.0
        %494 = vmatpush2.msra.mxu0 0.0
        %495 = vmatprep.subr.mxu0 0.0
        %496 = vmatpush2.msra.mxu0 0.0
        %497 = vmatprep.subr.mxu0 0.0
        %498 = vmatpush2.msra.mxu0 0.0
        %499 = vmatprep.subr.mxu0 0.0
        %500 = vmatpush2.msra.mxu0 0.0
        %501 = vmatprep.subr.mxu0 0.0
        %502 = vmatpush2.msra.mxu0 0.0
        %503 = vmatprep.subr.mxu0 0.0
        %504 = vmatpush2.msra.mxu0 0.0
        %505 = vmatprep.subr.mxu0 0.0
        %506 = vmatpush2.msra.mxu0 0.0
        %507 = vmatprep.subr.mxu0 0.0
        %508 = vmatpush2.msra.mxu0 0.0
        %509 = vmatprep.subr.mxu0 0.0
        %510 = vmatpush2.msra.mxu0 0.0
        %511 = vmatprep.subr.mxu0 0.0
        %512 = vmatpush2.msra.mxu0 0.0
        %513 = vmatprep.subr.mxu0 0.0
        %514 = vmatpush2.msra.mxu0 0.0
        %515 = vmatprep.mubr.f32.mxu0 0.0
        %516 = vmatmul.mubr.f32.gmra.mxu0 %v449
        %v517 = vpop.f32.mrf.mxu0
        %v518 = vadd.f32 %v445, %v517
        %v519 = vpop.f32.mrf.mxu0
        %520 = vdwg.mxu0
        %v521 = vsub.f32 %v345, %v518
        %522 = vst.msk [vmem:[%s336] sm:$0xff] %vm366, %v521
        %v523 = vmul.f32 %v521, 0.1
        %v525 = vsel %vm366, %v523, 0
        %527 = vmatprep.subr.mxu0 0.0
        %528 = vmatpush1.msra.mxu0 0.0
        %529 = vmatprep.subr.mxu0 0.0
        %530 = vmatpush1.msra.mxu0 0.0
        %531 = vmatprep.subr.mxu0 0.0
        %532 = vmatpush1.msra.mxu0 0.0
        %533 = vmatprep.subr.mxu0 0.0
        %534 = vmatpush1.msra.mxu0 0.0
        %535 = vmatprep.subr.mxu0 0.0
        %536 = vmatpush1.msra.mxu0 0.0
        %537 = vmatprep.subr.mxu0 0.0
        %538 = vmatpush1.msra.mxu0 0.0
        %539 = vmatprep.subr.mxu0 0.0
        %540 = vmatpush1.msra.mxu0 0.0
        %541 = vmatprep.subr.mxu0 0.0
        %542 = vmatpush1.msra.mxu0 0.0
        %543 = vmatprep.subr.mxu0 0.0
        %544 = vmatpush1.msra.mxu0 0.0
        %545 = vmatprep.subr.mxu0 0.0
        %546 = vmatpush1.msra.mxu0 0.0
        %547 = vmatprep.subr.mxu0 0.0
        %548 = vmatpush1.msra.mxu0 0.0
        %549 = vmatprep.subr.mxu0 0.0
        %550 = vmatpush1.msra.mxu0 0.0
        %551 = vmatprep.subr.mxu0 0.0
        %552 = vmatpush1.msra.mxu0 0.0
        %553 = vmatprep.subr.mxu0 0.0
        %554 = vmatpush1.msra.mxu0 0.0
        %555 = vmatprep.subr.mxu0 0.0
        %556 = vmatpush1.msra.mxu0 %v347
        %557 = vmatprep.subr.mxu0 0.0
        %558 = vmatpush1.msra.mxu0 %v346
        %559 = vmatprep.subr.mxu0 0.0
        %560 = vmatpush2.msra.mxu0 0.0
        %561 = vmatprep.subr.mxu0 0.0
        %562 = vmatpush2.msra.mxu0 0.0
        %563 = vmatprep.subr.mxu0 0.0
        %564 = vmatpush2.msra.mxu0 0.0
        %565 = vmatprep.subr.mxu0 0.0
        %566 = vmatpush2.msra.mxu0 0.0
        %567 = vmatprep.subr.mxu0 0.0
        %568 = vmatpush2.msra.mxu0 0.0
        %569 = vmatprep.subr.mxu0 0.0
        %570 = vmatpush2.msra.mxu0 0.0
        %571 = vmatprep.subr.mxu0 0.0
        %572 = vmatpush2.msra.mxu0 0.0
        %573 = vmatprep.subr.mxu0 0.0
        %574 = vmatpush2.msra.mxu0 0.0
        %575 = vmatprep.subr.mxu0 0.0
        %576 = vmatpush2.msra.mxu0 0.0
        %577 = vmatprep.subr.mxu0 0.0
        %578 = vmatpush2.msra.mxu0 0.0
        %579 = vmatprep.subr.mxu0 0.0
        %580 = vmatpush2.msra.mxu0 0.0
        %581 = vmatprep.subr.mxu0 0.0
        %582 = vmatpush2.msra.mxu0 0.0
        %583 = vmatprep.subr.mxu0 0.0
        %584 = vmatpush2.msra.mxu0 0.0
        %585 = vmatprep.subr.mxu0 0.0
        %586 = vmatpush2.msra.mxu0 0.0
        %587 = vmatprep.subr.mxu0 0.0
        %588 = vmatpush2.msra.mxu0 0.0
        %589 = vmatprep.subr.mxu0 0.0
        %590 = vmatpush2.msra.mxu0 0.0
        %591 = vmatprep.mubr.f32.mxu0 0.0
        %592 = vmatmul.mubr.f32.gmra.mxu0 %v525
        %v593 = vpop.f32.mrf.mxu0
        %v594 = vadd.f32 0.0, %v593
        %v595 = vpop.f32.mrf.mxu0
        %596 = vdwg.mxu0
        %v597 = vadd.f32 %v440, %v594
        %v599 = vlaneseq
        %v600 = vshrl.u32 %v599, 7
        %v601 = vsub.s32 0, %v600
        %v602 = vrot.slane %v359, %v601
        %v604 = vadd.f32 %v597, %v602
        %v606 = vlaneseq
        %v607 = vshrl.u32 %v606, 7
        %v608 = vsub.s32 0, %v607
        %v609 = vrot.slane %v358, %v608
        %v612 = vsel %vm447, %v604, 0
        %614 = vmatprep.subr.mxu0 0.0
        %615 = vmatpush1.msra.mxu0 0.0
        %616 = vmatprep.subr.mxu0 0.0
        %617 = vmatpush1.msra.mxu0 0.0
        %618 = vmatprep.subr.mxu0 0.0
        %619 = vmatpush1.msra.mxu0 0.0
        %620 = vmatprep.subr.mxu0 0.0
        %621 = vmatpush1.msra.mxu0 0.0
        %622 = vmatprep.subr.mxu0 0.0
        %623 = vmatpush1.msra.mxu0 0.0
        %624 = vmatprep.subr.mxu0 0.0
        %625 = vmatpush1.msra.mxu0 0.0
        %626 = vmatprep.subr.mxu0 0.0
        %627 = vmatpush1.msra.mxu0 0.0
        %628 = vmatprep.subr.mxu0 0.0
        %629 = vmatpush1.msra.mxu0 0.0
        %630 = vmatprep.subr.mxu0 0.0
        %631 = vmatpush1.msra.mxu0 0.0
        %632 = vmatprep.subr.mxu0 0.0
        %633 = vmatpush1.msra.mxu0 0.0
        %634 = vmatprep.subr.mxu0 0.0
        %635 = vmatpush1.msra.mxu0 0.0
        %636 = vmatprep.subr.mxu0 0.0
        %637 = vmatpush1.msra.mxu0 0.0
        %638 = vmatprep.subr.mxu0 0.0
        %639 = vmatpush1.msra.mxu0 %v355
        %640 = vmatprep.subr.mxu0 0.0
        %641 = vmatpush1.msra.mxu0 %v354
        %642 = vmatprep.subr.mxu0 0.0
        %643 = vmatpush1.msra.mxu0 %v353
        %644 = vmatprep.subr.mxu0 0.0
        %645 = vmatpush1.msra.mxu0 %v352
        %646 = vmatprep.subr.mxu0 0.0
        %647 = vmatpush2.msra.mxu0 0.0
        %648 = vmatprep.subr.mxu0 0.0
        %649 = vmatpush2.msra.mxu0 0.0
        %650 = vmatprep.subr.mxu0 0.0
        %651 = vmatpush2.msra.mxu0 0.0
        %652 = vmatprep.subr.mxu0 0.0
        %653 = vmatpush2.msra.mxu0 0.0
        %654 = vmatprep.subr.mxu0 0.0
        %655 = vmatpush2.msra.mxu0 0.0
        %656 = vmatprep.subr.mxu0 0.0
        %657 = vmatpush2.msra.mxu0 0.0
        %658 = vmatprep.subr.mxu0 0.0
        %659 = vmatpush2.msra.mxu0 0.0
        %660 = vmatprep.subr.mxu0 0.0
        %661 = vmatpush2.msra.mxu0 0.0
        %662 = vmatprep.subr.mxu0 0.0
        %663 = vmatpush2.msra.mxu0 0.0
        %664 = vmatprep.subr.mxu0 0.0
        %665 = vmatpush2.msra.mxu0 0.0
        %666 = vmatprep.subr.mxu0 0.0
        %667 = vmatpush2.msra.mxu0 0.0
        %668 = vmatprep.subr.mxu0 0.0
        %669 = vmatpush2.msra.mxu0 0.0
        %670 = vmatprep.subr.mxu0 0.0
        %671 = vmatpush2.msra.mxu0 0.0
        %672 = vmatprep.subr.mxu0 0.0
        %673 = vmatpush2.msra.mxu0 0.0
        %674 = vmatprep.subr.mxu0 0.0
        %675 = vmatpush2.msra.mxu0 0.0
        %676 = vmatprep.subr.mxu0 0.0
        %677 = vmatpush2.msra.mxu0 0.0
        %678 = vmatprep.mubr.f32.mxu0 0.0
        %679 = vmatmul.mubr.f32.gmra.mxu0 %v612
        %v680 = vpop.f32.mrf.mxu0
        %v681 = vadd.f32 %v609, %v680
        %v682 = vpop.f32.mrf.mxu0
        %683 = vdwg.mxu0
        %v684 = vmax.f32 %v681, 0.0
        %v685 = vmul.f32 %v684, 0.1
        %v686 = vadd.f32 %v604, %v685
        %v687 = vmax.f32 %v686, 0.0
        %v689 = vsel %vm447, %v687, 0
        %691 = vmatprep.subr.mxu0 0.0
        %692 = vmatpush1.msra.mxu0 0.0
        %693 = vmatprep.subr.mxu0 0.0
        %694 = vmatpush1.msra.mxu0 0.0
        %695 = vmatprep.subr.mxu0 0.0
        %696 = vmatpush1.msra.mxu0 0.0
        %697 = vmatprep.subr.mxu0 0.0
        %698 = vmatpush1.msra.mxu0 0.0
        %699 = vmatprep.subr.mxu0 0.0
        %700 = vmatpush1.msra.mxu0 0.0
        %701 = vmatprep.subr.mxu0 0.0
        %702 = vmatpush1.msra.mxu0 0.0
        %703 = vmatprep.subr.mxu0 0.0
        %704 = vmatpush1.msra.mxu0 0.0
        %705 = vmatprep.subr.mxu0 0.0
        %706 = vmatpush1.msra.mxu0 0.0
        %707 = vmatprep.subr.mxu0 0.0
        %708 = vmatpush1.msra.mxu0 0.0
        %709 = vmatprep.subr.mxu0 0.0
        %710 = vmatpush1.msra.mxu0 0.0
        %711 = vmatprep.subr.mxu0 0.0
        %712 = vmatpush1.msra.mxu0 0.0
        %713 = vmatprep.subr.mxu0 0.0
        %714 = vmatpush1.msra.mxu0 0.0
        %715 = vmatprep.subr.mxu0 0.0
        %716 = vmatpush1.msra.mxu0 %v351
        %717 = vmatprep.subr.mxu0 0.0
        %718 = vmatpush1.msra.mxu0 %v350
        %719 = vmatprep.subr.mxu0 0.0
        %720 = vmatpush1.msra.mxu0 %v349
        %721 = vmatprep.subr.mxu0 0.0
        %722 = vmatpush1.msra.mxu0 %v348
        %723 = vmatprep.subr.mxu0 0.0
        %724 = vmatpush2.msra.mxu0 0.0
        %725 = vmatprep.subr.mxu0 0.0
        %726 = vmatpush2.msra.mxu0 0.0
        %727 = vmatprep.subr.mxu0 0.0
        %728 = vmatpush2.msra.mxu0 0.0
        %729 = vmatprep.subr.mxu0 0.0
        %730 = vmatpush2.msra.mxu0 0.0
        %731 = vmatprep.subr.mxu0 0.0
        %732 = vmatpush2.msra.mxu0 0.0
        %733 = vmatprep.subr.mxu0 0.0
        %734 = vmatpush2.msra.mxu0 0.0
        %735 = vmatprep.subr.mxu0 0.0
        %736 = vmatpush2.msra.mxu0 0.0
        %737 = vmatprep.subr.mxu0 0.0
        %738 = vmatpush2.msra.mxu0 0.0
        %739 = vmatprep.subr.mxu0 0.0
        %740 = vmatpush2.msra.mxu0 0.0
        %741 = vmatprep.subr.mxu0 0.0
        %742 = vmatpush2.msra.mxu0 0.0
        %743 = vmatprep.subr.mxu0 0.0
        %744 = vmatpush2.msra.mxu0 0.0
        %745 = vmatprep.subr.mxu0 0.0
        %746 = vmatpush2.msra.mxu0 0.0
        %747 = vmatprep.subr.mxu0 0.0
        %748 = vmatpush2.msra.mxu0 0.0
        %749 = vmatprep.subr.mxu0 0.0
        %750 = vmatpush2.msra.mxu0 0.0
        %751 = vmatprep.subr.mxu0 0.0
        %752 = vmatpush2.msra.mxu0 0.0
        %753 = vmatprep.subr.mxu0 0.0
        %754 = vmatpush2.msra.mxu0 0.0
        %755 = vmatprep.mubr.f32.mxu0 0.0
        %756 = vmatmul.mubr.f32.gmra.mxu0 %v689
        %v757 = vpop.f32.mrf.mxu0
        %v758 = vadd.f32 %v445, %v757
        %v759 = vpop.f32.mrf.mxu0
        %760 = vdwg.mxu0
        %v761 = vsub.f32 %v345, %v758
        %s762 = scalar_lea.vmem %s336, 8 [#allocation4]
        %763 = vst.msk [vmem:[%s762] sm:$0xff] %vm366, %v761
        %v764 = vmul.f32 %v761, 0.1
        %v766 = vsel %vm366, %v764, 0
        %768 = vmatprep.subr.mxu0 0.0
        %769 = vmatpush1.msra.mxu0 0.0
        %770 = vmatprep.subr.mxu0 0.0
        %771 = vmatpush1.msra.mxu0 0.0
        %772 = vmatprep.subr.mxu0 0.0
        %773 = vmatpush1.msra.mxu0 0.0
        %774 = vmatprep.subr.mxu0 0.0
        %775 = vmatpush1.msra.mxu0 0.0
        %776 = vmatprep.subr.mxu0 0.0
        %777 = vmatpush1.msra.mxu0 0.0
        %778 = vmatprep.subr.mxu0 0.0
        %779 = vmatpush1.msra.mxu0 0.0
        %780 = vmatprep.subr.mxu0 0.0
        %781 = vmatpush1.msra.mxu0 0.0
        %782 = vmatprep.subr.mxu0 0.0
        %783 = vmatpush1.msra.mxu0 0.0
        %784 = vmatprep.subr.mxu0 0.0
        %785 = vmatpush1.msra.mxu0 0.0
        %786 = vmatprep.subr.mxu0 0.0
        %787 = vmatpush1.msra.mxu0 0.0
        %788 = vmatprep.subr.mxu0 0.0
        %789 = vmatpush1.msra.mxu0 0.0
        %790 = vmatprep.subr.mxu0 0.0
        %791 = vmatpush1.msra.mxu0 0.0
        %792 = vmatprep.subr.mxu0 0.0
        %793 = vmatpush1.msra.mxu0 0.0
        %794 = vmatprep.subr.mxu0 0.0
        %795 = vmatpush1.msra.mxu0 0.0
        %796 = vmatprep.subr.mxu0 0.0
        %797 = vmatpush1.msra.mxu0 %v347
        %798 = vmatprep.subr.mxu0 0.0
        %799 = vmatpush1.msra.mxu0 %v346
        %800 = vmatprep.subr.mxu0 0.0
        %801 = vmatpush2.msra.mxu0 0.0
        %802 = vmatprep.subr.mxu0 0.0
        %803 = vmatpush2.msra.mxu0 0.0
        %804 = vmatprep.subr.mxu0 0.0
        %805 = vmatpush2.msra.mxu0 0.0
        %806 = vmatprep.subr.mxu0 0.0
        %807 = vmatpush2.msra.mxu0 0.0
        %808 = vmatprep.subr.mxu0 0.0
        %809 = vmatpush2.msra.mxu0 0.0
        %810 = vmatprep.subr.mxu0 0.0
        %811 = vmatpush2.msra.mxu0 0.0
        %812 = vmatprep.subr.mxu0 0.0
        %813 = vmatpush2.msra.mxu0 0.0
        %814 = vmatprep.subr.mxu0 0.0
        %815 = vmatpush2.msra.mxu0 0.0
        %816 = vmatprep.subr.mxu0 0.0
        %817 = vmatpush2.msra.mxu0 0.0
        %818 = vmatprep.subr.mxu0 0.0
        %819 = vmatpush2.msra.mxu0 0.0
        %820 = vmatprep.subr.mxu0 0.0
        %821 = vmatpush2.msra.mxu0 0.0
        %822 = vmatprep.subr.mxu0 0.0
        %823 = vmatpush2.msra.mxu0 0.0
        %824 = vmatprep.subr.mxu0 0.0
        %825 = vmatpush2.msra.mxu0 0.0
        %826 = vmatprep.subr.mxu0 0.0
        %827 = vmatpush2.msra.mxu0 0.0
        %828 = vmatprep.subr.mxu0 0.0
        %829 = vmatpush2.msra.mxu0 0.0
        %830 = vmatprep.subr.mxu0 0.0
        %831 = vmatpush2.msra.mxu0 0.0
        %832 = vmatprep.mubr.f32.mxu0 0.0
        %833 = vmatmul.mubr.f32.gmra.mxu0 %v766
        %v834 = vpop.f32.mrf.mxu0
        %v835 = vadd.f32 0.0, %v834
        %v836 = vpop.f32.mrf.mxu0
        %837 = vdwg.mxu0
        %v838 = vadd.f32 %v687, %v835
        %v839 = vadd.f32 %v838, %v602
        %v841 = vsel %vm447, %v839, 0
        %843 = vmatprep.subr.mxu0 0.0
        %844 = vmatpush1.msra.mxu0 0.0
        %845 = vmatprep.subr.mxu0 0.0
        %846 = vmatpush1.msra.mxu0 0.0
        %847 = vmatprep.subr.mxu0 0.0
        %848 = vmatpush1.msra.mxu0 0.0
        %849 = vmatprep.subr.mxu0 0.0
        %850 = vmatpush1.msra.mxu0 0.0
        %851 = vmatprep.subr.mxu0 0.0
        %852 = vmatpush1.msra.mxu0 0.0
        %853 = vmatprep.subr.mxu0 0.0
        %854 = vmatpush1.msra.mxu0 0.0
        %855 = vmatprep.subr.mxu0 0.0
        %856 = vmatpush1.msra.mxu0 0.0
        %857 = vmatprep.subr.mxu0 0.0
        %858 = vmatpush1.msra.mxu0 0.0
        %859 = vmatprep.subr.mxu0 0.0
        %860 = vmatpush1.msra.mxu0 0.0
        %861 = vmatprep.subr.mxu0 0.0
        %862 = vmatpush1.msra.mxu0 0.0
        %863 = vmatprep.subr.mxu0 0.0
        %864 = vmatpush1.msra.mxu0 0.0
        %865 = vmatprep.subr.mxu0 0.0
        %866 = vmatpush1.msra.mxu0 0.0
        %867 = vmatprep.subr.mxu0 0.0
        %868 = vmatpush1.msra.mxu0 %v355
        %869 = vmatprep.subr.mxu0 0.0
        %870 = vmatpush1.msra.mxu0 %v354
        %871 = vmatprep.subr.mxu0 0.0
        %872 = vmatpush1.msra.mxu0 %v353
        %873 = vmatprep.subr.mxu0 0.0
        %874 = vmatpush1.msra.mxu0 %v352
        %875 = vmatprep.subr.mxu0 0.0
        %876 = vmatpush2.msra.mxu0 0.0
        %877 = vmatprep.subr.mxu0 0.0
        %878 = vmatpush2.msra.mxu0 0.0
        %879 = vmatprep.subr.mxu0 0.0
        %880 = vmatpush2.msra.mxu0 0.0
        %881 = vmatprep.subr.mxu0 0.0
        %882 = vmatpush2.msra.mxu0 0.0
        %883 = vmatprep.subr.mxu0 0.0
        %884 = vmatpush2.msra.mxu0 0.0
        %885 = vmatprep.subr.mxu0 0.0
        %886 = vmatpush2.msra.mxu0 0.0
        %887 = vmatprep.subr.mxu0 0.0
        %888 = vmatpush2.msra.mxu0 0.0
        %889 = vmatprep.subr.mxu0 0.0
        %890 = vmatpush2.msra.mxu0 0.0
        %891 = vmatprep.subr.mxu0 0.0
        %892 = vmatpush2.msra.mxu0 0.0
        %893 = vmatprep.subr.mxu0 0.0
        %894 = vmatpush2.msra.mxu0 0.0
        %895 = vmatprep.subr.mxu0 0.0
        %896 = vmatpush2.msra.mxu0 0.0
        %897 = vmatprep.subr.mxu0 0.0
        %898 = vmatpush2.msra.mxu0 0.0
        %899 = vmatprep.subr.mxu0 0.0
        %900 = vmatpush2.msra.mxu0 0.0
        %901 = vmatprep.subr.mxu0 0.0
        %902 = vmatpush2.msra.mxu0 0.0
        %903 = vmatprep.subr.mxu0 0.0
        %904 = vmatpush2.msra.mxu0 0.0
        %905 = vmatprep.subr.mxu0 0.0
        %906 = vmatpush2.msra.mxu0 0.0
        %907 = vmatprep.mubr.f32.mxu0 0.0
        %908 = vmatmul.mubr.f32.gmra.mxu0 %v841
        %v909 = vpop.f32.mrf.mxu0
        %v910 = vadd.f32 %v609, %v909
        %v911 = vpop.f32.mrf.mxu0
        %912 = vdwg.mxu0
        %v913 = vmax.f32 %v910, 0.0
        %v914 = vmul.f32 %v913, 0.1
        %v915 = vadd.f32 %v839, %v914
        %v916 = vmax.f32 %v915, 0.0
        %v918 = vsel %vm447, %v916, 0
        %920 = vmatprep.subr.mxu0 0.0
        %921 = vmatpush1.msra.mxu0 0.0
        %922 = vmatprep.subr.mxu0 0.0
        %923 = vmatpush1.msra.mxu0 0.0
        %924 = vmatprep.subr.mxu0 0.0
        %925 = vmatpush1.msra.mxu0 0.0
        %926 = vmatprep.subr.mxu0 0.0
        %927 = vmatpush1.msra.mxu0 0.0
        %928 = vmatprep.subr.mxu0 0.0
        %929 = vmatpush1.msra.mxu0 0.0
        %930 = vmatprep.subr.mxu0 0.0
        %931 = vmatpush1.msra.mxu0 0.0
        %932 = vmatprep.subr.mxu0 0.0
        %933 = vmatpush1.msra.mxu0 0.0
        %934 = vmatprep.subr.mxu0 0.0
        %935 = vmatpush1.msra.mxu0 0.0
        %936 = vmatprep.subr.mxu0 0.0
        %937 = vmatpush1.msra.mxu0 0.0
        %938 = vmatprep.subr.mxu0 0.0
        %939 = vmatpush1.msra.mxu0 0.0
        %940 = vmatprep.subr.mxu0 0.0
        %941 = vmatpush1.msra.mxu0 0.0
        %942 = vmatprep.subr.mxu0 0.0
        %943 = vmatpush1.msra.mxu0 0.0
        %944 = vmatprep.subr.mxu0 0.0
        %945 = vmatpush1.msra.mxu0 %v351
        %946 = vmatprep.subr.mxu0 0.0
        %947 = vmatpush1.msra.mxu0 %v350
        %948 = vmatprep.subr.mxu0 0.0
        %949 = vmatpush1.msra.mxu0 %v349
        %950 = vmatprep.subr.mxu0 0.0
        %951 = vmatpush1.msra.mxu0 %v348
        %952 = vmatprep.subr.mxu0 0.0
        %953 = vmatpush2.msra.mxu0 0.0
        %954 = vmatprep.subr.mxu0 0.0
        %955 = vmatpush2.msra.mxu0 0.0
        %956 = vmatprep.subr.mxu0 0.0
        %957 = vmatpush2.msra.mxu0 0.0
        %958 = vmatprep.subr.mxu0 0.0
        %959 = vmatpush2.msra.mxu0 0.0
        %960 = vmatprep.subr.mxu0 0.0
        %961 = vmatpush2.msra.mxu0 0.0
        %962 = vmatprep.subr.mxu0 0.0
        %963 = vmatpush2.msra.mxu0 0.0
        %964 = vmatprep.subr.mxu0 0.0
        %965 = vmatpush2.msra.mxu0 0.0
        %966 = vmatprep.subr.mxu0 0.0
        %967 = vmatpush2.msra.mxu0 0.0
        %968 = vmatprep.subr.mxu0 0.0
        %969 = vmatpush2.msra.mxu0 0.0
        %970 = vmatprep.subr.mxu0 0.0
        %971 = vmatpush2.msra.mxu0 0.0
        %972 = vmatprep.subr.mxu0 0.0
        %973 = vmatpush2.msra.mxu0 0.0
        %974 = vmatprep.subr.mxu0 0.0
        %975 = vmatpush2.msra.mxu0 0.0
        %976 = vmatprep.subr.mxu0 0.0
        %977 = vmatpush2.msra.mxu0 0.0
        %978 = vmatprep.subr.mxu0 0.0
        %979 = vmatpush2.msra.mxu0 0.0
        %980 = vmatprep.subr.mxu0 0.0
        %981 = vmatpush2.msra.mxu0 0.0
        %982 = vmatprep.subr.mxu0 0.0
        %983 = vmatpush2.msra.mxu0 0.0
        %984 = vmatprep.mubr.f32.mxu0 0.0
        %985 = vmatmul.mubr.f32.gmra.mxu0 %v918
        %v986 = vpop.f32.mrf.mxu0
        %v987 = vadd.f32 %v445, %v986
        %v988 = vpop.f32.mrf.mxu0
        %989 = vdwg.mxu0
        %v990 = vsub.f32 %v345, %v987
        %s991 = scalar_lea.vmem %s336, 16 [#allocation4]
        %992 = vst.msk [vmem:[%s991] sm:$0xff] %vm366, %v990
        %v993 = vmul.f32 %v990, 0.1
        %v995 = vsel %vm366, %v993, 0
        %997 = vmatprep.subr.mxu0 0.0
        %998 = vmatpush1.msra.mxu0 0.0
        %999 = vmatprep.subr.mxu0 0.0
        %1000 = vmatpush1.msra.mxu0 0.0
        %1001 = vmatprep.subr.mxu0 0.0
        %1002 = vmatpush1.msra.mxu0 0.0
        %1003 = vmatprep.subr.mxu0 0.0
        %1004 = vmatpush1.msra.mxu0 0.0
        %1005 = vmatprep.subr.mxu0 0.0
        %1006 = vmatpush1.msra.mxu0 0.0
        %1007 = vmatprep.subr.mxu0 0.0
        %1008 = vmatpush1.msra.mxu0 0.0
        %1009 = vmatprep.subr.mxu0 0.0
        %1010 = vmatpush1.msra.mxu0 0.0
        %1011 = vmatprep.subr.mxu0 0.0
        %1012 = vmatpush1.msra.mxu0 0.0
        %1013 = vmatprep.subr.mxu0 0.0
        %1014 = vmatpush1.msra.mxu0 0.0
        %1015 = vmatprep.subr.mxu0 0.0
        %1016 = vmatpush1.msra.mxu0 0.0
        %1017 = vmatprep.subr.mxu0 0.0
        %1018 = vmatpush1.msra.mxu0 0.0
        %1019 = vmatprep.subr.mxu0 0.0
        %1020 = vmatpush1.msra.mxu0 0.0
        %1021 = vmatprep.subr.mxu0 0.0
        %1022 = vmatpush1.msra.mxu0 0.0
        %1023 = vmatprep.subr.mxu0 0.0
        %1024 = vmatpush1.msra.mxu0 0.0
        %1025 = vmatprep.subr.mxu0 0.0
        %1026 = vmatpush1.msra.mxu0 %v347
        %1027 = vmatprep.subr.mxu0 0.0
        %1028 = vmatpush1.msra.mxu0 %v346
        %1029 = vmatprep.subr.mxu0 0.0
        %1030 = vmatpush2.msra.mxu0 0.0
        %1031 = vmatprep.subr.mxu0 0.0
        %1032 = vmatpush2.msra.mxu0 0.0
        %1033 = vmatprep.subr.mxu0 0.0
        %1034 = vmatpush2.msra.mxu0 0.0
        %1035 = vmatprep.subr.mxu0 0.0
        %1036 = vmatpush2.msra.mxu0 0.0
        %1037 = vmatprep.subr.mxu0 0.0
        %1038 = vmatpush2.msra.mxu0 0.0
        %1039 = vmatprep.subr.mxu0 0.0
        %1040 = vmatpush2.msra.mxu0 0.0
        %1041 = vmatprep.subr.mxu0 0.0
        %1042 = vmatpush2.msra.mxu0 0.0
        %1043 = vmatprep.subr.mxu0 0.0
        %1044 = vmatpush2.msra.mxu0 0.0
        %1045 = vmatprep.subr.mxu0 0.0
        %1046 = vmatpush2.msra.mxu0 0.0
        %1047 = vmatprep.subr.mxu0 0.0
        %1048 = vmatpush2.msra.mxu0 0.0
        %1049 = vmatprep.subr.mxu0 0.0
        %1050 = vmatpush2.msra.mxu0 0.0
        %1051 = vmatprep.subr.mxu0 0.0
        %1052 = vmatpush2.msra.mxu0 0.0
        %1053 = vmatprep.subr.mxu0 0.0
        %1054 = vmatpush2.msra.mxu0 0.0
        %1055 = vmatprep.subr.mxu0 0.0
        %1056 = vmatpush2.msra.mxu0 0.0
        %1057 = vmatprep.subr.mxu0 0.0
        %1058 = vmatpush2.msra.mxu0 0.0
        %1059 = vmatprep.subr.mxu0 0.0
        %1060 = vmatpush2.msra.mxu0 0.0
        %1061 = vmatprep.mubr.f32.mxu0 0.0
        %1062 = vmatmul.mubr.f32.gmra.mxu0 %v995
        %v1063 = vpop.f32.mrf.mxu0
        %v1064 = vadd.f32 0.0, %v1063
        %v1065 = vpop.f32.mrf.mxu0
        %1066 = vdwg.mxu0
        %v1067 = vadd.f32 %v916, %v1064
        %v1068 = vadd.f32 %v1067, %v602
        %v1070 = vsel %vm447, %v1068, 0
        %1072 = vmatprep.subr.mxu0 0.0
        %1073 = vmatpush1.msra.mxu0 0.0
        %1074 = vmatprep.subr.mxu0 0.0
        %1075 = vmatpush1.msra.mxu0 0.0
        %1076 = vmatprep.subr.mxu0 0.0
        %1077 = vmatpush1.msra.mxu0 0.0
        %1078 = vmatprep.subr.mxu0 0.0
        %1079 = vmatpush1.msra.mxu0 0.0
        %1080 = vmatprep.subr.mxu0 0.0
        %1081 = vmatpush1.msra.mxu0 0.0
        %1082 = vmatprep.subr.mxu0 0.0
        %1083 = vmatpush1.msra.mxu0 0.0
        %1084 = vmatprep.subr.mxu0 0.0
        %1085 = vmatpush1.msra.mxu0 0.0
        %1086 = vmatprep.subr.mxu0 0.0
        %1087 = vmatpush1.msra.mxu0 0.0
        %1088 = vmatprep.subr.mxu0 0.0
        %1089 = vmatpush1.msra.mxu0 0.0
        %1090 = vmatprep.subr.mxu0 0.0
        %1091 = vmatpush1.msra.mxu0 0.0
        %1092 = vmatprep.subr.mxu0 0.0
        %1093 = vmatpush1.msra.mxu0 0.0
        %1094 = vmatprep.subr.mxu0 0.0
        %1095 = vmatpush1.msra.mxu0 0.0
        %1096 = vmatprep.subr.mxu0 0.0
        %1097 = vmatpush1.msra.mxu0 %v355
        %1098 = vmatprep.subr.mxu0 0.0
        %1099 = vmatpush1.msra.mxu0 %v354
        %1100 = vmatprep.subr.mxu0 0.0
        %1101 = vmatpush1.msra.mxu0 %v353
        %1102 = vmatprep.subr.mxu0 0.0
        %1103 = vmatpush1.msra.mxu0 %v352
        %1104 = vmatprep.subr.mxu0 0.0
        %1105 = vmatpush2.msra.mxu0 0.0
        %1106 = vmatprep.subr.mxu0 0.0
        %1107 = vmatpush2.msra.mxu0 0.0
        %1108 = vmatprep.subr.mxu0 0.0
        %1109 = vmatpush2.msra.mxu0 0.0
        %1110 = vmatprep.subr.mxu0 0.0
        %1111 = vmatpush2.msra.mxu0 0.0
        %1112 = vmatprep.subr.mxu0 0.0
        %1113 = vmatpush2.msra.mxu0 0.0
        %1114 = vmatprep.subr.mxu0 0.0
        %1115 = vmatpush2.msra.mxu0 0.0
        %1116 = vmatprep.subr.mxu0 0.0
        %1117 = vmatpush2.msra.mxu0 0.0
        %1118 = vmatprep.subr.mxu0 0.0
        %1119 = vmatpush2.msra.mxu0 0.0
        %1120 = vmatprep.subr.mxu0 0.0
        %1121 = vmatpush2.msra.mxu0 0.0
        %1122 = vmatprep.subr.mxu0 0.0
        %1123 = vmatpush2.msra.mxu0 0.0
        %1124 = vmatprep.subr.mxu0 0.0
        %1125 = vmatpush2.msra.mxu0 0.0
        %1126 = vmatprep.subr.mxu0 0.0
        %1127 = vmatpush2.msra.mxu0 0.0
        %1128 = vmatprep.subr.mxu0 0.0
        %1129 = vmatpush2.msra.mxu0 0.0
        %1130 = vmatprep.subr.mxu0 0.0
        %1131 = vmatpush2.msra.mxu0 0.0
        %1132 = vmatprep.subr.mxu0 0.0
        %1133 = vmatpush2.msra.mxu0 0.0
        %1134 = vmatprep.subr.mxu0 0.0
        %1135 = vmatpush2.msra.mxu0 0.0
        %1136 = vmatprep.mubr.f32.mxu0 0.0
        %1137 = vmatmul.mubr.f32.gmra.mxu0 %v1070
        %v1138 = vpop.f32.mrf.mxu0
        %v1139 = vadd.f32 %v609, %v1138
        %v1140 = vpop.f32.mrf.mxu0
        %1141 = vdwg.mxu0
        %v1142 = vmax.f32 %v1139, 0.0
        %v1143 = vmul.f32 %v1142, 0.1
        %v1144 = vadd.f32 %v1068, %v1143
        %v1145 = vmax.f32 %v1144, 0.0
        %v1147 = vsel %vm447, %v1145, 0
        %1149 = vmatprep.subr.mxu0 0.0
        %1150 = vmatpush1.msra.mxu0 0.0
        %1151 = vmatprep.subr.mxu0 0.0
        %1152 = vmatpush1.msra.mxu0 0.0
        %1153 = vmatprep.subr.mxu0 0.0
        %1154 = vmatpush1.msra.mxu0 0.0
        %1155 = vmatprep.subr.mxu0 0.0
        %1156 = vmatpush1.msra.mxu0 0.0
        %1157 = vmatprep.subr.mxu0 0.0
        %1158 = vmatpush1.msra.mxu0 0.0
        %1159 = vmatprep.subr.mxu0 0.0
        %1160 = vmatpush1.msra.mxu0 0.0
        %1161 = vmatprep.subr.mxu0 0.0
        %1162 = vmatpush1.msra.mxu0 0.0
        %1163 = vmatprep.subr.mxu0 0.0
        %1164 = vmatpush1.msra.mxu0 0.0
        %1165 = vmatprep.subr.mxu0 0.0
        %1166 = vmatpush1.msra.mxu0 0.0
        %1167 = vmatprep.subr.mxu0 0.0
        %1168 = vmatpush1.msra.mxu0 0.0
        %1169 = vmatprep.subr.mxu0 0.0
        %1170 = vmatpush1.msra.mxu0 0.0
        %1171 = vmatprep.subr.mxu0 0.0
        %1172 = vmatpush1.msra.mxu0 0.0
        %1173 = vmatprep.subr.mxu0 0.0
        %1174 = vmatpush1.msra.mxu0 %v351
        %1175 = vmatprep.subr.mxu0 0.0
        %1176 = vmatpush1.msra.mxu0 %v350
        %1177 = vmatprep.subr.mxu0 0.0
        %1178 = vmatpush1.msra.mxu0 %v349
        %1179 = vmatprep.subr.mxu0 0.0
        %1180 = vmatpush1.msra.mxu0 %v348
        %1181 = vmatprep.subr.mxu0 0.0
        %1182 = vmatpush2.msra.mxu0 0.0
        %1183 = vmatprep.subr.mxu0 0.0
        %1184 = vmatpush2.msra.mxu0 0.0
        %1185 = vmatprep.subr.mxu0 0.0
        %1186 = vmatpush2.msra.mxu0 0.0
        %1187 = vmatprep.subr.mxu0 0.0
        %1188 = vmatpush2.msra.mxu0 0.0
        %1189 = vmatprep.subr.mxu0 0.0
        %1190 = vmatpush2.msra.mxu0 0.0
        %1191 = vmatprep.subr.mxu0 0.0
        %1192 = vmatpush2.msra.mxu0 0.0
        %1193 = vmatprep.subr.mxu0 0.0
        %1194 = vmatpush2.msra.mxu0 0.0
        %1195 = vmatprep.subr.mxu0 0.0
        %1196 = vmatpush2.msra.mxu0 0.0
        %1197 = vmatprep.subr.mxu0 0.0
        %1198 = vmatpush2.msra.mxu0 0.0
        %1199 = vmatprep.subr.mxu0 0.0
        %1200 = vmatpush2.msra.mxu0 0.0
        %1201 = vmatprep.subr.mxu0 0.0
        %1202 = vmatpush2.msra.mxu0 0.0
        %1203 = vmatprep.subr.mxu0 0.0
        %1204 = vmatpush2.msra.mxu0 0.0
        %1205 = vmatprep.subr.mxu0 0.0
        %1206 = vmatpush2.msra.mxu0 0.0
        %1207 = vmatprep.subr.mxu0 0.0
        %1208 = vmatpush2.msra.mxu0 0.0
        %1209 = vmatprep.subr.mxu0 0.0
        %1210 = vmatpush2.msra.mxu0 0.0
        %1211 = vmatprep.subr.mxu0 0.0
        %1212 = vmatpush2.msra.mxu0 0.0
        %1213 = vmatprep.mubr.f32.mxu0 0.0
        %1214 = vmatmul.mubr.f32.gmra.mxu0 %v1147
        %v1215 = vpop.f32.mrf.mxu0
        %v1216 = vadd.f32 %v445, %v1215
        %v1217 = vpop.f32.mrf.mxu0
        %1218 = vdwg.mxu0
        %v1219 = vsub.f32 %v345, %v1216
        %s1220 = scalar_lea.vmem %s336, 24 [#allocation4]
        %1221 = vst.msk [vmem:[%s1220] sm:$0xff] %vm366, %v1219
        %v1222 = vmul.f32 %v1219, 0.1
        %v1224 = vsel %vm366, %v1222, 0
        %1226 = vmatprep.subr.mxu0 0.0
        %1227 = vmatpush1.msra.mxu0 0.0
        %1228 = vmatprep.subr.mxu0 0.0
        %1229 = vmatpush1.msra.mxu0 0.0
        %1230 = vmatprep.subr.mxu0 0.0
        %1231 = vmatpush1.msra.mxu0 0.0
        %1232 = vmatprep.subr.mxu0 0.0
        %1233 = vmatpush1.msra.mxu0 0.0
        %1234 = vmatprep.subr.mxu0 0.0
        %1235 = vmatpush1.msra.mxu0 0.0
        %1236 = vmatprep.subr.mxu0 0.0
        %1237 = vmatpush1.msra.mxu0 0.0
        %1238 = vmatprep.subr.mxu0 0.0
        %1239 = vmatpush1.msra.mxu0 0.0
        %1240 = vmatprep.subr.mxu0 0.0
        %1241 = vmatpush1.msra.mxu0 0.0
        %1242 = vmatprep.subr.mxu0 0.0
        %1243 = vmatpush1.msra.mxu0 0.0
        %1244 = vmatprep.subr.mxu0 0.0
        %1245 = vmatpush1.msra.mxu0 0.0
        %1246 = vmatprep.subr.mxu0 0.0
        %1247 = vmatpush1.msra.mxu0 0.0
        %1248 = vmatprep.subr.mxu0 0.0
        %1249 = vmatpush1.msra.mxu0 0.0
        %1250 = vmatprep.subr.mxu0 0.0
        %1251 = vmatpush1.msra.mxu0 0.0
        %1252 = vmatprep.subr.mxu0 0.0
        %1253 = vmatpush1.msra.mxu0 0.0
        %1254 = vmatprep.subr.mxu0 0.0
        %1255 = vmatpush1.msra.mxu0 %v347
        %1256 = vmatprep.subr.mxu0 0.0
        %1257 = vmatpush1.msra.mxu0 %v346
        %1258 = vmatprep.subr.mxu0 0.0
        %1259 = vmatpush2.msra.mxu0 0.0
        %1260 = vmatprep.subr.mxu0 0.0
        %1261 = vmatpush2.msra.mxu0 0.0
        %1262 = vmatprep.subr.mxu0 0.0
        %1263 = vmatpush2.msra.mxu0 0.0
        %1264 = vmatprep.subr.mxu0 0.0
        %1265 = vmatpush2.msra.mxu0 0.0
        %1266 = vmatprep.subr.mxu0 0.0
        %1267 = vmatpush2.msra.mxu0 0.0
        %1268 = vmatprep.subr.mxu0 0.0
        %1269 = vmatpush2.msra.mxu0 0.0
        %1270 = vmatprep.subr.mxu0 0.0
        %1271 = vmatpush2.msra.mxu0 0.0
        %1272 = vmatprep.subr.mxu0 0.0
        %1273 = vmatpush2.msra.mxu0 0.0
        %1274 = vmatprep.subr.mxu0 0.0
        %1275 = vmatpush2.msra.mxu0 0.0
        %1276 = vmatprep.subr.mxu0 0.0
        %1277 = vmatpush2.msra.mxu0 0.0
        %1278 = vmatprep.subr.mxu0 0.0
        %1279 = vmatpush2.msra.mxu0 0.0
        %1280 = vmatprep.subr.mxu0 0.0
        %1281 = vmatpush2.msra.mxu0 0.0
        %1282 = vmatprep.subr.mxu0 0.0
        %1283 = vmatpush2.msra.mxu0 0.0
        %1284 = vmatprep.subr.mxu0 0.0
        %1285 = vmatpush2.msra.mxu0 0.0
        %1286 = vmatprep.subr.mxu0 0.0
        %1287 = vmatpush2.msra.mxu0 0.0
        %1288 = vmatprep.subr.mxu0 0.0
        %1289 = vmatpush2.msra.mxu0 0.0
        %1290 = vmatprep.mubr.f32.mxu0 0.0
        %1291 = vmatmul.mubr.f32.gmra.mxu0 %v1224
        %v1292 = vpop.f32.mrf.mxu0
        %v1293 = vadd.f32 0.0, %v1292
        %v1294 = vpop.f32.mrf.mxu0
        %1295 = vdwg.mxu0
        %v1296 = vadd.f32 %v1145, %v1293
        %v1297 = vadd.f32 %v1296, %v602
        %v1299 = vsel %vm447, %v1297, 0
        %1301 = vmatprep.subr.mxu0 0.0
        %1302 = vmatpush1.msra.mxu0 0.0
        %1303 = vmatprep.subr.mxu0 0.0
        %1304 = vmatpush1.msra.mxu0 0.0
        %1305 = vmatprep.subr.mxu0 0.0
        %1306 = vmatpush1.msra.mxu0 0.0
        %1307 = vmatprep.subr.mxu0 0.0
        %1308 = vmatpush1.msra.mxu0 0.0
        %1309 = vmatprep.subr.mxu0 0.0
        %1310 = vmatpush1.msra.mxu0 0.0
        %1311 = vmatprep.subr.mxu0 0.0
        %1312 = vmatpush1.msra.mxu0 0.0
        %1313 = vmatprep.subr.mxu0 0.0
        %1314 = vmatpush1.msra.mxu0 0.0
        %1315 = vmatprep.subr.mxu0 0.0
        %1316 = vmatpush1.msra.mxu0 0.0
        %1317 = vmatprep.subr.mxu0 0.0
        %1318 = vmatpush1.msra.mxu0 0.0
        %1319 = vmatprep.subr.mxu0 0.0
        %1320 = vmatpush1.msra.mxu0 0.0
        %1321 = vmatprep.subr.mxu0 0.0
        %1322 = vmatpush1.msra.mxu0 0.0
        %1323 = vmatprep.subr.mxu0 0.0
        %1324 = vmatpush1.msra.mxu0 0.0
        %1325 = vmatprep.subr.mxu0 0.0
        %1326 = vmatpush1.msra.mxu0 %v355
        %1327 = vmatprep.subr.mxu0 0.0
        %1328 = vmatpush1.msra.mxu0 %v354
        %1329 = vmatprep.subr.mxu0 0.0
        %1330 = vmatpush1.msra.mxu0 %v353
        %1331 = vmatprep.subr.mxu0 0.0
        %1332 = vmatpush1.msra.mxu0 %v352
        %1333 = vmatprep.subr.mxu0 0.0
        %1334 = vmatpush2.msra.mxu0 0.0
        %1335 = vmatprep.subr.mxu0 0.0
        %1336 = vmatpush2.msra.mxu0 0.0
        %1337 = vmatprep.subr.mxu0 0.0
        %1338 = vmatpush2.msra.mxu0 0.0
        %1339 = vmatprep.subr.mxu0 0.0
        %1340 = vmatpush2.msra.mxu0 0.0
        %1341 = vmatprep.subr.mxu0 0.0
        %1342 = vmatpush2.msra.mxu0 0.0
        %1343 = vmatprep.subr.mxu0 0.0
        %1344 = vmatpush2.msra.mxu0 0.0
        %1345 = vmatprep.subr.mxu0 0.0
        %1346 = vmatpush2.msra.mxu0 0.0
        %1347 = vmatprep.subr.mxu0 0.0
        %1348 = vmatpush2.msra.mxu0 0.0
        %1349 = vmatprep.subr.mxu0 0.0
        %1350 = vmatpush2.msra.mxu0 0.0
        %1351 = vmatprep.subr.mxu0 0.0
        %1352 = vmatpush2.msra.mxu0 0.0
        %1353 = vmatprep.subr.mxu0 0.0
        %1354 = vmatpush2.msra.mxu0 0.0
        %1355 = vmatprep.subr.mxu0 0.0
        %1356 = vmatpush2.msra.mxu0 0.0
        %1357 = vmatprep.subr.mxu0 0.0
        %1358 = vmatpush2.msra.mxu0 0.0
        %1359 = vmatprep.subr.mxu0 0.0
        %1360 = vmatpush2.msra.mxu0 0.0
        %1361 = vmatprep.subr.mxu0 0.0
        %1362 = vmatpush2.msra.mxu0 0.0
        %1363 = vmatprep.subr.mxu0 0.0
        %1364 = vmatpush2.msra.mxu0 0.0
        %1365 = vmatprep.mubr.f32.mxu0 0.0
        %1366 = vmatmul.mubr.f32.gmra.mxu0 %v1299
        %v1367 = vpop.f32.mrf.mxu0
        %v1368 = vadd.f32 %v609, %v1367
        %v1369 = vpop.f32.mrf.mxu0
        %1370 = vdwg.mxu0
        %v1371 = vmax.f32 %v1368, 0.0
        %v1372 = vmul.f32 %v1371, 0.1
        %v1373 = vadd.f32 %v1297, %v1372
        %v1374 = vmax.f32 %v1373, 0.0
        %v1376 = vsel %vm447, %v1374, 0
        %1378 = vmatprep.subr.mxu0 0.0
        %1379 = vmatpush1.msra.mxu0 0.0
        %1380 = vmatprep.subr.mxu0 0.0
        %1381 = vmatpush1.msra.mxu0 0.0
        %1382 = vmatprep.subr.mxu0 0.0
        %1383 = vmatpush1.msra.mxu0 0.0
        %1384 = vmatprep.subr.mxu0 0.0
        %1385 = vmatpush1.msra.mxu0 0.0
        %1386 = vmatprep.subr.mxu0 0.0
        %1387 = vmatpush1.msra.mxu0 0.0
        %1388 = vmatprep.subr.mxu0 0.0
        %1389 = vmatpush1.msra.mxu0 0.0
        %1390 = vmatprep.subr.mxu0 0.0
        %1391 = vmatpush1.msra.mxu0 0.0
        %1392 = vmatprep.subr.mxu0 0.0
        %1393 = vmatpush1.msra.mxu0 0.0
        %1394 = vmatprep.subr.mxu0 0.0
        %1395 = vmatpush1.msra.mxu0 0.0
        %1396 = vmatprep.subr.mxu0 0.0
        %1397 = vmatpush1.msra.mxu0 0.0
        %1398 = vmatprep.subr.mxu0 0.0
        %1399 = vmatpush1.msra.mxu0 0.0
        %1400 = vmatprep.subr.mxu0 0.0
        %1401 = vmatpush1.msra.mxu0 0.0
        %1402 = vmatprep.subr.mxu0 0.0
        %1403 = vmatpush1.msra.mxu0 %v351
        %1404 = vmatprep.subr.mxu0 0.0
        %1405 = vmatpush1.msra.mxu0 %v350
        %1406 = vmatprep.subr.mxu0 0.0
        %1407 = vmatpush1.msra.mxu0 %v349
        %1408 = vmatprep.subr.mxu0 0.0
        %1409 = vmatpush1.msra.mxu0 %v348
        %1410 = vmatprep.subr.mxu0 0.0
        %1411 = vmatpush2.msra.mxu0 0.0
        %1412 = vmatprep.subr.mxu0 0.0
        %1413 = vmatpush2.msra.mxu0 0.0
        %1414 = vmatprep.subr.mxu0 0.0
        %1415 = vmatpush2.msra.mxu0 0.0
        %1416 = vmatprep.subr.mxu0 0.0
        %1417 = vmatpush2.msra.mxu0 0.0
        %1418 = vmatprep.subr.mxu0 0.0
        %1419 = vmatpush2.msra.mxu0 0.0
        %1420 = vmatprep.subr.mxu0 0.0
        %1421 = vmatpush2.msra.mxu0 0.0
        %1422 = vmatprep.subr.mxu0 0.0
        %1423 = vmatpush2.msra.mxu0 0.0
        %1424 = vmatprep.subr.mxu0 0.0
        %1425 = vmatpush2.msra.mxu0 0.0
        %1426 = vmatprep.subr.mxu0 0.0
        %1427 = vmatpush2.msra.mxu0 0.0
        %1428 = vmatprep.subr.mxu0 0.0
        %1429 = vmatpush2.msra.mxu0 0.0
        %1430 = vmatprep.subr.mxu0 0.0
        %1431 = vmatpush2.msra.mxu0 0.0
        %1432 = vmatprep.subr.mxu0 0.0
        %1433 = vmatpush2.msra.mxu0 0.0
        %1434 = vmatprep.subr.mxu0 0.0
        %1435 = vmatpush2.msra.mxu0 0.0
        %1436 = vmatprep.subr.mxu0 0.0
        %1437 = vmatpush2.msra.mxu0 0.0
        %1438 = vmatprep.subr.mxu0 0.0
        %1439 = vmatpush2.msra.mxu0 0.0
        %1440 = vmatprep.subr.mxu0 0.0
        %1441 = vmatpush2.msra.mxu0 0.0
        %1442 = vmatprep.mubr.f32.mxu0 0.0
        %1443 = vmatmul.mubr.f32.gmra.mxu0 %v1376
        %v1444 = vpop.f32.mrf.mxu0
        %v1445 = vadd.f32 %v445, %v1444
        %v1446 = vpop.f32.mrf.mxu0
        %1447 = vdwg.mxu0
        %v1448 = vsub.f32 %v345, %v1445
        %s1449 = scalar_lea.vmem %s336, 32 [#allocation4]
        %1450 = vst.msk [vmem:[%s1449] sm:$0xff] %vm366, %v1448
        %v1451 = vmul.f32 %v1448, 0.1
        %v1453 = vsel %vm366, %v1451, 0
        %1455 = vmatprep.subr.mxu0 0.0
        %1456 = vmatpush1.msra.mxu0 0.0
        %1457 = vmatprep.subr.mxu0 0.0
        %1458 = vmatpush1.msra.mxu0 0.0
        %1459 = vmatprep.subr.mxu0 0.0
        %1460 = vmatpush1.msra.mxu0 0.0
        %1461 = vmatprep.subr.mxu0 0.0
        %1462 = vmatpush1.msra.mxu0 0.0
        %1463 = vmatprep.subr.mxu0 0.0
        %1464 = vmatpush1.msra.mxu0 0.0
        %1465 = vmatprep.subr.mxu0 0.0
        %1466 = vmatpush1.msra.mxu0 0.0
        %1467 = vmatprep.subr.mxu0 0.0
        %1468 = vmatpush1.msra.mxu0 0.0
        %1469 = vmatprep.subr.mxu0 0.0
        %1470 = vmatpush1.msra.mxu0 0.0
        %1471 = vmatprep.subr.mxu0 0.0
        %1472 = vmatpush1.msra.mxu0 0.0
        %1473 = vmatprep.subr.mxu0 0.0
        %1474 = vmatpush1.msra.mxu0 0.0
        %1475 = vmatprep.subr.mxu0 0.0
        %1476 = vmatpush1.msra.mxu0 0.0
        %1477 = vmatprep.subr.mxu0 0.0
        %1478 = vmatpush1.msra.mxu0 0.0
        %1479 = vmatprep.subr.mxu0 0.0
        %1480 = vmatpush1.msra.mxu0 0.0
        %1481 = vmatprep.subr.mxu0 0.0
        %1482 = vmatpush1.msra.mxu0 0.0
        %1483 = vmatprep.subr.mxu0 0.0
        %1484 = vmatpush1.msra.mxu0 %v347
        %1485 = vmatprep.subr.mxu0 0.0
        %1486 = vmatpush1.msra.mxu0 %v346
        %1487 = vmatprep.subr.mxu0 0.0
        %1488 = vmatpush2.msra.mxu0 0.0
        %1489 = vmatprep.subr.mxu0 0.0
        %1490 = vmatpush2.msra.mxu0 0.0
        %1491 = vmatprep.subr.mxu0 0.0
        %1492 = vmatpush2.msra.mxu0 0.0
        %1493 = vmatprep.subr.mxu0 0.0
        %1494 = vmatpush2.msra.mxu0 0.0
        %1495 = vmatprep.subr.mxu0 0.0
        %1496 = vmatpush2.msra.mxu0 0.0
        %1497 = vmatprep.subr.mxu0 0.0
        %1498 = vmatpush2.msra.mxu0 0.0
        %1499 = vmatprep.subr.mxu0 0.0
        %1500 = vmatpush2.msra.mxu0 0.0
        %1501 = vmatprep.subr.mxu0 0.0
        %1502 = vmatpush2.msra.mxu0 0.0
        %1503 = vmatprep.subr.mxu0 0.0
        %1504 = vmatpush2.msra.mxu0 0.0
        %1505 = vmatprep.subr.mxu0 0.0
        %1506 = vmatpush2.msra.mxu0 0.0
        %1507 = vmatprep.subr.mxu0 0.0
        %1508 = vmatpush2.msra.mxu0 0.0
        %1509 = vmatprep.subr.mxu0 0.0
        %1510 = vmatpush2.msra.mxu0 0.0
        %1511 = vmatprep.subr.mxu0 0.0
        %1512 = vmatpush2.msra.mxu0 0.0
        %1513 = vmatprep.subr.mxu0 0.0
        %1514 = vmatpush2.msra.mxu0 0.0
        %1515 = vmatprep.subr.mxu0 0.0
        %1516 = vmatpush2.msra.mxu0 0.0
        %1517 = vmatprep.subr.mxu0 0.0
        %1518 = vmatpush2.msra.mxu0 0.0
        %1519 = vmatprep.mubr.f32.mxu0 0.0
        %1520 = vmatmul.mubr.f32.gmra.mxu0 %v1453
        %v1521 = vpop.f32.mrf.mxu0
        %v1522 = vadd.f32 0.0, %v1521
        %v1523 = vpop.f32.mrf.mxu0
        %1524 = vdwg.mxu0
        %v1525 = vadd.f32 %v1374, %v1522
        %v1526 = vadd.f32 %v1525, %v602
        %v1528 = vsel %vm447, %v1526, 0
        %1530 = vmatprep.subr.mxu0 0.0
        %1531 = vmatpush1.msra.mxu0 0.0
        %1532 = vmatprep.subr.mxu0 0.0
        %1533 = vmatpush1.msra.mxu0 0.0
        %1534 = vmatprep.subr.mxu0 0.0
        %1535 = vmatpush1.msra.mxu0 0.0
        %1536 = vmatprep.subr.mxu0 0.0
        %1537 = vmatpush1.msra.mxu0 0.0
        %1538 = vmatprep.subr.mxu0 0.0
        %1539 = vmatpush1.msra.mxu0 0.0
        %1540 = vmatprep.subr.mxu0 0.0
        %1541 = vmatpush1.msra.mxu0 0.0
        %1542 = vmatprep.subr.mxu0 0.0
        %1543 = vmatpush1.msra.mxu0 0.0
        %1544 = vmatprep.subr.mxu0 0.0
        %1545 = vmatpush1.msra.mxu0 0.0
        %1546 = vmatprep.subr.mxu0 0.0
        %1547 = vmatpush1.msra.mxu0 0.0
        %1548 = vmatprep.subr.mxu0 0.0
        %1549 = vmatpush1.msra.mxu0 0.0
        %1550 = vmatprep.subr.mxu0 0.0
        %1551 = vmatpush1.msra.mxu0 0.0
        %1552 = vmatprep.subr.mxu0 0.0
        %1553 = vmatpush1.msra.mxu0 0.0
        %1554 = vmatprep.subr.mxu0 0.0
        %1555 = vmatpush1.msra.mxu0 %v355
        %1556 = vmatprep.subr.mxu0 0.0
        %1557 = vmatpush1.msra.mxu0 %v354
        %1558 = vmatprep.subr.mxu0 0.0
        %1559 = vmatpush1.msra.mxu0 %v353
        %1560 = vmatprep.subr.mxu0 0.0
        %1561 = vmatpush1.msra.mxu0 %v352
        %1562 = vmatprep.subr.mxu0 0.0
        %1563 = vmatpush2.msra.mxu0 0.0
        %1564 = vmatprep.subr.mxu0 0.0
        %1565 = vmatpush2.msra.mxu0 0.0
        %1566 = vmatprep.subr.mxu0 0.0
        %1567 = vmatpush2.msra.mxu0 0.0
        %1568 = vmatprep.subr.mxu0 0.0
        %1569 = vmatpush2.msra.mxu0 0.0
        %1570 = vmatprep.subr.mxu0 0.0
        %1571 = vmatpush2.msra.mxu0 0.0
        %1572 = vmatprep.subr.mxu0 0.0
        %1573 = vmatpush2.msra.mxu0 0.0
        %1574 = vmatprep.subr.mxu0 0.0
        %1575 = vmatpush2.msra.mxu0 0.0
        %1576 = vmatprep.subr.mxu0 0.0
        %1577 = vmatpush2.msra.mxu0 0.0
        %1578 = vmatprep.subr.mxu0 0.0
        %1579 = vmatpush2.msra.mxu0 0.0
        %1580 = vmatprep.subr.mxu0 0.0
        %1581 = vmatpush2.msra.mxu0 0.0
        %1582 = vmatprep.subr.mxu0 0.0
        %1583 = vmatpush2.msra.mxu0 0.0
        %1584 = vmatprep.subr.mxu0 0.0
        %1585 = vmatpush2.msra.mxu0 0.0
        %1586 = vmatprep.subr.mxu0 0.0
        %1587 = vmatpush2.msra.mxu0 0.0
        %1588 = vmatprep.subr.mxu0 0.0
        %1589 = vmatpush2.msra.mxu0 0.0
        %1590 = vmatprep.subr.mxu0 0.0
        %1591 = vmatpush2.msra.mxu0 0.0
        %1592 = vmatprep.subr.mxu0 0.0
        %1593 = vmatpush2.msra.mxu0 0.0
        %1594 = vmatprep.mubr.f32.mxu0 0.0
        %1595 = vmatmul.mubr.f32.gmra.mxu0 %v1528
        %v1596 = vpop.f32.mrf.mxu0
        %v1597 = vadd.f32 %v609, %v1596
        %v1598 = vpop.f32.mrf.mxu0
        %1599 = vdwg.mxu0
        %v1600 = vmax.f32 %v1597, 0.0
        %v1601 = vmul.f32 %v1600, 0.1
        %v1602 = vadd.f32 %v1526, %v1601
        %v1603 = vmax.f32 %v1602, 0.0
        %v1605 = vsel %vm447, %v1603, 0
        %1607 = vmatprep.subr.mxu0 0.0
        %1608 = vmatpush1.msra.mxu0 0.0
        %1609 = vmatprep.subr.mxu0 0.0
        %1610 = vmatpush1.msra.mxu0 0.0
        %1611 = vmatprep.subr.mxu0 0.0
        %1612 = vmatpush1.msra.mxu0 0.0
        %1613 = vmatprep.subr.mxu0 0.0
        %1614 = vmatpush1.msra.mxu0 0.0
        %1615 = vmatprep.subr.mxu0 0.0
        %1616 = vmatpush1.msra.mxu0 0.0
        %1617 = vmatprep.subr.mxu0 0.0
        %1618 = vmatpush1.msra.mxu0 0.0
        %1619 = vmatprep.subr.mxu0 0.0
        %1620 = vmatpush1.msra.mxu0 0.0
        %1621 = vmatprep.subr.mxu0 0.0
        %1622 = vmatpush1.msra.mxu0 0.0
        %1623 = vmatprep.subr.mxu0 0.0
        %1624 = vmatpush1.msra.mxu0 0.0
        %1625 = vmatprep.subr.mxu0 0.0
        %1626 = vmatpush1.msra.mxu0 0.0
        %1627 = vmatprep.subr.mxu0 0.0
        %1628 = vmatpush1.msra.mxu0 0.0
        %1629 = vmatprep.subr.mxu0 0.0
        %1630 = vmatpush1.msra.mxu0 0.0
        %1631 = vmatprep.subr.mxu0 0.0
        %1632 = vmatpush1.msra.mxu0 %v351
        %1633 = vmatprep.subr.mxu0 0.0
        %1634 = vmatpush1.msra.mxu0 %v350
        %1635 = vmatprep.subr.mxu0 0.0
        %1636 = vmatpush1.msra.mxu0 %v349
        %1637 = vmatprep.subr.mxu0 0.0
        %1638 = vmatpush1.msra.mxu0 %v348
        %1639 = vmatprep.subr.mxu0 0.0
        %1640 = vmatpush2.msra.mxu0 0.0
        %1641 = vmatprep.subr.mxu0 0.0
        %1642 = vmatpush2.msra.mxu0 0.0
        %1643 = vmatprep.subr.mxu0 0.0
        %1644 = vmatpush2.msra.mxu0 0.0
        %1645 = vmatprep.subr.mxu0 0.0
        %1646 = vmatpush2.msra.mxu0 0.0
        %1647 = vmatprep.subr.mxu0 0.0
        %1648 = vmatpush2.msra.mxu0 0.0
        %1649 = vmatprep.subr.mxu0 0.0
        %1650 = vmatpush2.msra.mxu0 0.0
        %1651 = vmatprep.subr.mxu0 0.0
        %1652 = vmatpush2.msra.mxu0 0.0
        %1653 = vmatprep.subr.mxu0 0.0
        %1654 = vmatpush2.msra.mxu0 0.0
        %1655 = vmatprep.subr.mxu0 0.0
        %1656 = vmatpush2.msra.mxu0 0.0
        %1657 = vmatprep.subr.mxu0 0.0
        %1658 = vmatpush2.msra.mxu0 0.0
        %1659 = vmatprep.subr.mxu0 0.0
        %1660 = vmatpush2.msra.mxu0 0.0
        %1661 = vmatprep.subr.mxu0 0.0
        %1662 = vmatpush2.msra.mxu0 0.0
        %1663 = vmatprep.subr.mxu0 0.0
        %1664 = vmatpush2.msra.mxu0 0.0
        %1665 = vmatprep.subr.mxu0 0.0
        %1666 = vmatpush2.msra.mxu0 0.0
        %1667 = vmatprep.subr.mxu0 0.0
        %1668 = vmatpush2.msra.mxu0 0.0
        %1669 = vmatprep.subr.mxu0 0.0
        %1670 = vmatpush2.msra.mxu0 0.0
        %1671 = vmatprep.mubr.f32.mxu0 0.0
        %1672 = vmatmul.mubr.f32.gmra.mxu0 %v1605
        %v1673 = vpop.f32.mrf.mxu0
        %v1674 = vadd.f32 %v445, %v1673
        %v1675 = vpop.f32.mrf.mxu0
        %1676 = vdwg.mxu0
        %v1677 = vsub.f32 %v345, %v1674
        %s1678 = scalar_lea.vmem %s336, 40 [#allocation4]
        %1679 = vst.msk [vmem:[%s1678] sm:$0xff] %vm366, %v1677
        %v1680 = vmul.f32 %v1677, 0.1
        %v1682 = vsel %vm366, %v1680, 0
        %1684 = vmatprep.subr.mxu0 0.0
        %1685 = vmatpush1.msra.mxu0 0.0
        %1686 = vmatprep.subr.mxu0 0.0
        %1687 = vmatpush1.msra.mxu0 0.0
        %1688 = vmatprep.subr.mxu0 0.0
        %1689 = vmatpush1.msra.mxu0 0.0
        %1690 = vmatprep.subr.mxu0 0.0
        %1691 = vmatpush1.msra.mxu0 0.0
        %1692 = vmatprep.subr.mxu0 0.0
        %1693 = vmatpush1.msra.mxu0 0.0
        %1694 = vmatprep.subr.mxu0 0.0
        %1695 = vmatpush1.msra.mxu0 0.0
        %1696 = vmatprep.subr.mxu0 0.0
        %1697 = vmatpush1.msra.mxu0 0.0
        %1698 = vmatprep.subr.mxu0 0.0
        %1699 = vmatpush1.msra.mxu0 0.0
        %1700 = vmatprep.subr.mxu0 0.0
        %1701 = vmatpush1.msra.mxu0 0.0
        %1702 = vmatprep.subr.mxu0 0.0
        %1703 = vmatpush1.msra.mxu0 0.0
        %1704 = vmatprep.subr.mxu0 0.0
        %1705 = vmatpush1.msra.mxu0 0.0
        %1706 = vmatprep.subr.mxu0 0.0
        %1707 = vmatpush1.msra.mxu0 0.0
        %1708 = vmatprep.subr.mxu0 0.0
        %1709 = vmatpush1.msra.mxu0 0.0
        %1710 = vmatprep.subr.mxu0 0.0
        %1711 = vmatpush1.msra.mxu0 0.0
        %1712 = vmatprep.subr.mxu0 0.0
        %1713 = vmatpush1.msra.mxu0 %v347
        %1714 = vmatprep.subr.mxu0 0.0
        %1715 = vmatpush1.msra.mxu0 %v346
        %1716 = vmatprep.subr.mxu0 0.0
        %1717 = vmatpush2.msra.mxu0 0.0
        %1718 = vmatprep.subr.mxu0 0.0
        %1719 = vmatpush2.msra.mxu0 0.0
        %1720 = vmatprep.subr.mxu0 0.0
        %1721 = vmatpush2.msra.mxu0 0.0
        %1722 = vmatprep.subr.mxu0 0.0
        %1723 = vmatpush2.msra.mxu0 0.0
        %1724 = vmatprep.subr.mxu0 0.0
        %1725 = vmatpush2.msra.mxu0 0.0
        %1726 = vmatprep.subr.mxu0 0.0
        %1727 = vmatpush2.msra.mxu0 0.0
        %1728 = vmatprep.subr.mxu0 0.0
        %1729 = vmatpush2.msra.mxu0 0.0
        %1730 = vmatprep.subr.mxu0 0.0
        %1731 = vmatpush2.msra.mxu0 0.0
        %1732 = vmatprep.subr.mxu0 0.0
        %1733 = vmatpush2.msra.mxu0 0.0
        %1734 = vmatprep.subr.mxu0 0.0
        %1735 = vmatpush2.msra.mxu0 0.0
        %1736 = vmatprep.subr.mxu0 0.0
        %1737 = vmatpush2.msra.mxu0 0.0
        %1738 = vmatprep.subr.mxu0 0.0
        %1739 = vmatpush2.msra.mxu0 0.0
        %1740 = vmatprep.subr.mxu0 0.0
        %1741 = vmatpush2.msra.mxu0 0.0
        %1742 = vmatprep.subr.mxu0 0.0
        %1743 = vmatpush2.msra.mxu0 0.0
        %1744 = vmatprep.subr.mxu0 0.0
        %1745 = vmatpush2.msra.mxu0 0.0
        %1746 = vmatprep.subr.mxu0 0.0
        %1747 = vmatpush2.msra.mxu0 0.0
        %1748 = vmatprep.mubr.f32.mxu0 0.0
        %1749 = vmatmul.mubr.f32.gmra.mxu0 %v1682
        %v1750 = vpop.f32.mrf.mxu0
        %v1751 = vadd.f32 0.0, %v1750
        %v1752 = vpop.f32.mrf.mxu0
        %1753 = vdwg.mxu0
        %v1754 = vadd.f32 %v1603, %v1751
        %v1755 = vadd.f32 %v1754, %v602
        %v1757 = vsel %vm447, %v1755, 0
        %1759 = vmatprep.subr.mxu0 0.0
        %1760 = vmatpush1.msra.mxu0 0.0
        %1761 = vmatprep.subr.mxu0 0.0
        %1762 = vmatpush1.msra.mxu0 0.0
        %1763 = vmatprep.subr.mxu0 0.0
        %1764 = vmatpush1.msra.mxu0 0.0
        %1765 = vmatprep.subr.mxu0 0.0
        %1766 = vmatpush1.msra.mxu0 0.0
        %1767 = vmatprep.subr.mxu0 0.0
        %1768 = vmatpush1.msra.mxu0 0.0
        %1769 = vmatprep.subr.mxu0 0.0
        %1770 = vmatpush1.msra.mxu0 0.0
        %1771 = vmatprep.subr.mxu0 0.0
        %1772 = vmatpush1.msra.mxu0 0.0
        %1773 = vmatprep.subr.mxu0 0.0
        %1774 = vmatpush1.msra.mxu0 0.0
        %1775 = vmatprep.subr.mxu0 0.0
        %1776 = vmatpush1.msra.mxu0 0.0
        %1777 = vmatprep.subr.mxu0 0.0
        %1778 = vmatpush1.msra.mxu0 0.0
        %1779 = vmatprep.subr.mxu0 0.0
        %1780 = vmatpush1.msra.mxu0 0.0
        %1781 = vmatprep.subr.mxu0 0.0
        %1782 = vmatpush1.msra.mxu0 0.0
        %1783 = vmatprep.subr.mxu0 0.0
        %1784 = vmatpush1.msra.mxu0 %v355
        %1785 = vmatprep.subr.mxu0 0.0
        %1786 = vmatpush1.msra.mxu0 %v354
        %1787 = vmatprep.subr.mxu0 0.0
        %1788 = vmatpush1.msra.mxu0 %v353
        %1789 = vmatprep.subr.mxu0 0.0
        %1790 = vmatpush1.msra.mxu0 %v352
        %1791 = vmatprep.subr.mxu0 0.0
        %1792 = vmatpush2.msra.mxu0 0.0
        %1793 = vmatprep.subr.mxu0 0.0
        %1794 = vmatpush2.msra.mxu0 0.0
        %1795 = vmatprep.subr.mxu0 0.0
        %1796 = vmatpush2.msra.mxu0 0.0
        %1797 = vmatprep.subr.mxu0 0.0
        %1798 = vmatpush2.msra.mxu0 0.0
        %1799 = vmatprep.subr.mxu0 0.0
        %1800 = vmatpush2.msra.mxu0 0.0
        %1801 = vmatprep.subr.mxu0 0.0
        %1802 = vmatpush2.msra.mxu0 0.0
        %1803 = vmatprep.subr.mxu0 0.0
        %1804 = vmatpush2.msra.mxu0 0.0
        %1805 = vmatprep.subr.mxu0 0.0
        %1806 = vmatpush2.msra.mxu0 0.0
        %1807 = vmatprep.subr.mxu0 0.0
        %1808 = vmatpush2.msra.mxu0 0.0
        %1809 = vmatprep.subr.mxu0 0.0
        %1810 = vmatpush2.msra.mxu0 0.0
        %1811 = vmatprep.subr.mxu0 0.0
        %1812 = vmatpush2.msra.mxu0 0.0
        %1813 = vmatprep.subr.mxu0 0.0
        %1814 = vmatpush2.msra.mxu0 0.0
        %1815 = vmatprep.subr.mxu0 0.0
        %1816 = vmatpush2.msra.mxu0 0.0
        %1817 = vmatprep.subr.mxu0 0.0
        %1818 = vmatpush2.msra.mxu0 0.0
        %1819 = vmatprep.subr.mxu0 0.0
        %1820 = vmatpush2.msra.mxu0 0.0
        %1821 = vmatprep.subr.mxu0 0.0
        %1822 = vmatpush2.msra.mxu0 0.0
        %1823 = vmatprep.mubr.f32.mxu0 0.0
        %1824 = vmatmul.mubr.f32.gmra.mxu0 %v1757
        %v1825 = vpop.f32.mrf.mxu0
        %v1826 = vadd.f32 %v609, %v1825
        %v1827 = vpop.f32.mrf.mxu0
        %1828 = vdwg.mxu0
        %v1829 = vmax.f32 %v1826, 0.0
        %v1830 = vmul.f32 %v1829, 0.1
        %v1831 = vadd.f32 %v1755, %v1830
        %v1832 = vmax.f32 %v1831, 0.0
        %v1834 = vsel %vm447, %v1832, 0
        %1836 = vmatprep.subr.mxu0 0.0
        %1837 = vmatpush1.msra.mxu0 0.0
        %1838 = vmatprep.subr.mxu0 0.0
        %1839 = vmatpush1.msra.mxu0 0.0
        %1840 = vmatprep.subr.mxu0 0.0
        %1841 = vmatpush1.msra.mxu0 0.0
        %1842 = vmatprep.subr.mxu0 0.0
        %1843 = vmatpush1.msra.mxu0 0.0
        %1844 = vmatprep.subr.mxu0 0.0
        %1845 = vmatpush1.msra.mxu0 0.0
        %1846 = vmatprep.subr.mxu0 0.0
        %1847 = vmatpush1.msra.mxu0 0.0
        %1848 = vmatprep.subr.mxu0 0.0
        %1849 = vmatpush1.msra.mxu0 0.0
        %1850 = vmatprep.subr.mxu0 0.0
        %1851 = vmatpush1.msra.mxu0 0.0
        %1852 = vmatprep.subr.mxu0 0.0
        %1853 = vmatpush1.msra.mxu0 0.0
        %1854 = vmatprep.subr.mxu0 0.0
        %1855 = vmatpush1.msra.mxu0 0.0
        %1856 = vmatprep.subr.mxu0 0.0
        %1857 = vmatpush1.msra.mxu0 0.0
        %1858 = vmatprep.subr.mxu0 0.0
        %1859 = vmatpush1.msra.mxu0 0.0
        %1860 = vmatprep.subr.mxu0 0.0
        %1861 = vmatpush1.msra.mxu0 %v351
        %1862 = vmatprep.subr.mxu0 0.0
        %1863 = vmatpush1.msra.mxu0 %v350
        %1864 = vmatprep.subr.mxu0 0.0
        %1865 = vmatpush1.msra.mxu0 %v349
        %1866 = vmatprep.subr.mxu0 0.0
        %1867 = vmatpush1.msra.mxu0 %v348
        %1868 = vmatprep.subr.mxu0 0.0
        %1869 = vmatpush2.msra.mxu0 0.0
        %1870 = vmatprep.subr.mxu0 0.0
        %1871 = vmatpush2.msra.mxu0 0.0
        %1872 = vmatprep.subr.mxu0 0.0
        %1873 = vmatpush2.msra.mxu0 0.0
        %1874 = vmatprep.subr.mxu0 0.0
        %1875 = vmatpush2.msra.mxu0 0.0
        %1876 = vmatprep.subr.mxu0 0.0
        %1877 = vmatpush2.msra.mxu0 0.0
        %1878 = vmatprep.subr.mxu0 0.0
        %1879 = vmatpush2.msra.mxu0 0.0
        %1880 = vmatprep.subr.mxu0 0.0
        %1881 = vmatpush2.msra.mxu0 0.0
        %1882 = vmatprep.subr.mxu0 0.0
        %1883 = vmatpush2.msra.mxu0 0.0
        %1884 = vmatprep.subr.mxu0 0.0
        %1885 = vmatpush2.msra.mxu0 0.0
        %1886 = vmatprep.subr.mxu0 0.0
        %1887 = vmatpush2.msra.mxu0 0.0
        %1888 = vmatprep.subr.mxu0 0.0
        %1889 = vmatpush2.msra.mxu0 0.0
        %1890 = vmatprep.subr.mxu0 0.0
        %1891 = vmatpush2.msra.mxu0 0.0
        %1892 = vmatprep.subr.mxu0 0.0
        %1893 = vmatpush2.msra.mxu0 0.0
        %1894 = vmatprep.subr.mxu0 0.0
        %1895 = vmatpush2.msra.mxu0 0.0
        %1896 = vmatprep.subr.mxu0 0.0
        %1897 = vmatpush2.msra.mxu0 0.0
        %1898 = vmatprep.subr.mxu0 0.0
        %1899 = vmatpush2.msra.mxu0 0.0
        %1900 = vmatprep.mubr.f32.mxu0 0.0
        %1901 = vmatmul.mubr.f32.gmra.mxu0 %v1834
        %v1902 = vpop.f32.mrf.mxu0
        %v1903 = vadd.f32 %v445, %v1902
        %v1904 = vpop.f32.mrf.mxu0
        %1905 = vdwg.mxu0
        %v1906 = vsub.f32 %v345, %v1903
        %s1907 = scalar_lea.vmem %s336, 48 [#allocation4]
        %1908 = vst.msk [vmem:[%s1907] sm:$0xff] %vm366, %v1906
        %v1909 = vmul.f32 %v1906, 0.1
        %v1911 = vsel %vm366, %v1909, 0
        %1913 = vmatprep.subr.mxu0 0.0
        %1914 = vmatpush1.msra.mxu0 0.0
        %1915 = vmatprep.subr.mxu0 0.0
        %1916 = vmatpush1.msra.mxu0 0.0
        %1917 = vmatprep.subr.mxu0 0.0
        %1918 = vmatpush1.msra.mxu0 0.0
        %1919 = vmatprep.subr.mxu0 0.0
        %1920 = vmatpush1.msra.mxu0 0.0
        %1921 = vmatprep.subr.mxu0 0.0
        %1922 = vmatpush1.msra.mxu0 0.0
        %1923 = vmatprep.subr.mxu0 0.0
        %1924 = vmatpush1.msra.mxu0 0.0
        %1925 = vmatprep.subr.mxu0 0.0
        %1926 = vmatpush1.msra.mxu0 0.0
        %1927 = vmatprep.subr.mxu0 0.0
        %1928 = vmatpush1.msra.mxu0 0.0
        %1929 = vmatprep.subr.mxu0 0.0
        %1930 = vmatpush1.msra.mxu0 0.0
        %1931 = vmatprep.subr.mxu0 0.0
        %1932 = vmatpush1.msra.mxu0 0.0
        %1933 = vmatprep.subr.mxu0 0.0
        %1934 = vmatpush1.msra.mxu0 0.0
        %1935 = vmatprep.subr.mxu0 0.0
        %1936 = vmatpush1.msra.mxu0 0.0
        %1937 = vmatprep.subr.mxu0 0.0
        %1938 = vmatpush1.msra.mxu0 0.0
        %1939 = vmatprep.subr.mxu0 0.0
        %1940 = vmatpush1.msra.mxu0 0.0
        %1941 = vmatprep.subr.mxu0 0.0
        %1942 = vmatpush1.msra.mxu0 %v347
        %1943 = vmatprep.subr.mxu0 0.0
        %1944 = vmatpush1.msra.mxu0 %v346
        %1945 = vmatprep.subr.mxu0 0.0
        %1946 = vmatpush2.msra.mxu0 0.0
        %1947 = vmatprep.subr.mxu0 0.0
        %1948 = vmatpush2.msra.mxu0 0.0
        %1949 = vmatprep.subr.mxu0 0.0
        %1950 = vmatpush2.msra.mxu0 0.0
        %1951 = vmatprep.subr.mxu0 0.0
        %1952 = vmatpush2.msra.mxu0 0.0
        %1953 = vmatprep.subr.mxu0 0.0
        %1954 = vmatpush2.msra.mxu0 0.0
        %1955 = vmatprep.subr.mxu0 0.0
        %1956 = vmatpush2.msra.mxu0 0.0
        %1957 = vmatprep.subr.mxu0 0.0
        %1958 = vmatpush2.msra.mxu0 0.0
        %1959 = vmatprep.subr.mxu0 0.0
        %1960 = vmatpush2.msra.mxu0 0.0
        %1961 = vmatprep.subr.mxu0 0.0
        %1962 = vmatpush2.msra.mxu0 0.0
        %1963 = vmatprep.subr.mxu0 0.0
        %1964 = vmatpush2.msra.mxu0 0.0
        %1965 = vmatprep.subr.mxu0 0.0
        %1966 = vmatpush2.msra.mxu0 0.0
        %1967 = vmatprep.subr.mxu0 0.0
        %1968 = vmatpush2.msra.mxu0 0.0
        %1969 = vmatprep.subr.mxu0 0.0
        %1970 = vmatpush2.msra.mxu0 0.0
        %1971 = vmatprep.subr.mxu0 0.0
        %1972 = vmatpush2.msra.mxu0 0.0
        %1973 = vmatprep.subr.mxu0 0.0
        %1974 = vmatpush2.msra.mxu0 0.0
        %1975 = vmatprep.subr.mxu0 0.0
        %1976 = vmatpush2.msra.mxu0 0.0
        %1977 = vmatprep.mubr.f32.mxu0 0.0
        %1978 = vmatmul.mubr.f32.gmra.mxu0 %v1911
        %v1979 = vpop.f32.mrf.mxu0
        %v1980 = vadd.f32 0.0, %v1979
        %v1981 = vpop.f32.mrf.mxu0
        %1982 = vdwg.mxu0
        %v1983 = vadd.f32 %v1832, %v1980
        %v1984 = vadd.f32 %v1983, %v602
        %v1986 = vsel %vm447, %v1984, 0
        %1988 = vmatprep.subr.mxu0 0.0
        %1989 = vmatpush1.msra.mxu0 0.0
        %1990 = vmatprep.subr.mxu0 0.0
        %1991 = vmatpush1.msra.mxu0 0.0
        %1992 = vmatprep.subr.mxu0 0.0
        %1993 = vmatpush1.msra.mxu0 0.0
        %1994 = vmatprep.subr.mxu0 0.0
        %1995 = vmatpush1.msra.mxu0 0.0
        %1996 = vmatprep.subr.mxu0 0.0
        %1997 = vmatpush1.msra.mxu0 0.0
        %1998 = vmatprep.subr.mxu0 0.0
        %1999 = vmatpush1.msra.mxu0 0.0
        %2000 = vmatprep.subr.mxu0 0.0
        %2001 = vmatpush1.msra.mxu0 0.0
        %2002 = vmatprep.subr.mxu0 0.0
        %2003 = vmatpush1.msra.mxu0 0.0
        %2004 = vmatprep.subr.mxu0 0.0
        %2005 = vmatpush1.msra.mxu0 0.0
        %2006 = vmatprep.subr.mxu0 0.0
        %2007 = vmatpush1.msra.mxu0 0.0
        %2008 = vmatprep.subr.mxu0 0.0
        %2009 = vmatpush1.msra.mxu0 0.0
        %2010 = vmatprep.subr.mxu0 0.0
        %2011 = vmatpush1.msra.mxu0 0.0
        %2012 = vmatprep.subr.mxu0 0.0
        %2013 = vmatpush1.msra.mxu0 %v355
        %2014 = vmatprep.subr.mxu0 0.0
        %2015 = vmatpush1.msra.mxu0 %v354
        %2016 = vmatprep.subr.mxu0 0.0
        %2017 = vmatpush1.msra.mxu0 %v353
        %2018 = vmatprep.subr.mxu0 0.0
        %2019 = vmatpush1.msra.mxu0 %v352
        %2020 = vmatprep.subr.mxu0 0.0
        %2021 = vmatpush2.msra.mxu0 0.0
        %2022 = vmatprep.subr.mxu0 0.0
        %2023 = vmatpush2.msra.mxu0 0.0
        %2024 = vmatprep.subr.mxu0 0.0
        %2025 = vmatpush2.msra.mxu0 0.0
        %2026 = vmatprep.subr.mxu0 0.0
        %2027 = vmatpush2.msra.mxu0 0.0
        %2028 = vmatprep.subr.mxu0 0.0
        %2029 = vmatpush2.msra.mxu0 0.0
        %2030 = vmatprep.subr.mxu0 0.0
        %2031 = vmatpush2.msra.mxu0 0.0
        %2032 = vmatprep.subr.mxu0 0.0
        %2033 = vmatpush2.msra.mxu0 0.0
        %2034 = vmatprep.subr.mxu0 0.0
        %2035 = vmatpush2.msra.mxu0 0.0
        %2036 = vmatprep.subr.mxu0 0.0
        %2037 = vmatpush2.msra.mxu0 0.0
        %2038 = vmatprep.subr.mxu0 0.0
        %2039 = vmatpush2.msra.mxu0 0.0
        %2040 = vmatprep.subr.mxu0 0.0
        %2041 = vmatpush2.msra.mxu0 0.0
        %2042 = vmatprep.subr.mxu0 0.0
        %2043 = vmatpush2.msra.mxu0 0.0
        %2044 = vmatprep.subr.mxu0 0.0
        %2045 = vmatpush2.msra.mxu0 0.0
        %2046 = vmatprep.subr.mxu0 0.0
        %2047 = vmatpush2.msra.mxu0 0.0
        %2048 = vmatprep.subr.mxu0 0.0
        %2049 = vmatpush2.msra.mxu0 0.0
        %2050 = vmatprep.subr.mxu0 0.0
        %2051 = vmatpush2.msra.mxu0 0.0
        %2052 = vmatprep.mubr.f32.mxu0 0.0
        %2053 = vmatmul.mubr.f32.gmra.mxu0 %v1986
        %v2054 = vpop.f32.mrf.mxu0
        %v2055 = vadd.f32 %v609, %v2054
        %v2056 = vpop.f32.mrf.mxu0
        %2057 = vdwg.mxu0
        %v2058 = vmax.f32 %v2055, 0.0
        %v2059 = vmul.f32 %v2058, 0.1
        %v2060 = vadd.f32 %v1984, %v2059
        %v2061 = vmax.f32 %v2060, 0.0
        %v2063 = vsel %vm447, %v2061, 0
        %2065 = vmatprep.subr.mxu0 0.0
        %2066 = vmatpush1.msra.mxu0 0.0
        %2067 = vmatprep.subr.mxu0 0.0
        %2068 = vmatpush1.msra.mxu0 0.0
        %2069 = vmatprep.subr.mxu0 0.0
        %2070 = vmatpush1.msra.mxu0 0.0
        %2071 = vmatprep.subr.mxu0 0.0
        %2072 = vmatpush1.msra.mxu0 0.0
        %2073 = vmatprep.subr.mxu0 0.0
        %2074 = vmatpush1.msra.mxu0 0.0
        %2075 = vmatprep.subr.mxu0 0.0
        %2076 = vmatpush1.msra.mxu0 0.0
        %2077 = vmatprep.subr.mxu0 0.0
        %2078 = vmatpush1.msra.mxu0 0.0
        %2079 = vmatprep.subr.mxu0 0.0
        %2080 = vmatpush1.msra.mxu0 0.0
        %2081 = vmatprep.subr.mxu0 0.0
        %2082 = vmatpush1.msra.mxu0 0.0
        %2083 = vmatprep.subr.mxu0 0.0
        %2084 = vmatpush1.msra.mxu0 0.0
        %2085 = vmatprep.subr.mxu0 0.0
        %2086 = vmatpush1.msra.mxu0 0.0
        %2087 = vmatprep.subr.mxu0 0.0
        %2088 = vmatpush1.msra.mxu0 0.0
        %2089 = vmatprep.subr.mxu0 0.0
        %2090 = vmatpush1.msra.mxu0 %v351
        %2091 = vmatprep.subr.mxu0 0.0
        %2092 = vmatpush1.msra.mxu0 %v350
        %2093 = vmatprep.subr.mxu0 0.0
        %2094 = vmatpush1.msra.mxu0 %v349
        %2095 = vmatprep.subr.mxu0 0.0
        %2096 = vmatpush1.msra.mxu0 %v348
        %2097 = vmatprep.subr.mxu0 0.0
        %2098 = vmatpush2.msra.mxu0 0.0
        %2099 = vmatprep.subr.mxu0 0.0
        %2100 = vmatpush2.msra.mxu0 0.0
        %2101 = vmatprep.subr.mxu0 0.0
        %2102 = vmatpush2.msra.mxu0 0.0
        %2103 = vmatprep.subr.mxu0 0.0
        %2104 = vmatpush2.msra.mxu0 0.0
        %2105 = vmatprep.subr.mxu0 0.0
        %2106 = vmatpush2.msra.mxu0 0.0
        %2107 = vmatprep.subr.mxu0 0.0
        %2108 = vmatpush2.msra.mxu0 0.0
        %2109 = vmatprep.subr.mxu0 0.0
        %2110 = vmatpush2.msra.mxu0 0.0
        %2111 = vmatprep.subr.mxu0 0.0
        %2112 = vmatpush2.msra.mxu0 0.0
        %2113 = vmatprep.subr.mxu0 0.0
        %2114 = vmatpush2.msra.mxu0 0.0
        %2115 = vmatprep.subr.mxu0 0.0
        %2116 = vmatpush2.msra.mxu0 0.0
        %2117 = vmatprep.subr.mxu0 0.0
        %2118 = vmatpush2.msra.mxu0 0.0
        %2119 = vmatprep.subr.mxu0 0.0
        %2120 = vmatpush2.msra.mxu0 0.0
        %2121 = vmatprep.subr.mxu0 0.0
        %2122 = vmatpush2.msra.mxu0 0.0
        %2123 = vmatprep.subr.mxu0 0.0
        %2124 = vmatpush2.msra.mxu0 0.0
        %2125 = vmatprep.subr.mxu0 0.0
        %2126 = vmatpush2.msra.mxu0 0.0
        %2127 = vmatprep.subr.mxu0 0.0
        %2128 = vmatpush2.msra.mxu0 0.0
        %2129 = vmatprep.mubr.f32.mxu0 0.0
        %2130 = vmatmul.mubr.f32.gmra.mxu0 %v2063
        %v2131 = vpop.f32.mrf.mxu0
        %v2132 = vadd.f32 %v445, %v2131
        %v2133 = vpop.f32.mrf.mxu0
        %2134 = vdwg.mxu0
        %v2135 = vsub.f32 %v345, %v2132
        %s2136 = scalar_lea.vmem %s336, 56 [#allocation4]
        %2137 = vst.msk [vmem:[%s2136] sm:$0xff] %vm366, %v2135
        %v2138 = vmul.f32 %v2135, 0.1
        %v2140 = vsel %vm366, %v2138, 0
        %2142 = vmatprep.subr.mxu0 0.0
        %2143 = vmatpush1.msra.mxu0 0.0
        %2144 = vmatprep.subr.mxu0 0.0
        %2145 = vmatpush1.msra.mxu0 0.0
        %2146 = vmatprep.subr.mxu0 0.0
        %2147 = vmatpush1.msra.mxu0 0.0
        %2148 = vmatprep.subr.mxu0 0.0
        %2149 = vmatpush1.msra.mxu0 0.0
        %2150 = vmatprep.subr.mxu0 0.0
        %2151 = vmatpush1.msra.mxu0 0.0
        %2152 = vmatprep.subr.mxu0 0.0
        %2153 = vmatpush1.msra.mxu0 0.0
        %2154 = vmatprep.subr.mxu0 0.0
        %2155 = vmatpush1.msra.mxu0 0.0
        %2156 = vmatprep.subr.mxu0 0.0
        %2157 = vmatpush1.msra.mxu0 0.0
        %2158 = vmatprep.subr.mxu0 0.0
        %2159 = vmatpush1.msra.mxu0 0.0
        %2160 = vmatprep.subr.mxu0 0.0
        %2161 = vmatpush1.msra.mxu0 0.0
        %2162 = vmatprep.subr.mxu0 0.0
        %2163 = vmatpush1.msra.mxu0 0.0
        %2164 = vmatprep.subr.mxu0 0.0
        %2165 = vmatpush1.msra.mxu0 0.0
        %2166 = vmatprep.subr.mxu0 0.0
        %2167 = vmatpush1.msra.mxu0 0.0
        %2168 = vmatprep.subr.mxu0 0.0
        %2169 = vmatpush1.msra.mxu0 0.0
        %2170 = vmatprep.subr.mxu0 0.0
        %2171 = vmatpush1.msra.mxu0 %v347
        %2172 = vmatprep.subr.mxu0 0.0
        %2173 = vmatpush1.msra.mxu0 %v346
        %2174 = vmatprep.subr.mxu0 0.0
        %2175 = vmatpush2.msra.mxu0 0.0
        %2176 = vmatprep.subr.mxu0 0.0
        %2177 = vmatpush2.msra.mxu0 0.0
        %2178 = vmatprep.subr.mxu0 0.0
        %2179 = vmatpush2.msra.mxu0 0.0
        %2180 = vmatprep.subr.mxu0 0.0
        %2181 = vmatpush2.msra.mxu0 0.0
        %2182 = vmatprep.subr.mxu0 0.0
        %2183 = vmatpush2.msra.mxu0 0.0
        %2184 = vmatprep.subr.mxu0 0.0
        %2185 = vmatpush2.msra.mxu0 0.0
        %2186 = vmatprep.subr.mxu0 0.0
        %2187 = vmatpush2.msra.mxu0 0.0
        %2188 = vmatprep.subr.mxu0 0.0
        %2189 = vmatpush2.msra.mxu0 0.0
        %2190 = vmatprep.subr.mxu0 0.0
        %2191 = vmatpush2.msra.mxu0 0.0
        %2192 = vmatprep.subr.mxu0 0.0
        %2193 = vmatpush2.msra.mxu0 0.0
        %2194 = vmatprep.subr.mxu0 0.0
        %2195 = vmatpush2.msra.mxu0 0.0
        %2196 = vmatprep.subr.mxu0 0.0
        %2197 = vmatpush2.msra.mxu0 0.0
        %2198 = vmatprep.subr.mxu0 0.0
        %2199 = vmatpush2.msra.mxu0 0.0
        %2200 = vmatprep.subr.mxu0 0.0
        %2201 = vmatpush2.msra.mxu0 0.0
        %2202 = vmatprep.subr.mxu0 0.0
        %2203 = vmatpush2.msra.mxu0 0.0
        %2204 = vmatprep.subr.mxu0 0.0
        %2205 = vmatpush2.msra.mxu0 0.0
        %2206 = vmatprep.mubr.f32.mxu0 0.0
        %2207 = vmatmul.mubr.f32.gmra.mxu0 %v2140
        %v2208 = vpop.f32.mrf.mxu0
        %v2209 = vadd.f32 0.0, %v2208
        %v2210 = vpop.f32.mrf.mxu0
        %2211 = vdwg.mxu0
        %v2212 = vadd.f32 %v2061, %v2209
        %v2213 = vadd.f32 %v2212, %v602
        %v2215 = vsel %vm447, %v2213, 0
        %2217 = vmatprep.subr.mxu0 0.0
        %2218 = vmatpush1.msra.mxu0 0.0
        %2219 = vmatprep.subr.mxu0 0.0
        %2220 = vmatpush1.msra.mxu0 0.0
        %2221 = vmatprep.subr.mxu0 0.0
        %2222 = vmatpush1.msra.mxu0 0.0
        %2223 = vmatprep.subr.mxu0 0.0
        %2224 = vmatpush1.msra.mxu0 0.0
        %2225 = vmatprep.subr.mxu0 0.0
        %2226 = vmatpush1.msra.mxu0 0.0
        %2227 = vmatprep.subr.mxu0 0.0
        %2228 = vmatpush1.msra.mxu0 0.0
        %2229 = vmatprep.subr.mxu0 0.0
        %2230 = vmatpush1.msra.mxu0 0.0
        %2231 = vmatprep.subr.mxu0 0.0
        %2232 = vmatpush1.msra.mxu0 0.0
        %2233 = vmatprep.subr.mxu0 0.0
        %2234 = vmatpush1.msra.mxu0 0.0
        %2235 = vmatprep.subr.mxu0 0.0
        %2236 = vmatpush1.msra.mxu0 0.0
        %2237 = vmatprep.subr.mxu0 0.0
        %2238 = vmatpush1.msra.mxu0 0.0
        %2239 = vmatprep.subr.mxu0 0.0
        %2240 = vmatpush1.msra.mxu0 0.0
        %2241 = vmatprep.subr.mxu0 0.0
        %2242 = vmatpush1.msra.mxu0 %v355
        %2243 = vmatprep.subr.mxu0 0.0
        %2244 = vmatpush1.msra.mxu0 %v354
        %2245 = vmatprep.subr.mxu0 0.0
        %2246 = vmatpush1.msra.mxu0 %v353
        %2247 = vmatprep.subr.mxu0 0.0
        %2248 = vmatpush1.msra.mxu0 %v352
        %2249 = vmatprep.subr.mxu0 0.0
        %2250 = vmatpush2.msra.mxu0 0.0
        %2251 = vmatprep.subr.mxu0 0.0
        %2252 = vmatpush2.msra.mxu0 0.0
        %2253 = vmatprep.subr.mxu0 0.0
        %2254 = vmatpush2.msra.mxu0 0.0
        %2255 = vmatprep.subr.mxu0 0.0
        %2256 = vmatpush2.msra.mxu0 0.0
        %2257 = vmatprep.subr.mxu0 0.0
        %2258 = vmatpush2.msra.mxu0 0.0
        %2259 = vmatprep.subr.mxu0 0.0
        %2260 = vmatpush2.msra.mxu0 0.0
        %2261 = vmatprep.subr.mxu0 0.0
        %2262 = vmatpush2.msra.mxu0 0.0
        %2263 = vmatprep.subr.mxu0 0.0
        %2264 = vmatpush2.msra.mxu0 0.0
        %2265 = vmatprep.subr.mxu0 0.0
        %2266 = vmatpush2.msra.mxu0 0.0
        %2267 = vmatprep.subr.mxu0 0.0
        %2268 = vmatpush2.msra.mxu0 0.0
        %2269 = vmatprep.subr.mxu0 0.0
        %2270 = vmatpush2.msra.mxu0 0.0
        %2271 = vmatprep.subr.mxu0 0.0
        %2272 = vmatpush2.msra.mxu0 0.0
        %2273 = vmatprep.subr.mxu0 0.0
        %2274 = vmatpush2.msra.mxu0 0.0
        %2275 = vmatprep.subr.mxu0 0.0
        %2276 = vmatpush2.msra.mxu0 0.0
        %2277 = vmatprep.subr.mxu0 0.0
        %2278 = vmatpush2.msra.mxu0 0.0
        %2279 = vmatprep.subr.mxu0 0.0
        %2280 = vmatpush2.msra.mxu0 0.0
        %2281 = vmatprep.mubr.f32.mxu0 0.0
        %2282 = vmatmul.mubr.f32.gmra.mxu0 %v2215
        %v2283 = vpop.f32.mrf.mxu0
        %v2284 = vadd.f32 %v609, %v2283
        %v2285 = vpop.f32.mrf.mxu0
        %2286 = vdwg.mxu0
        %v2287 = vmax.f32 %v2284, 0.0
        %v2288 = vmul.f32 %v2287, 0.1
        %v2289 = vadd.f32 %v2213, %v2288
        %v2290 = vmax.f32 %v2289, 0.0
        %v2292 = vsel %vm447, %v2290, 0
        %2294 = vmatprep.subr.mxu0 0.0
        %2295 = vmatpush1.msra.mxu0 0.0
        %2296 = vmatprep.subr.mxu0 0.0
        %2297 = vmatpush1.msra.mxu0 0.0
        %2298 = vmatprep.subr.mxu0 0.0
        %2299 = vmatpush1.msra.mxu0 0.0
        %2300 = vmatprep.subr.mxu0 0.0
        %2301 = vmatpush1.msra.mxu0 0.0
        %2302 = vmatprep.subr.mxu0 0.0
        %2303 = vmatpush1.msra.mxu0 0.0
        %2304 = vmatprep.subr.mxu0 0.0
        %2305 = vmatpush1.msra.mxu0 0.0
        %2306 = vmatprep.subr.mxu0 0.0
        %2307 = vmatpush1.msra.mxu0 0.0
        %2308 = vmatprep.subr.mxu0 0.0
        %2309 = vmatpush1.msra.mxu0 0.0
        %2310 = vmatprep.subr.mxu0 0.0
        %2311 = vmatpush1.msra.mxu0 0.0
        %2312 = vmatprep.subr.mxu0 0.0
        %2313 = vmatpush1.msra.mxu0 0.0
        %2314 = vmatprep.subr.mxu0 0.0
        %2315 = vmatpush1.msra.mxu0 0.0
        %2316 = vmatprep.subr.mxu0 0.0
        %2317 = vmatpush1.msra.mxu0 0.0
        %2318 = vmatprep.subr.mxu0 0.0
        %2319 = vmatpush1.msra.mxu0 %v351
        %2320 = vmatprep.subr.mxu0 0.0
        %2321 = vmatpush1.msra.mxu0 %v350
        %2322 = vmatprep.subr.mxu0 0.0
        %2323 = vmatpush1.msra.mxu0 %v349
        %2324 = vmatprep.subr.mxu0 0.0
        %2325 = vmatpush1.msra.mxu0 %v348
        %2326 = vmatprep.subr.mxu0 0.0
        %2327 = vmatpush2.msra.mxu0 0.0
        %2328 = vmatprep.subr.mxu0 0.0
        %2329 = vmatpush2.msra.mxu0 0.0
        %2330 = vmatprep.subr.mxu0 0.0
        %2331 = vmatpush2.msra.mxu0 0.0
        %2332 = vmatprep.subr.mxu0 0.0
        %2333 = vmatpush2.msra.mxu0 0.0
        %2334 = vmatprep.subr.mxu0 0.0
        %2335 = vmatpush2.msra.mxu0 0.0
        %2336 = vmatprep.subr.mxu0 0.0
        %2337 = vmatpush2.msra.mxu0 0.0
        %2338 = vmatprep.subr.mxu0 0.0
        %2339 = vmatpush2.msra.mxu0 0.0
        %2340 = vmatprep.subr.mxu0 0.0
        %2341 = vmatpush2.msra.mxu0 0.0
        %2342 = vmatprep.subr.mxu0 0.0
        %2343 = vmatpush2.msra.mxu0 0.0
        %2344 = vmatprep.subr.mxu0 0.0
        %2345 = vmatpush2.msra.mxu0 0.0
        %2346 = vmatprep.subr.mxu0 0.0
        %2347 = vmatpush2.msra.mxu0 0.0
        %2348 = vmatprep.subr.mxu0 0.0
        %2349 = vmatpush2.msra.mxu0 0.0
        %2350 = vmatprep.subr.mxu0 0.0
        %2351 = vmatpush2.msra.mxu0 0.0
        %2352 = vmatprep.subr.mxu0 0.0
        %2353 = vmatpush2.msra.mxu0 0.0
        %2354 = vmatprep.subr.mxu0 0.0
        %2355 = vmatpush2.msra.mxu0 0.0
        %2356 = vmatprep.subr.mxu0 0.0
        %2357 = vmatpush2.msra.mxu0 0.0
        %2358 = vmatprep.mubr.f32.mxu0 0.0
        %2359 = vmatmul.mubr.f32.gmra.mxu0 %v2292
        %v2360 = vpop.f32.mrf.mxu0
        %v2361 = vadd.f32 %v445, %v2360
        %v2362 = vpop.f32.mrf.mxu0
        %2363 = vdwg.mxu0
        %v2364 = vsub.f32 %v345, %v2361
        %s2365 = scalar_lea.vmem %s336, 64 [#allocation4]
        %2366 = vst.msk [vmem:[%s2365] sm:$0xff] %vm366, %v2364
        %v2367 = vmul.f32 %v2364, 0.1
        %v2369 = vsel %vm366, %v2367, 0
        %2371 = vmatprep.subr.mxu0 0.0
        %2372 = vmatpush1.msra.mxu0 0.0
        %2373 = vmatprep.subr.mxu0 0.0
        %2374 = vmatpush1.msra.mxu0 0.0
        %2375 = vmatprep.subr.mxu0 0.0
        %2376 = vmatpush1.msra.mxu0 0.0
        %2377 = vmatprep.subr.mxu0 0.0
        %2378 = vmatpush1.msra.mxu0 0.0
        %2379 = vmatprep.subr.mxu0 0.0
        %2380 = vmatpush1.msra.mxu0 0.0
        %2381 = vmatprep.subr.mxu0 0.0
        %2382 = vmatpush1.msra.mxu0 0.0
        %2383 = vmatprep.subr.mxu0 0.0
        %2384 = vmatpush1.msra.mxu0 0.0
        %2385 = vmatprep.subr.mxu0 0.0
        %2386 = vmatpush1.msra.mxu0 0.0
        %2387 = vmatprep.subr.mxu0 0.0
        %2388 = vmatpush1.msra.mxu0 0.0
        %2389 = vmatprep.subr.mxu0 0.0
        %2390 = vmatpush1.msra.mxu0 0.0
        %2391 = vmatprep.subr.mxu0 0.0
        %2392 = vmatpush1.msra.mxu0 0.0
        %2393 = vmatprep.subr.mxu0 0.0
        %2394 = vmatpush1.msra.mxu0 0.0
        %2395 = vmatprep.subr.mxu0 0.0
        %2396 = vmatpush1.msra.mxu0 0.0
        %2397 = vmatprep.subr.mxu0 0.0
        %2398 = vmatpush1.msra.mxu0 0.0
        %2399 = vmatprep.subr.mxu0 0.0
        %2400 = vmatpush1.msra.mxu0 %v347
        %2401 = vmatprep.subr.mxu0 0.0
        %2402 = vmatpush1.msra.mxu0 %v346
        %2403 = vmatprep.subr.mxu0 0.0
        %2404 = vmatpush2.msra.mxu0 0.0
        %2405 = vmatprep.subr.mxu0 0.0
        %2406 = vmatpush2.msra.mxu0 0.0
        %2407 = vmatprep.subr.mxu0 0.0
        %2408 = vmatpush2.msra.mxu0 0.0
        %2409 = vmatprep.subr.mxu0 0.0
        %2410 = vmatpush2.msra.mxu0 0.0
        %2411 = vmatprep.subr.mxu0 0.0
        %2412 = vmatpush2.msra.mxu0 0.0
        %2413 = vmatprep.subr.mxu0 0.0
        %2414 = vmatpush2.msra.mxu0 0.0
        %2415 = vmatprep.subr.mxu0 0.0
        %2416 = vmatpush2.msra.mxu0 0.0
        %2417 = vmatprep.subr.mxu0 0.0
        %2418 = vmatpush2.msra.mxu0 0.0
        %2419 = vmatprep.subr.mxu0 0.0
        %2420 = vmatpush2.msra.mxu0 0.0
        %2421 = vmatprep.subr.mxu0 0.0
        %2422 = vmatpush2.msra.mxu0 0.0
        %2423 = vmatprep.subr.mxu0 0.0
        %2424 = vmatpush2.msra.mxu0 0.0
        %2425 = vmatprep.subr.mxu0 0.0
        %2426 = vmatpush2.msra.mxu0 0.0
        %2427 = vmatprep.subr.mxu0 0.0
        %2428 = vmatpush2.msra.mxu0 0.0
        %2429 = vmatprep.subr.mxu0 0.0
        %2430 = vmatpush2.msra.mxu0 0.0
        %2431 = vmatprep.subr.mxu0 0.0
        %2432 = vmatpush2.msra.mxu0 0.0
        %2433 = vmatprep.subr.mxu0 0.0
        %2434 = vmatpush2.msra.mxu0 0.0
        %2435 = vmatprep.mubr.f32.mxu0 0.0
        %2436 = vmatmul.mubr.f32.gmra.mxu0 %v2369
        %v2437 = vpop.f32.mrf.mxu0
        %v2438 = vadd.f32 0.0, %v2437
        %v2439 = vpop.f32.mrf.mxu0
        %2440 = vdwg.mxu0
        %v2441 = vadd.f32 %v2290, %v2438
        %v2442 = vadd.f32 %v2441, %v602
        %v2444 = vsel %vm447, %v2442, 0
        %2446 = vmatprep.subr.mxu0 0.0
        %2447 = vmatpush1.msra.mxu0 0.0
        %2448 = vmatprep.subr.mxu0 0.0
        %2449 = vmatpush1.msra.mxu0 0.0
        %2450 = vmatprep.subr.mxu0 0.0
        %2451 = vmatpush1.msra.mxu0 0.0
        %2452 = vmatprep.subr.mxu0 0.0
        %2453 = vmatpush1.msra.mxu0 0.0
        %2454 = vmatprep.subr.mxu0 0.0
        %2455 = vmatpush1.msra.mxu0 0.0
        %2456 = vmatprep.subr.mxu0 0.0
        %2457 = vmatpush1.msra.mxu0 0.0
        %2458 = vmatprep.subr.mxu0 0.0
        %2459 = vmatpush1.msra.mxu0 0.0
        %2460 = vmatprep.subr.mxu0 0.0
        %2461 = vmatpush1.msra.mxu0 0.0
        %2462 = vmatprep.subr.mxu0 0.0
        %2463 = vmatpush1.msra.mxu0 0.0
        %2464 = vmatprep.subr.mxu0 0.0
        %2465 = vmatpush1.msra.mxu0 0.0
        %2466 = vmatprep.subr.mxu0 0.0
        %2467 = vmatpush1.msra.mxu0 0.0
        %2468 = vmatprep.subr.mxu0 0.0
        %2469 = vmatpush1.msra.mxu0 0.0
        %2470 = vmatprep.subr.mxu0 0.0
        %2471 = vmatpush1.msra.mxu0 %v355
        %2472 = vmatprep.subr.mxu0 0.0
        %2473 = vmatpush1.msra.mxu0 %v354
        %2474 = vmatprep.subr.mxu0 0.0
        %2475 = vmatpush1.msra.mxu0 %v353
        %2476 = vmatprep.subr.mxu0 0.0
        %2477 = vmatpush1.msra.mxu0 %v352
        %2478 = vmatprep.subr.mxu0 0.0
        %2479 = vmatpush2.msra.mxu0 0.0
        %2480 = vmatprep.subr.mxu0 0.0
        %2481 = vmatpush2.msra.mxu0 0.0
        %2482 = vmatprep.subr.mxu0 0.0
        %2483 = vmatpush2.msra.mxu0 0.0
        %2484 = vmatprep.subr.mxu0 0.0
        %2485 = vmatpush2.msra.mxu0 0.0
        %2486 = vmatprep.subr.mxu0 0.0
        %2487 = vmatpush2.msra.mxu0 0.0
        %2488 = vmatprep.subr.mxu0 0.0
        %2489 = vmatpush2.msra.mxu0 0.0
        %2490 = vmatprep.subr.mxu0 0.0
        %2491 = vmatpush2.msra.mxu0 0.0
        %2492 = vmatprep.subr.mxu0 0.0
        %2493 = vmatpush2.msra.mxu0 0.0
        %2494 = vmatprep.subr.mxu0 0.0
        %2495 = vmatpush2.msra.mxu0 0.0
        %2496 = vmatprep.subr.mxu0 0.0
        %2497 = vmatpush2.msra.mxu0 0.0
        %2498 = vmatprep.subr.mxu0 0.0
        %2499 = vmatpush2.msra.mxu0 0.0
        %2500 = vmatprep.subr.mxu0 0.0
        %2501 = vmatpush2.msra.mxu0 0.0
        %2502 = vmatprep.subr.mxu0 0.0
        %2503 = vmatpush2.msra.mxu0 0.0
        %2504 = vmatprep.subr.mxu0 0.0
        %2505 = vmatpush2.msra.mxu0 0.0
        %2506 = vmatprep.subr.mxu0 0.0
        %2507 = vmatpush2.msra.mxu0 0.0
        %2508 = vmatprep.subr.mxu0 0.0
        %2509 = vmatpush2.msra.mxu0 0.0
        %2510 = vmatprep.mubr.f32.mxu0 0.0
        %2511 = vmatmul.mubr.f32.gmra.mxu0 %v2444
        %v2512 = vpop.f32.mrf.mxu0
        %v2513 = vadd.f32 %v609, %v2512
        %v2514 = vpop.f32.mrf.mxu0
        %2515 = vdwg.mxu0
        %v2516 = vmax.f32 %v2513, 0.0
        %v2517 = vmul.f32 %v2516, 0.1
        %v2518 = vadd.f32 %v2442, %v2517
        %v2519 = vmax.f32 %v2518, 0.0
        %v2521 = vsel %vm447, %v2519, 0
        %2523 = vmatprep.subr.mxu0 0.0
        %2524 = vmatpush1.msra.mxu0 0.0
        %2525 = vmatprep.subr.mxu0 0.0
        %2526 = vmatpush1.msra.mxu0 0.0
        %2527 = vmatprep.subr.mxu0 0.0
        %2528 = vmatpush1.msra.mxu0 0.0
        %2529 = vmatprep.subr.mxu0 0.0
        %2530 = vmatpush1.msra.mxu0 0.0
        %2531 = vmatprep.subr.mxu0 0.0
        %2532 = vmatpush1.msra.mxu0 0.0
        %2533 = vmatprep.subr.mxu0 0.0
        %2534 = vmatpush1.msra.mxu0 0.0
        %2535 = vmatprep.subr.mxu0 0.0
        %2536 = vmatpush1.msra.mxu0 0.0
        %2537 = vmatprep.subr.mxu0 0.0
        %2538 = vmatpush1.msra.mxu0 0.0
        %2539 = vmatprep.subr.mxu0 0.0
        %2540 = vmatpush1.msra.mxu0 0.0
        %2541 = vmatprep.subr.mxu0 0.0
        %2542 = vmatpush1.msra.mxu0 0.0
        %2543 = vmatprep.subr.mxu0 0.0
        %2544 = vmatpush1.msra.mxu0 0.0
        %2545 = vmatprep.subr.mxu0 0.0
        %2546 = vmatpush1.msra.mxu0 0.0
        %2547 = vmatprep.subr.mxu0 0.0
        %2548 = vmatpush1.msra.mxu0 %v351
        %2549 = vmatprep.subr.mxu0 0.0
        %2550 = vmatpush1.msra.mxu0 %v350
        %2551 = vmatprep.subr.mxu0 0.0
        %2552 = vmatpush1.msra.mxu0 %v349
        %2553 = vmatprep.subr.mxu0 0.0
        %2554 = vmatpush1.msra.mxu0 %v348
        %2555 = vmatprep.subr.mxu0 0.0
        %2556 = vmatpush2.msra.mxu0 0.0
        %2557 = vmatprep.subr.mxu0 0.0
        %2558 = vmatpush2.msra.mxu0 0.0
        %2559 = vmatprep.subr.mxu0 0.0
        %2560 = vmatpush2.msra.mxu0 0.0
        %2561 = vmatprep.subr.mxu0 0.0
        %2562 = vmatpush2.msra.mxu0 0.0
        %2563 = vmatprep.subr.mxu0 0.0
        %2564 = vmatpush2.msra.mxu0 0.0
        %2565 = vmatprep.subr.mxu0 0.0
        %2566 = vmatpush2.msra.mxu0 0.0
        %2567 = vmatprep.subr.mxu0 0.0
        %2568 = vmatpush2.msra.mxu0 0.0
        %2569 = vmatprep.subr.mxu0 0.0
        %2570 = vmatpush2.msra.mxu0 0.0
        %2571 = vmatprep.subr.mxu0 0.0
        %2572 = vmatpush2.msra.mxu0 0.0
        %2573 = vmatprep.subr.mxu0 0.0
        %2574 = vmatpush2.msra.mxu0 0.0
        %2575 = vmatprep.subr.mxu0 0.0
        %2576 = vmatpush2.msra.mxu0 0.0
        %2577 = vmatprep.subr.mxu0 0.0
        %2578 = vmatpush2.msra.mxu0 0.0
        %2579 = vmatprep.subr.mxu0 0.0
        %2580 = vmatpush2.msra.mxu0 0.0
        %2581 = vmatprep.subr.mxu0 0.0
        %2582 = vmatpush2.msra.mxu0 0.0
        %2583 = vmatprep.subr.mxu0 0.0
        %2584 = vmatpush2.msra.mxu0 0.0
        %2585 = vmatprep.subr.mxu0 0.0
        %2586 = vmatpush2.msra.mxu0 0.0
        %2587 = vmatprep.mubr.f32.mxu0 0.0
        %2588 = vmatmul.mubr.f32.gmra.mxu0 %v2521
        %v2589 = vpop.f32.mrf.mxu0
        %v2590 = vadd.f32 %v445, %v2589
        %v2591 = vpop.f32.mrf.mxu0
        %2592 = vdwg.mxu0
        %v2593 = vsub.f32 %v345, %v2590
        %s2594 = scalar_lea.vmem %s336, 72 [#allocation4]
        %2595 = vst.msk [vmem:[%s2594] sm:$0xff] %vm366, %v2593
        %v2596 = vmul.f32 %v2593, 0.1
        %v2598 = vsel %vm366, %v2596, 0
        %2600 = vmatprep.subr.mxu0 0.0
        %2601 = vmatpush1.msra.mxu0 0.0
        %2602 = vmatprep.subr.mxu0 0.0
        %2603 = vmatpush1.msra.mxu0 0.0
        %2604 = vmatprep.subr.mxu0 0.0
        %2605 = vmatpush1.msra.mxu0 0.0
        %2606 = vmatprep.subr.mxu0 0.0
        %2607 = vmatpush1.msra.mxu0 0.0
        %2608 = vmatprep.subr.mxu0 0.0
        %2609 = vmatpush1.msra.mxu0 0.0
        %2610 = vmatprep.subr.mxu0 0.0
        %2611 = vmatpush1.msra.mxu0 0.0
        %2612 = vmatprep.subr.mxu0 0.0
        %2613 = vmatpush1.msra.mxu0 0.0
        %2614 = vmatprep.subr.mxu0 0.0
        %2615 = vmatpush1.msra.mxu0 0.0
        %2616 = vmatprep.subr.mxu0 0.0
        %2617 = vmatpush1.msra.mxu0 0.0
        %2618 = vmatprep.subr.mxu0 0.0
        %2619 = vmatpush1.msra.mxu0 0.0
        %2620 = vmatprep.subr.mxu0 0.0
        %2621 = vmatpush1.msra.mxu0 0.0
        %2622 = vmatprep.subr.mxu0 0.0
        %2623 = vmatpush1.msra.mxu0 0.0
        %2624 = vmatprep.subr.mxu0 0.0
        %2625 = vmatpush1.msra.mxu0 0.0
        %2626 = vmatprep.subr.mxu0 0.0
        %2627 = vmatpush1.msra.mxu0 0.0
        %2628 = vmatprep.subr.mxu0 0.0
        %2629 = vmatpush1.msra.mxu0 %v347
        %2630 = vmatprep.subr.mxu0 0.0
        %2631 = vmatpush1.msra.mxu0 %v346
        %2632 = vmatprep.subr.mxu0 0.0
        %2633 = vmatpush2.msra.mxu0 0.0
        %2634 = vmatprep.subr.mxu0 0.0
        %2635 = vmatpush2.msra.mxu0 0.0
        %2636 = vmatprep.subr.mxu0 0.0
        %2637 = vmatpush2.msra.mxu0 0.0
        %2638 = vmatprep.subr.mxu0 0.0
        %2639 = vmatpush2.msra.mxu0 0.0
        %2640 = vmatprep.subr.mxu0 0.0
        %2641 = vmatpush2.msra.mxu0 0.0
        %2642 = vmatprep.subr.mxu0 0.0
        %2643 = vmatpush2.msra.mxu0 0.0
        %2644 = vmatprep.subr.mxu0 0.0
        %2645 = vmatpush2.msra.mxu0 0.0
        %2646 = vmatprep.subr.mxu0 0.0
        %2647 = vmatpush2.msra.mxu0 0.0
        %2648 = vmatprep.subr.mxu0 0.0
        %2649 = vmatpush2.msra.mxu0 0.0
        %2650 = vmatprep.subr.mxu0 0.0
        %2651 = vmatpush2.msra.mxu0 0.0
        %2652 = vmatprep.subr.mxu0 0.0
        %2653 = vmatpush2.msra.mxu0 0.0
        %2654 = vmatprep.subr.mxu0 0.0
        %2655 = vmatpush2.msra.mxu0 0.0
        %2656 = vmatprep.subr.mxu0 0.0
        %2657 = vmatpush2.msra.mxu0 0.0
        %2658 = vmatprep.subr.mxu0 0.0
        %2659 = vmatpush2.msra.mxu0 0.0
        %2660 = vmatprep.subr.mxu0 0.0
        %2661 = vmatpush2.msra.mxu0 0.0
        %2662 = vmatprep.subr.mxu0 0.0
        %2663 = vmatpush2.msra.mxu0 0.0
        %2664 = vmatprep.mubr.f32.mxu0 0.0
        %2665 = vmatmul.mubr.f32.gmra.mxu0 %v2598
        %v2666 = vpop.f32.mrf.mxu0
        %v2667 = vadd.f32 0.0, %v2666
        %v2668 = vpop.f32.mrf.mxu0
        %2669 = vdwg.mxu0
        %v2670 = vadd.f32 %v2519, %v2667
        %v2671 = vadd.f32 %v2670, %v602
        %v2673 = vsel %vm447, %v2671, 0
        %2675 = vmatprep.subr.mxu0 0.0
        %2676 = vmatpush1.msra.mxu0 0.0
        %2677 = vmatprep.subr.mxu0 0.0
        %2678 = vmatpush1.msra.mxu0 0.0
        %2679 = vmatprep.subr.mxu0 0.0
        %2680 = vmatpush1.msra.mxu0 0.0
        %2681 = vmatprep.subr.mxu0 0.0
        %2682 = vmatpush1.msra.mxu0 0.0
        %2683 = vmatprep.subr.mxu0 0.0
        %2684 = vmatpush1.msra.mxu0 0.0
        %2685 = vmatprep.subr.mxu0 0.0
        %2686 = vmatpush1.msra.mxu0 0.0
        %2687 = vmatprep.subr.mxu0 0.0
        %2688 = vmatpush1.msra.mxu0 0.0
        %2689 = vmatprep.subr.mxu0 0.0
        %2690 = vmatpush1.msra.mxu0 0.0
        %2691 = vmatprep.subr.mxu0 0.0
        %2692 = vmatpush1.msra.mxu0 0.0
        %2693 = vmatprep.subr.mxu0 0.0
        %2694 = vmatpush1.msra.mxu0 0.0
        %2695 = vmatprep.subr.mxu0 0.0
        %2696 = vmatpush1.msra.mxu0 0.0
        %2697 = vmatprep.subr.mxu0 0.0
        %2698 = vmatpush1.msra.mxu0 0.0
        %2699 = vmatprep.subr.mxu0 0.0
        %2700 = vmatpush1.msra.mxu0 %v355
        %2701 = vmatprep.subr.mxu0 0.0
        %2702 = vmatpush1.msra.mxu0 %v354
        %2703 = vmatprep.subr.mxu0 0.0
        %2704 = vmatpush1.msra.mxu0 %v353
        %2705 = vmatprep.subr.mxu0 0.0
        %2706 = vmatpush1.msra.mxu0 %v352
        %2707 = vmatprep.subr.mxu0 0.0
        %2708 = vmatpush2.msra.mxu0 0.0
        %2709 = vmatprep.subr.mxu0 0.0
        %2710 = vmatpush2.msra.mxu0 0.0
        %2711 = vmatprep.subr.mxu0 0.0
        %2712 = vmatpush2.msra.mxu0 0.0
        %2713 = vmatprep.subr.mxu0 0.0
        %2714 = vmatpush2.msra.mxu0 0.0
        %2715 = vmatprep.subr.mxu0 0.0
        %2716 = vmatpush2.msra.mxu0 0.0
        %2717 = vmatprep.subr.mxu0 0.0
        %2718 = vmatpush2.msra.mxu0 0.0
        %2719 = vmatprep.subr.mxu0 0.0
        %2720 = vmatpush2.msra.mxu0 0.0
        %2721 = vmatprep.subr.mxu0 0.0
        %2722 = vmatpush2.msra.mxu0 0.0
        %2723 = vmatprep.subr.mxu0 0.0
        %2724 = vmatpush2.msra.mxu0 0.0
        %2725 = vmatprep.subr.mxu0 0.0
        %2726 = vmatpush2.msra.mxu0 0.0
        %2727 = vmatprep.subr.mxu0 0.0
        %2728 = vmatpush2.msra.mxu0 0.0
        %2729 = vmatprep.subr.mxu0 0.0
        %2730 = vmatpush2.msra.mxu0 0.0
        %2731 = vmatprep.subr.mxu0 0.0
        %2732 = vmatpush2.msra.mxu0 0.0
        %2733 = vmatprep.subr.mxu0 0.0
        %2734 = vmatpush2.msra.mxu0 0.0
        %2735 = vmatprep.subr.mxu0 0.0
        %2736 = vmatpush2.msra.mxu0 0.0
        %2737 = vmatprep.subr.mxu0 0.0
        %2738 = vmatpush2.msra.mxu0 0.0
        %2739 = vmatprep.mubr.f32.mxu0 0.0
        %2740 = vmatmul.mubr.f32.gmra.mxu0 %v2673
        %v2741 = vpop.f32.mrf.mxu0
        %v2742 = vadd.f32 %v609, %v2741
        %v2743 = vpop.f32.mrf.mxu0
        %2744 = vdwg.mxu0
        %v2745 = vmax.f32 %v2742, 0.0
        %v2746 = vmul.f32 %v2745, 0.1
        %v2747 = vadd.f32 %v2671, %v2746
        %v2748 = vmax.f32 %v2747, 0.0
        %2749 = vst.msk [vmem:[%s324] sm:$0xff] %vm447, %v2748
        %2750 = vst.msk [vmem:[%s344] sm:$0xff] %vm366, %v2590
        %s2751 = sand.u32 %s184, 1
        %s2752 = scalar_lea.sflag [#allocation3], %s2751
        %s2753 = sand.u32 %s184, 1
        %s2754 = smul.addr %s2753, 8
        %s2755 = scalar_lea.vmem [#allocation2], %s2754
        %p2756 = scmp.lt.s32.totalorder %s24, 2
        %s2757 = scalar_select %p2756, %s24, 2
        %s2758 = smul.addr %s2757, 8
        %s2759 = scalar_lea.vmem %s8, %s2758
        %s2760 = sand.u32 %s236, 1
        %s2761 = sand.u32 %s236, 1
        %s2762 = smul.addr %s2761, 80
        %s2763 = scalar_lea.vmem [#allocation4], %s2762
        // Predicated region
        $region49: #{tpu_custom_call.1} parent=47 // pred_check
          %p2764 = pneg %p194
        $region50: #{tpu_custom_call.1} parent=47 // pred_check_branch
          %2766 = sbr.rel (%p2764) target = $region52
        $region51: #{tpu_custom_call.1} parent=47 // pred_region
          %s2768 = ssub.s32 128, 128
          %2769 = vsyncadd %s2752, %s2768
          %s2770 = smul.addr %s24, 128
          %s2771 = scalar_lea.hbm %s7, %s2770
          %s2773 = sshll.u32 %s2755, 4
          %s2774 = int_to_ptr.vmem [resolvable:$true] %s2773
          %2776 = dma.vmem_to_hbm [thread:$0]  %s2774, 128, %s2771, %s2752
        $region52: #{tpu_custom_call.1} parent=47 // pred_fallthru
          _
        // Predicated region
        $region53: #{tpu_custom_call.1} parent=47 // pred_check
          %p2777 = pneg %p220
        $region54: #{tpu_custom_call.1} parent=47 // pred_check_branch
          %2779 = sbr.rel (%p2777) target = $region56
        $region55: #{tpu_custom_call.1} parent=47 // pred_region
          _
        $region56: #{tpu_custom_call.1} parent=47 // pred_fallthru
          _
        // Predicated region
        $region57: #{tpu_custom_call.1} parent=47 // pred_check
          %p2780 = pneg %p246
        $region58: #{tpu_custom_call.1} parent=47 // pred_check_branch
          %2782 = sbr.rel (%p2780) target = $region60
        $region59: #{tpu_custom_call.1} parent=47 // pred_region
          %s2783 = smul.addr %s24, 8
          %s2784 = scalar_lea.vmem %s9, %s2783
          // Predicated region
          $region61: #{tpu_custom_call.1} parent=59 // pred_check
            _
          $region62: #{tpu_custom_call.1} parent=59 // pred_check_branch
            %2786 = sbr.rel (0) target = $region64
          $region63: #{tpu_custom_call.1} parent=59 // pred_region
            // Predicated region
            $region65: #{tpu_custom_call.1} parent=63 // pred_check
              _
            $region66: #{tpu_custom_call.1} parent=63 // pred_check_branch
              %2788 = sbr.rel (0) target = $region68
            $region67: #{tpu_custom_call.1} parent=63 // pred_region
              // Predicated region
              $region80: #{tpu_custom_call.1} parent=67 // pred_check
                _
              $region81: #{tpu_custom_call.1} parent=67 // pred_check_branch
                %2822 = sbr.rel (0) target = $region83
              $region82: #{tpu_custom_call.1} parent=67 // pred_region
                loop: start=0, step=1, limit=1
                $region84: #{tpu_custom_call.1} parent=82 // loop_pre_header
                  _
                $region85: #{tpu_custom_call.1} parent=82 // loop_header
                  %s2824 = sphi 0, %s2828
                  %p2825 = scmp.ge.s32.totalorder %s2824, 1
                  %s2829 = sphi %s2763, %s2763
                  %s2830 = sphi %s2784, %s2784
                $region86: #{tpu_custom_call.1} parent=82 // loop_header_branch
                  %2827 = sbr.rel (%p2825) target = $region90
                $region87: #{tpu_custom_call.1} parent=82 // loop_body
                  %v2831 = vld [vmem:[%s2829] sm:$0xff]
                  %2832 = vst [vmem:[%s2830] sm:$0xff] %v2831
                  %v2833 = vld [vmem:[%s2829 + $0x8] sm:$0xff]
                  %2834 = vst [vmem:[%s2830 + $0x18] sm:$0xff] %v2833
                  %v2835 = vld [vmem:[%s2829 + $0x10] sm:$0xff]
                  %2836 = vst [vmem:[%s2830 + $0x30] sm:$0xff] %v2835
                  %v2837 = vld [vmem:[%s2829 + $0x18] sm:$0xff]
                  %2838 = vst [vmem:[%s2830 + $0x48] sm:$0xff] %v2837
                  %v2839 = vld [vmem:[%s2829 + $0x20] sm:$0xff]
                  %2840 = vst [vmem:[%s2830 + $0x60] sm:$0xff] %v2839
                  %v2841 = vld [vmem:[%s2829 + $0x28] sm:$0xff]
                  %2842 = vst [vmem:[%s2830 + $0x78] sm:$0xff] %v2841
                  %v2843 = vld [vmem:[%s2829 + $0x30] sm:$0xff]
                  %2844 = vst [vmem:[%s2830 + $0x90] sm:$0xff] %v2843
                  %v2845 = vld [vmem:[%s2829 + $0x38] sm:$0xff]
                  %2846 = vst [vmem:[%s2830 + $0xa8] sm:$0xff] %v2845
                  %v2847 = vld [vmem:[%s2829 + $0x40] sm:$0xff]
                  %2848 = vst [vmem:[%s2830 + $0xc0] sm:$0xff] %v2847
                  %v2849 = vld [vmem:[%s2829 + $0x48] sm:$0xff]
                  %2850 = vst [vmem:[%s2830 + $0xd8] sm:$0xff] %v2849
                $region88: #{tpu_custom_call.1} parent=82 // loop_footer
                  %s2828 = sadd.s32 1, %s2824
                $region89: #{tpu_custom_call.1} parent=82 // loop_footer_branch
                  %2823 = sbr.rel target = $region85
                $region90: #{tpu_custom_call.1} parent=82 // loop_exit
                  _
              $region83: #{tpu_custom_call.1} parent=67 // pred_fallthru
                _
              // Predicated region
              $region91: #{tpu_custom_call.1} parent=67 // pred_check
                _
              $region92: #{tpu_custom_call.1} parent=67 // pred_check_branch
                %2852 = sbr.rel target = $region94
              $region93: #{tpu_custom_call.1} parent=67 // pred_region
                _
              $region94: #{tpu_custom_call.1} parent=67 // pred_fallthru
                _
            $region68: #{tpu_custom_call.1} parent=63 // pred_fallthru
              _
            // Predicated region
            $region69: #{tpu_custom_call.1} parent=63 // pred_check
              _
            $region70: #{tpu_custom_call.1} parent=63 // pred_check_branch
              %2790 = sbr.rel target = $region72
            $region71: #{tpu_custom_call.1} parent=63 // pred_region
              %s2792 = ssub.s32 256, 1
              loop: start=0, step=1, limit=1
              $region73: #{tpu_custom_call.1} parent=71 // loop_pre_header
                _
              $region74: #{tpu_custom_call.1} parent=71 // loop_header
                %s2794 = sphi 0, %s2798
                %p2795 = scmp.ge.s32.totalorder %s2794, 1
                %s2799 = sphi %s2763, %s2763
                %s2800 = sphi %s2784, %s2784
              $region75: #{tpu_custom_call.1} parent=71 // loop_header_branch
                %2797 = sbr.rel (%p2795) target = $region79
              $region76: #{tpu_custom_call.1} parent=71 // loop_body
                %v2801 = vld [vmem:[%s2799] sm:%s2792]
                %2802 = vst [vmem:[%s2800] sm:%s2792] %v2801
                %v2803 = vld [vmem:[%s2799 + $0x8] sm:%s2792]
                %2804 = vst [vmem:[%s2800 + $0x18] sm:%s2792] %v2803
                %v2805 = vld [vmem:[%s2799 + $0x10] sm:%s2792]
                %2806 = vst [vmem:[%s2800 + $0x30] sm:%s2792] %v2805
                %v2807 = vld [vmem:[%s2799 + $0x18] sm:%s2792]
                %2808 = vst [vmem:[%s2800 + $0x48] sm:%s2792] %v2807
                %v2809 = vld [vmem:[%s2799 + $0x20] sm:%s2792]
                %2810 = vst [vmem:[%s2800 + $0x60] sm:%s2792] %v2809
                %v2811 = vld [vmem:[%s2799 + $0x28] sm:%s2792]
                %2812 = vst [vmem:[%s2800 + $0x78] sm:%s2792] %v2811
                %v2813 = vld [vmem:[%s2799 + $0x30] sm:%s2792]
                %2814 = vst [vmem:[%s2800 + $0x90] sm:%s2792] %v2813
                %v2815 = vld [vmem:[%s2799 + $0x38] sm:%s2792]
                %2816 = vst [vmem:[%s2800 + $0xa8] sm:%s2792] %v2815
                %v2817 = vld [vmem:[%s2799 + $0x40] sm:%s2792]
                %2818 = vst [vmem:[%s2800 + $0xc0] sm:%s2792] %v2817
                %v2819 = vld [vmem:[%s2799 + $0x48] sm:%s2792]
                %2820 = vst [vmem:[%s2800 + $0xd8] sm:%s2792] %v2819
              $region77: #{tpu_custom_call.1} parent=71 // loop_footer
                %s2798 = sadd.s32 1, %s2794
              $region78: #{tpu_custom_call.1} parent=71 // loop_footer_branch
                %2793 = sbr.rel target = $region74
              $region79: #{tpu_custom_call.1} parent=71 // loop_exit
                _
            $region72: #{tpu_custom_call.1} parent=63 // pred_fallthru
              _
          $region64: #{tpu_custom_call.1} parent=59 // pred_fallthru
            _
          %2853 = vnop
        $region60: #{tpu_custom_call.1} parent=47 // pred_fallthru
          _
      $region48: #{tpu_custom_call.1} parent=5 // pred_fallthru
        _
      %p2854 = scmp.le.s32.totalorder 2, %s19
      // Predicated region
      $region95: #{tpu_custom_call.1} parent=5 // pred_check
        %p2855 = pneg %p2854
      $region96: #{tpu_custom_call.1} parent=5 // pred_check_branch
        %2857 = sbr.rel (%p2855) target = $region98
      $region97: #{tpu_custom_call.1} parent=5 // pred_region
        %s2858 = ssub.s32 %s19, 2
        // Predicated region
        $region99: #{tpu_custom_call.1} parent=97 // pred_check
          %p2859 = pneg %p200
        $region100: #{tpu_custom_call.1} parent=97 // pred_check_branch
          %2861 = sbr.rel (%p2859) target = $region102
        $region101: #{tpu_custom_call.1} parent=97 // pred_region
          %s2862 = sand.u32 %s185, 1
          %s2863 = scalar_lea.sflag [#allocation3], %s2862
          %s2864 = sand.u32 %s185, 1
          %s2865 = smul.addr %s2864, 8
          %s2866 = scalar_lea.vmem [#allocation2], %s2865
          %2867 = dma.done %s2863, 128
        $region102: #{tpu_custom_call.1} parent=97 // pred_fallthru
          _
        // Predicated region
        $region103: #{tpu_custom_call.1} parent=97 // pred_check
          %p2868 = pneg %p226
        $region104: #{tpu_custom_call.1} parent=97 // pred_check_branch
          %2870 = sbr.rel (%p2868) target = $region106
        $region105: #{tpu_custom_call.1} parent=97 // pred_region
          %p2871 = scmp.lt.s32.totalorder %s25, 2
          %s2872 = scalar_select %p2871, %s25, 2
          %s2873 = smul.addr %s2872, 8
          %s2874 = scalar_lea.vmem %s8, %s2873
        $region106: #{tpu_custom_call.1} parent=97 // pred_fallthru
          _
        // Predicated region
        $region107: #{tpu_custom_call.1} parent=97 // pred_check
          %p2875 = pneg %p252
        $region108: #{tpu_custom_call.1} parent=97 // pred_check_branch
          %2877 = sbr.rel (%p2875) target = $region110
        $region109: #{tpu_custom_call.1} parent=97 // pred_region
          %s2878 = sand.u32 %s237, 1
          %s2879 = sand.u32 %s237, 1
          %s2880 = smul.addr %s2879, 80
          %s2881 = scalar_lea.vmem [#allocation4], %s2880
        $region110: #{tpu_custom_call.1} parent=97 // pred_fallthru
          _
      $region98: #{tpu_custom_call.1} parent=5 // pred_fallthru
        _
    $region6: #{tpu_custom_call.1} parent=1 // loop_footer
      %s23 = sadd.s32 1, %s19
    $region7: #{tpu_custom_call.1} parent=1 // loop_footer_branch
      %18 = sbr.rel target = $region3
    $region8: #{tpu_custom_call.1} parent=1 // loop_exit
      _
    %2882 = vsyncpa [#allocation3], 1
    %s2883 = scalar_lea.sflag [#allocation3], 1
    %2884 = vsyncpa %s2883, 1

// kernel: tpu_custom_call.1
$region0: #{tpu_custom_call.1}
  #allocation0 [shape = 'u32[]', space=smem, size = 0x4, offset = 0x4, fixed_abs, tag = 'smem constant byte address 0x4 - core index']
  #allocation1 [shape = 'u32[144,128]{1,0:T(1,128)}', space=vmem, size = 0x12000, scoped, tag = 'internal scratch']
  %s0 = inlined_call_operand.vmem [shape: f32[24,16], index: 0, kind: input, shape index: {}]
  %s1 = inlined_call_operand.vmem [shape: f32[16,32], index: 1, kind: input, shape index: {}]
  %s2 = inlined_call_operand.vmem [shape: f32[1,32], index: 2, kind: input, shape index: {}]
  %s3 = inlined_call_operand.vmem [shape: f32[32,16], index: 3, kind: input, shape index: {}]
  %s4 = inlined_call_operand.vmem [shape: f32[1,16], index: 4, kind: input, shape index: {}]
  %s5 = inlined_call_operand.vmem [shape: f32[32,32], index: 5, kind: input, shape index: {}]
  %s6 = inlined_call_operand.vmem [shape: f32[1,32], index: 6, kind: input, shape index: {}]
  %s7 = inlined_call_operand.hbm [shape: f32[24,32], index: 7, kind: output, shape index: {0}]
  %s8 = inlined_call_operand.vmem [shape: f32[24,16], index: 8, kind: output, shape index: {1}]
  %s9 = inlined_call_operand.vmem [shape: f32[10,24,16], index: 9, kind: output, shape index: {2}]
  %10 = xla_tuple %s7, %s8, %s9
  %s11 = sld [smem:[#allocation0]]
  $region111: #{tpu_custom_call.1} parent=0
    _
  %s13 = ssub.s32 1, %s11
  %s14 = scalar_select 0, %s13, %s11
  $region1: #{tpu_custom_call.1} parent=0
    #allocation2 [shape = 'u8[8192]{0}', space=vmem, size = 0x2000, scoped, tag = 'output window, operand 0']
    #allocation3 [shape = 's32[2]{0}', space=sflag, size = 0x8, scoped, tag = 'scoped memory for tpu_custom_call.1']
    #allocation4 [shape = 'u8[81920]{0}', space=vmem, size = 0x14000, scoped, tag = 'output window, operand 2']
    %15 = vsyncpa [#allocation3], 0
    %s16 = scalar_lea.sflag [#allocation3], 1
    %17 = vsyncpa %s16, 0
    loop: start=0, step=1, limit=5
    $region2: #{tpu_custom_call.1} parent=1 // loop_pre_header
      _
    $region3: #{tpu_custom_call.1} parent=1 // loop_header
      %s19 = sphi 0, %s23
      %p20 = scmp.ge.s32.totalorder %s19, 5
      %s29 = sphi 0, %s31
      %s32 = sphi 0, %s29
      %s33 = sphi 0, %s32
      %s49 = sphi 0, %s33
      %s53 = sphi 0, %s53
      %s55 = sphi 0, %s53
      %s56 = sphi 0, %s55
      %s70 = sphi 0, %s56
      %s74 = sphi 0, %s74
      %s76 = sphi 0, %s74
      %s77 = sphi 0, %s76
      %s91 = sphi 0, %s77
      %s95 = sphi 0, %s95
      %s97 = sphi 0, %s95
      %s98 = sphi 0, %s97
      %s112 = sphi 0, %s98
      %s116 = sphi 0, %s116
      %s118 = sphi 0, %s116
      %s119 = sphi 0, %s118
      %s133 = sphi 0, %s119
      %s137 = sphi 0, %s137
      %s139 = sphi 0, %s137
      %s140 = sphi 0, %s139
      %s154 = sphi 0, %s140
      %s158 = sphi 0, %s158
      %s160 = sphi 0, %s158
      %s161 = sphi 0, %s160
      %s175 = sphi 0, %s161
      %s181 = sphi 0, %s183
      %s184 = sphi 0, %s181
      %s185 = sphi 0, %s184
      %s201 = sphi 0, %s185
      %s207 = sphi 0, %s209
      %s210 = sphi 0, %s207
      %s211 = sphi 0, %s210
      %s227 = sphi 0, %s211
      %s233 = sphi 0, %s235
      %s236 = sphi 0, %s233
      %s237 = sphi 0, %s236
      %s253 = sphi 0, %s237
    $region4: #{tpu_custom_call.1} parent=1 // loop_header_branch
      %22 = sbr.rel (%p20) target = $region8
    $region5: #{tpu_custom_call.1} parent=1 // loop_body
      %s24 = ssub.s32 %s19, 1
      %s25 = ssub.s32 %s19, 2
      %s26 = sadd.s32 %s19, 1
      %s27 = ssub.s32 %s19, %s26
      %p28 = scmp.eq.s32.totalorder %s27, 0
      %s30 = sadd.s32 %s29, 1
      %s31 = scalar_select %p28, %s29, %s30
      %p34 = pneg %p28
      %p35 = scmp.eq.s32.totalorder %s19, 2
      %p36 = por %p34, %p35
      %p37 = scmp.ne.s32.totalorder %s29, %s32
      %p38 = scmp.eq.s32.totalorder %s19, 0
      %p39 = por %p37, %p38
      %p40 = scmp.ne.s32.totalorder %s29, %s32
      %p41 = scmp.eq.s32.totalorder %s24, 2
      %p42 = por %p40, %p41
      %p43 = scmp.ne.s32.totalorder %s32, %s33
      %p44 = scmp.eq.s32.totalorder %s24, 0
      %p45 = por %p43, %p44
      %p46 = scmp.ne.s32.totalorder %s32, %s33
      %p47 = scmp.eq.s32.totalorder %s25, 2
      %p48 = por %p46, %p47
      %p50 = scmp.ne.s32.totalorder %s33, %s49
      %p51 = scmp.eq.s32.totalorder %s25, 0
      %p52 = por %p50, %p51
      %s54 = sadd.s32 %s53, 1
      %p57 = scmp.eq.s32.totalorder %s19, 2
      %p58 = scmp.ne.s32.totalorder %s53, %s55
      %p59 = scmp.eq.s32.totalorder %s19, 0
      %p60 = por %p58, %p59
      %p61 = scmp.ne.s32.totalorder %s53, %s55
      %p62 = scmp.eq.s32.totalorder %s24, 2
      %p63 = por %p61, %p62
      %p64 = scmp.ne.s32.totalorder %s55, %s56
      %p65 = scmp.eq.s32.totalorder %s24, 0
      %p66 = por %p64, %p65
      %p67 = scmp.ne.s32.totalorder %s55, %s56
      %p68 = scmp.eq.s32.totalorder %s25, 2
      %p69 = por %p67, %p68
      %p71 = scmp.ne.s32.totalorder %s56, %s70
      %p72 = scmp.eq.s32.totalorder %s25, 0
      %p73 = por %p71, %p72
      %s75 = sadd.s32 %s74, 1
      %p78 = scmp.eq.s32.totalorder %s19, 2
      %p79 = scmp.ne.s32.totalorder %s74, %s76
      %p80 = scmp.eq.s32.totalorder %s19, 0
      %p81 = por %p79, %p80
      %p82 = scmp.ne.s32.totalorder %s74, %s76
      %p83 = scmp.eq.s32.totalorder %s24, 2
      %p84 = por %p82, %p83
      %p85 = scmp.ne.s32.totalorder %s76, %s77
      %p86 = scmp.eq.s32.totalorder %s24, 0
      %p87 = por %p85, %p86
      %p88 = scmp.ne.s32.totalorder %s76, %s77
      %p89 = scmp.eq.s32.totalorder %s25, 2
      %p90 = por %p88, %p89
      %p92 = scmp.ne.s32.totalorder %s77, %s91
      %p93 = scmp.eq.s32.totalorder %s25, 0
      %p94 = por %p92, %p93
      %s96 = sadd.s32 %s95, 1
      %p99 = scmp.eq.s32.totalorder %s19, 2
      %p100 = scmp.ne.s32.totalorder %s95, %s97
      %p101 = scmp.eq.s32.totalorder %s19, 0
      %p102 = por %p100, %p101
      %p103 = scmp.ne.s32.totalorder %s95, %s97
      %p104 = scmp.eq.s32.totalorder %s24, 2
      %p105 = por %p103, %p104
      %p106 = scmp.ne.s32.totalorder %s97, %s98
      %p107 = scmp.eq.s32.totalorder %s24, 0
      %p108 = por %p106, %p107
      %p109 = scmp.ne.s32.totalorder %s97, %s98
      %p110 = scmp.eq.s32.totalorder %s25, 2
      %p111 = por %p109, %p110
      %p113 = scmp.ne.s32.totalorder %s98, %s112
      %p114 = scmp.eq.s32.totalorder %s25, 0
      %p115 = por %p113, %p114
      %s117 = sadd.s32 %s116, 1
      %p120 = scmp.eq.s32.totalorder %s19, 2
      %p121 = scmp.ne.s32.totalorder %s116, %s118
      %p122 = scmp.eq.s32.totalorder %s19, 0
      %p123 = por %p121, %p122
      %p124 = scmp.ne.s32.totalorder %s116, %s118
      %p125 = scmp.eq.s32.totalorder %s24, 2
      %p126 = por %p124, %p125
      %p127 = scmp.ne.s32.totalorder %s118, %s119
      %p128 = scmp.eq.s32.totalorder %s24, 0
      %p129 = por %p127, %p128
      %p130 = scmp.ne.s32.totalorder %s118, %s119
      %p131 = scmp.eq.s32.totalorder %s25, 2
      %p132 = por %p130, %p131
      %p134 = scmp.ne.s32.totalorder %s119, %s133
      %p135 = scmp.eq.s32.totalorder %s25, 0
      %p136 = por %p134, %p135
      %s138 = sadd.s32 %s137, 1
      %p141 = scmp.eq.s32.totalorder %s19, 2
      %p142 = scmp.ne.s32.totalorder %s137, %s139
      %p143 = scmp.eq.s32.totalorder %s19, 0
      %p144 = por %p142, %p143
      %p145 = scmp.ne.s32.totalorder %s137, %s139
      %p146 = scmp.eq.s32.totalorder %s24, 2
      %p147 = por %p145, %p146
      %p148 = scmp.ne.s32.totalorder %s139, %s140
      %p149 = scmp.eq.s32.totalorder %s24, 0
      %p150 = por %p148, %p149
      %p151 = scmp.ne.s32.totalorder %s139, %s140
      %p152 = scmp.eq.s32.totalorder %s25, 2
      %p153 = por %p151, %p152
      %p155 = scmp.ne.s32.totalorder %s140, %s154
      %p156 = scmp.eq.s32.totalorder %s25, 0
      %p157 = por %p155, %p156
      %s159 = sadd.s32 %s158, 1
      %p162 = scmp.eq.s32.totalorder %s19, 2
      %p163 = scmp.ne.s32.totalorder %s158, %s160
      %p164 = scmp.eq.s32.totalorder %s19, 0
      %p165 = por %p163, %p164
      %p166 = scmp.ne.s32.totalorder %s158, %s160
      %p167 = scmp.eq.s32.totalorder %s24, 2
      %p168 = por %p166, %p167
      %p169 = scmp.ne.s32.totalorder %s160, %s161
      %p170 = scmp.eq.s32.totalorder %s24, 0
      %p171 = por %p169, %p170
      %p172 = scmp.ne.s32.totalorder %s160, %s161
      %p173 = scmp.eq.s32.totalorder %s25, 2
      %p174 = por %p172, %p173
      %p176 = scmp.ne.s32.totalorder %s161, %s175
      %p177 = scmp.eq.s32.totalorder %s25, 0
      %p178 = por %p176, %p177
      %s179 = ssub.s32 %s19, %s26
      %p180 = scmp.eq.s32.totalorder %s179, 0
      %s182 = sadd.s32 %s181, 1
      %s183 = scalar_select %p180, %s181, %s182
      %p186 = pneg %p180
      %p187 = scmp.eq.s32.totalorder %s19, 2
      %p188 = por %p186, %p187
      %p189 = scmp.ne.s32.totalorder %s181, %s184
      %p190 = scmp.eq.s32.totalorder %s19, 0
      %p191 = por %p189, %p190
      %p192 = scmp.ne.s32.totalorder %s181, %s184
      %p193 = scmp.eq.s32.totalorder %s24, 2
      %p194 = por %p192, %p193
      %p195 = scmp.ne.s32.totalorder %s184, %s185
      %p196 = scmp.eq.s32.totalorder %s24, 0
      %p197 = por %p195, %p196
      %p198 = scmp.ne.s32.totalorder %s184, %s185
      %p199 = scmp.eq.s32.totalorder %s25, 2
      %p200 = por %p198, %p199
      %p202 = scmp.ne.s32.totalorder %s185, %s201
      %p203 = scmp.eq.s32.totalorder %s25, 0
      %p204 = por %p202, %p203
      %s205 = ssub.s32 %s19, %s26
      %p206 = scmp.eq.s32.totalorder %s205, 0
      %s208 = sadd.s32 %s207, 1
      %s209 = scalar_select %p206, %s207, %s208
      %p212 = pneg %p206
      %p213 = scmp.eq.s32.totalorder %s19, 2
      %p214 = por %p212, %p213
      %p215 = scmp.ne.s32.totalorder %s207, %s210
      %p216 = scmp.eq.s32.totalorder %s19, 0
      %p217 = por %p215, %p216
      %p218 = scmp.ne.s32.totalorder %s207, %s210
      %p219 = scmp.eq.s32.totalorder %s24, 2
      %p220 = por %p218, %p219
      %p221 = scmp.ne.s32.totalorder %s210, %s211
      %p222 = scmp.eq.s32.totalorder %s24, 0
      %p223 = por %p221, %p222
      %p224 = scmp.ne.s32.totalorder %s210, %s211
      %p225 = scmp.eq.s32.totalorder %s25, 2
      %p226 = por %p224, %p225
      %p228 = scmp.ne.s32.totalorder %s211, %s227
      %p229 = scmp.eq.s32.totalorder %s25, 0
      %p230 = por %p228, %p229
      %s231 = ssub.s32 %s19, %s26
      %p232 = scmp.eq.s32.totalorder %s231, 0
      %s234 = sadd.s32 %s233, 1
      %s235 = scalar_select %p232, %s233, %s234
      %p238 = pneg %p232
      %p239 = scmp.eq.s32.totalorder %s19, 2
      %p240 = por %p238, %p239
      %p241 = scmp.ne.s32.totalorder %s233, %s236
      %p242 = scmp.eq.s32.totalorder %s19, 0
      %p243 = por %p241, %p242
      %p244 = scmp.ne.s32.totalorder %s233, %s236
      %p245 = scmp.eq.s32.totalorder %s24, 2
      %p246 = por %p244, %p245
      %p247 = scmp.ne.s32.totalorder %s236, %s237
      %p248 = scmp.eq.s32.totalorder %s24, 0
      %p249 = por %p247, %p248
      %p250 = scmp.ne.s32.totalorder %s236, %s237
      %p251 = scmp.eq.s32.totalorder %s25, 2
      %p252 = por %p250, %p251
      %p254 = scmp.ne.s32.totalorder %s237, %s253
      %p255 = scmp.eq.s32.totalorder %s25, 0
      %p256 = por %p254, %p255
      %p257 = scmp.le.s32.totalorder 1, %s19
      %p258 = scmp.lt.s32.totalorder %s19, 4
      %p259 = pnand %p257, %p258
      %p260 = pneg %p259
      // Predicated region
      $region9: #{tpu_custom_call.1} parent=5 // pred_check
        _
      $region10: #{tpu_custom_call.1} parent=5 // pred_check_branch
        %262 = sbr.rel (%p259) target = $region12
      $region11: #{tpu_custom_call.1} parent=5 // pred_region
        %s263 = ssub.s32 %s19, 1
        // Predicated region
        $region13: #{tpu_custom_call.1} parent=11 // pred_check
          %p264 = pneg %p66
        $region14: #{tpu_custom_call.1} parent=11 // pred_check_branch
          %266 = sbr.rel (%p264) target = $region16
        $region15: #{tpu_custom_call.1} parent=11 // pred_region
          _
        $region16: #{tpu_custom_call.1} parent=11 // pred_fallthru
          _
        // Predicated region
        $region17: #{tpu_custom_call.1} parent=11 // pred_check
          %p267 = pneg %p87
        $region18: #{tpu_custom_call.1} parent=11 // pred_check_branch
          %269 = sbr.rel (%p267) target = $region20
        $region19: #{tpu_custom_call.1} parent=11 // pred_region
          _
        $region20: #{tpu_custom_call.1} parent=11 // pred_fallthru
          _
        // Predicated region
        $region21: #{tpu_custom_call.1} parent=11 // pred_check
          %p270 = pneg %p108
        $region22: #{tpu_custom_call.1} parent=11 // pred_check_branch
          %272 = sbr.rel (%p270) target = $region24
        $region23: #{tpu_custom_call.1} parent=11 // pred_region
          _
        $region24: #{tpu_custom_call.1} parent=11 // pred_fallthru
          _
        // Predicated region
        $region25: #{tpu_custom_call.1} parent=11 // pred_check
          %p273 = pneg %p129
        $region26: #{tpu_custom_call.1} parent=11 // pred_check_branch
          %275 = sbr.rel (%p273) target = $region28
        $region27: #{tpu_custom_call.1} parent=11 // pred_region
          _
        $region28: #{tpu_custom_call.1} parent=11 // pred_fallthru
          _
        // Predicated region
        $region29: #{tpu_custom_call.1} parent=11 // pred_check
          %p276 = pneg %p150
        $region30: #{tpu_custom_call.1} parent=11 // pred_check_branch
          %278 = sbr.rel (%p276) target = $region32
        $region31: #{tpu_custom_call.1} parent=11 // pred_region
          _
        $region32: #{tpu_custom_call.1} parent=11 // pred_fallthru
          _
        // Predicated region
        $region33: #{tpu_custom_call.1} parent=11 // pred_check
          %p279 = pneg %p171
        $region34: #{tpu_custom_call.1} parent=11 // pred_check_branch
          %281 = sbr.rel (%p279) target = $region36
        $region35: #{tpu_custom_call.1} parent=11 // pred_region
          _
        $region36: #{tpu_custom_call.1} parent=11 // pred_fallthru
          _
      $region12: #{tpu_custom_call.1} parent=5 // pred_fallthru
        _
      %p282 = scmp.lt.s32.totalorder %s19, 3
      // Predicated region
      $region37: #{tpu_custom_call.1} parent=5 // pred_check
        %p283 = pneg %p282
      $region38: #{tpu_custom_call.1} parent=5 // pred_check_branch
        %285 = sbr.rel (%p283) target = $region40
      $region39: #{tpu_custom_call.1} parent=5 // pred_region
        // Predicated region
        $region41: #{tpu_custom_call.1} parent=39 // pred_check
          %p286 = pneg %p39
        $region42: #{tpu_custom_call.1} parent=39 // pred_check_branch
          %288 = sbr.rel (%p286) target = $region44
        $region43: #{tpu_custom_call.1} parent=39 // pred_region
          %p289 = scmp.lt.s32.totalorder %s19, 2
          %s290 = scalar_select %p289, %s19, 2
          %s291 = smul.addr %s290, 8
          %s292 = scalar_lea.vmem %s0, %s291
        $region44: #{tpu_custom_call.1} parent=39 // pred_fallthru
          _
      $region40: #{tpu_custom_call.1} parent=5 // pred_fallthru
        _
      %p293 = scmp.le.s32.totalorder 1, %s19
      %p294 = scmp.lt.s32.totalorder %s19, 4
      %p295 = pnand %p293, %p294
      %p296 = pneg %p295
      // Predicated region
      $region45: #{tpu_custom_call.1} parent=5 // pred_check
        _
      $region46: #{tpu_custom_call.1} parent=5 // pred_check_branch
        %298 = sbr.rel (%p295) target = $region48
      $region47: #{tpu_custom_call.1} parent=5 // pred_region
        %s299 = ssub.s32 %s19, 1
        %p300 = scmp.lt.s32.totalorder %s24, 2
        %s301 = scalar_select %p300, %s24, 2
        %s302 = smul.addr %s301, 8
        %s303 = scalar_lea.vmem %s0, %s302
        %p304 = pneg %p45
        %p305 = pneg %p42
        %p306 = pneg %p66
        %p307 = pneg %p63
        %p308 = pneg %p87
        %p309 = pneg %p84
        %p310 = pneg %p108
        %p311 = pneg %p105
        %p312 = pneg %p129
        %p313 = pneg %p126
        %p314 = pneg %p150
        %p315 = pneg %p147
        %p316 = pneg %p171
        %p317 = pneg %p168
        %p318 = pneg %p197
        %p319 = pneg %p194
        %s320 = sand.u32 %s184, 1
        %s321 = scalar_lea.sflag [#allocation3], %s320
        %s322 = sand.u32 %s184, 1
        %s323 = smul.addr %s322, 8
        %s324 = scalar_lea.vmem [#allocation2], %s323
        %p325 = pneg %p223
        %p326 = pneg %p220
        %p327 = scmp.lt.s32.totalorder %s24, 2
        %s328 = scalar_select %p327, %s24, 2
        %s329 = smul.addr %s328, 8
        %s330 = scalar_lea.vmem %s8, %s329
        %p331 = pneg %p249
        %p332 = pneg %p246
        %s333 = sand.u32 %s236, 1
        %s334 = sand.u32 %s236, 1
        %s335 = smul.addr %s334, 80
        %s336 = scalar_lea.vmem [#allocation4], %s335
        %p337 = scmp.lt.s32.totalorder %s24, 2
        %s338 = scalar_select %p337, %s24, 2
        %s339 = smul.addr %s338, 8
        %s340 = scalar_lea.vmem %s0, %s339
        %p341 = scmp.lt.s32.totalorder %s24, 2
        %s342 = scalar_select %p341, %s24, 2
        %s343 = smul.addr %s342, 8
        %s344 = scalar_lea.vmem %s8, %s343
        %v345 = vld [vmem:[%s340] sm:$0xff]
        %v346 = vld [vmem:[%s1] sm:$0xff]
        %v347 = vld [vmem:[%s1 + $0x8] sm:$0xff]
        %v348 = vld [vmem:[%s3] sm:$0xff]
        %v349 = vld [vmem:[%s3 + $0x8] sm:$0xff]
        %v350 = vld [vmem:[%s3 + $0x10] sm:$0xff]
        %v351 = vld [vmem:[%s3 + $0x18] sm:$0xff]
        %v352 = vld [vmem:[%s5] sm:$0xff]
        %v353 = vld [vmem:[%s5 + $0x8] sm:$0xff]
        %v354 = vld [vmem:[%s5 + $0x10] sm:$0xff]
        %v355 = vld [vmem:[%s5 + $0x18] sm:$0xff]
        %v356 = vld [vmem:[%s2] sm:$0x1]
        %v357 = vld [vmem:[%s4] sm:$0x1]
        %v358 = vld [vmem:[%s6] sm:$0x1]
        %v359 = vmul.f32 %v356, 0.1
        %v361 = vlaneseq
        %v362 = vshrl.u32 %v361, 7
        %v363 = vsub.s32 0, %v362
        %v364 = vrot.slane %v356, %v363
        %vm366 = vcmask 130048
        %v368 = vsel %vm366, %v345, 0
        %370 = vmatprep.subr.mxu0 0.0
        %371 = vmatpush1.msra.mxu0 0.0
        %372 = vmatprep.subr.mxu0 0.0
        %373 = vmatpush1.msra.mxu0 0.0
        %374 = vmatprep.subr.mxu0 0.0
        %375 = vmatpush1.msra.mxu0 0.0
        %376 = vmatprep.subr.mxu0 0.0
        %377 = vmatpush1.msra.mxu0 0.0
        %378 = vmatprep.subr.mxu0 0.0
        %379 = vmatpush1.msra.mxu0 0.0
        %380 = vmatprep.subr.mxu0 0.0
        %381 = vmatpush1.msra.mxu0 0.0
        %382 = vmatprep.subr.mxu0 0.0
        %383 = vmatpush1.msra.mxu0 0.0
        %384 = vmatprep.subr.mxu0 0.0
        %385 = vmatpush1.msra.mxu0 0.0
        %386 = vmatprep.subr.mxu0 0.0
        %387 = vmatpush1.msra.mxu0 0.0
        %388 = vmatprep.subr.mxu0 0.0
        %389 = vmatpush1.msra.mxu0 0.0
        %390 = vmatprep.subr.mxu0 0.0
        %391 = vmatpush1.msra.mxu0 0.0
        %392 = vmatprep.subr.mxu0 0.0
        %393 = vmatpush1.msra.mxu0 0.0
        %394 = vmatprep.subr.mxu0 0.0
        %395 = vmatpush1.msra.mxu0 0.0
        %396 = vmatprep.subr.mxu0 0.0
        %397 = vmatpush1.msra.mxu0 0.0
        %398 = vmatprep.subr.mxu0 0.0
        %399 = vmatpush1.msra.mxu0 %v347
        %400 = vmatprep.subr.mxu0 0.0
        %401 = vmatpush1.msra.mxu0 %v346
        %402 = vmatprep.subr.mxu0 0.0
        %403 = vmatpush2.msra.mxu0 0.0
        %404 = vmatprep.subr.mxu0 0.0
        %405 = vmatpush2.msra.mxu0 0.0
        %406 = vmatprep.subr.mxu0 0.0
        %407 = vmatpush2.msra.mxu0 0.0
        %408 = vmatprep.subr.mxu0 0.0
        %409 = vmatpush2.msra.mxu0 0.0
        %410 = vmatprep.subr.mxu0 0.0
        %411 = vmatpush2.msra.mxu0 0.0
        %412 = vmatprep.subr.mxu0 0.0
        %413 = vmatpush2.msra.mxu0 0.0
        %414 = vmatprep.subr.mxu0 0.0
        %415 = vmatpush2.msra.mxu0 0.0
        %416 = vmatprep.subr.mxu0 0.0
        %417 = vmatpush2.msra.mxu0 0.0
        %418 = vmatprep.subr.mxu0 0.0
        %419 = vmatpush2.msra.mxu0 0.0
        %420 = vmatprep.subr.mxu0 0.0
        %421 = vmatpush2.msra.mxu0 0.0
        %422 = vmatprep.subr.mxu0 0.0
        %423 = vmatpush2.msra.mxu0 0.0
        %424 = vmatprep.subr.mxu0 0.0
        %425 = vmatpush2.msra.mxu0 0.0
        %426 = vmatprep.subr.mxu0 0.0
        %427 = vmatpush2.msra.mxu0 0.0
        %428 = vmatprep.subr.mxu0 0.0
        %429 = vmatpush2.msra.mxu0 0.0
        %430 = vmatprep.subr.mxu0 0.0
        %431 = vmatpush2.msra.mxu0 0.0
        %432 = vmatprep.subr.mxu0 0.0
        %433 = vmatpush2.msra.mxu0 0.0
        %434 = vmatprep.mubr.f32.mxu0 0.0
        %435 = vmatmul.mubr.f32.gmra.mxu0 %v368
        %v436 = vpop.f32.mrf.mxu0
        %v437 = vadd.f32 %v364, %v436
        %v438 = vpop.f32.mrf.mxu0
        %439 = vdwg.mxu0
        %v440 = vmax.f32 %v437, 0.0
        %v442 = vlaneseq
        %v443 = vshrl.u32 %v442, 7
        %v444 = vsub.s32 0, %v443
        %v445 = vrot.slane %v357, %v444
        %vm447 = vcmask 261120
        %v449 = vsel %vm447, %v440, 0
        %451 = vmatprep.subr.mxu0 0.0
        %452 = vmatpush1.msra.mxu0 0.0
        %453 = vmatprep.subr.mxu0 0.0
        %454 = vmatpush1.msra.mxu0 0.0
        %455 = vmatprep.subr.mxu0 0.0
        %456 = vmatpush1.msra.mxu0 0.0
        %457 = vmatprep.subr.mxu0 0.0
        %458 = vmatpush1.msra.mxu0 0.0
        %459 = vmatprep.subr.mxu0 0.0
        %460 = vmatpush1.msra.mxu0 0.0
        %461 = vmatprep.subr.mxu0 0.0
        %462 = vmatpush1.msra.mxu0 0.0
        %463 = vmatprep.subr.mxu0 0.0
        %464 = vmatpush1.msra.mxu0 0.0
        %465 = vmatprep.subr.mxu0 0.0
        %466 = vmatpush1.msra.mxu0 0.0
        %467 = vmatprep.subr.mxu0 0.0
        %468 = vmatpush1.msra.mxu0 0.0
        %469 = vmatprep.subr.mxu0 0.0
        %470 = vmatpush1.msra.mxu0 0.0
        %471 = vmatprep.subr.mxu0 0.0
        %472 = vmatpush1.msra.mxu0 0.0
        %473 = vmatprep.subr.mxu0 0.0
        %474 = vmatpush1.msra.mxu0 0.0
        %475 = vmatprep.subr.mxu0 0.0
        %476 = vmatpush1.msra.mxu0 %v351
        %477 = vmatprep.subr.mxu0 0.0
        %478 = vmatpush1.msra.mxu0 %v350
        %479 = vmatprep.subr.mxu0 0.0
        %480 = vmatpush1.msra.mxu0 %v349
        %481 = vmatprep.subr.mxu0 0.0
        %482 = vmatpush1.msra.mxu0 %v348
        %483 = vmatprep.subr.mxu0 0.0
        %484 = vmatpush2.msra.mxu0 0.0
        %485 = vmatprep.subr.mxu0 0.0
        %486 = vmatpush2.msra.mxu0 0.0
        %487 = vmatprep.subr.mxu0 0.0
        %488 = vmatpush2.msra.mxu0 0.0
        %489 = vmatprep.subr.mxu0 0.0
        %490 = vmatpush2.msra.mxu0 0.0
        %491 = vmatprep.subr.mxu0 0.0
        %492 = vmatpush2.msra.mxu0 0.0
        %493 = vmatprep.subr.mxu0 0.0
        %494 = vmatpush2.msra.mxu0 0.0
        %495 = vmatprep.subr.mxu0 0.0
        %496 = vmatpush2.msra.mxu0 0.0
        %497 = vmatprep.subr.mxu0 0.0
        %498 = vmatpush2.msra.mxu0 0.0
        %499 = vmatprep.subr.mxu0 0.0
        %500 = vmatpush2.msra.mxu0 0.0
        %501 = vmatprep.subr.mxu0 0.0
        %502 = vmatpush2.msra.mxu0 0.0
        %503 = vmatprep.subr.mxu0 0.0
        %504 = vmatpush2.msra.mxu0 0.0
        %505 = vmatprep.subr.mxu0 0.0
        %506 = vmatpush2.msra.mxu0 0.0
        %507 = vmatprep.subr.mxu0 0.0
        %508 = vmatpush2.msra.mxu0 0.0
        %509 = vmatprep.subr.mxu0 0.0
        %510 = vmatpush2.msra.mxu0 0.0
        %511 = vmatprep.subr.mxu0 0.0
        %512 = vmatpush2.msra.mxu0 0.0
        %513 = vmatprep.subr.mxu0 0.0
        %514 = vmatpush2.msra.mxu0 0.0
        %515 = vmatprep.mubr.f32.mxu0 0.0
        %516 = vmatmul.mubr.f32.gmra.mxu0 %v449
        %v517 = vpop.f32.mrf.mxu0
        %v518 = vadd.f32 %v445, %v517
        %v519 = vpop.f32.mrf.mxu0
        %520 = vdwg.mxu0
        %v521 = vsub.f32 %v345, %v518
        %522 = vst.msk [vmem:[%s336] sm:$0xff] %vm366, %v521
        %v523 = vmul.f32 %v521, 0.1
        %v525 = vsel %vm366, %v523, 0
        %527 = vmatprep.subr.mxu0 0.0
        %528 = vmatpush1.msra.mxu0 0.0
        %529 = vmatprep.subr.mxu0 0.0
        %530 = vmatpush1.msra.mxu0 0.0
        %531 = vmatprep.subr.mxu0 0.0
        %532 = vmatpush1.msra.mxu0 0.0
        %533 = vmatprep.subr.mxu0 0.0
        %534 = vmatpush1.msra.mxu0 0.0
        %535 = vmatprep.subr.mxu0 0.0
        %536 = vmatpush1.msra.mxu0 0.0
        %537 = vmatprep.subr.mxu0 0.0
        %538 = vmatpush1.msra.mxu0 0.0
        %539 = vmatprep.subr.mxu0 0.0
        %540 = vmatpush1.msra.mxu0 0.0
        %541 = vmatprep.subr.mxu0 0.0
        %542 = vmatpush1.msra.mxu0 0.0
        %543 = vmatprep.subr.mxu0 0.0
        %544 = vmatpush1.msra.mxu0 0.0
        %545 = vmatprep.subr.mxu0 0.0
        %546 = vmatpush1.msra.mxu0 0.0
        %547 = vmatprep.subr.mxu0 0.0
        %548 = vmatpush1.msra.mxu0 0.0
        %549 = vmatprep.subr.mxu0 0.0
        %550 = vmatpush1.msra.mxu0 0.0
        %551 = vmatprep.subr.mxu0 0.0
        %552 = vmatpush1.msra.mxu0 0.0
        %553 = vmatprep.subr.mxu0 0.0
        %554 = vmatpush1.msra.mxu0 0.0
        %555 = vmatprep.subr.mxu0 0.0
        %556 = vmatpush1.msra.mxu0 %v347
        %557 = vmatprep.subr.mxu0 0.0
        %558 = vmatpush1.msra.mxu0 %v346
        %559 = vmatprep.subr.mxu0 0.0
        %560 = vmatpush2.msra.mxu0 0.0
        %561 = vmatprep.subr.mxu0 0.0
        %562 = vmatpush2.msra.mxu0 0.0
        %563 = vmatprep.subr.mxu0 0.0
        %564 = vmatpush2.msra.mxu0 0.0
        %565 = vmatprep.subr.mxu0 0.0
        %566 = vmatpush2.msra.mxu0 0.0
        %567 = vmatprep.subr.mxu0 0.0
        %568 = vmatpush2.msra.mxu0 0.0
        %569 = vmatprep.subr.mxu0 0.0
        %570 = vmatpush2.msra.mxu0 0.0
        %571 = vmatprep.subr.mxu0 0.0
        %572 = vmatpush2.msra.mxu0 0.0
        %573 = vmatprep.subr.mxu0 0.0
        %574 = vmatpush2.msra.mxu0 0.0
        %575 = vmatprep.subr.mxu0 0.0
        %576 = vmatpush2.msra.mxu0 0.0
        %577 = vmatprep.subr.mxu0 0.0
        %578 = vmatpush2.msra.mxu0 0.0
        %579 = vmatprep.subr.mxu0 0.0
        %580 = vmatpush2.msra.mxu0 0.0
        %581 = vmatprep.subr.mxu0 0.0
        %582 = vmatpush2.msra.mxu0 0.0
        %583 = vmatprep.subr.mxu0 0.0
        %584 = vmatpush2.msra.mxu0 0.0
        %585 = vmatprep.subr.mxu0 0.0
        %586 = vmatpush2.msra.mxu0 0.0
        %587 = vmatprep.subr.mxu0 0.0
        %588 = vmatpush2.msra.mxu0 0.0
        %589 = vmatprep.subr.mxu0 0.0
        %590 = vmatpush2.msra.mxu0 0.0
        %591 = vmatprep.mubr.f32.mxu0 0.0
        %592 = vmatmul.mubr.f32.gmra.mxu0 %v525
        %v593 = vpop.f32.mrf.mxu0
        %v594 = vadd.f32 0.0, %v593
        %v595 = vpop.f32.mrf.mxu0
        %596 = vdwg.mxu0
        %v597 = vadd.f32 %v440, %v594
        %v599 = vlaneseq
        %v600 = vshrl.u32 %v599, 7
        %v601 = vsub.s32 0, %v600
        %v602 = vrot.slane %v359, %v601
        %v604 = vadd.f32 %v597, %v602
        %v606 = vlaneseq
        %v607 = vshrl.u32 %v606, 7
        %v608 = vsub.s32 0, %v607
        %v609 = vrot.slane %v358, %v608
        %v612 = vsel %vm447, %v604, 0
        %614 = vmatprep.subr.mxu0 0.0
        %615 = vmatpush1.msra.mxu0 0.0
        %616 = vmatprep.subr.mxu0 0.0
        %617 = vmatpush1.msra.mxu0 0.0
        %618 = vmatprep.subr.mxu0 0.0
        %619 = vmatpush1.msra.mxu0 0.0
        %620 = vmatprep.subr.mxu0 0.0
        %621 = vmatpush1.msra.mxu0 0.0
        %622 = vmatprep.subr.mxu0 0.0
        %623 = vmatpush1.msra.mxu0 0.0
        %624 = vmatprep.subr.mxu0 0.0
        %625 = vmatpush1.msra.mxu0 0.0
        %626 = vmatprep.subr.mxu0 0.0
        %627 = vmatpush1.msra.mxu0 0.0
        %628 = vmatprep.subr.mxu0 0.0
        %629 = vmatpush1.msra.mxu0 0.0
        %630 = vmatprep.subr.mxu0 0.0
        %631 = vmatpush1.msra.mxu0 0.0
        %632 = vmatprep.subr.mxu0 0.0
        %633 = vmatpush1.msra.mxu0 0.0
        %634 = vmatprep.subr.mxu0 0.0
        %635 = vmatpush1.msra.mxu0 0.0
        %636 = vmatprep.subr.mxu0 0.0
        %637 = vmatpush1.msra.mxu0 0.0
        %638 = vmatprep.subr.mxu0 0.0
        %639 = vmatpush1.msra.mxu0 %v355
        %640 = vmatprep.subr.mxu0 0.0
        %641 = vmatpush1.msra.mxu0 %v354
        %642 = vmatprep.subr.mxu0 0.0
        %643 = vmatpush1.msra.mxu0 %v353
        %644 = vmatprep.subr.mxu0 0.0
        %645 = vmatpush1.msra.mxu0 %v352
        %646 = vmatprep.subr.mxu0 0.0
        %647 = vmatpush2.msra.mxu0 0.0
        %648 = vmatprep.subr.mxu0 0.0
        %649 = vmatpush2.msra.mxu0 0.0
        %650 = vmatprep.subr.mxu0 0.0
        %651 = vmatpush2.msra.mxu0 0.0
        %652 = vmatprep.subr.mxu0 0.0
        %653 = vmatpush2.msra.mxu0 0.0
        %654 = vmatprep.subr.mxu0 0.0
        %655 = vmatpush2.msra.mxu0 0.0
        %656 = vmatprep.subr.mxu0 0.0
        %657 = vmatpush2.msra.mxu0 0.0
        %658 = vmatprep.subr.mxu0 0.0
        %659 = vmatpush2.msra.mxu0 0.0
        %660 = vmatprep.subr.mxu0 0.0
        %661 = vmatpush2.msra.mxu0 0.0
        %662 = vmatprep.subr.mxu0 0.0
        %663 = vmatpush2.msra.mxu0 0.0
        %664 = vmatprep.subr.mxu0 0.0
        %665 = vmatpush2.msra.mxu0 0.0
        %666 = vmatprep.subr.mxu0 0.0
        %667 = vmatpush2.msra.mxu0 0.0
        %668 = vmatprep.subr.mxu0 0.0
        %669 = vmatpush2.msra.mxu0 0.0
        %670 = vmatprep.subr.mxu0 0.0
        %671 = vmatpush2.msra.mxu0 0.0
        %672 = vmatprep.subr.mxu0 0.0
        %673 = vmatpush2.msra.mxu0 0.0
        %674 = vmatprep.subr.mxu0 0.0
        %675 = vmatpush2.msra.mxu0 0.0
        %676 = vmatprep.subr.mxu0 0.0
        %677 = vmatpush2.msra.mxu0 0.0
        %678 = vmatprep.mubr.f32.mxu0 0.0
        %679 = vmatmul.mubr.f32.gmra.mxu0 %v612
        %v680 = vpop.f32.mrf.mxu0
        %v681 = vadd.f32 %v609, %v680
        %v682 = vpop.f32.mrf.mxu0
        %683 = vdwg.mxu0
        %v684 = vmax.f32 %v681, 0.0
        %v685 = vmul.f32 %v684, 0.1
        %v686 = vadd.f32 %v604, %v685
        %v687 = vmax.f32 %v686, 0.0
        %v689 = vsel %vm447, %v687, 0
        %691 = vmatprep.subr.mxu0 0.0
        %692 = vmatpush1.msra.mxu0 0.0
        %693 = vmatprep.subr.mxu0 0.0
        %694 = vmatpush1.msra.mxu0 0.0
        %695 = vmatprep.subr.mxu0 0.0
        %696 = vmatpush1.msra.mxu0 0.0
        %697 = vmatprep.subr.mxu0 0.0
        %698 = vmatpush1.msra.mxu0 0.0
        %699 = vmatprep.subr.mxu0 0.0
        %700 = vmatpush1.msra.mxu0 0.0
        %701 = vmatprep.subr.mxu0 0.0
        %702 = vmatpush1.msra.mxu0 0.0
        %703 = vmatprep.subr.mxu0 0.0
        %704 = vmatpush1.msra.mxu0 0.0
        %705 = vmatprep.subr.mxu0 0.0
        %706 = vmatpush1.msra.mxu0 0.0
        %707 = vmatprep.subr.mxu0 0.0
        %708 = vmatpush1.msra.mxu0 0.0
        %709 = vmatprep.subr.mxu0 0.0
        %710 = vmatpush1.msra.mxu0 0.0
        %711 = vmatprep.subr.mxu0 0.0
        %712 = vmatpush1.msra.mxu0 0.0
        %713 = vmatprep.subr.mxu0 0.0
        %714 = vmatpush1.msra.mxu0 0.0
        %715 = vmatprep.subr.mxu0 0.0
        %716 = vmatpush1.msra.mxu0 %v351
        %717 = vmatprep.subr.mxu0 0.0
        %718 = vmatpush1.msra.mxu0 %v350
        %719 = vmatprep.subr.mxu0 0.0
        %720 = vmatpush1.msra.mxu0 %v349
        %721 = vmatprep.subr.mxu0 0.0
        %722 = vmatpush1.msra.mxu0 %v348
        %723 = vmatprep.subr.mxu0 0.0
        %724 = vmatpush2.msra.mxu0 0.0
        %725 = vmatprep.subr.mxu0 0.0
        %726 = vmatpush2.msra.mxu0 0.0
        %727 = vmatprep.subr.mxu0 0.0
        %728 = vmatpush2.msra.mxu0 0.0
        %729 = vmatprep.subr.mxu0 0.0
        %730 = vmatpush2.msra.mxu0 0.0
        %731 = vmatprep.subr.mxu0 0.0
        %732 = vmatpush2.msra.mxu0 0.0
        %733 = vmatprep.subr.mxu0 0.0
        %734 = vmatpush2.msra.mxu0 0.0
        %735 = vmatprep.subr.mxu0 0.0
        %736 = vmatpush2.msra.mxu0 0.0
        %737 = vmatprep.subr.mxu0 0.0
        %738 = vmatpush2.msra.mxu0 0.0
        %739 = vmatprep.subr.mxu0 0.0
        %740 = vmatpush2.msra.mxu0 0.0
        %741 = vmatprep.subr.mxu0 0.0
        %742 = vmatpush2.msra.mxu0 0.0
        %743 = vmatprep.subr.mxu0 0.0
        %744 = vmatpush2.msra.mxu0 0.0
        %745 = vmatprep.subr.mxu0 0.0
        %746 = vmatpush2.msra.mxu0 0.0
        %747 = vmatprep.subr.mxu0 0.0
        %748 = vmatpush2.msra.mxu0 0.0
        %749 = vmatprep.subr.mxu0 0.0
        %750 = vmatpush2.msra.mxu0 0.0
        %751 = vmatprep.subr.mxu0 0.0
        %752 = vmatpush2.msra.mxu0 0.0
        %753 = vmatprep.subr.mxu0 0.0
        %754 = vmatpush2.msra.mxu0 0.0
        %755 = vmatprep.mubr.f32.mxu0 0.0
        %756 = vmatmul.mubr.f32.gmra.mxu0 %v689
        %v757 = vpop.f32.mrf.mxu0
        %v758 = vadd.f32 %v445, %v757
        %v759 = vpop.f32.mrf.mxu0
        %760 = vdwg.mxu0
        %v761 = vsub.f32 %v345, %v758
        %s762 = scalar_lea.vmem %s336, 8 [#allocation4]
        %763 = vst.msk [vmem:[%s762] sm:$0xff] %vm366, %v761
        %v764 = vmul.f32 %v761, 0.1
        %v766 = vsel %vm366, %v764, 0
        %768 = vmatprep.subr.mxu0 0.0
        %769 = vmatpush1.msra.mxu0 0.0
        %770 = vmatprep.subr.mxu0 0.0
        %771 = vmatpush1.msra.mxu0 0.0
        %772 = vmatprep.subr.mxu0 0.0
        %773 = vmatpush1.msra.mxu0 0.0
        %774 = vmatprep.subr.mxu0 0.0
        %775 = vmatpush1.msra.mxu0 0.0
        %776 = vmatprep.subr.mxu0 0.0
        %777 = vmatpush1.msra.mxu0 0.0
        %778 = vmatprep.subr.mxu0 0.0
        %779 = vmatpush1.msra.mxu0 0.0
        %780 = vmatprep.subr.mxu0 0.0
        %781 = vmatpush1.msra.mxu0 0.0
        %782 = vmatprep.subr.mxu0 0.0
        %783 = vmatpush1.msra.mxu0 0.0
        %784 = vmatprep.subr.mxu0 0.0
        %785 = vmatpush1.msra.mxu0 0.0
        %786 = vmatprep.subr.mxu0 0.0
        %787 = vmatpush1.msra.mxu0 0.0
        %788 = vmatprep.subr.mxu0 0.0
        %789 = vmatpush1.msra.mxu0 0.0
        %790 = vmatprep.subr.mxu0 0.0
        %791 = vmatpush1.msra.mxu0 0.0
        %792 = vmatprep.subr.mxu0 0.0
        %793 = vmatpush1.msra.mxu0 0.0
        %794 = vmatprep.subr.mxu0 0.0
        %795 = vmatpush1.msra.mxu0 0.0
        %796 = vmatprep.subr.mxu0 0.0
        %797 = vmatpush1.msra.mxu0 %v347
        %798 = vmatprep.subr.mxu0 0.0
        %799 = vmatpush1.msra.mxu0 %v346
        %800 = vmatprep.subr.mxu0 0.0
        %801 = vmatpush2.msra.mxu0 0.0
        %802 = vmatprep.subr.mxu0 0.0
        %803 = vmatpush2.msra.mxu0 0.0
        %804 = vmatprep.subr.mxu0 0.0
        %805 = vmatpush2.msra.mxu0 0.0
        %806 = vmatprep.subr.mxu0 0.0
        %807 = vmatpush2.msra.mxu0 0.0
        %808 = vmatprep.subr.mxu0 0.0
        %809 = vmatpush2.msra.mxu0 0.0
        %810 = vmatprep.subr.mxu0 0.0
        %811 = vmatpush2.msra.mxu0 0.0
        %812 = vmatprep.subr.mxu0 0.0
        %813 = vmatpush2.msra.mxu0 0.0
        %814 = vmatprep.subr.mxu0 0.0
        %815 = vmatpush2.msra.mxu0 0.0
        %816 = vmatprep.subr.mxu0 0.0
        %817 = vmatpush2.msra.mxu0 0.0
        %818 = vmatprep.subr.mxu0 0.0
        %819 = vmatpush2.msra.mxu0 0.0
        %820 = vmatprep.subr.mxu0 0.0
        %821 = vmatpush2.msra.mxu0 0.0
        %822 = vmatprep.subr.mxu0 0.0
        %823 = vmatpush2.msra.mxu0 0.0
        %824 = vmatprep.subr.mxu0 0.0
        %825 = vmatpush2.msra.mxu0 0.0
        %826 = vmatprep.subr.mxu0 0.0
        %827 = vmatpush2.msra.mxu0 0.0
        %828 = vmatprep.subr.mxu0 0.0
        %829 = vmatpush2.msra.mxu0 0.0
        %830 = vmatprep.subr.mxu0 0.0
        %831 = vmatpush2.msra.mxu0 0.0
        %832 = vmatprep.mubr.f32.mxu0 0.0
        %833 = vmatmul.mubr.f32.gmra.mxu0 %v766
        %v834 = vpop.f32.mrf.mxu0
        %v835 = vadd.f32 0.0, %v834
        %v836 = vpop.f32.mrf.mxu0
        %837 = vdwg.mxu0
        %v838 = vadd.f32 %v687, %v835
        %v839 = vadd.f32 %v838, %v602
        %v841 = vsel %vm447, %v839, 0
        %843 = vmatprep.subr.mxu0 0.0
        %844 = vmatpush1.msra.mxu0 0.0
        %845 = vmatprep.subr.mxu0 0.0
        %846 = vmatpush1.msra.mxu0 0.0
        %847 = vmatprep.subr.mxu0 0.0
        %848 = vmatpush1.msra.mxu0 0.0
        %849 = vmatprep.subr.mxu0 0.0
        %850 = vmatpush1.msra.mxu0 0.0
        %851 = vmatprep.subr.mxu0 0.0
        %852 = vmatpush1.msra.mxu0 0.0
        %853 = vmatprep.subr.mxu0 0.0
        %854 = vmatpush1.msra.mxu0 0.0
        %855 = vmatprep.subr.mxu0 0.0
        %856 = vmatpush1.msra.mxu0 0.0
        %857 = vmatprep.subr.mxu0 0.0
        %858 = vmatpush1.msra.mxu0 0.0
        %859 = vmatprep.subr.mxu0 0.0
        %860 = vmatpush1.msra.mxu0 0.0
        %861 = vmatprep.subr.mxu0 0.0
        %862 = vmatpush1.msra.mxu0 0.0
        %863 = vmatprep.subr.mxu0 0.0
        %864 = vmatpush1.msra.mxu0 0.0
        %865 = vmatprep.subr.mxu0 0.0
        %866 = vmatpush1.msra.mxu0 0.0
        %867 = vmatprep.subr.mxu0 0.0
        %868 = vmatpush1.msra.mxu0 %v355
        %869 = vmatprep.subr.mxu0 0.0
        %870 = vmatpush1.msra.mxu0 %v354
        %871 = vmatprep.subr.mxu0 0.0
        %872 = vmatpush1.msra.mxu0 %v353
        %873 = vmatprep.subr.mxu0 0.0
        %874 = vmatpush1.msra.mxu0 %v352
        %875 = vmatprep.subr.mxu0 0.0
        %876 = vmatpush2.msra.mxu0 0.0
        %877 = vmatprep.subr.mxu0 0.0
        %878 = vmatpush2.msra.mxu0 0.0
        %879 = vmatprep.subr.mxu0 0.0
        %880 = vmatpush2.msra.mxu0 0.0
        %881 = vmatprep.subr.mxu0 0.0
        %882 = vmatpush2.msra.mxu0 0.0
        %883 = vmatprep.subr.mxu0 0.0
        %884 = vmatpush2.msra.mxu0 0.0
        %885 = vmatprep.subr.mxu0 0.0
        %886 = vmatpush2.msra.mxu0 0.0
        %887 = vmatprep.subr.mxu0 0.0
        %888 = vmatpush2.msra.mxu0 0.0
        %889 = vmatprep.subr.mxu0 0.0
        %890 = vmatpush2.msra.mxu0 0.0
        %891 = vmatprep.subr.mxu0 0.0
        %892 = vmatpush2.msra.mxu0 0.0
        %893 = vmatprep.subr.mxu0 0.0
        %894 = vmatpush2.msra.mxu0 0.0
        %895 = vmatprep.subr.mxu0 0.0
        %896 = vmatpush2.msra.mxu0 0.0
        %897 = vmatprep.subr.mxu0 0.0
        %898 = vmatpush2.msra.mxu0 0.0
        %899 = vmatprep.subr.mxu0 0.0
        %900 = vmatpush2.msra.mxu0 0.0
        %901 = vmatprep.subr.mxu0 0.0
        %902 = vmatpush2.msra.mxu0 0.0
        %903 = vmatprep.subr.mxu0 0.0
        %904 = vmatpush2.msra.mxu0 0.0
        %905 = vmatprep.subr.mxu0 0.0
        %906 = vmatpush2.msra.mxu0 0.0
        %907 = vmatprep.mubr.f32.mxu0 0.0
        %908 = vmatmul.mubr.f32.gmra.mxu0 %v841
        %v909 = vpop.f32.mrf.mxu0
        %v910 = vadd.f32 %v609, %v909
        %v911 = vpop.f32.mrf.mxu0
        %912 = vdwg.mxu0
        %v913 = vmax.f32 %v910, 0.0
        %v914 = vmul.f32 %v913, 0.1
        %v915 = vadd.f32 %v839, %v914
        %v916 = vmax.f32 %v915, 0.0
        %v918 = vsel %vm447, %v916, 0
        %920 = vmatprep.subr.mxu0 0.0
        %921 = vmatpush1.msra.mxu0 0.0
        %922 = vmatprep.subr.mxu0 0.0
        %923 = vmatpush1.msra.mxu0 0.0
        %924 = vmatprep.subr.mxu0 0.0
        %925 = vmatpush1.msra.mxu0 0.0
        %926 = vmatprep.subr.mxu0 0.0
        %927 = vmatpush1.msra.mxu0 0.0
        %928 = vmatprep.subr.mxu0 0.0
        %929 = vmatpush1.msra.mxu0 0.0
        %930 = vmatprep.subr.mxu0 0.0
        %931 = vmatpush1.msra.mxu0 0.0
        %932 = vmatprep.subr.mxu0 0.0
        %933 = vmatpush1.msra.mxu0 0.0
        %934 = vmatprep.subr.mxu0 0.0
        %935 = vmatpush1.msra.mxu0 0.0
        %936 = vmatprep.subr.mxu0 0.0
        %937 = vmatpush1.msra.mxu0 0.0
        %938 = vmatprep.subr.mxu0 0.0
        %939 = vmatpush1.msra.mxu0 0.0
        %940 = vmatprep.subr.mxu0 0.0
        %941 = vmatpush1.msra.mxu0 0.0
        %942 = vmatprep.subr.mxu0 0.0
        %943 = vmatpush1.msra.mxu0 0.0
        %944 = vmatprep.subr.mxu0 0.0
        %945 = vmatpush1.msra.mxu0 %v351
        %946 = vmatprep.subr.mxu0 0.0
        %947 = vmatpush1.msra.mxu0 %v350
        %948 = vmatprep.subr.mxu0 0.0
        %949 = vmatpush1.msra.mxu0 %v349
        %950 = vmatprep.subr.mxu0 0.0
        %951 = vmatpush1.msra.mxu0 %v348
        %952 = vmatprep.subr.mxu0 0.0
        %953 = vmatpush2.msra.mxu0 0.0
        %954 = vmatprep.subr.mxu0 0.0
        %955 = vmatpush2.msra.mxu0 0.0
        %956 = vmatprep.subr.mxu0 0.0
        %957 = vmatpush2.msra.mxu0 0.0
        %958 = vmatprep.subr.mxu0 0.0
        %959 = vmatpush2.msra.mxu0 0.0
        %960 = vmatprep.subr.mxu0 0.0
        %961 = vmatpush2.msra.mxu0 0.0
        %962 = vmatprep.subr.mxu0 0.0
        %963 = vmatpush2.msra.mxu0 0.0
        %964 = vmatprep.subr.mxu0 0.0
        %965 = vmatpush2.msra.mxu0 0.0
        %966 = vmatprep.subr.mxu0 0.0
        %967 = vmatpush2.msra.mxu0 0.0
        %968 = vmatprep.subr.mxu0 0.0
        %969 = vmatpush2.msra.mxu0 0.0
        %970 = vmatprep.subr.mxu0 0.0
        %971 = vmatpush2.msra.mxu0 0.0
        %972 = vmatprep.subr.mxu0 0.0
        %973 = vmatpush2.msra.mxu0 0.0
        %974 = vmatprep.subr.mxu0 0.0
        %975 = vmatpush2.msra.mxu0 0.0
        %976 = vmatprep.subr.mxu0 0.0
        %977 = vmatpush2.msra.mxu0 0.0
        %978 = vmatprep.subr.mxu0 0.0
        %979 = vmatpush2.msra.mxu0 0.0
        %980 = vmatprep.subr.mxu0 0.0
        %981 = vmatpush2.msra.mxu0 0.0
        %982 = vmatprep.subr.mxu0 0.0
        %983 = vmatpush2.msra.mxu0 0.0
        %984 = vmatprep.mubr.f32.mxu0 0.0
        %985 = vmatmul.mubr.f32.gmra.mxu0 %v918
        %v986 = vpop.f32.mrf.mxu0
        %v987 = vadd.f32 %v445, %v986
        %v988 = vpop.f32.mrf.mxu0
        %989 = vdwg.mxu0
        %v990 = vsub.f32 %v345, %v987
        %s991 = scalar_lea.vmem %s336, 16 [#allocation4]
        %992 = vst.msk [vmem:[%s991] sm:$0xff] %vm366, %v990
        %v993 = vmul.f32 %v990, 0.1
        %v995 = vsel %vm366, %v993, 0
        %997 = vmatprep.subr.mxu0 0.0
        %998 = vmatpush1.msra.mxu0 0.0
        %999 = vmatprep.subr.mxu0 0.0
        %1000 = vmatpush1.msra.mxu0 0.0
        %1001 = vmatprep.subr.mxu0 0.0
        %1002 = vmatpush1.msra.mxu0 0.0
        %1003 = vmatprep.subr.mxu0 0.0
        %1004 = vmatpush1.msra.mxu0 0.0
        %1005 = vmatprep.subr.mxu0 0.0
        %1006 = vmatpush1.msra.mxu0 0.0
        %1007 = vmatprep.subr.mxu0 0.0
        %1008 = vmatpush1.msra.mxu0 0.0
        %1009 = vmatprep.subr.mxu0 0.0
        %1010 = vmatpush1.msra.mxu0 0.0
        %1011 = vmatprep.subr.mxu0 0.0
        %1012 = vmatpush1.msra.mxu0 0.0
        %1013 = vmatprep.subr.mxu0 0.0
        %1014 = vmatpush1.msra.mxu0 0.0
        %1015 = vmatprep.subr.mxu0 0.0
        %1016 = vmatpush1.msra.mxu0 0.0
        %1017 = vmatprep.subr.mxu0 0.0
        %1018 = vmatpush1.msra.mxu0 0.0
        %1019 = vmatprep.subr.mxu0 0.0
        %1020 = vmatpush1.msra.mxu0 0.0
        %1021 = vmatprep.subr.mxu0 0.0
        %1022 = vmatpush1.msra.mxu0 0.0
        %1023 = vmatprep.subr.mxu0 0.0
        %1024 = vmatpush1.msra.mxu0 0.0
        %1025 = vmatprep.subr.mxu0 0.0
        %1026 = vmatpush1.msra.mxu0 %v347
        %1027 = vmatprep.subr.mxu0 0.0
        %1028 = vmatpush1.msra.mxu0 %v346
        %1029 = vmatprep.subr.mxu0 0.0
        %1030 = vmatpush2.msra.mxu0 0.0
        %1031 = vmatprep.subr.mxu0 0.0
        %1032 = vmatpush2.msra.mxu0 0.0
        %1033 = vmatprep.subr.mxu0 0.0
        %1034 = vmatpush2.msra.mxu0 0.0
        %1035 = vmatprep.subr.mxu0 0.0
        %1036 = vmatpush2.msra.mxu0 0.0
        %1037 = vmatprep.subr.mxu0 0.0
        %1038 = vmatpush2.msra.mxu0 0.0
        %1039 = vmatprep.subr.mxu0 0.0
        %1040 = vmatpush2.msra.mxu0 0.0
        %1041 = vmatprep.subr.mxu0 0.0
        %1042 = vmatpush2.msra.mxu0 0.0
        %1043 = vmatprep.subr.mxu0 0.0
        %1044 = vmatpush2.msra.mxu0 0.0
        %1045 = vmatprep.subr.mxu0 0.0
        %1046 = vmatpush2.msra.mxu0 0.0
        %1047 = vmatprep.subr.mxu0 0.0
        %1048 = vmatpush2.msra.mxu0 0.0
        %1049 = vmatprep.subr.mxu0 0.0
        %1050 = vmatpush2.msra.mxu0 0.0
        %1051 = vmatprep.subr.mxu0 0.0
        %1052 = vmatpush2.msra.mxu0 0.0
        %1053 = vmatprep.subr.mxu0 0.0
        %1054 = vmatpush2.msra.mxu0 0.0
        %1055 = vmatprep.subr.mxu0 0.0
        %1056 = vmatpush2.msra.mxu0 0.0
        %1057 = vmatprep.subr.mxu0 0.0
        %1058 = vmatpush2.msra.mxu0 0.0
        %1059 = vmatprep.subr.mxu0 0.0
        %1060 = vmatpush2.msra.mxu0 0.0
        %1061 = vmatprep.mubr.f32.mxu0 0.0
        %1062 = vmatmul.mubr.f32.gmra.mxu0 %v995
        %v1063 = vpop.f32.mrf.mxu0
        %v1064 = vadd.f32 0.0, %v1063
        %v1065 = vpop.f32.mrf.mxu0
        %1066 = vdwg.mxu0
        %v1067 = vadd.f32 %v916, %v1064
        %v1068 = vadd.f32 %v1067, %v602
        %v1070 = vsel %vm447, %v1068, 0
        %1072 = vmatprep.subr.mxu0 0.0
        %1073 = vmatpush1.msra.mxu0 0.0
        %1074 = vmatprep.subr.mxu0 0.0
        %1075 = vmatpush1.msra.mxu0 0.0
        %1076 = vmatprep.subr.mxu0 0.0
        %1077 = vmatpush1.msra.mxu0 0.0
        %1078 = vmatprep.subr.mxu0 0.0
        %1079 = vmatpush1.msra.mxu0 0.0
        %1080 = vmatprep.subr.mxu0 0.0
        %1081 = vmatpush1.msra.mxu0 0.0
        %1082 = vmatprep.subr.mxu0 0.0
        %1083 = vmatpush1.msra.mxu0 0.0
        %1084 = vmatprep.subr.mxu0 0.0
        %1085 = vmatpush1.msra.mxu0 0.0
        %1086 = vmatprep.subr.mxu0 0.0
        %1087 = vmatpush1.msra.mxu0 0.0
        %1088 = vmatprep.subr.mxu0 0.0
        %1089 = vmatpush1.msra.mxu0 0.0
        %1090 = vmatprep.subr.mxu0 0.0
        %1091 = vmatpush1.msra.mxu0 0.0
        %1092 = vmatprep.subr.mxu0 0.0
        %1093 = vmatpush1.msra.mxu0 0.0
        %1094 = vmatprep.subr.mxu0 0.0
        %1095 = vmatpush1.msra.mxu0 0.0
        %1096 = vmatprep.subr.mxu0 0.0
        %1097 = vmatpush1.msra.mxu0 %v355
        %1098 = vmatprep.subr.mxu0 0.0
        %1099 = vmatpush1.msra.mxu0 %v354
        %1100 = vmatprep.subr.mxu0 0.0
        %1101 = vmatpush1.msra.mxu0 %v353
        %1102 = vmatprep.subr.mxu0 0.0
        %1103 = vmatpush1.msra.mxu0 %v352
        %1104 = vmatprep.subr.mxu0 0.0
        %1105 = vmatpush2.msra.mxu0 0.0
        %1106 = vmatprep.subr.mxu0 0.0
        %1107 = vmatpush2.msra.mxu0 0.0
        %1108 = vmatprep.subr.mxu0 0.0
        %1109 = vmatpush2.msra.mxu0 0.0
        %1110 = vmatprep.subr.mxu0 0.0
        %1111 = vmatpush2.msra.mxu0 0.0
        %1112 = vmatprep.subr.mxu0 0.0
        %1113 = vmatpush2.msra.mxu0 0.0
        %1114 = vmatprep.subr.mxu0 0.0
        %1115 = vmatpush2.msra.mxu0 0.0
        %1116 = vmatprep.subr.mxu0 0.0
        %1117 = vmatpush2.msra.mxu0 0.0
        %1118 = vmatprep.subr.mxu0 0.0
        %1119 = vmatpush2.msra.mxu0 0.0
        %1120 = vmatprep.subr.mxu0 0.0
        %1121 = vmatpush2.msra.mxu0 0.0
        %1122 = vmatprep.subr.mxu0 0.0
        %1123 = vmatpush2.msra.mxu0 0.0
        %1124 = vmatprep.subr.mxu0 0.0
        %1125 = vmatpush2.msra.mxu0 0.0
        %1126 = vmatprep.subr.mxu0 0.0
        %1127 = vmatpush2.msra.mxu0 0.0
        %1128 = vmatprep.subr.mxu0 0.0
        %1129 = vmatpush2.msra.mxu0 0.0
        %1130 = vmatprep.subr.mxu0 0.0
        %1131 = vmatpush2.msra.mxu0 0.0
        %1132 = vmatprep.subr.mxu0 0.0
        %1133 = vmatpush2.msra.mxu0 0.0
        %1134 = vmatprep.subr.mxu0 0.0
        %1135 = vmatpush2.msra.mxu0 0.0
        %1136 = vmatprep.mubr.f32.mxu0 0.0
        %1137 = vmatmul.mubr.f32.gmra.mxu0 %v1070
        %v1138 = vpop.f32.mrf.mxu0
        %v1139 = vadd.f32 %v609, %v1138
        %v1140 = vpop.f32.mrf.mxu0
        %1141 = vdwg.mxu0
        %v1142 = vmax.f32 %v1139, 0.0
        %v1143 = vmul.f32 %v1142, 0.1
        %v1144 = vadd.f32 %v1068, %v1143
        %v1145 = vmax.f32 %v1144, 0.0
        %v1147 = vsel %vm447, %v1145, 0
        %1149 = vmatprep.subr.mxu0 0.0
        %1150 = vmatpush1.msra.mxu0 0.0
        %1151 = vmatprep.subr.mxu0 0.0
        %1152 = vmatpush1.msra.mxu0 0.0
        %1153 = vmatprep.subr.mxu0 0.0
        %1154 = vmatpush1.msra.mxu0 0.0
        %1155 = vmatprep.subr.mxu0 0.0
        %1156 = vmatpush1.msra.mxu0 0.0
        %1157 = vmatprep.subr.mxu0 0.0
        %1158 = vmatpush1.msra.mxu0 0.0
        %1159 = vmatprep.subr.mxu0 0.0
        %1160 = vmatpush1.msra.mxu0 0.0
        %1161 = vmatprep.subr.mxu0 0.0
        %1162 = vmatpush1.msra.mxu0 0.0
        %1163 = vmatprep.subr.mxu0 0.0
        %1164 = vmatpush1.msra.mxu0 0.0
        %1165 = vmatprep.subr.mxu0 0.0
        %1166 = vmatpush1.msra.mxu0 0.0
        %1167 = vmatprep.subr.mxu0 0.0
        %1168 = vmatpush1.msra.mxu0 0.0
        %1169 = vmatprep.subr.mxu0 0.0
        %1170 = vmatpush1.msra.mxu0 0.0
        %1171 = vmatprep.subr.mxu0 0.0
        %1172 = vmatpush1.msra.mxu0 0.0
        %1173 = vmatprep.subr.mxu0 0.0
        %1174 = vmatpush1.msra.mxu0 %v351
        %1175 = vmatprep.subr.mxu0 0.0
        %1176 = vmatpush1.msra.mxu0 %v350
        %1177 = vmatprep.subr.mxu0 0.0
        %1178 = vmatpush1.msra.mxu0 %v349
        %1179 = vmatprep.subr.mxu0 0.0
        %1180 = vmatpush1.msra.mxu0 %v348
        %1181 = vmatprep.subr.mxu0 0.0
        %1182 = vmatpush2.msra.mxu0 0.0
        %1183 = vmatprep.subr.mxu0 0.0
        %1184 = vmatpush2.msra.mxu0 0.0
        %1185 = vmatprep.subr.mxu0 0.0
        %1186 = vmatpush2.msra.mxu0 0.0
        %1187 = vmatprep.subr.mxu0 0.0
        %1188 = vmatpush2.msra.mxu0 0.0
        %1189 = vmatprep.subr.mxu0 0.0
        %1190 = vmatpush2.msra.mxu0 0.0
        %1191 = vmatprep.subr.mxu0 0.0
        %1192 = vmatpush2.msra.mxu0 0.0
        %1193 = vmatprep.subr.mxu0 0.0
        %1194 = vmatpush2.msra.mxu0 0.0
        %1195 = vmatprep.subr.mxu0 0.0
        %1196 = vmatpush2.msra.mxu0 0.0
        %1197 = vmatprep.subr.mxu0 0.0
        %1198 = vmatpush2.msra.mxu0 0.0
        %1199 = vmatprep.subr.mxu0 0.0
        %1200 = vmatpush2.msra.mxu0 0.0
        %1201 = vmatprep.subr.mxu0 0.0
        %1202 = vmatpush2.msra.mxu0 0.0
        %1203 = vmatprep.subr.mxu0 0.0
        %1204 = vmatpush2.msra.mxu0 0.0
        %1205 = vmatprep.subr.mxu0 0.0
        %1206 = vmatpush2.msra.mxu0 0.0
        %1207 = vmatprep.subr.mxu0 0.0
        %1208 = vmatpush2.msra.mxu0 0.0
        %1209 = vmatprep.subr.mxu0 0.0
        %1210 = vmatpush2.msra.mxu0 0.0
        %1211 = vmatprep.subr.mxu0 0.0
        %1212 = vmatpush2.msra.mxu0 0.0
        %1213 = vmatprep.mubr.f32.mxu0 0.0
        %1214 = vmatmul.mubr.f32.gmra.mxu0 %v1147
        %v1215 = vpop.f32.mrf.mxu0
        %v1216 = vadd.f32 %v445, %v1215
        %v1217 = vpop.f32.mrf.mxu0
        %1218 = vdwg.mxu0
        %v1219 = vsub.f32 %v345, %v1216
        %s1220 = scalar_lea.vmem %s336, 24 [#allocation4]
        %1221 = vst.msk [vmem:[%s1220] sm:$0xff] %vm366, %v1219
        %v1222 = vmul.f32 %v1219, 0.1
        %v1224 = vsel %vm366, %v1222, 0
        %1226 = vmatprep.subr.mxu0 0.0
        %1227 = vmatpush1.msra.mxu0 0.0
        %1228 = vmatprep.subr.mxu0 0.0
        %1229 = vmatpush1.msra.mxu0 0.0
        %1230 = vmatprep.subr.mxu0 0.0
        %1231 = vmatpush1.msra.mxu0 0.0
        %1232 = vmatprep.subr.mxu0 0.0
        %1233 = vmatpush1.msra.mxu0 0.0
        %1234 = vmatprep.subr.mxu0 0.0
        %1235 = vmatpush1.msra.mxu0 0.0
        %1236 = vmatprep.subr.mxu0 0.0
        %1237 = vmatpush1.msra.mxu0 0.0
        %1238 = vmatprep.subr.mxu0 0.0
        %1239 = vmatpush1.msra.mxu0 0.0
        %1240 = vmatprep.subr.mxu0 0.0
        %1241 = vmatpush1.msra.mxu0 0.0
        %1242 = vmatprep.subr.mxu0 0.0
        %1243 = vmatpush1.msra.mxu0 0.0
        %1244 = vmatprep.subr.mxu0 0.0
        %1245 = vmatpush1.msra.mxu0 0.0
        %1246 = vmatprep.subr.mxu0 0.0
        %1247 = vmatpush1.msra.mxu0 0.0
        %1248 = vmatprep.subr.mxu0 0.0
        %1249 = vmatpush1.msra.mxu0 0.0
        %1250 = vmatprep.subr.mxu0 0.0
        %1251 = vmatpush1.msra.mxu0 0.0
        %1252 = vmatprep.subr.mxu0 0.0
        %1253 = vmatpush1.msra.mxu0 0.0
        %1254 = vmatprep.subr.mxu0 0.0
        %1255 = vmatpush1.msra.mxu0 %v347
        %1256 = vmatprep.subr.mxu0 0.0
        %1257 = vmatpush1.msra.mxu0 %v346
        %1258 = vmatprep.subr.mxu0 0.0
        %1259 = vmatpush2.msra.mxu0 0.0
        %1260 = vmatprep.subr.mxu0 0.0
        %1261 = vmatpush2.msra.mxu0 0.0
        %1262 = vmatprep.subr.mxu0 0.0
        %1263 = vmatpush2.msra.mxu0 0.0
        %1264 = vmatprep.subr.mxu0 0.0
        %1265 = vmatpush2.msra.mxu0 0.0
        %1266 = vmatprep.subr.mxu0 0.0
        %1267 = vmatpush2.msra.mxu0 0.0
        %1268 = vmatprep.subr.mxu0 0.0
        %1269 = vmatpush2.msra.mxu0 0.0
        %1270 = vmatprep.subr.mxu0 0.0
        %1271 = vmatpush2.msra.mxu0 0.0
        %1272 = vmatprep.subr.mxu0 0.0
        %1273 = vmatpush2.msra.mxu0 0.0
        %1274 = vmatprep.subr.mxu0 0.0
        %1275 = vmatpush2.msra.mxu0 0.0
        %1276 = vmatprep.subr.mxu0 0.0
        %1277 = vmatpush2.msra.mxu0 0.0
        %1278 = vmatprep.subr.mxu0 0.0
        %1279 = vmatpush2.msra.mxu0 0.0
        %1280 = vmatprep.subr.mxu0 0.0
        %1281 = vmatpush2.msra.mxu0 0.0
        %1282 = vmatprep.subr.mxu0 0.0
        %1283 = vmatpush2.msra.mxu0 0.0
        %1284 = vmatprep.subr.mxu0 0.0
        %1285 = vmatpush2.msra.mxu0 0.0
        %1286 = vmatprep.subr.mxu0 0.0
        %1287 = vmatpush2.msra.mxu0 0.0
        %1288 = vmatprep.subr.mxu0 0.0
        %1289 = vmatpush2.msra.mxu0 0.0
        %1290 = vmatprep.mubr.f32.mxu0 0.0
        %1291 = vmatmul.mubr.f32.gmra.mxu0 %v1224
        %v1292 = vpop.f32.mrf.mxu0
        %v1293 = vadd.f32 0.0, %v1292
        %v1294 = vpop.f32.mrf.mxu0
        %1295 = vdwg.mxu0
        %v1296 = vadd.f32 %v1145, %v1293
        %v1297 = vadd.f32 %v1296, %v602
        %v1299 = vsel %vm447, %v1297, 0
        %1301 = vmatprep.subr.mxu0 0.0
        %1302 = vmatpush1.msra.mxu0 0.0
        %1303 = vmatprep.subr.mxu0 0.0
        %1304 = vmatpush1.msra.mxu0 0.0
        %1305 = vmatprep.subr.mxu0 0.0
        %1306 = vmatpush1.msra.mxu0 0.0
        %1307 = vmatprep.subr.mxu0 0.0
        %1308 = vmatpush1.msra.mxu0 0.0
        %1309 = vmatprep.subr.mxu0 0.0
        %1310 = vmatpush1.msra.mxu0 0.0
        %1311 = vmatprep.subr.mxu0 0.0
        %1312 = vmatpush1.msra.mxu0 0.0
        %1313 = vmatprep.subr.mxu0 0.0
        %1314 = vmatpush1.msra.mxu0 0.0
        %1315 = vmatprep.subr.mxu0 0.0
        %1316 = vmatpush1.msra.mxu0 0.0
        %1317 = vmatprep.subr.mxu0 0.0
        %1318 = vmatpush1.msra.mxu0 0.0
        %1319 = vmatprep.subr.mxu0 0.0
        %1320 = vmatpush1.msra.mxu0 0.0
        %1321 = vmatprep.subr.mxu0 0.0
        %1322 = vmatpush1.msra.mxu0 0.0
        %1323 = vmatprep.subr.mxu0 0.0
        %1324 = vmatpush1.msra.mxu0 0.0
        %1325 = vmatprep.subr.mxu0 0.0
        %1326 = vmatpush1.msra.mxu0 %v355
        %1327 = vmatprep.subr.mxu0 0.0
        %1328 = vmatpush1.msra.mxu0 %v354
        %1329 = vmatprep.subr.mxu0 0.0
        %1330 = vmatpush1.msra.mxu0 %v353
        %1331 = vmatprep.subr.mxu0 0.0
        %1332 = vmatpush1.msra.mxu0 %v352
        %1333 = vmatprep.subr.mxu0 0.0
        %1334 = vmatpush2.msra.mxu0 0.0
        %1335 = vmatprep.subr.mxu0 0.0
        %1336 = vmatpush2.msra.mxu0 0.0
        %1337 = vmatprep.subr.mxu0 0.0
        %1338 = vmatpush2.msra.mxu0 0.0
        %1339 = vmatprep.subr.mxu0 0.0
        %1340 = vmatpush2.msra.mxu0 0.0
        %1341 = vmatprep.subr.mxu0 0.0
        %1342 = vmatpush2.msra.mxu0 0.0
        %1343 = vmatprep.subr.mxu0 0.0
        %1344 = vmatpush2.msra.mxu0 0.0
        %1345 = vmatprep.subr.mxu0 0.0
        %1346 = vmatpush2.msra.mxu0 0.0
        %1347 = vmatprep.subr.mxu0 0.0
        %1348 = vmatpush2.msra.mxu0 0.0
        %1349 = vmatprep.subr.mxu0 0.0
        %1350 = vmatpush2.msra.mxu0 0.0
        %1351 = vmatprep.subr.mxu0 0.0
        %1352 = vmatpush2.msra.mxu0 0.0
        %1353 = vmatprep.subr.mxu0 0.0
        %1354 = vmatpush2.msra.mxu0 0.0
        %1355 = vmatprep.subr.mxu0 0.0
        %1356 = vmatpush2.msra.mxu0 0.0
        %1357 = vmatprep.subr.mxu0 0.0
        %1358 = vmatpush2.msra.mxu0 0.0
        %1359 = vmatprep.subr.mxu0 0.0
        %1360 = vmatpush2.msra.mxu0 0.0
        %1361 = vmatprep.subr.mxu0 0.0
        %1362 = vmatpush2.msra.mxu0 0.0
        %1363 = vmatprep.subr.mxu0 0.0
        %1364 = vmatpush2.msra.mxu0 0.0
        %1365 = vmatprep.mubr.f32.mxu0 0.0
        %1366 = vmatmul.mubr.f32.gmra.mxu0 %v1299
        %v1367 = vpop.f32.mrf.mxu0
        %v1368 = vadd.f32 %v609, %v1367
        %v1369 = vpop.f32.mrf.mxu0
        %1370 = vdwg.mxu0
        %v1371 = vmax.f32 %v1368, 0.0
        %v1372 = vmul.f32 %v1371, 0.1
        %v1373 = vadd.f32 %v1297, %v1372
        %v1374 = vmax.f32 %v1373, 0.0
        %v1376 = vsel %vm447, %v1374, 0
        %1378 = vmatprep.subr.mxu0 0.0
        %1379 = vmatpush1.msra.mxu0 0.0
        %1380 = vmatprep.subr.mxu0 0.0
        %1381 = vmatpush1.msra.mxu0 0.0
        %1382 = vmatprep.subr.mxu0 0.0
        %1383 = vmatpush1.msra.mxu0 0.0
        %1384 = vmatprep.subr.mxu0 0.0
        %1385 = vmatpush1.msra.mxu0 0.0
        %1386 = vmatprep.subr.mxu0 0.0
        %1387 = vmatpush1.msra.mxu0 0.0
        %1388 = vmatprep.subr.mxu0 0.0
        %1389 = vmatpush1.msra.mxu0 0.0
        %1390 = vmatprep.subr.mxu0 0.0
        %1391 = vmatpush1.msra.mxu0 0.0
        %1392 = vmatprep.subr.mxu0 0.0
        %1393 = vmatpush1.msra.mxu0 0.0
        %1394 = vmatprep.subr.mxu0 0.0
        %1395 = vmatpush1.msra.mxu0 0.0
        %1396 = vmatprep.subr.mxu0 0.0
        %1397 = vmatpush1.msra.mxu0 0.0
        %1398 = vmatprep.subr.mxu0 0.0
        %1399 = vmatpush1.msra.mxu0 0.0
        %1400 = vmatprep.subr.mxu0 0.0
        %1401 = vmatpush1.msra.mxu0 0.0
        %1402 = vmatprep.subr.mxu0 0.0
        %1403 = vmatpush1.msra.mxu0 %v351
        %1404 = vmatprep.subr.mxu0 0.0
        %1405 = vmatpush1.msra.mxu0 %v350
        %1406 = vmatprep.subr.mxu0 0.0
        %1407 = vmatpush1.msra.mxu0 %v349
        %1408 = vmatprep.subr.mxu0 0.0
        %1409 = vmatpush1.msra.mxu0 %v348
        %1410 = vmatprep.subr.mxu0 0.0
        %1411 = vmatpush2.msra.mxu0 0.0
        %1412 = vmatprep.subr.mxu0 0.0
        %1413 = vmatpush2.msra.mxu0 0.0
        %1414 = vmatprep.subr.mxu0 0.0
        %1415 = vmatpush2.msra.mxu0 0.0
        %1416 = vmatprep.subr.mxu0 0.0
        %1417 = vmatpush2.msra.mxu0 0.0
        %1418 = vmatprep.subr.mxu0 0.0
        %1419 = vmatpush2.msra.mxu0 0.0
        %1420 = vmatprep.subr.mxu0 0.0
        %1421 = vmatpush2.msra.mxu0 0.0
        %1422 = vmatprep.subr.mxu0 0.0
        %1423 = vmatpush2.msra.mxu0 0.0
        %1424 = vmatprep.subr.mxu0 0.0
        %1425 = vmatpush2.msra.mxu0 0.0
        %1426 = vmatprep.subr.mxu0 0.0
        %1427 = vmatpush2.msra.mxu0 0.0
        %1428 = vmatprep.subr.mxu0 0.0
        %1429 = vmatpush2.msra.mxu0 0.0
        %1430 = vmatprep.subr.mxu0 0.0
        %1431 = vmatpush2.msra.mxu0 0.0
        %1432 = vmatprep.subr.mxu0 0.0
        %1433 = vmatpush2.msra.mxu0 0.0
        %1434 = vmatprep.subr.mxu0 0.0
        %1435 = vmatpush2.msra.mxu0 0.0
        %1436 = vmatprep.subr.mxu0 0.0
        %1437 = vmatpush2.msra.mxu0 0.0
        %1438 = vmatprep.subr.mxu0 0.0
        %1439 = vmatpush2.msra.mxu0 0.0
        %1440 = vmatprep.subr.mxu0 0.0
        %1441 = vmatpush2.msra.mxu0 0.0
        %1442 = vmatprep.mubr.f32.mxu0 0.0
        %1443 = vmatmul.mubr.f32.gmra.mxu0 %v1376
        %v1444 = vpop.f32.mrf.mxu0
        %v1445 = vadd.f32 %v445, %v1444
        %v1446 = vpop.f32.mrf.mxu0
        %1447 = vdwg.mxu0
        %v1448 = vsub.f32 %v345, %v1445
        %s1449 = scalar_lea.vmem %s336, 32 [#allocation4]
        %1450 = vst.msk [vmem:[%s1449] sm:$0xff] %vm366, %v1448
        %v1451 = vmul.f32 %v1448, 0.1
        %v1453 = vsel %vm366, %v1451, 0
        %1455 = vmatprep.subr.mxu0 0.0
        %1456 = vmatpush1.msra.mxu0 0.0
        %1457 = vmatprep.subr.mxu0 0.0
        %1458 = vmatpush1.msra.mxu0 0.0
        %1459 = vmatprep.subr.mxu0 0.0
        %1460 = vmatpush1.msra.mxu0 0.0
        %1461 = vmatprep.subr.mxu0 0.0
        %1462 = vmatpush1.msra.mxu0 0.0
        %1463 = vmatprep.subr.mxu0 0.0
        %1464 = vmatpush1.msra.mxu0 0.0
        %1465 = vmatprep.subr.mxu0 0.0
        %1466 = vmatpush1.msra.mxu0 0.0
        %1467 = vmatprep.subr.mxu0 0.0
        %1468 = vmatpush1.msra.mxu0 0.0
        %1469 = vmatprep.subr.mxu0 0.0
        %1470 = vmatpush1.msra.mxu0 0.0
        %1471 = vmatprep.subr.mxu0 0.0
        %1472 = vmatpush1.msra.mxu0 0.0
        %1473 = vmatprep.subr.mxu0 0.0
        %1474 = vmatpush1.msra.mxu0 0.0
        %1475 = vmatprep.subr.mxu0 0.0
        %1476 = vmatpush1.msra.mxu0 0.0
        %1477 = vmatprep.subr.mxu0 0.0
        %1478 = vmatpush1.msra.mxu0 0.0
        %1479 = vmatprep.subr.mxu0 0.0
        %1480 = vmatpush1.msra.mxu0 0.0
        %1481 = vmatprep.subr.mxu0 0.0
        %1482 = vmatpush1.msra.mxu0 0.0
        %1483 = vmatprep.subr.mxu0 0.0
        %1484 = vmatpush1.msra.mxu0 %v347
        %1485 = vmatprep.subr.mxu0 0.0
        %1486 = vmatpush1.msra.mxu0 %v346
        %1487 = vmatprep.subr.mxu0 0.0
        %1488 = vmatpush2.msra.mxu0 0.0
        %1489 = vmatprep.subr.mxu0 0.0
        %1490 = vmatpush2.msra.mxu0 0.0
        %1491 = vmatprep.subr.mxu0 0.0
        %1492 = vmatpush2.msra.mxu0 0.0
        %1493 = vmatprep.subr.mxu0 0.0
        %1494 = vmatpush2.msra.mxu0 0.0
        %1495 = vmatprep.subr.mxu0 0.0
        %1496 = vmatpush2.msra.mxu0 0.0
        %1497 = vmatprep.subr.mxu0 0.0
        %1498 = vmatpush2.msra.mxu0 0.0
        %1499 = vmatprep.subr.mxu0 0.0
        %1500 = vmatpush2.msra.mxu0 0.0
        %1501 = vmatprep.subr.mxu0 0.0
        %1502 = vmatpush2.msra.mxu0 0.0
        %1503 = vmatprep.subr.mxu0 0.0
        %1504 = vmatpush2.msra.mxu0 0.0
        %1505 = vmatprep.subr.mxu0 0.0
        %1506 = vmatpush2.msra.mxu0 0.0
        %1507 = vmatprep.subr.mxu0 0.0
        %1508 = vmatpush2.msra.mxu0 0.0
        %1509 = vmatprep.subr.mxu0 0.0
        %1510 = vmatpush2.msra.mxu0 0.0
        %1511 = vmatprep.subr.mxu0 0.0
        %1512 = vmatpush2.msra.mxu0 0.0
        %1513 = vmatprep.subr.mxu0 0.0
        %1514 = vmatpush2.msra.mxu0 0.0
        %1515 = vmatprep.subr.mxu0 0.0
        %1516 = vmatpush2.msra.mxu0 0.0
        %1517 = vmatprep.subr.mxu0 0.0
        %1518 = vmatpush2.msra.mxu0 0.0
        %1519 = vmatprep.mubr.f32.mxu0 0.0
        %1520 = vmatmul.mubr.f32.gmra.mxu0 %v1453
        %v1521 = vpop.f32.mrf.mxu0
        %v1522 = vadd.f32 0.0, %v1521
        %v1523 = vpop.f32.mrf.mxu0
        %1524 = vdwg.mxu0
        %v1525 = vadd.f32 %v1374, %v1522
        %v1526 = vadd.f32 %v1525, %v602
        %v1528 = vsel %vm447, %v1526, 0
        %1530 = vmatprep.subr.mxu0 0.0
        %1531 = vmatpush1.msra.mxu0 0.0
        %1532 = vmatprep.subr.mxu0 0.0
        %1533 = vmatpush1.msra.mxu0 0.0
        %1534 = vmatprep.subr.mxu0 0.0
        %1535 = vmatpush1.msra.mxu0 0.0
        %1536 = vmatprep.subr.mxu0 0.0
        %1537 = vmatpush1.msra.mxu0 0.0
        %1538 = vmatprep.subr.mxu0 0.0
        %1539 = vmatpush1.msra.mxu0 0.0
        %1540 = vmatprep.subr.mxu0 0.0
        %1541 = vmatpush1.msra.mxu0 0.0
        %1542 = vmatprep.subr.mxu0 0.0
        %1543 = vmatpush1.msra.mxu0 0.0
        %1544 = vmatprep.subr.mxu0 0.0
        %1545 = vmatpush1.msra.mxu0 0.0
        %1546 = vmatprep.subr.mxu0 0.0
        %1547 = vmatpush1.msra.mxu0 0.0
        %1548 = vmatprep.subr.mxu0 0.0
        %1549 = vmatpush1.msra.mxu0 0.0
        %1550 = vmatprep.subr.mxu0 0.0
        %1551 = vmatpush1.msra.mxu0 0.0
        %1552 = vmatprep.subr.mxu0 0.0
        %1553 = vmatpush1.msra.mxu0 0.0
        %1554 = vmatprep.subr.mxu0 0.0
        %1555 = vmatpush1.msra.mxu0 %v355
        %1556 = vmatprep.subr.mxu0 0.0
        %1557 = vmatpush1.msra.mxu0 %v354
        %1558 = vmatprep.subr.mxu0 0.0
        %1559 = vmatpush1.msra.mxu0 %v353
        %1560 = vmatprep.subr.mxu0 0.0
        %1561 = vmatpush1.msra.mxu0 %v352
        %1562 = vmatprep.subr.mxu0 0.0
        %1563 = vmatpush2.msra.mxu0 0.0
        %1564 = vmatprep.subr.mxu0 0.0
        %1565 = vmatpush2.msra.mxu0 0.0
        %1566 = vmatprep.subr.mxu0 0.0
        %1567 = vmatpush2.msra.mxu0 0.0
        %1568 = vmatprep.subr.mxu0 0.0
        %1569 = vmatpush2.msra.mxu0 0.0
        %1570 = vmatprep.subr.mxu0 0.0
        %1571 = vmatpush2.msra.mxu0 0.0
        %1572 = vmatprep.subr.mxu0 0.0
        %1573 = vmatpush2.msra.mxu0 0.0
        %1574 = vmatprep.subr.mxu0 0.0
        %1575 = vmatpush2.msra.mxu0 0.0
        %1576 = vmatprep.subr.mxu0 0.0
        %1577 = vmatpush2.msra.mxu0 0.0
        %1578 = vmatprep.subr.mxu0 0.0
        %1579 = vmatpush2.msra.mxu0 0.0
        %1580 = vmatprep.subr.mxu0 0.0
        %1581 = vmatpush2.msra.mxu0 0.0
        %1582 = vmatprep.subr.mxu0 0.0
        %1583 = vmatpush2.msra.mxu0 0.0
        %1584 = vmatprep.subr.mxu0 0.0
        %1585 = vmatpush2.msra.mxu0 0.0
        %1586 = vmatprep.subr.mxu0 0.0
        %1587 = vmatpush2.msra.mxu0 0.0
        %1588 = vmatprep.subr.mxu0 0.0
        %1589 = vmatpush2.msra.mxu0 0.0
        %1590 = vmatprep.subr.mxu0 0.0
        %1591 = vmatpush2.msra.mxu0 0.0
        %1592 = vmatprep.subr.mxu0 0.0
        %1593 = vmatpush2.msra.mxu0 0.0
        %1594 = vmatprep.mubr.f32.mxu0 0.0
        %1595 = vmatmul.mubr.f32.gmra.mxu0 %v1528
        %v1596 = vpop.f32.mrf.mxu0
        %v1597 = vadd.f32 %v609, %v1596
        %v1598 = vpop.f32.mrf.mxu0
        %1599 = vdwg.mxu0
        %v1600 = vmax.f32 %v1597, 0.0
        %v1601 = vmul.f32 %v1600, 0.1
        %v1602 = vadd.f32 %v1526, %v1601
        %v1603 = vmax.f32 %v1602, 0.0
        %v1605 = vsel %vm447, %v1603, 0
        %1607 = vmatprep.subr.mxu0 0.0
        %1608 = vmatpush1.msra.mxu0 0.0
        %1609 = vmatprep.subr.mxu0 0.0
        %1610 = vmatpush1.msra.mxu0 0.0
        %1611 = vmatprep.subr.mxu0 0.0
        %1612 = vmatpush1.msra.mxu0 0.0
        %1613 = vmatprep.subr.mxu0 0.0
        %1614 = vmatpush1.msra.mxu0 0.0
        %1615 = vmatprep.subr.mxu0 0.0
        %1616 = vmatpush1.msra.mxu0 0.0
        %1617 = vmatprep.subr.mxu0 0.0
        %1618 = vmatpush1.msra.mxu0 0.0
        %1619 = vmatprep.subr.mxu0 0.0
        %1620 = vmatpush1.msra.mxu0 0.0
        %1621 = vmatprep.subr.mxu0 0.0
        %1622 = vmatpush1.msra.mxu0 0.0
        %1623 = vmatprep.subr.mxu0 0.0
        %1624 = vmatpush1.msra.mxu0 0.0
        %1625 = vmatprep.subr.mxu0 0.0
        %1626 = vmatpush1.msra.mxu0 0.0
        %1627 = vmatprep.subr.mxu0 0.0
        %1628 = vmatpush1.msra.mxu0 0.0
        %1629 = vmatprep.subr.mxu0 0.0
        %1630 = vmatpush1.msra.mxu0 0.0
        %1631 = vmatprep.subr.mxu0 0.0
        %1632 = vmatpush1.msra.mxu0 %v351
        %1633 = vmatprep.subr.mxu0 0.0
        %1634 = vmatpush1.msra.mxu0 %v350
        %1635 = vmatprep.subr.mxu0 0.0
        %1636 = vmatpush1.msra.mxu0 %v349
        %1637 = vmatprep.subr.mxu0 0.0
        %1638 = vmatpush1.msra.mxu0 %v348
        %1639 = vmatprep.subr.mxu0 0.0
        %1640 = vmatpush2.msra.mxu0 0.0
        %1641 = vmatprep.subr.mxu0 0.0
        %1642 = vmatpush2.msra.mxu0 0.0
        %1643 = vmatprep.subr.mxu0 0.0
        %1644 = vmatpush2.msra.mxu0 0.0
        %1645 = vmatprep.subr.mxu0 0.0
        %1646 = vmatpush2.msra.mxu0 0.0
        %1647 = vmatprep.subr.mxu0 0.0
        %1648 = vmatpush2.msra.mxu0 0.0
        %1649 = vmatprep.subr.mxu0 0.0
        %1650 = vmatpush2.msra.mxu0 0.0
        %1651 = vmatprep.subr.mxu0 0.0
        %1652 = vmatpush2.msra.mxu0 0.0
        %1653 = vmatprep.subr.mxu0 0.0
        %1654 = vmatpush2.msra.mxu0 0.0
        %1655 = vmatprep.subr.mxu0 0.0
        %1656 = vmatpush2.msra.mxu0 0.0
        %1657 = vmatprep.subr.mxu0 0.0
        %1658 = vmatpush2.msra.mxu0 0.0
        %1659 = vmatprep.subr.mxu0 0.0
        %1660 = vmatpush2.msra.mxu0 0.0
        %1661 = vmatprep.subr.mxu0 0.0
        %1662 = vmatpush2.msra.mxu0 0.0
        %1663 = vmatprep.subr.mxu0 0.0
        %1664 = vmatpush2.msra.mxu0 0.0
        %1665 = vmatprep.subr.mxu0 0.0
        %1666 = vmatpush2.msra.mxu0 0.0
        %1667 = vmatprep.subr.mxu0 0.0
        %1668 = vmatpush2.msra.mxu0 0.0
        %1669 = vmatprep.subr.mxu0 0.0
        %1670 = vmatpush2.msra.mxu0 0.0
        %1671 = vmatprep.mubr.f32.mxu0 0.0
        %1672 = vmatmul.mubr.f32.gmra.mxu0 %v1605
        %v1673 = vpop.f32.mrf.mxu0
        %v1674 = vadd.f32 %v445, %v1673
        %v1675 = vpop.f32.mrf.mxu0
        %1676 = vdwg.mxu0
        %v1677 = vsub.f32 %v345, %v1674
        %s1678 = scalar_lea.vmem %s336, 40 [#allocation4]
        %1679 = vst.msk [vmem:[%s1678] sm:$0xff] %vm366, %v1677
        %v1680 = vmul.f32 %v1677, 0.1
        %v1682 = vsel %vm366, %v1680, 0
        %1684 = vmatprep.subr.mxu0 0.0
        %1685 = vmatpush1.msra.mxu0 0.0
        %1686 = vmatprep.subr.mxu0 0.0
        %1687 = vmatpush1.msra.mxu0 0.0
        %1688 = vmatprep.subr.mxu0 0.0
        %1689 = vmatpush1.msra.mxu0 0.0
        %1690 = vmatprep.subr.mxu0 0.0
        %1691 = vmatpush1.msra.mxu0 0.0
        %1692 = vmatprep.subr.mxu0 0.0
        %1693 = vmatpush1.msra.mxu0 0.0
        %1694 = vmatprep.subr.mxu0 0.0
        %1695 = vmatpush1.msra.mxu0 0.0
        %1696 = vmatprep.subr.mxu0 0.0
        %1697 = vmatpush1.msra.mxu0 0.0
        %1698 = vmatprep.subr.mxu0 0.0
        %1699 = vmatpush1.msra.mxu0 0.0
        %1700 = vmatprep.subr.mxu0 0.0
        %1701 = vmatpush1.msra.mxu0 0.0
        %1702 = vmatprep.subr.mxu0 0.0
        %1703 = vmatpush1.msra.mxu0 0.0
        %1704 = vmatprep.subr.mxu0 0.0
        %1705 = vmatpush1.msra.mxu0 0.0
        %1706 = vmatprep.subr.mxu0 0.0
        %1707 = vmatpush1.msra.mxu0 0.0
        %1708 = vmatprep.subr.mxu0 0.0
        %1709 = vmatpush1.msra.mxu0 0.0
        %1710 = vmatprep.subr.mxu0 0.0
        %1711 = vmatpush1.msra.mxu0 0.0
        %1712 = vmatprep.subr.mxu0 0.0
        %1713 = vmatpush1.msra.mxu0 %v347
        %1714 = vmatprep.subr.mxu0 0.0
        %1715 = vmatpush1.msra.mxu0 %v346
        %1716 = vmatprep.subr.mxu0 0.0
        %1717 = vmatpush2.msra.mxu0 0.0
        %1718 = vmatprep.subr.mxu0 0.0
        %1719 = vmatpush2.msra.mxu0 0.0
        %1720 = vmatprep.subr.mxu0 0.0
        %1721 = vmatpush2.msra.mxu0 0.0
        %1722 = vmatprep.subr.mxu0 0.0
        %1723 = vmatpush2.msra.mxu0 0.0
        %1724 = vmatprep.subr.mxu0 0.0
        %1725 = vmatpush2.msra.mxu0 0.0
        %1726 = vmatprep.subr.mxu0 0.0
        %1727 = vmatpush2.msra.mxu0 0.0
        %1728 = vmatprep.subr.mxu0 0.0
        %1729 = vmatpush2.msra.mxu0 0.0
        %1730 = vmatprep.subr.mxu0 0.0
        %1731 = vmatpush2.msra.mxu0 0.0
        %1732 = vmatprep.subr.mxu0 0.0
        %1733 = vmatpush2.msra.mxu0 0.0
        %1734 = vmatprep.subr.mxu0 0.0
        %1735 = vmatpush2.msra.mxu0 0.0
        %1736 = vmatprep.subr.mxu0 0.0
        %1737 = vmatpush2.msra.mxu0 0.0
        %1738 = vmatprep.subr.mxu0 0.0
        %1739 = vmatpush2.msra.mxu0 0.0
        %1740 = vmatprep.subr.mxu0 0.0
        %1741 = vmatpush2.msra.mxu0 0.0
        %1742 = vmatprep.subr.mxu0 0.0
        %1743 = vmatpush2.msra.mxu0 0.0
        %1744 = vmatprep.subr.mxu0 0.0
        %1745 = vmatpush2.msra.mxu0 0.0
        %1746 = vmatprep.subr.mxu0 0.0
        %1747 = vmatpush2.msra.mxu0 0.0
        %1748 = vmatprep.mubr.f32.mxu0 0.0
        %1749 = vmatmul.mubr.f32.gmra.mxu0 %v1682
        %v1750 = vpop.f32.mrf.mxu0
        %v1751 = vadd.f32 0.0, %v1750
        %v1752 = vpop.f32.mrf.mxu0
        %1753 = vdwg.mxu0
        %v1754 = vadd.f32 %v1603, %v1751
        %v1755 = vadd.f32 %v1754, %v602
        %v1757 = vsel %vm447, %v1755, 0
        %1759 = vmatprep.subr.mxu0 0.0
        %1760 = vmatpush1.msra.mxu0 0.0
        %1761 = vmatprep.subr.mxu0 0.0
        %1762 = vmatpush1.msra.mxu0 0.0
        %1763 = vmatprep.subr.mxu0 0.0
        %1764 = vmatpush1.msra.mxu0 0.0
        %1765 = vmatprep.subr.mxu0 0.0
        %1766 = vmatpush1.msra.mxu0 0.0
        %1767 = vmatprep.subr.mxu0 0.0
        %1768 = vmatpush1.msra.mxu0 0.0
        %1769 = vmatprep.subr.mxu0 0.0
        %1770 = vmatpush1.msra.mxu0 0.0
        %1771 = vmatprep.subr.mxu0 0.0
        %1772 = vmatpush1.msra.mxu0 0.0
        %1773 = vmatprep.subr.mxu0 0.0
        %1774 = vmatpush1.msra.mxu0 0.0
        %1775 = vmatprep.subr.mxu0 0.0
        %1776 = vmatpush1.msra.mxu0 0.0
        %1777 = vmatprep.subr.mxu0 0.0
        %1778 = vmatpush1.msra.mxu0 0.0
        %1779 = vmatprep.subr.mxu0 0.0
        %1780 = vmatpush1.msra.mxu0 0.0
        %1781 = vmatprep.subr.mxu0 0.0
        %1782 = vmatpush1.msra.mxu0 0.0
        %1783 = vmatprep.subr.mxu0 0.0
        %1784 = vmatpush1.msra.mxu0 %v355
        %1785 = vmatprep.subr.mxu0 0.0
        %1786 = vmatpush1.msra.mxu0 %v354
        %1787 = vmatprep.subr.mxu0 0.0
        %1788 = vmatpush1.msra.mxu0 %v353
        %1789 = vmatprep.subr.mxu0 0.0
        %1790 = vmatpush1.msra.mxu0 %v352
        %1791 = vmatprep.subr.mxu0 0.0
        %1792 = vmatpush2.msra.mxu0 0.0
        %1793 = vmatprep.subr.mxu0 0.0
        %1794 = vmatpush2.msra.mxu0 0.0
        %1795 = vmatprep.subr.mxu0 0.0
        %1796 = vmatpush2.msra.mxu0 0.0
        %1797 = vmatprep.subr.mxu0 0.0
        %1798 = vmatpush2.msra.mxu0 0.0
        %1799 = vmatprep.subr.mxu0 0.0
        %1800 = vmatpush2.msra.mxu0 0.0
        %1801 = vmatprep.subr.mxu0 0.0
        %1802 = vmatpush2.msra.mxu0 0.0
        %1803 = vmatprep.subr.mxu0 0.0
        %1804 = vmatpush2.msra.mxu0 0.0
        %1805 = vmatprep.subr.mxu0 0.0
        %1806 = vmatpush2.msra.mxu0 0.0
        %1807 = vmatprep.subr.mxu0 0.0
        %1808 = vmatpush2.msra.mxu0 0.0
        %1809 = vmatprep.subr.mxu0 0.0
        %1810 = vmatpush2.msra.mxu0 0.0
        %1811 = vmatprep.subr.mxu0 0.0
        %1812 = vmatpush2.msra.mxu0 0.0
        %1813 = vmatprep.subr.mxu0 0.0
        %1814 = vmatpush2.msra.mxu0 0.0
        %1815 = vmatprep.subr.mxu0 0.0
        %1816 = vmatpush2.msra.mxu0 0.0
        %1817 = vmatprep.subr.mxu0 0.0
        %1818 = vmatpush2.msra.mxu0 0.0
        %1819 = vmatprep.subr.mxu0 0.0
        %1820 = vmatpush2.msra.mxu0 0.0
        %1821 = vmatprep.subr.mxu0 0.0
        %1822 = vmatpush2.msra.mxu0 0.0
        %1823 = vmatprep.mubr.f32.mxu0 0.0
        %1824 = vmatmul.mubr.f32.gmra.mxu0 %v1757
        %v1825 = vpop.f32.mrf.mxu0
        %v1826 = vadd.f32 %v609, %v1825
        %v1827 = vpop.f32.mrf.mxu0
        %1828 = vdwg.mxu0
        %v1829 = vmax.f32 %v1826, 0.0
        %v1830 = vmul.f32 %v1829, 0.1
        %v1831 = vadd.f32 %v1755, %v1830
        %v1832 = vmax.f32 %v1831, 0.0
        %v1834 = vsel %vm447, %v1832, 0
        %1836 = vmatprep.subr.mxu0 0.0
        %1837 = vmatpush1.msra.mxu0 0.0
        %1838 = vmatprep.subr.mxu0 0.0
        %1839 = vmatpush1.msra.mxu0 0.0
        %1840 = vmatprep.subr.mxu0 0.0
        %1841 = vmatpush1.msra.mxu0 0.0
        %1842 = vmatprep.subr.mxu0 0.0
        %1843 = vmatpush1.msra.mxu0 0.0
        %1844 = vmatprep.subr.mxu0 0.0
        %1845 = vmatpush1.msra.mxu0 0.0
        %1846 = vmatprep.subr.mxu0 0.0
        %1847 = vmatpush1.msra.mxu0 0.0
        %1848 = vmatprep.subr.mxu0 0.0
        %1849 = vmatpush1.msra.mxu0 0.0
        %1850 = vmatprep.subr.mxu0 0.0
        %1851 = vmatpush1.msra.mxu0 0.0
        %1852 = vmatprep.subr.mxu0 0.0
        %1853 = vmatpush1.msra.mxu0 0.0
        %1854 = vmatprep.subr.mxu0 0.0
        %1855 = vmatpush1.msra.mxu0 0.0
        %1856 = vmatprep.subr.mxu0 0.0
        %1857 = vmatpush1.msra.mxu0 0.0
        %1858 = vmatprep.subr.mxu0 0.0
        %1859 = vmatpush1.msra.mxu0 0.0
        %1860 = vmatprep.subr.mxu0 0.0
        %1861 = vmatpush1.msra.mxu0 %v351
        %1862 = vmatprep.subr.mxu0 0.0
        %1863 = vmatpush1.msra.mxu0 %v350
        %1864 = vmatprep.subr.mxu0 0.0
        %1865 = vmatpush1.msra.mxu0 %v349
        %1866 = vmatprep.subr.mxu0 0.0
        %1867 = vmatpush1.msra.mxu0 %v348
        %1868 = vmatprep.subr.mxu0 0.0
        %1869 = vmatpush2.msra.mxu0 0.0
        %1870 = vmatprep.subr.mxu0 0.0
        %1871 = vmatpush2.msra.mxu0 0.0
        %1872 = vmatprep.subr.mxu0 0.0
        %1873 = vmatpush2.msra.mxu0 0.0
        %1874 = vmatprep.subr.mxu0 0.0
        %1875 = vmatpush2.msra.mxu0 0.0
        %1876 = vmatprep.subr.mxu0 0.0
        %1877 = vmatpush2.msra.mxu0 0.0
        %1878 = vmatprep.subr.mxu0 0.0
        %1879 = vmatpush2.msra.mxu0 0.0
        %1880 = vmatprep.subr.mxu0 0.0
        %1881 = vmatpush2.msra.mxu0 0.0
        %1882 = vmatprep.subr.mxu0 0.0
        %1883 = vmatpush2.msra.mxu0 0.0
        %1884 = vmatprep.subr.mxu0 0.0
        %1885 = vmatpush2.msra.mxu0 0.0
        %1886 = vmatprep.subr.mxu0 0.0
        %1887 = vmatpush2.msra.mxu0 0.0
        %1888 = vmatprep.subr.mxu0 0.0
        %1889 = vmatpush2.msra.mxu0 0.0
        %1890 = vmatprep.subr.mxu0 0.0
        %1891 = vmatpush2.msra.mxu0 0.0
        %1892 = vmatprep.subr.mxu0 0.0
        %1893 = vmatpush2.msra.mxu0 0.0
        %1894 = vmatprep.subr.mxu0 0.0
        %1895 = vmatpush2.msra.mxu0 0.0
        %1896 = vmatprep.subr.mxu0 0.0
        %1897 = vmatpush2.msra.mxu0 0.0
        %1898 = vmatprep.subr.mxu0 0.0
        %1899 = vmatpush2.msra.mxu0 0.0
        %1900 = vmatprep.mubr.f32.mxu0 0.0
        %1901 = vmatmul.mubr.f32.gmra.mxu0 %v1834
        %v1902 = vpop.f32.mrf.mxu0
        %v1903 = vadd.f32 %v445, %v1902
        %v1904 = vpop.f32.mrf.mxu0
        %1905 = vdwg.mxu0
        %v1906 = vsub.f32 %v345, %v1903
        %s1907 = scalar_lea.vmem %s336, 48 [#allocation4]
        %1908 = vst.msk [vmem:[%s1907] sm:$0xff] %vm366, %v1906
        %v1909 = vmul.f32 %v1906, 0.1
        %v1911 = vsel %vm366, %v1909, 0
        %1913 = vmatprep.subr.mxu0 0.0
        %1914 = vmatpush1.msra.mxu0 0.0
        %1915 = vmatprep.subr.mxu0 0.0
        %1916 = vmatpush1.msra.mxu0 0.0
        %1917 = vmatprep.subr.mxu0 0.0
        %1918 = vmatpush1.msra.mxu0 0.0
        %1919 = vmatprep.subr.mxu0 0.0
        %1920 = vmatpush1.msra.mxu0 0.0
        %1921 = vmatprep.subr.mxu0 0.0
        %1922 = vmatpush1.msra.mxu0 0.0
        %1923 = vmatprep.subr.mxu0 0.0
        %1924 = vmatpush1.msra.mxu0 0.0
        %1925 = vmatprep.subr.mxu0 0.0
        %1926 = vmatpush1.msra.mxu0 0.0
        %1927 = vmatprep.subr.mxu0 0.0
        %1928 = vmatpush1.msra.mxu0 0.0
        %1929 = vmatprep.subr.mxu0 0.0
        %1930 = vmatpush1.msra.mxu0 0.0
        %1931 = vmatprep.subr.mxu0 0.0
        %1932 = vmatpush1.msra.mxu0 0.0
        %1933 = vmatprep.subr.mxu0 0.0
        %1934 = vmatpush1.msra.mxu0 0.0
        %1935 = vmatprep.subr.mxu0 0.0
        %1936 = vmatpush1.msra.mxu0 0.0
        %1937 = vmatprep.subr.mxu0 0.0
        %1938 = vmatpush1.msra.mxu0 0.0
        %1939 = vmatprep.subr.mxu0 0.0
        %1940 = vmatpush1.msra.mxu0 0.0
        %1941 = vmatprep.subr.mxu0 0.0
        %1942 = vmatpush1.msra.mxu0 %v347
        %1943 = vmatprep.subr.mxu0 0.0
        %1944 = vmatpush1.msra.mxu0 %v346
        %1945 = vmatprep.subr.mxu0 0.0
        %1946 = vmatpush2.msra.mxu0 0.0
        %1947 = vmatprep.subr.mxu0 0.0
        %1948 = vmatpush2.msra.mxu0 0.0
        %1949 = vmatprep.subr.mxu0 0.0
        %1950 = vmatpush2.msra.mxu0 0.0
        %1951 = vmatprep.subr.mxu0 0.0
        %1952 = vmatpush2.msra.mxu0 0.0
        %1953 = vmatprep.subr.mxu0 0.0
        %1954 = vmatpush2.msra.mxu0 0.0
        %1955 = vmatprep.subr.mxu0 0.0
        %1956 = vmatpush2.msra.mxu0 0.0
        %1957 = vmatprep.subr.mxu0 0.0
        %1958 = vmatpush2.msra.mxu0 0.0
        %1959 = vmatprep.subr.mxu0 0.0
        %1960 = vmatpush2.msra.mxu0 0.0
        %1961 = vmatprep.subr.mxu0 0.0
        %1962 = vmatpush2.msra.mxu0 0.0
        %1963 = vmatprep.subr.mxu0 0.0
        %1964 = vmatpush2.msra.mxu0 0.0
        %1965 = vmatprep.subr.mxu0 0.0
        %1966 = vmatpush2.msra.mxu0 0.0
        %1967 = vmatprep.subr.mxu0 0.0
        %1968 = vmatpush2.msra.mxu0 0.0
        %1969 = vmatprep.subr.mxu0 0.0
        %1970 = vmatpush2.msra.mxu0 0.0
        %1971 = vmatprep.subr.mxu0 0.0
        %1972 = vmatpush2.msra.mxu0 0.0
        %1973 = vmatprep.subr.mxu0 0.0
        %1974 = vmatpush2.msra.mxu0 0.0
        %1975 = vmatprep.subr.mxu0 0.0
        %1976 = vmatpush2.msra.mxu0 0.0
        %1977 = vmatprep.mubr.f32.mxu0 0.0
        %1978 = vmatmul.mubr.f32.gmra.mxu0 %v1911
        %v1979 = vpop.f32.mrf.mxu0
        %v1980 = vadd.f32 0.0, %v1979
        %v1981 = vpop.f32.mrf.mxu0
        %1982 = vdwg.mxu0
        %v1983 = vadd.f32 %v1832, %v1980
        %v1984 = vadd.f32 %v1983, %v602
        %v1986 = vsel %vm447, %v1984, 0
        %1988 = vmatprep.subr.mxu0 0.0
        %1989 = vmatpush1.msra.mxu0 0.0
        %1990 = vmatprep.subr.mxu0 0.0
        %1991 = vmatpush1.msra.mxu0 0.0
        %1992 = vmatprep.subr.mxu0 0.0
        %1993 = vmatpush1.msra.mxu0 0.0
        %1994 = vmatprep.subr.mxu0 0.0
        %1995 = vmatpush1.msra.mxu0 0.0
        %1996 = vmatprep.subr.mxu0 0.0
        %1997 = vmatpush1.msra.mxu0 0.0
        %1998 = vmatprep.subr.mxu0 0.0
        %1999 = vmatpush1.msra.mxu0 0.0
        %2000 = vmatprep.subr.mxu0 0.0
        %2001 = vmatpush1.msra.mxu0 0.0
        %2002 = vmatprep.subr.mxu0 0.0
        %2003 = vmatpush1.msra.mxu0 0.0
        %2004 = vmatprep.subr.mxu0 0.0
        %2005 = vmatpush1.msra.mxu0 0.0
        %2006 = vmatprep.subr.mxu0 0.0
        %2007 = vmatpush1.msra.mxu0 0.0
        %2008 = vmatprep.subr.mxu0 0.0
        %2009 = vmatpush1.msra.mxu0 0.0
        %2010 = vmatprep.subr.mxu0 0.0
        %2011 = vmatpush1.msra.mxu0 0.0
        %2012 = vmatprep.subr.mxu0 0.0
        %2013 = vmatpush1.msra.mxu0 %v355
        %2014 = vmatprep.subr.mxu0 0.0
        %2015 = vmatpush1.msra.mxu0 %v354
        %2016 = vmatprep.subr.mxu0 0.0
        %2017 = vmatpush1.msra.mxu0 %v353
        %2018 = vmatprep.subr.mxu0 0.0
        %2019 = vmatpush1.msra.mxu0 %v352
        %2020 = vmatprep.subr.mxu0 0.0
        %2021 = vmatpush2.msra.mxu0 0.0
        %2022 = vmatprep.subr.mxu0 0.0
        %2023 = vmatpush2.msra.mxu0 0.0
        %2024 = vmatprep.subr.mxu0 0.0
        %2025 = vmatpush2.msra.mxu0 0.0
        %2026 = vmatprep.subr.mxu0 0.0
        %2027 = vmatpush2.msra.mxu0 0.0
        %2028 = vmatprep.subr.mxu0 0.0
        %2029 = vmatpush2.msra.mxu0 0.0
        %2030 = vmatprep.subr.mxu0 0.0
        %2031 = vmatpush2.msra.mxu0 0.0
        %2032 = vmatprep.subr.mxu0 0.0
        %2033 = vmatpush2.msra.mxu0 0.0
        %2034 = vmatprep.subr.mxu0 0.0
        %2035 = vmatpush2.msra.mxu0 0.0
        %2036 = vmatprep.subr.mxu0 0.0
        %2037 = vmatpush2.msra.mxu0 0.0
        %2038 = vmatprep.subr.mxu0 0.0
        %2039 = vmatpush2.msra.mxu0 0.0
        %2040 = vmatprep.subr.mxu0 0.0
        %2041 = vmatpush2.msra.mxu0 0.0
        %2042 = vmatprep.subr.mxu0 0.0
        %2043 = vmatpush2.msra.mxu0 0.0
        %2044 = vmatprep.subr.mxu0 0.0
        %2045 = vmatpush2.msra.mxu0 0.0
        %2046 = vmatprep.subr.mxu0 0.0
        %2047 = vmatpush2.msra.mxu0 0.0
        %2048 = vmatprep.subr.mxu0 0.0
        %2049 = vmatpush2.msra.mxu0 0.0
        %2050 = vmatprep.subr.mxu0 0.0
        %2051 = vmatpush2.msra.mxu0 0.0
        %2052 = vmatprep.mubr.f32.mxu0 0.0
        %2053 = vmatmul.mubr.f32.gmra.mxu0 %v1986
        %v2054 = vpop.f32.mrf.mxu0
        %v2055 = vadd.f32 %v609, %v2054
        %v2056 = vpop.f32.mrf.mxu0
        %2057 = vdwg.mxu0
        %v2058 = vmax.f32 %v2055, 0.0
        %v2059 = vmul.f32 %v2058, 0.1
        %v2060 = vadd.f32 %v1984, %v2059
        %v2061 = vmax.f32 %v2060, 0.0
        %v2063 = vsel %vm447, %v2061, 0
        %2065 = vmatprep.subr.mxu0 0.0
        %2066 = vmatpush1.msra.mxu0 0.0
        %2067 = vmatprep.subr.mxu0 0.0
        %2068 = vmatpush1.msra.mxu0 0.0
        %2069 = vmatprep.subr.mxu0 0.0
        %2070 = vmatpush1.msra.mxu0 0.0
        %2071 = vmatprep.subr.mxu0 0.0
        %2072 = vmatpush1.msra.mxu0 0.0
        %2073 = vmatprep.subr.mxu0 0.0
        %2074 = vmatpush1.msra.mxu0 0.0
        %2075 = vmatprep.subr.mxu0 0.0
        %2076 = vmatpush1.msra.mxu0 0.0
        %2077 = vmatprep.subr.mxu0 0.0
        %2078 = vmatpush1.msra.mxu0 0.0
        %2079 = vmatprep.subr.mxu0 0.0
        %2080 = vmatpush1.msra.mxu0 0.0
        %2081 = vmatprep.subr.mxu0 0.0
        %2082 = vmatpush1.msra.mxu0 0.0
        %2083 = vmatprep.subr.mxu0 0.0
        %2084 = vmatpush1.msra.mxu0 0.0
        %2085 = vmatprep.subr.mxu0 0.0
        %2086 = vmatpush1.msra.mxu0 0.0
        %2087 = vmatprep.subr.mxu0 0.0
        %2088 = vmatpush1.msra.mxu0 0.0
        %2089 = vmatprep.subr.mxu0 0.0
        %2090 = vmatpush1.msra.mxu0 %v351
        %2091 = vmatprep.subr.mxu0 0.0
        %2092 = vmatpush1.msra.mxu0 %v350
        %2093 = vmatprep.subr.mxu0 0.0
        %2094 = vmatpush1.msra.mxu0 %v349
        %2095 = vmatprep.subr.mxu0 0.0
        %2096 = vmatpush1.msra.mxu0 %v348
        %2097 = vmatprep.subr.mxu0 0.0
        %2098 = vmatpush2.msra.mxu0 0.0
        %2099 = vmatprep.subr.mxu0 0.0
        %2100 = vmatpush2.msra.mxu0 0.0
        %2101 = vmatprep.subr.mxu0 0.0
        %2102 = vmatpush2.msra.mxu0 0.0
        %2103 = vmatprep.subr.mxu0 0.0
        %2104 = vmatpush2.msra.mxu0 0.0
        %2105 = vmatprep.subr.mxu0 0.0
        %2106 = vmatpush2.msra.mxu0 0.0
        %2107 = vmatprep.subr.mxu0 0.0
        %2108 = vmatpush2.msra.mxu0 0.0
        %2109 = vmatprep.subr.mxu0 0.0
        %2110 = vmatpush2.msra.mxu0 0.0
        %2111 = vmatprep.subr.mxu0 0.0
        %2112 = vmatpush2.msra.mxu0 0.0
        %2113 = vmatprep.subr.mxu0 0.0
        %2114 = vmatpush2.msra.mxu0 0.0
        %2115 = vmatprep.subr.mxu0 0.0
        %2116 = vmatpush2.msra.mxu0 0.0
        %2117 = vmatprep.subr.mxu0 0.0
        %2118 = vmatpush2.msra.mxu0 0.0
        %2119 = vmatprep.subr.mxu0 0.0
        %2120 = vmatpush2.msra.mxu0 0.0
        %2121 = vmatprep.subr.mxu0 0.0
        %2122 = vmatpush2.msra.mxu0 0.0
        %2123 = vmatprep.subr.mxu0 0.0
        %2124 = vmatpush2.msra.mxu0 0.0
        %2125 = vmatprep.subr.mxu0 0.0
        %2126 = vmatpush2.msra.mxu0 0.0
        %2127 = vmatprep.subr.mxu0 0.0
        %2128 = vmatpush2.msra.mxu0 0.0
        %2129 = vmatprep.mubr.f32.mxu0 0.0
        %2130 = vmatmul.mubr.f32.gmra.mxu0 %v2063
        %v2131 = vpop.f32.mrf.mxu0
        %v2132 = vadd.f32 %v445, %v2131
        %v2133 = vpop.f32.mrf.mxu0
        %2134 = vdwg.mxu0
        %v2135 = vsub.f32 %v345, %v2132
        %s2136 = scalar_lea.vmem %s336, 56 [#allocation4]
        %2137 = vst.msk [vmem:[%s2136] sm:$0xff] %vm366, %v2135
        %v2138 = vmul.f32 %v2135, 0.1
        %v2140 = vsel %vm366, %v2138, 0
        %2142 = vmatprep.subr.mxu0 0.0
        %2143 = vmatpush1.msra.mxu0 0.0
        %2144 = vmatprep.subr.mxu0 0.0
        %2145 = vmatpush1.msra.mxu0 0.0
        %2146 = vmatprep.subr.mxu0 0.0
        %2147 = vmatpush1.msra.mxu0 0.0
        %2148 = vmatprep.subr.mxu0 0.0
        %2149 = vmatpush1.msra.mxu0 0.0
        %2150 = vmatprep.subr.mxu0 0.0
        %2151 = vmatpush1.msra.mxu0 0.0
        %2152 = vmatprep.subr.mxu0 0.0
        %2153 = vmatpush1.msra.mxu0 0.0
        %2154 = vmatprep.subr.mxu0 0.0
        %2155 = vmatpush1.msra.mxu0 0.0
        %2156 = vmatprep.subr.mxu0 0.0
        %2157 = vmatpush1.msra.mxu0 0.0
        %2158 = vmatprep.subr.mxu0 0.0
        %2159 = vmatpush1.msra.mxu0 0.0
        %2160 = vmatprep.subr.mxu0 0.0
        %2161 = vmatpush1.msra.mxu0 0.0
        %2162 = vmatprep.subr.mxu0 0.0
        %2163 = vmatpush1.msra.mxu0 0.0
        %2164 = vmatprep.subr.mxu0 0.0
        %2165 = vmatpush1.msra.mxu0 0.0
        %2166 = vmatprep.subr.mxu0 0.0
        %2167 = vmatpush1.msra.mxu0 0.0
        %2168 = vmatprep.subr.mxu0 0.0
        %2169 = vmatpush1.msra.mxu0 0.0
        %2170 = vmatprep.subr.mxu0 0.0
        %2171 = vmatpush1.msra.mxu0 %v347
        %2172 = vmatprep.subr.mxu0 0.0
        %2173 = vmatpush1.msra.mxu0 %v346
        %2174 = vmatprep.subr.mxu0 0.0
        %2175 = vmatpush2.msra.mxu0 0.0
        %2176 = vmatprep.subr.mxu0 0.0
        %2177 = vmatpush2.msra.mxu0 0.0
        %2178 = vmatprep.subr.mxu0 0.0
        %2179 = vmatpush2.msra.mxu0 0.0
        %2180 = vmatprep.subr.mxu0 0.0
        %2181 = vmatpush2.msra.mxu0 0.0
        %2182 = vmatprep.subr.mxu0 0.0
        %2183 = vmatpush2.msra.mxu0 0.0
        %2184 = vmatprep.subr.mxu0 0.0
        %2185 = vmatpush2.msra.mxu0 0.0
        %2186 = vmatprep.subr.mxu0 0.0
        %2187 = vmatpush2.msra.mxu0 0.0
        %2188 = vmatprep.subr.mxu0 0.0
        %2189 = vmatpush2.msra.mxu0 0.0
        %2190 = vmatprep.subr.mxu0 0.0
        %2191 = vmatpush2.msra.mxu0 0.0
        %2192 = vmatprep.subr.mxu0 0.0
        %2193 = vmatpush2.msra.mxu0 0.0
        %2194 = vmatprep.subr.mxu0 0.0
        %2195 = vmatpush2.msra.mxu0 0.0
        %2196 = vmatprep.subr.mxu0 0.0
        %2197 = vmatpush2.msra.mxu0 0.0
        %2198 = vmatprep.subr.mxu0 0.0
        %2199 = vmatpush2.msra.mxu0 0.0
        %2200 = vmatprep.subr.mxu0 0.0
        %2201 = vmatpush2.msra.mxu0 0.0
        %2202 = vmatprep.subr.mxu0 0.0
        %2203 = vmatpush2.msra.mxu0 0.0
        %2204 = vmatprep.subr.mxu0 0.0
        %2205 = vmatpush2.msra.mxu0 0.0
        %2206 = vmatprep.mubr.f32.mxu0 0.0
        %2207 = vmatmul.mubr.f32.gmra.mxu0 %v2140
        %v2208 = vpop.f32.mrf.mxu0
        %v2209 = vadd.f32 0.0, %v2208
        %v2210 = vpop.f32.mrf.mxu0
        %2211 = vdwg.mxu0
        %v2212 = vadd.f32 %v2061, %v2209
        %v2213 = vadd.f32 %v2212, %v602
        %v2215 = vsel %vm447, %v2213, 0
        %2217 = vmatprep.subr.mxu0 0.0
        %2218 = vmatpush1.msra.mxu0 0.0
        %2219 = vmatprep.subr.mxu0 0.0
        %2220 = vmatpush1.msra.mxu0 0.0
        %2221 = vmatprep.subr.mxu0 0.0
        %2222 = vmatpush1.msra.mxu0 0.0
        %2223 = vmatprep.subr.mxu0 0.0
        %2224 = vmatpush1.msra.mxu0 0.0
        %2225 = vmatprep.subr.mxu0 0.0
        %2226 = vmatpush1.msra.mxu0 0.0
        %2227 = vmatprep.subr.mxu0 0.0
        %2228 = vmatpush1.msra.mxu0 0.0
        %2229 = vmatprep.subr.mxu0 0.0
        %2230 = vmatpush1.msra.mxu0 0.0
        %2231 = vmatprep.subr.mxu0 0.0
        %2232 = vmatpush1.msra.mxu0 0.0
        %2233 = vmatprep.subr.mxu0 0.0
        %2234 = vmatpush1.msra.mxu0 0.0
        %2235 = vmatprep.subr.mxu0 0.0
        %2236 = vmatpush1.msra.mxu0 0.0
        %2237 = vmatprep.subr.mxu0 0.0
        %2238 = vmatpush1.msra.mxu0 0.0
        %2239 = vmatprep.subr.mxu0 0.0
        %2240 = vmatpush1.msra.mxu0 0.0
        %2241 = vmatprep.subr.mxu0 0.0
        %2242 = vmatpush1.msra.mxu0 %v355
        %2243 = vmatprep.subr.mxu0 0.0
        %2244 = vmatpush1.msra.mxu0 %v354
        %2245 = vmatprep.subr.mxu0 0.0
        %2246 = vmatpush1.msra.mxu0 %v353
        %2247 = vmatprep.subr.mxu0 0.0
        %2248 = vmatpush1.msra.mxu0 %v352
        %2249 = vmatprep.subr.mxu0 0.0
        %2250 = vmatpush2.msra.mxu0 0.0
        %2251 = vmatprep.subr.mxu0 0.0
        %2252 = vmatpush2.msra.mxu0 0.0
        %2253 = vmatprep.subr.mxu0 0.0
        %2254 = vmatpush2.msra.mxu0 0.0
        %2255 = vmatprep.subr.mxu0 0.0
        %2256 = vmatpush2.msra.mxu0 0.0
        %2257 = vmatprep.subr.mxu0 0.0
        %2258 = vmatpush2.msra.mxu0 0.0
        %2259 = vmatprep.subr.mxu0 0.0
        %2260 = vmatpush2.msra.mxu0 0.0
        %2261 = vmatprep.subr.mxu0 0.0
        %2262 = vmatpush2.msra.mxu0 0.0
        %2263 = vmatprep.subr.mxu0 0.0
        %2264 = vmatpush2.msra.mxu0 0.0
        %2265 = vmatprep.subr.mxu0 0.0
        %2266 = vmatpush2.msra.mxu0 0.0
        %2267 = vmatprep.subr.mxu0 0.0
        %2268 = vmatpush2.msra.mxu0 0.0
        %2269 = vmatprep.subr.mxu0 0.0
        %2270 = vmatpush2.msra.mxu0 0.0
        %2271 = vmatprep.subr.mxu0 0.0
        %2272 = vmatpush2.msra.mxu0 0.0
        %2273 = vmatprep.subr.mxu0 0.0
        %2274 = vmatpush2.msra.mxu0 0.0
        %2275 = vmatprep.subr.mxu0 0.0
        %2276 = vmatpush2.msra.mxu0 0.0
        %2277 = vmatprep.subr.mxu0 0.0
        %2278 = vmatpush2.msra.mxu0 0.0
        %2279 = vmatprep.subr.mxu0 0.0
        %2280 = vmatpush2.msra.mxu0 0.0
        %2281 = vmatprep.mubr.f32.mxu0 0.0
        %2282 = vmatmul.mubr.f32.gmra.mxu0 %v2215
        %v2283 = vpop.f32.mrf.mxu0
        %v2284 = vadd.f32 %v609, %v2283
        %v2285 = vpop.f32.mrf.mxu0
        %2286 = vdwg.mxu0
        %v2287 = vmax.f32 %v2284, 0.0
        %v2288 = vmul.f32 %v2287, 0.1
        %v2289 = vadd.f32 %v2213, %v2288
        %v2290 = vmax.f32 %v2289, 0.0
        %v2292 = vsel %vm447, %v2290, 0
        %2294 = vmatprep.subr.mxu0 0.0
        %2295 = vmatpush1.msra.mxu0 0.0
        %2296 = vmatprep.subr.mxu0 0.0
        %2297 = vmatpush1.msra.mxu0 0.0
        %2298 = vmatprep.subr.mxu0 0.0
        %2299 = vmatpush1.msra.mxu0 0.0
        %2300 = vmatprep.subr.mxu0 0.0
        %2301 = vmatpush1.msra.mxu0 0.0
        %2302 = vmatprep.subr.mxu0 0.0
        %2303 = vmatpush1.msra.mxu0 0.0
        %2304 = vmatprep.subr.mxu0 0.0
        %2305 = vmatpush1.msra.mxu0 0.0
        %2306 = vmatprep.subr.mxu0 0.0
        %2307 = vmatpush1.msra.mxu0 0.0
        %2308 = vmatprep.subr.mxu0 0.0
        %2309 = vmatpush1.msra.mxu0 0.0
        %2310 = vmatprep.subr.mxu0 0.0
        %2311 = vmatpush1.msra.mxu0 0.0
        %2312 = vmatprep.subr.mxu0 0.0
        %2313 = vmatpush1.msra.mxu0 0.0
        %2314 = vmatprep.subr.mxu0 0.0
        %2315 = vmatpush1.msra.mxu0 0.0
        %2316 = vmatprep.subr.mxu0 0.0
        %2317 = vmatpush1.msra.mxu0 0.0
        %2318 = vmatprep.subr.mxu0 0.0
        %2319 = vmatpush1.msra.mxu0 %v351
        %2320 = vmatprep.subr.mxu0 0.0
        %2321 = vmatpush1.msra.mxu0 %v350
        %2322 = vmatprep.subr.mxu0 0.0
        %2323 = vmatpush1.msra.mxu0 %v349
        %2324 = vmatprep.subr.mxu0 0.0
        %2325 = vmatpush1.msra.mxu0 %v348
        %2326 = vmatprep.subr.mxu0 0.0
        %2327 = vmatpush2.msra.mxu0 0.0
        %2328 = vmatprep.subr.mxu0 0.0
        %2329 = vmatpush2.msra.mxu0 0.0
        %2330 = vmatprep.subr.mxu0 0.0
        %2331 = vmatpush2.msra.mxu0 0.0
        %2332 = vmatprep.subr.mxu0 0.0
        %2333 = vmatpush2.msra.mxu0 0.0
        %2334 = vmatprep.subr.mxu0 0.0
        %2335 = vmatpush2.msra.mxu0 0.0
        %2336 = vmatprep.subr.mxu0 0.0
        %2337 = vmatpush2.msra.mxu0 0.0
        %2338 = vmatprep.subr.mxu0 0.0
        %2339 = vmatpush2.msra.mxu0 0.0
        %2340 = vmatprep.subr.mxu0 0.0
        %2341 = vmatpush2.msra.mxu0 0.0
        %2342 = vmatprep.subr.mxu0 0.0
        %2343 = vmatpush2.msra.mxu0 0.0
        %2344 = vmatprep.subr.mxu0 0.0
        %2345 = vmatpush2.msra.mxu0 0.0
        %2346 = vmatprep.subr.mxu0 0.0
        %2347 = vmatpush2.msra.mxu0 0.0
        %2348 = vmatprep.subr.mxu0 0.0
        %2349 = vmatpush2.msra.mxu0 0.0
        %2350 = vmatprep.subr.mxu0 0.0
        %2351 = vmatpush2.msra.mxu0 0.0
        %2352 = vmatprep.subr.mxu0 0.0
        %2353 = vmatpush2.msra.mxu0 0.0
        %2354 = vmatprep.subr.mxu0 0.0
        %2355 = vmatpush2.msra.mxu0 0.0
        %2356 = vmatprep.subr.mxu0 0.0
        %2357 = vmatpush2.msra.mxu0 0.0
        %2358 = vmatprep.mubr.f32.mxu0 0.0
        %2359 = vmatmul.mubr.f32.gmra.mxu0 %v2292
        %v2360 = vpop.f32.mrf.mxu0
        %v2361 = vadd.f32 %v445, %v2360
        %v2362 = vpop.f32.mrf.mxu0
        %2363 = vdwg.mxu0
        %v2364 = vsub.f32 %v345, %v2361
        %s2365 = scalar_lea.vmem %s336, 64 [#allocation4]
        %2366 = vst.msk [vmem:[%s2365] sm:$0xff] %vm366, %v2364
        %v2367 = vmul.f32 %v2364, 0.1
        %v2369 = vsel %vm366, %v2367, 0
        %2371 = vmatprep.subr.mxu0 0.0
        %2372 = vmatpush1.msra.mxu0 0.0
        %2373 = vmatprep.subr.mxu0 0.0
        %2374 = vmatpush1.msra.mxu0 0.0
        %2375 = vmatprep.subr.mxu0 0.0
        %2376 = vmatpush1.msra.mxu0 0.0
        %2377 = vmatprep.subr.mxu0 0.0
        %2378 = vmatpush1.msra.mxu0 0.0
        %2379 = vmatprep.subr.mxu0 0.0
        %2380 = vmatpush1.msra.mxu0 0.0
        %2381 = vmatprep.subr.mxu0 0.0
        %2382 = vmatpush1.msra.mxu0 0.0
        %2383 = vmatprep.subr.mxu0 0.0
        %2384 = vmatpush1.msra.mxu0 0.0
        %2385 = vmatprep.subr.mxu0 0.0
        %2386 = vmatpush1.msra.mxu0 0.0
        %2387 = vmatprep.subr.mxu0 0.0
        %2388 = vmatpush1.msra.mxu0 0.0
        %2389 = vmatprep.subr.mxu0 0.0
        %2390 = vmatpush1.msra.mxu0 0.0
        %2391 = vmatprep.subr.mxu0 0.0
        %2392 = vmatpush1.msra.mxu0 0.0
        %2393 = vmatprep.subr.mxu0 0.0
        %2394 = vmatpush1.msra.mxu0 0.0
        %2395 = vmatprep.subr.mxu0 0.0
        %2396 = vmatpush1.msra.mxu0 0.0
        %2397 = vmatprep.subr.mxu0 0.0
        %2398 = vmatpush1.msra.mxu0 0.0
        %2399 = vmatprep.subr.mxu0 0.0
        %2400 = vmatpush1.msra.mxu0 %v347
        %2401 = vmatprep.subr.mxu0 0.0
        %2402 = vmatpush1.msra.mxu0 %v346
        %2403 = vmatprep.subr.mxu0 0.0
        %2404 = vmatpush2.msra.mxu0 0.0
        %2405 = vmatprep.subr.mxu0 0.0
        %2406 = vmatpush2.msra.mxu0 0.0
        %2407 = vmatprep.subr.mxu0 0.0
        %2408 = vmatpush2.msra.mxu0 0.0
        %2409 = vmatprep.subr.mxu0 0.0
        %2410 = vmatpush2.msra.mxu0 0.0
        %2411 = vmatprep.subr.mxu0 0.0
        %2412 = vmatpush2.msra.mxu0 0.0
        %2413 = vmatprep.subr.mxu0 0.0
        %2414 = vmatpush2.msra.mxu0 0.0
        %2415 = vmatprep.subr.mxu0 0.0
        %2416 = vmatpush2.msra.mxu0 0.0
        %2417 = vmatprep.subr.mxu0 0.0
        %2418 = vmatpush2.msra.mxu0 0.0
        %2419 = vmatprep.subr.mxu0 0.0
        %2420 = vmatpush2.msra.mxu0 0.0
        %2421 = vmatprep.subr.mxu0 0.0
        %2422 = vmatpush2.msra.mxu0 0.0
        %2423 = vmatprep.subr.mxu0 0.0
        %2424 = vmatpush2.msra.mxu0 0.0
        %2425 = vmatprep.subr.mxu0 0.0
        %2426 = vmatpush2.msra.mxu0 0.0
        %2427 = vmatprep.subr.mxu0 0.0
        %2428 = vmatpush2.msra.mxu0 0.0
        %2429 = vmatprep.subr.mxu0 0.0
        %2430 = vmatpush2.msra.mxu0 0.0
        %2431 = vmatprep.subr.mxu0 0.0
        %2432 = vmatpush2.msra.mxu0 0.0
        %2433 = vmatprep.subr.mxu0 0.0
        %2434 = vmatpush2.msra.mxu0 0.0
        %2435 = vmatprep.mubr.f32.mxu0 0.0
        %2436 = vmatmul.mubr.f32.gmra.mxu0 %v2369
        %v2437 = vpop.f32.mrf.mxu0
        %v2438 = vadd.f32 0.0, %v2437
        %v2439 = vpop.f32.mrf.mxu0
        %2440 = vdwg.mxu0
        %v2441 = vadd.f32 %v2290, %v2438
        %v2442 = vadd.f32 %v2441, %v602
        %v2444 = vsel %vm447, %v2442, 0
        %2446 = vmatprep.subr.mxu0 0.0
        %2447 = vmatpush1.msra.mxu0 0.0
        %2448 = vmatprep.subr.mxu0 0.0
        %2449 = vmatpush1.msra.mxu0 0.0
        %2450 = vmatprep.subr.mxu0 0.0
        %2451 = vmatpush1.msra.mxu0 0.0
        %2452 = vmatprep.subr.mxu0 0.0
        %2453 = vmatpush1.msra.mxu0 0.0
        %2454 = vmatprep.subr.mxu0 0.0
        %2455 = vmatpush1.msra.mxu0 0.0
        %2456 = vmatprep.subr.mxu0 0.0
        %2457 = vmatpush1.msra.mxu0 0.0
        %2458 = vmatprep.subr.mxu0 0.0
        %2459 = vmatpush1.msra.mxu0 0.0
        %2460 = vmatprep.subr.mxu0 0.0
        %2461 = vmatpush1.msra.mxu0 0.0
        %2462 = vmatprep.subr.mxu0 0.0
        %2463 = vmatpush1.msra.mxu0 0.0
        %2464 = vmatprep.subr.mxu0 0.0
        %2465 = vmatpush1.msra.mxu0 0.0
        %2466 = vmatprep.subr.mxu0 0.0
        %2467 = vmatpush1.msra.mxu0 0.0
        %2468 = vmatprep.subr.mxu0 0.0
        %2469 = vmatpush1.msra.mxu0 0.0
        %2470 = vmatprep.subr.mxu0 0.0
        %2471 = vmatpush1.msra.mxu0 %v355
        %2472 = vmatprep.subr.mxu0 0.0
        %2473 = vmatpush1.msra.mxu0 %v354
        %2474 = vmatprep.subr.mxu0 0.0
        %2475 = vmatpush1.msra.mxu0 %v353
        %2476 = vmatprep.subr.mxu0 0.0
        %2477 = vmatpush1.msra.mxu0 %v352
        %2478 = vmatprep.subr.mxu0 0.0
        %2479 = vmatpush2.msra.mxu0 0.0
        %2480 = vmatprep.subr.mxu0 0.0
        %2481 = vmatpush2.msra.mxu0 0.0
        %2482 = vmatprep.subr.mxu0 0.0
        %2483 = vmatpush2.msra.mxu0 0.0
        %2484 = vmatprep.subr.mxu0 0.0
        %2485 = vmatpush2.msra.mxu0 0.0
        %2486 = vmatprep.subr.mxu0 0.0
        %2487 = vmatpush2.msra.mxu0 0.0
        %2488 = vmatprep.subr.mxu0 0.0
        %2489 = vmatpush2.msra.mxu0 0.0
        %2490 = vmatprep.subr.mxu0 0.0
        %2491 = vmatpush2.msra.mxu0 0.0
        %2492 = vmatprep.subr.mxu0 0.0
        %2493 = vmatpush2.msra.mxu0 0.0
        %2494 = vmatprep.subr.mxu0 0.0
        %2495 = vmatpush2.msra.mxu0 0.0
        %2496 = vmatprep.subr.mxu0 0.0
        %2497 = vmatpush2.msra.mxu0 0.0
        %2498 = vmatprep.subr.mxu0 0.0
        %2499 = vmatpush2.msra.mxu0 0.0
        %2500 = vmatprep.subr.mxu0 0.0
        %2501 = vmatpush2.msra.mxu0 0.0
        %2502 = vmatprep.subr.mxu0 0.0
        %2503 = vmatpush2.msra.mxu0 0.0
        %2504 = vmatprep.subr.mxu0 0.0
        %2505 = vmatpush2.msra.mxu0 0.0
        %2506 = vmatprep.subr.mxu0 0.0
        %2507 = vmatpush2.msra.mxu0 0.0
        %2508 = vmatprep.subr.mxu0 0.0
        %2509 = vmatpush2.msra.mxu0 0.0
        %2510 = vmatprep.mubr.f32.mxu0 0.0
        %2511 = vmatmul.mubr.f32.gmra.mxu0 %v2444
        %v2512 = vpop.f32.mrf.mxu0
        %v2513 = vadd.f32 %v609, %v2512
        %v2514 = vpop.f32.mrf.mxu0
        %2515 = vdwg.mxu0
        %v2516 = vmax.f32 %v2513, 0.0
        %v2517 = vmul.f32 %v2516, 0.1
        %v2518 = vadd.f32 %v2442, %v2517
        %v2519 = vmax.f32 %v2518, 0.0
        %v2521 = vsel %vm447, %v2519, 0
        %2523 = vmatprep.subr.mxu0 0.0
        %2524 = vmatpush1.msra.mxu0 0.0
        %2525 = vmatprep.subr.mxu0 0.0
        %2526 = vmatpush1.msra.mxu0 0.0
        %2527 = vmatprep.subr.mxu0 0.0
        %2528 = vmatpush1.msra.mxu0 0.0
        %2529 = vmatprep.subr.mxu0 0.0
        %2530 = vmatpush1.msra.mxu0 0.0
        %2531 = vmatprep.subr.mxu0 0.0
        %2532 = vmatpush1.msra.mxu0 0.0
        %2533 = vmatprep.subr.mxu0 0.0
        %2534 = vmatpush1.msra.mxu0 0.0
        %2535 = vmatprep.subr.mxu0 0.0
        %2536 = vmatpush1.msra.mxu0 0.0
        %2537 = vmatprep.subr.mxu0 0.0
        %2538 = vmatpush1.msra.mxu0 0.0
        %2539 = vmatprep.subr.mxu0 0.0
        %2540 = vmatpush1.msra.mxu0 0.0
        %2541 = vmatprep.subr.mxu0 0.0
        %2542 = vmatpush1.msra.mxu0 0.0
        %2543 = vmatprep.subr.mxu0 0.0
        %2544 = vmatpush1.msra.mxu0 0.0
        %2545 = vmatprep.subr.mxu0 0.0
        %2546 = vmatpush1.msra.mxu0 0.0
        %2547 = vmatprep.subr.mxu0 0.0
        %2548 = vmatpush1.msra.mxu0 %v351
        %2549 = vmatprep.subr.mxu0 0.0
        %2550 = vmatpush1.msra.mxu0 %v350
        %2551 = vmatprep.subr.mxu0 0.0
        %2552 = vmatpush1.msra.mxu0 %v349
        %2553 = vmatprep.subr.mxu0 0.0
        %2554 = vmatpush1.msra.mxu0 %v348
        %2555 = vmatprep.subr.mxu0 0.0
        %2556 = vmatpush2.msra.mxu0 0.0
        %2557 = vmatprep.subr.mxu0 0.0
        %2558 = vmatpush2.msra.mxu0 0.0
        %2559 = vmatprep.subr.mxu0 0.0
        %2560 = vmatpush2.msra.mxu0 0.0
        %2561 = vmatprep.subr.mxu0 0.0
        %2562 = vmatpush2.msra.mxu0 0.0
        %2563 = vmatprep.subr.mxu0 0.0
        %2564 = vmatpush2.msra.mxu0 0.0
        %2565 = vmatprep.subr.mxu0 0.0
        %2566 = vmatpush2.msra.mxu0 0.0
        %2567 = vmatprep.subr.mxu0 0.0
        %2568 = vmatpush2.msra.mxu0 0.0
        %2569 = vmatprep.subr.mxu0 0.0
        %2570 = vmatpush2.msra.mxu0 0.0
        %2571 = vmatprep.subr.mxu0 0.0
        %2572 = vmatpush2.msra.mxu0 0.0
        %2573 = vmatprep.subr.mxu0 0.0
        %2574 = vmatpush2.msra.mxu0 0.0
        %2575 = vmatprep.subr.mxu0 0.0
        %2576 = vmatpush2.msra.mxu0 0.0
        %2577 = vmatprep.subr.mxu0 0.0
        %2578 = vmatpush2.msra.mxu0 0.0
        %2579 = vmatprep.subr.mxu0 0.0
        %2580 = vmatpush2.msra.mxu0 0.0
        %2581 = vmatprep.subr.mxu0 0.0
        %2582 = vmatpush2.msra.mxu0 0.0
        %2583 = vmatprep.subr.mxu0 0.0
        %2584 = vmatpush2.msra.mxu0 0.0
        %2585 = vmatprep.subr.mxu0 0.0
        %2586 = vmatpush2.msra.mxu0 0.0
        %2587 = vmatprep.mubr.f32.mxu0 0.0
        %2588 = vmatmul.mubr.f32.gmra.mxu0 %v2521
        %v2589 = vpop.f32.mrf.mxu0
        %v2590 = vadd.f32 %v445, %v2589
        %v2591 = vpop.f32.mrf.mxu0
        %2592 = vdwg.mxu0
        %v2593 = vsub.f32 %v345, %v2590
        %s2594 = scalar_lea.vmem %s336, 72 [#allocation4]
        %2595 = vst.msk [vmem:[%s2594] sm:$0xff] %vm366, %v2593
        %v2596 = vmul.f32 %v2593, 0.1
        %v2598 = vsel %vm366, %v2596, 0
        %2600 = vmatprep.subr.mxu0 0.0
        %2601 = vmatpush1.msra.mxu0 0.0
        %2602 = vmatprep.subr.mxu0 0.0
        %2603 = vmatpush1.msra.mxu0 0.0
        %2604 = vmatprep.subr.mxu0 0.0
        %2605 = vmatpush1.msra.mxu0 0.0
        %2606 = vmatprep.subr.mxu0 0.0
        %2607 = vmatpush1.msra.mxu0 0.0
        %2608 = vmatprep.subr.mxu0 0.0
        %2609 = vmatpush1.msra.mxu0 0.0
        %2610 = vmatprep.subr.mxu0 0.0
        %2611 = vmatpush1.msra.mxu0 0.0
        %2612 = vmatprep.subr.mxu0 0.0
        %2613 = vmatpush1.msra.mxu0 0.0
        %2614 = vmatprep.subr.mxu0 0.0
        %2615 = vmatpush1.msra.mxu0 0.0
        %2616 = vmatprep.subr.mxu0 0.0
        %2617 = vmatpush1.msra.mxu0 0.0
        %2618 = vmatprep.subr.mxu0 0.0
        %2619 = vmatpush1.msra.mxu0 0.0
        %2620 = vmatprep.subr.mxu0 0.0
        %2621 = vmatpush1.msra.mxu0 0.0
        %2622 = vmatprep.subr.mxu0 0.0
        %2623 = vmatpush1.msra.mxu0 0.0
        %2624 = vmatprep.subr.mxu0 0.0
        %2625 = vmatpush1.msra.mxu0 0.0
        %2626 = vmatprep.subr.mxu0 0.0
        %2627 = vmatpush1.msra.mxu0 0.0
        %2628 = vmatprep.subr.mxu0 0.0
        %2629 = vmatpush1.msra.mxu0 %v347
        %2630 = vmatprep.subr.mxu0 0.0
        %2631 = vmatpush1.msra.mxu0 %v346
        %2632 = vmatprep.subr.mxu0 0.0
        %2633 = vmatpush2.msra.mxu0 0.0
        %2634 = vmatprep.subr.mxu0 0.0
        %2635 = vmatpush2.msra.mxu0 0.0
        %2636 = vmatprep.subr.mxu0 0.0
        %2637 = vmatpush2.msra.mxu0 0.0
        %2638 = vmatprep.subr.mxu0 0.0
        %2639 = vmatpush2.msra.mxu0 0.0
        %2640 = vmatprep.subr.mxu0 0.0
        %2641 = vmatpush2.msra.mxu0 0.0
        %2642 = vmatprep.subr.mxu0 0.0
        %2643 = vmatpush2.msra.mxu0 0.0
        %2644 = vmatprep.subr.mxu0 0.0
        %2645 = vmatpush2.msra.mxu0 0.0
        %2646 = vmatprep.subr.mxu0 0.0
        %2647 = vmatpush2.msra.mxu0 0.0
        %2648 = vmatprep.subr.mxu0 0.0
        %2649 = vmatpush2.msra.mxu0 0.0
        %2650 = vmatprep.subr.mxu0 0.0
        %2651 = vmatpush2.msra.mxu0 0.0
        %2652 = vmatprep.subr.mxu0 0.0
        %2653 = vmatpush2.msra.mxu0 0.0
        %2654 = vmatprep.subr.mxu0 0.0
        %2655 = vmatpush2.msra.mxu0 0.0
        %2656 = vmatprep.subr.mxu0 0.0
        %2657 = vmatpush2.msra.mxu0 0.0
        %2658 = vmatprep.subr.mxu0 0.0
        %2659 = vmatpush2.msra.mxu0 0.0
        %2660 = vmatprep.subr.mxu0 0.0
        %2661 = vmatpush2.msra.mxu0 0.0
        %2662 = vmatprep.subr.mxu0 0.0
        %2663 = vmatpush2.msra.mxu0 0.0
        %2664 = vmatprep.mubr.f32.mxu0 0.0
        %2665 = vmatmul.mubr.f32.gmra.mxu0 %v2598
        %v2666 = vpop.f32.mrf.mxu0
        %v2667 = vadd.f32 0.0, %v2666
        %v2668 = vpop.f32.mrf.mxu0
        %2669 = vdwg.mxu0
        %v2670 = vadd.f32 %v2519, %v2667
        %v2671 = vadd.f32 %v2670, %v602
        %v2673 = vsel %vm447, %v2671, 0
        %2675 = vmatprep.subr.mxu0 0.0
        %2676 = vmatpush1.msra.mxu0 0.0
        %2677 = vmatprep.subr.mxu0 0.0
        %2678 = vmatpush1.msra.mxu0 0.0
        %2679 = vmatprep.subr.mxu0 0.0
        %2680 = vmatpush1.msra.mxu0 0.0
        %2681 = vmatprep.subr.mxu0 0.0
        %2682 = vmatpush1.msra.mxu0 0.0
        %2683 = vmatprep.subr.mxu0 0.0
        %2684 = vmatpush1.msra.mxu0 0.0
        %2685 = vmatprep.subr.mxu0 0.0
        %2686 = vmatpush1.msra.mxu0 0.0
        %2687 = vmatprep.subr.mxu0 0.0
        %2688 = vmatpush1.msra.mxu0 0.0
        %2689 = vmatprep.subr.mxu0 0.0
        %2690 = vmatpush1.msra.mxu0 0.0
        %2691 = vmatprep.subr.mxu0 0.0
        %2692 = vmatpush1.msra.mxu0 0.0
        %2693 = vmatprep.subr.mxu0 0.0
        %2694 = vmatpush1.msra.mxu0 0.0
        %2695 = vmatprep.subr.mxu0 0.0
        %2696 = vmatpush1.msra.mxu0 0.0
        %2697 = vmatprep.subr.mxu0 0.0
        %2698 = vmatpush1.msra.mxu0 0.0
        %2699 = vmatprep.subr.mxu0 0.0
        %2700 = vmatpush1.msra.mxu0 %v355
        %2701 = vmatprep.subr.mxu0 0.0
        %2702 = vmatpush1.msra.mxu0 %v354
        %2703 = vmatprep.subr.mxu0 0.0
        %2704 = vmatpush1.msra.mxu0 %v353
        %2705 = vmatprep.subr.mxu0 0.0
        %2706 = vmatpush1.msra.mxu0 %v352
        %2707 = vmatprep.subr.mxu0 0.0
        %2708 = vmatpush2.msra.mxu0 0.0
        %2709 = vmatprep.subr.mxu0 0.0
        %2710 = vmatpush2.msra.mxu0 0.0
        %2711 = vmatprep.subr.mxu0 0.0
        %2712 = vmatpush2.msra.mxu0 0.0
        %2713 = vmatprep.subr.mxu0 0.0
        %2714 = vmatpush2.msra.mxu0 0.0
        %2715 = vmatprep.subr.mxu0 0.0
        %2716 = vmatpush2.msra.mxu0 0.0
        %2717 = vmatprep.subr.mxu0 0.0
        %2718 = vmatpush2.msra.mxu0 0.0
        %2719 = vmatprep.subr.mxu0 0.0
        %2720 = vmatpush2.msra.mxu0 0.0
        %2721 = vmatprep.subr.mxu0 0.0
        %2722 = vmatpush2.msra.mxu0 0.0
        %2723 = vmatprep.subr.mxu0 0.0
        %2724 = vmatpush2.msra.mxu0 0.0
        %2725 = vmatprep.subr.mxu0 0.0
        %2726 = vmatpush2.msra.mxu0 0.0
        %2727 = vmatprep.subr.mxu0 0.0
        %2728 = vmatpush2.msra.mxu0 0.0
        %2729 = vmatprep.subr.mxu0 0.0
        %2730 = vmatpush2.msra.mxu0 0.0
        %2731 = vmatprep.subr.mxu0 0.0
        %2732 = vmatpush2.msra.mxu0 0.0
        %2733 = vmatprep.subr.mxu0 0.0
        %2734 = vmatpush2.msra.mxu0 0.0
        %2735 = vmatprep.subr.mxu0 0.0
        %2736 = vmatpush2.msra.mxu0 0.0
        %2737 = vmatprep.subr.mxu0 0.0
        %2738 = vmatpush2.msra.mxu0 0.0
        %2739 = vmatprep.mubr.f32.mxu0 0.0
        %2740 = vmatmul.mubr.f32.gmra.mxu0 %v2673
        %v2741 = vpop.f32.mrf.mxu0
        %v2742 = vadd.f32 %v609, %v2741
        %v2743 = vpop.f32.mrf.mxu0
        %2744 = vdwg.mxu0
        %v2745 = vmax.f32 %v2742, 0.0
        %v2746 = vmul.f32 %v2745, 0.1
        %v2747 = vadd.f32 %v2671, %v2746
        %v2748 = vmax.f32 %v2747, 0.0
        %2749 = vst.msk [vmem:[%s324] sm:$0xff] %vm447, %v2748
        %2750 = vst.msk [vmem:[%s344] sm:$0xff] %vm366, %v2590
        %s2751 = sand.u32 %s184, 1
        %s2752 = scalar_lea.sflag [#allocation3], %s2751
        %s2753 = sand.u32 %s184, 1
        %s2754 = smul.addr %s2753, 8
        %s2755 = scalar_lea.vmem [#allocation2], %s2754
        %p2756 = scmp.lt.s32.totalorder %s24, 2
        %s2757 = scalar_select %p2756, %s24, 2
        %s2758 = smul.addr %s2757, 8
        %s2759 = scalar_lea.vmem %s8, %s2758
        %s2760 = sand.u32 %s236, 1
        %s2761 = sand.u32 %s236, 1
        %s2762 = smul.addr %s2761, 80
        %s2763 = scalar_lea.vmem [#allocation4], %s2762
        // Predicated region
        $region49: #{tpu_custom_call.1} parent=47 // pred_check
          %p2764 = pneg %p194
        $region50: #{tpu_custom_call.1} parent=47 // pred_check_branch
          %2766 = sbr.rel (%p2764) target = $region52
        $region51: #{tpu_custom_call.1} parent=47 // pred_region
          %s2768 = ssub.s32 128, 128
          %2769 = vsyncadd %s2752, %s2768
          %s2770 = smul.addr %s24, 128
          %s2771 = scalar_lea.hbm %s7, %s2770
          %s2773 = sshll.u32 %s2755, 4
          %s2774 = int_to_ptr.vmem [resolvable:$true] %s2773
          %2776 = dma.vmem_to_hbm [thread:$0]  %s2774, 128, %s2771, %s2752
        $region52: #{tpu_custom_call.1} parent=47 // pred_fallthru
          _
        // Predicated region
        $region53: #{tpu_custom_call.1} parent=47 // pred_check
          %p2777 = pneg %p220
        $region54: #{tpu_custom_call.1} parent=47 // pred_check_branch
          %2779 = sbr.rel (%p2777) target = $region56
        $region55: #{tpu_custom_call.1} parent=47 // pred_region
          _
        $region56: #{tpu_custom_call.1} parent=47 // pred_fallthru
          _
        // Predicated region
        $region57: #{tpu_custom_call.1} parent=47 // pred_check
          %p2780 = pneg %p246
        $region58: #{tpu_custom_call.1} parent=47 // pred_check_branch
          %2782 = sbr.rel (%p2780) target = $region60
        $region59: #{tpu_custom_call.1} parent=47 // pred_region
          %s2783 = smul.addr %s24, 8
          %s2784 = scalar_lea.vmem %s9, %s2783
          // Predicated region
          $region61: #{tpu_custom_call.1} parent=59 // pred_check
            _
          $region62: #{tpu_custom_call.1} parent=59 // pred_check_branch
            %2786 = sbr.rel (0) target = $region64
          $region63: #{tpu_custom_call.1} parent=59 // pred_region
            // Predicated region
            $region65: #{tpu_custom_call.1} parent=63 // pred_check
              _
            $region66: #{tpu_custom_call.1} parent=63 // pred_check_branch
              %2788 = sbr.rel (0) target = $region68
            $region67: #{tpu_custom_call.1} parent=63 // pred_region
              // Predicated region
              $region80: #{tpu_custom_call.1} parent=67 // pred_check
                _
              $region81: #{tpu_custom_call.1} parent=67 // pred_check_branch
                %2822 = sbr.rel (0) target = $region83
              $region82: #{tpu_custom_call.1} parent=67 // pred_region
                loop: start=0, step=1, limit=1
                $region84: #{tpu_custom_call.1} parent=82 // loop_pre_header
                  _
                $region85: #{tpu_custom_call.1} parent=82 // loop_header
                  %s2824 = sphi 0, %s2828
                  %p2825 = scmp.ge.s32.totalorder %s2824, 1
                  %s2829 = sphi %s2763, %s2763
                  %s2830 = sphi %s2784, %s2784
                $region86: #{tpu_custom_call.1} parent=82 // loop_header_branch
                  %2827 = sbr.rel (%p2825) target = $region90
                $region87: #{tpu_custom_call.1} parent=82 // loop_body
                  %v2831 = vld [vmem:[%s2829] sm:$0xff]
                  %2832 = vst [vmem:[%s2830] sm:$0xff] %v2831
                  %v2833 = vld [vmem:[%s2829 + $0x8] sm:$0xff]
                  %2834 = vst [vmem:[%s2830 + $0x18] sm:$0xff] %v2833
                  %v2835 = vld [vmem:[%s2829 + $0x10] sm:$0xff]
                  %2836 = vst [vmem:[%s2830 + $0x30] sm:$0xff] %v2835
                  %v2837 = vld [vmem:[%s2829 + $0x18] sm:$0xff]
                  %2838 = vst [vmem:[%s2830 + $0x48] sm:$0xff] %v2837
                  %v2839 = vld [vmem:[%s2829 + $0x20] sm:$0xff]
                  %2840 = vst [vmem:[%s2830 + $0x60] sm:$0xff] %v2839
                  %v2841 = vld [vmem:[%s2829 + $0x28] sm:$0xff]
                  %2842 = vst [vmem:[%s2830 + $0x78] sm:$0xff] %v2841
                  %v2843 = vld [vmem:[%s2829 + $0x30] sm:$0xff]
                  %2844 = vst [vmem:[%s2830 + $0x90] sm:$0xff] %v2843
                  %v2845 = vld [vmem:[%s2829 + $0x38] sm:$0xff]
                  %2846 = vst [vmem:[%s2830 + $0xa8] sm:$0xff] %v2845
                  %v2847 = vld [vmem:[%s2829 + $0x40] sm:$0xff]
                  %2848 = vst [vmem:[%s2830 + $0xc0] sm:$0xff] %v2847
                  %v2849 = vld [vmem:[%s2829 + $0x48] sm:$0xff]
                  %2850 = vst [vmem:[%s2830 + $0xd8] sm:$0xff] %v2849
                $region88: #{tpu_custom_call.1} parent=82 // loop_footer
                  %s2828 = sadd.s32 1, %s2824
                $region89: #{tpu_custom_call.1} parent=82 // loop_footer_branch
                  %2823 = sbr.rel target = $region85
                $region90: #{tpu_custom_call.1} parent=82 // loop_exit
                  _
              $region83: #{tpu_custom_call.1} parent=67 // pred_fallthru
                _
              // Predicated region
              $region91: #{tpu_custom_call.1} parent=67 // pred_check
                _
              $region92: #{tpu_custom_call.1} parent=67 // pred_check_branch
                %2852 = sbr.rel target = $region94
              $region93: #{tpu_custom_call.1} parent=67 // pred_region
                _
              $region94: #{tpu_custom_call.1} parent=67 // pred_fallthru
                _
            $region68: #{tpu_custom_call.1} parent=63 // pred_fallthru
              _
            // Predicated region
            $region69: #{tpu_custom_call.1} parent=63 // pred_check
              _
            $region70: #{tpu_custom_call.1} parent=63 // pred_check_branch
              %2790 = sbr.rel target = $region72
            $region71: #{tpu_custom_call.1} parent=63 // pred_region
              %s2792 = ssub.s32 256, 1
              loop: start=0, step=1, limit=1
              $region73: #{tpu_custom_call.1} parent=71 // loop_pre_header
                _
              $region74: #{tpu_custom_call.1} parent=71 // loop_header
                %s2794 = sphi 0, %s2798
                %p2795 = scmp.ge.s32.totalorder %s2794, 1
                %s2799 = sphi %s2763, %s2763
                %s2800 = sphi %s2784, %s2784
              $region75: #{tpu_custom_call.1} parent=71 // loop_header_branch
                %2797 = sbr.rel (%p2795) target = $region79
              $region76: #{tpu_custom_call.1} parent=71 // loop_body
                %v2801 = vld [vmem:[%s2799] sm:%s2792]
                %2802 = vst [vmem:[%s2800] sm:%s2792] %v2801
                %v2803 = vld [vmem:[%s2799 + $0x8] sm:%s2792]
                %2804 = vst [vmem:[%s2800 + $0x18] sm:%s2792] %v2803
                %v2805 = vld [vmem:[%s2799 + $0x10] sm:%s2792]
                %2806 = vst [vmem:[%s2800 + $0x30] sm:%s2792] %v2805
                %v2807 = vld [vmem:[%s2799 + $0x18] sm:%s2792]
                %2808 = vst [vmem:[%s2800 + $0x48] sm:%s2792] %v2807
                %v2809 = vld [vmem:[%s2799 + $0x20] sm:%s2792]
                %2810 = vst [vmem:[%s2800 + $0x60] sm:%s2792] %v2809
                %v2811 = vld [vmem:[%s2799 + $0x28] sm:%s2792]
                %2812 = vst [vmem:[%s2800 + $0x78] sm:%s2792] %v2811
                %v2813 = vld [vmem:[%s2799 + $0x30] sm:%s2792]
                %2814 = vst [vmem:[%s2800 + $0x90] sm:%s2792] %v2813
                %v2815 = vld [vmem:[%s2799 + $0x38] sm:%s2792]
                %2816 = vst [vmem:[%s2800 + $0xa8] sm:%s2792] %v2815
                %v2817 = vld [vmem:[%s2799 + $0x40] sm:%s2792]
                %2818 = vst [vmem:[%s2800 + $0xc0] sm:%s2792] %v2817
                %v2819 = vld [vmem:[%s2799 + $0x48] sm:%s2792]
                %2820 = vst [vmem:[%s2800 + $0xd8] sm:%s2792] %v2819
              $region77: #{tpu_custom_call.1} parent=71 // loop_footer
                %s2798 = sadd.s32 1, %s2794
              $region78: #{tpu_custom_call.1} parent=71 // loop_footer_branch
                %2793 = sbr.rel target = $region74
              $region79: #{tpu_custom_call.1} parent=71 // loop_exit
                _
            $region72: #{tpu_custom_call.1} parent=63 // pred_fallthru
              _
          $region64: #{tpu_custom_call.1} parent=59 // pred_fallthru
            _
          %2853 = vnop
        $region60: #{tpu_custom_call.1} parent=47 // pred_fallthru
          _
      $region48: #{tpu_custom_call.1} parent=5 // pred_fallthru
        _
      %p2854 = scmp.le.s32.totalorder 2, %s19
      // Predicated region
      $region95: #{tpu_custom_call.1} parent=5 // pred_check
        %p2855 = pneg %p2854
      $region96: #{tpu_custom_call.1} parent=5 // pred_check_branch
        %2857 = sbr.rel (%p2855) target = $region98
      $region97: #{tpu_custom_call.1} parent=5 // pred_region
        %s2858 = ssub.s32 %s19, 2
        // Predicated region
        $region99: #{tpu_custom_call.1} parent=97 // pred_check
          %p2859 = pneg %p200
        $region100: #{tpu_custom_call.1} parent=97 // pred_check_branch
          %2861 = sbr.rel (%p2859) target = $region102
        $region101: #{tpu_custom_call.1} parent=97 // pred_region
          %s2862 = sand.u32 %s185, 1
          %s2863 = scalar_lea.sflag [#allocation3], %s2862
          %s2864 = sand.u32 %s185, 1
          %s2865 = smul.addr %s2864, 8
          %s2866 = scalar_lea.vmem [#allocation2], %s2865
          %2867 = dma.done %s2863, 128
        $region102: #{tpu_custom_call.1} parent=97 // pred_fallthru
          _
        // Predicated region
        $region103: #{tpu_custom_call.1} parent=97 // pred_check
          %p2868 = pneg %p226
        $region104: #{tpu_custom_call.1} parent=97 // pred_check_branch
          %2870 = sbr.rel (%p2868) target = $region106
        $region105: #{tpu_custom_call.1} parent=97 // pred_region
          %p2871 = scmp.lt.s32.totalorder %s25, 2
          %s2872 = scalar_select %p2871, %s25, 2
          %s2873 = smul.addr %s2872, 8
          %s2874 = scalar_lea.vmem %s8, %s2873
        $region106: #{tpu_custom_call.1} parent=97 // pred_fallthru
          _
        // Predicated region
        $region107: #{tpu_custom_call.1} parent=97 // pred_check
          %p2875 = pneg %p252
        $region108: #{tpu_custom_call.1} parent=97 // pred_check_branch
          %2877 = sbr.rel (%p2875) target = $region110
        $region109: #{tpu_custom_call.1} parent=97 // pred_region
          %s2878 = sand.u32 %s237, 1
          %s2879 = sand.u32 %s237, 1
          %s2880 = smul.addr %s2879, 80
          %s2881 = scalar_lea.vmem [#allocation4], %s2880
        $region110: #{tpu_custom_call.1} parent=97 // pred_fallthru
          _
      $region98: #{tpu_custom_call.1} parent=5 // pred_fallthru
        _
    $region6: #{tpu_custom_call.1} parent=1 // loop_footer
      %s23 = sadd.s32 1, %s19
    $region7: #{tpu_custom_call.1} parent=1 // loop_footer_branch
      %18 = sbr.rel target = $region3
    $region8: #{tpu_custom_call.1} parent=1 // loop_exit
      _
    %2882 = vsyncpa [#allocation3], 1
    %s2883 = scalar_lea.sflag [#allocation3], 1
    %2884 = vsyncpa %s2883, 1

</llo_original>
